<compile_context>
chip_gen: v7x
topology: tpu7x:2x2x1
jax: 0.10.0
libtpu: 0.0.40
codegen_flags: <defaults>
</compile_context>

<pallas_src>
import functools

import numpy as np
import jax
import jax.numpy as jnp
from jax.experimental import pallas as pl
from jax.experimental.pallas import tpu as pltpu

EPS = 1e-5
LANE = 128


def _round_up(n, m):
    return ((n + m - 1) // m) * m


@functools.lru_cache(maxsize=1)
def _vmem_limit_bytes():
    """Generation-aware scoped-VMEM limit (~75% of physical, capped)."""
    try:
        cap = int(getattr(pltpu.get_tpu_info(), "vmem_capacity_bytes", 0))
    except Exception:
        cap = 0
    if cap <= 0:
        return 32 * 1024 * 1024                       # safe on every generation
    return min(cap * 3 // 4, 100 * 1024 * 1024)       # ~48 MiB v7x, ~96 MiB v5e/v6e


def _compiler_params():
    return pltpu.CompilerParams(
        dimension_semantics=("parallel",),
        vmem_limit_bytes=_vmem_limit_bytes())


# --------------------------------------------------------------------------
# Kernels
# --------------------------------------------------------------------------
def _store_raw_and_stats(acc, o_ref, stats_ref):
    """Store raw conv output + numerically-robust per-image BN partials.

    acc: (H*W, CPO) f32.  Partials are (sum, M2) where M2 is the sum of squared
    deviations from the per-image mean; the glue combines them with Chan's
    parallel update (avoids the one-pass E[x^2]-mean^2 cancellation).
    """
    _, H, W, CPO = o_ref.shape
    o_ref[...] = acc.reshape(1, H, W, CPO)
    inv_n = 1.0 / float(H * W)
    s = jnp.sum(acc, axis=0, keepdims=True)            # (1, CPO)
    d = acc - s * inv_n
    m2 = jnp.sum(d * d, axis=0, keepdims=True)          # (1, CPO)
    stats_ref[...] = jnp.concatenate([s, m2], axis=0)[None]


def _packed_matmul_stats_kernel(p_ref, w_ref, o_ref, stats_ref):
    """Conv1 for small Cin: host-packed im2col (K = round_up(9*Cin, 128)),
    one bf16 MXU matmul per image, f32 accumulation + BN partials."""
    _, H, W, KP = p_ref.shape
    pm = p_ref[0].reshape(H * W, KP)                     # bf16, lane-dense K
    acc = jnp.dot(pm, w_ref[...], preferred_element_type=jnp.float32)
    _store_raw_and_stats(acc, o_ref, stats_ref)


def _tap_conv_stats_kernel(x_ref, w_ref, scale_ref, shift_ref,
                           o_ref, stats_ref, ap_ref, *, fuse_prologue):
    """3x3 conv as 9 accumulated bf16 MXU matmuls (K = CPI each) + BN partials.

    If fuse_prologue: x_ref holds the previous conv's *raw* output and the
    previous BatchNorm affine + ReLU is applied here (saves one full HBM
    write+read pass and the XLA pad copy).  The 1-pixel zero halo is built in
    a small VMEM scratch, matching zero-padding of the post-ReLU activations
    (PyTorch Conv2d padding=1 semantics).
    """
    _, H, W, CPI = x_ref.shape
    x = x_ref[0]                                         # (H, W, CPI) f32
    if fuse_prologue:
        a = jnp.maximum(x * scale_ref[...] + shift_ref[...], 0.0)
    else:
        a = x
    ap_ref[...] = jnp.zeros_like(ap_ref)                 # zero halo
    ap_ref[pl.ds(1, H), pl.ds(1, W), :] = a.astype(ap_ref.dtype)

    acc = None
    for dy in range(3):
        for dx in range(3):
            sl = ap_ref[pl.ds(dy, H), pl.ds(dx, W), :].reshape(H * W, CPI)
            part = jnp.dot(sl, w_ref[3 * dy + dx],
                           preferred_element_type=jnp.float32)
            acc = part if acc is None else acc + part
    _store_raw_and_stats(acc, o_ref, stats_ref)


def _affine_relu_kernel(y_ref, scale_ref, shift_ref, out_ref):
    """Fused BN-normalize (pre-combined per-channel affine) + ReLU."""
    out_ref[...] = jnp.maximum(
        y_ref[...] * scale_ref[...] + shift_ref[...], 0.0)


# --------------------------------------------------------------------------
# pallas_call wrappers
# --------------------------------------------------------------------------
def _conv1_packed(patches, wmat):
    B, H, W, KP = patches.shape
    CPO = wmat.shape[1]
    return pl.pallas_call(
        _packed_matmul_stats_kernel,
        grid=(B,),
        in_specs=[
            pl.BlockSpec((1, H, W, KP), lambda b: (b, 0, 0, 0)),
            pl.BlockSpec((KP, CPO), lambda b: (0, 0)),       # weight: resident
        ],
        out_specs=[
            pl.BlockSpec((1, H, W, CPO), lambda b: (b, 0, 0, 0)),
            pl.BlockSpec((1, 2, CPO), lambda b: (b, 0, 0)),
        ],
        out_shape=[
            jax.ShapeDtypeStruct((B, H, W, CPO), jnp.float32),
            jax.ShapeDtypeStruct((B, 2, CPO), jnp.float32),
        ],
        compiler_params=_compiler_params(),
    )(patches, wmat)


def _conv_taps(x_raw, w_taps, scale, shift, *, fuse_prologue):
    B, H, W, CPI = x_raw.shape
    CPO = w_taps.shape[-1]
    kern = functools.partial(_tap_conv_stats_kernel,
                             fuse_prologue=fuse_prologue)
    return pl.pallas_call(
        kern,
        grid=(B,),
        in_specs=[
            pl.BlockSpec((1, H, W, CPI), lambda b: (b, 0, 0, 0)),
            pl.BlockSpec((9, CPI, CPO), lambda b: (0, 0, 0)),  # resident taps
            pl.BlockSpec((1, CPI), lambda b: (0, 0)),
            pl.BlockSpec((1, CPI), lambda b: (0, 0)),
        ],
        out_specs=[
            pl.BlockSpec((1, H, W, CPO), lambda b: (b, 0, 0, 0)),
            pl.BlockSpec((1, 2, CPO), lambda b: (b, 0, 0)),
        ],
        out_shape=[
            jax.ShapeDtypeStruct((B, H, W, CPO), jnp.float32),
            jax.ShapeDtypeStruct((B, 2, CPO), jnp.float32),
        ],
        scratch_shapes=[pltpu.VMEM((H + 2, W + 2, CPI), jnp.bfloat16)],
        compiler_params=_compiler_params(),
    )(x_raw, w_taps, scale, shift)


def _affine_relu(y, scale, shift):
    B, H, W, CP = y.shape
    return pl.pallas_call(
        _affine_relu_kernel,
        grid=(B,),
        in_specs=[
            pl.BlockSpec((1, H, W, CP), lambda b: (b, 0, 0, 0)),
            pl.BlockSpec((1, CP), lambda b: (0, 0)),
            pl.BlockSpec((1, CP), lambda b: (0, 0)),
        ],
        out_specs=pl.BlockSpec((1, H, W, CP), lambda b: (b, 0, 0, 0)),
        out_shape=jax.ShapeDtypeStruct((B, H, W, CP), jnp.float32),
        compiler_params=_compiler_params(),
    )(y, scale, shift)


# --------------------------------------------------------------------------
# Glue (tiny O(C) math only), weight prep, and the DoubleConv forward
# --------------------------------------------------------------------------
def _bn_affine(stats, gamma_pad, beta_pad, n_per_img):
    """Chan-combine per-image (sum, M2) partials, then pre-fold BN into a
    single per-channel affine: y * scale + shift (training-mode batch stats,
    biased variance, eps=1e-5)."""
    s_i = stats[:, 0, :]                                  # (B, CP)
    m2_i = stats[:, 1, :]                                 # (B, CP)
    n = stats.shape[0] * n_per_img
    mean_i = s_i / n_per_img
    mean = jnp.sum(s_i, axis=0) / n
    m2 = jnp.sum(m2_i, axis=0) + n_per_img * jnp.sum(
        (mean_i - mean[None, :]) ** 2, axis=0)
    var = m2 / n
    scale = gamma_pad * jax.lax.rsqrt(var + EPS)
    shift = beta_pad - mean * scale
    return scale[None, :], shift[None, :]


def _prep_weight_packed(w_oihw, kp, cpo):
    cout, cin = w_oihw.shape[0], w_oihw.shape[1]
    w = jnp.transpose(w_oihw.astype(jnp.float32), (2, 3, 1, 0))   # HWIO
    w = w.reshape(9 * cin, cout)                                  # (dy,dx,ci) x co
    w = jnp.pad(w, ((0, kp - 9 * cin), (0, cpo - cout)))
    return w.astype(jnp.bfloat16)


def _prep_weight_taps(w_oihw, cpi, cpo):
    cout, cin = w_oihw.shape[0], w_oihw.shape[1]
    w = jnp.transpose(w_oihw.astype(jnp.float32), (2, 3, 1, 0))   # HWIO
    w = jnp.pad(w, ((0, 0), (0, 0), (0, cpi - cin), (0, cpo - cout)))
    return w.reshape(9, cpi, cpo).astype(jnp.bfloat16)


def _pad_vec(v, cp):
    return jnp.pad(v.astype(jnp.float32), (0, cp - v.shape[0]))


def double_conv(x_nchw, params):
    """x_nchw: (B, Cin, H, W) float32; returns (B, Cout, H, W) float32."""
    B, Cin, H, W = x_nchw.shape
    Cout = params["w1"].shape[0]
    CPO = _round_up(Cout, LANE)

    x = jnp.transpose(x_nchw, (0, 2, 3, 1)).astype(jnp.float32)   # NHWC

    g1, bt1 = _pad_vec(params["g1"], CPO), _pad_vec(params["bt1"], CPO)
    g2, bt2 = _pad_vec(params["g2"], CPO), _pad_vec(params["bt2"], CPO)
    # NOTE: conv biases b1/b2 cancel exactly under training-mode BatchNorm.

    # ---- conv1 (+ BN1 partial statistics) -------------------------------
    if 9 * Cin <= 2 * LANE:
        # Small Cin: pack the 9 taps of the *true* Cin so K = round_up(9*Cin,
        # 128) instead of 9*128.
        KP1 = _round_up(9 * Cin, LANE)
        xs = jnp.pad(x, ((0, 0), (1, 1), (1, 1), (0, 0)))
        cols = [xs[:, dy:dy + H, dx:dx + W, :]
                for dy in range(3) for dx in range(3)]
        patches = jnp.pad(jnp.concatenate(cols, axis=-1),
                          ((0, 0), (0, 0), (0, 0), (0, KP1 - 9 * Cin)))
        patches = patches.astype(jnp.bfloat16)
        w1 = _prep_weight_packed(params["w1"], KP1, CPO)
        y1_raw, stats1 = _conv1_packed(patches, w1)
    else:
        CPI = _round_up(Cin, LANE)
        x_p = jnp.pad(x, ((0, 0), (0, 0), (0, 0), (0, CPI - Cin)))
        w1 = _prep_weight_taps(params["w1"], CPI, CPO)
        ident = jnp.ones((1, CPI), jnp.float32)
        zero = jnp.zeros((1, CPI), jnp.float32)
        y1_raw, stats1 = _conv_taps(x_p, w1, ident, zero,
                                    fuse_prologue=False)

    scale1, shift1 = _bn_affine(stats1, g1, bt1, H * W)

    # ---- conv2 with BN1 + ReLU fused into its prologue (+ BN2 partials) --
    w2 = _prep_weight_taps(params["w2"], CPO, CPO)
    y2_raw, stats2 = _conv_taps(y1_raw, w2, scale1, shift1,
                                fuse_prologue=True)
    scale2, shift2 = _bn_affine(stats2, g2, bt2, H * W)

    # ---- final BN2 affine + ReLU epilogue --------------------------------
    y = _affine_relu(y2_raw, scale2, shift2)                        # (B,H,W,CPO)

    return jnp.transpose(y[..., :Cout], (0, 3, 1, 2))


# --------------------------------------------------------------------------
# Pure-JAX reference (PyTorch training-mode semantics, f32) and test
# --------------------------------------------------------------------------
def _reference(x, p):
    def conv(x, w, b):
        y = jax.lax.conv_general_dilated(
            x, w, window_strides=(1, 1), padding=((1, 1), (1, 1)),
            dimension_numbers=("NCHW", "OIHW", "NCHW"))
        return y + b[None, :, None, None]

    def bn_relu(y, g, bt):
        m = y.mean(axis=(0, 2, 3), keepdims=True)
        v = ((y - m) ** 2).mean(axis=(0, 2, 3), keepdims=True)
        z = (y - m) * jax.lax.rsqrt(v + EPS)
        z = z * g[None, :, None, None] + bt[None, :, None, None]
        return jnp.maximum(z, 0.0)

    y = bn_relu(conv(x, p["w1"], p["b1"]), p["g1"], p["bt1"])
    return bn_relu(conv(y, p["w2"], p["b2"]), p["g2"], p["bt2"])


if __name__ == "__main__":
    B, Cin, Cout, H, W = 2, 4, 8, 16, 16
    key = jax.random.PRNGKey(0)
    ks = jax.random.split(key, 9)

    params = {
        "w1": jax.random.normal(ks[0], (Cout, Cin, 3, 3), jnp.float32) * 0.2,
        "b1": jax.random.normal(ks[1], (Cout,), jnp.float32) * 0.1,
        "g1": 1.0 + 0.1 * jax.random.normal(ks[2], (Cout,), jnp.float32),
        "bt1": 0.1 * jax.random.normal(ks[3], (Cout,), jnp.float32),
        "w2": jax.random.normal(ks[4], (Cout, Cout, 3, 3), jnp.float32) * 0.2,
        "b2": jax.random.normal(ks[5], (Cout,), jnp.float32) * 0.1,
        "g2": 1.0 + 0.1 * jax.random.normal(ks[6], (Cout,), jnp.float32),
        "bt2": 0.1 * jax.random.normal(ks[7], (Cout,), jnp.float32),
    }
    x = jax.random.normal(ks[8], (B, Cin, H, W), jnp.float32)

    out = jax.block_until_ready(jax.jit(double_conv)(x, params))
    ref = jax.block_until_ready(_reference(x, params))

    assert out.shape == (B, Cout, H, W), out.shape
    # bf16 MXU operands with f32 accumulation vs a pure-f32 reference:
    # expected max deviation ~1e-2 after two conv+BN layers.
    np.testing.assert_allclose(np.asarray(out), np.asarray(ref),
                               rtol=2e-2, atol=2e-2)
    print("KERNEL_OK")
</pallas_src>

<mosaic_0001>
module attributes {stable_mosaic.version = 11 : i64} {
  func.func @_packed_matmul_stats_kernel(%arg0: i32, %arg1: memref<1x16x16x128xbf16, #tpu.memory_space<vmem>>, %arg2: memref<128x128xbf16, #tpu.memory_space<vmem>>, %arg3: memref<1x16x16x128xf32, #tpu.memory_space<vmem>>, %arg4: memref<1x2x128xf32, #tpu.memory_space<vmem>>) attributes {dimension_semantics = [#tpu.dimension_semantics<parallel>], iteration_bounds = array<i64: 2>, scalar_prefetch = 0 : i64, scratch_operands = 0 : i64, tpu.core_type = #tpu.core_type<tc>, window_params = [{transform_indices = @transform_0, window_bounds = array<i64: 1, 16, 16, 128>}, {pipeline_mode = #tpu.pipeline_mode<synchronous>, transform_indices = @transform_1, window_bounds = array<i64: 128, 128>}, {transform_indices = @transform_2, window_bounds = array<i64: 1, 16, 16, 128>}, {transform_indices = @transform_3, window_bounds = array<i64: 1, 2, 128>}]} {
    %c0 = arith.constant 0 : index
    %c0_0 = arith.constant 0 : index
    %c0_1 = arith.constant 0 : index
    %c0_2 = arith.constant 0 : index
    %0 = vector.load %arg1[%c0, %c0_0, %c0_1, %c0_2] : memref<1x16x16x128xbf16, #tpu.memory_space<vmem>>, vector<1x16x16x128xbf16>
    %1 = vector.shape_cast %0 : vector<1x16x16x128xbf16> to vector<16x16x128xbf16>
    %2 = vector.shape_cast %1 : vector<16x16x128xbf16> to vector<256x128xbf16>
    %c0_3 = arith.constant 0 : index
    %c0_4 = arith.constant 0 : index
    %3 = vector.load %arg2[%c0_3, %c0_4] : memref<128x128xbf16, #tpu.memory_space<vmem>>, vector<128x128xbf16>
    %cst = arith.constant dense<0.000000e+00> : vector<256x128xf32>
    %4 = tpu.matmul %2, %3, %cst {dimension_numbers = #tpu.dot_dimension_numbers<[1], [0], [0], [1], [0, 0, 1, 1], [], []>} : vector<256x128xbf16>, vector<128x128xbf16>, vector<256x128xf32> -> vector<256x128xf32>
    %5 = vector.shape_cast %4 : vector<256x128xf32> to vector<1x16x16x128xf32>
    %c0_5 = arith.constant 0 : index
    %c0_6 = arith.constant 0 : index
    %c0_7 = arith.constant 0 : index
    %c0_8 = arith.constant 0 : index
    %6 = vector.load %arg3[%c0_5, %c0_6, %c0_7, %c0_8] : memref<1x16x16x128xf32, #tpu.memory_space<vmem>>, vector<1x16x16x128xf32>
    tpu.vector_store %arg3[%c0_5, %c0_6, %c0_7, %c0_8], %5 {strides = array<i32>} : memref<1x16x16x128xf32, #tpu.memory_space<vmem>>, vector<1x16x16x128xf32>,
    %cst_9 = arith.constant dense<0.000000e+00> : vector<128xf32>
    %7 = vector.multi_reduction <add>, %4, %cst_9 [0] : vector<256x128xf32> to vector<128xf32>
    %8 = vector.shape_cast %7 : vector<128xf32> to vector<1x128xf32>
    %cst_10 = arith.constant 3.906250e-03 : f32
    %9 = vector.broadcast %cst_10 : f32 to vector<1x128xf32>
    %10 = arith.mulf %8, %9 : vector<1x128xf32>
    %11 = vector.broadcast %10 : vector<1x128xf32> to vector<256x128xf32>
    %12 = arith.subf %4, %11 : vector<256x128xf32>
    %13 = arith.mulf %12, %12 : vector<256x128xf32>
    %cst_11 = arith.constant dense<0.000000e+00> : vector<128xf32>
    %14 = vector.multi_reduction <add>, %13, %cst_11 [0] : vector<256x128xf32> to vector<128xf32>
    %15 = vector.shape_cast %14 : vector<128xf32> to vector<1x128xf32>
    %16 = tpu.concatenate %8, %15 in 0 : vector<1x128xf32>, vector<1x128xf32> -> vector<2x128xf32>
    %17 = vector.shape_cast %16 : vector<2x128xf32> to vector<1x2x128xf32>
    %c0_12 = arith.constant 0 : index
    %c0_13 = arith.constant 0 : index
    %c0_14 = arith.constant 0 : index
    %18 = vector.load %arg4[%c0_12, %c0_13, %c0_14] : memref<1x2x128xf32, #tpu.memory_space<vmem>>, vector<1x2x128xf32>
    tpu.vector_store %arg4[%c0_12, %c0_13, %c0_14], %17 {strides = array<i32>} : memref<1x2x128xf32, #tpu.memory_space<vmem>>, vector<1x2x128xf32>,
    return
  }
  func.func @transform_0(%arg0: i32) -> (i32, i32, i32, i32) {
    %c0_i32 = arith.constant 0 : i32
    %c0_i32_0 = arith.constant 0 : i32
    %c0_i32_1 = arith.constant 0 : i32
    %c0_i32_2 = arith.constant 0 : i32
    return %arg0, %c0_i32, %c0_i32_0, %c0_i32_1 : i32, i32, i32, i32
  }
  func.func @transform_1(%arg0: i32) -> (i32, i32) {
    %c0_i32 = arith.constant 0 : i32
    %c0_i32_0 = arith.constant 0 : i32
    %c0_i32_1 = arith.constant 0 : i32
    return %c0_i32, %c0_i32_0 : i32, i32
  }
  func.func @transform_2(%arg0: i32) -> (i32, i32, i32, i32) {
    %c0_i32 = arith.constant 0 : i32
    %c0_i32_0 = arith.constant 0 : i32
    %c0_i32_1 = arith.constant 0 : i32
    %c0_i32_2 = arith.constant 0 : i32
    return %arg0, %c0_i32, %c0_i32_0, %c0_i32_1 : i32, i32, i32, i32
  }
  func.func @transform_3(%arg0: i32) -> (i32, i32, i32) {
    %c0_i32 = arith.constant 0 : i32
    %c0_i32_0 = arith.constant 0 : i32
    %c0_i32_1 = arith.constant 0 : i32
    return %arg0, %c0_i32, %c0_i32_0 : i32, i32, i32
  }
}

module attributes {stable_mosaic.version = 11 : i64} {
  func.func @_tap_conv_stats_kernel(%arg0: i32, %arg1: memref<1x16x16x128xf32, #tpu.memory_space<vmem>>, %arg2: memref<9x128x128xbf16, #tpu.memory_space<vmem>>, %arg3: memref<1x128xf32, #tpu.memory_space<vmem>>, %arg4: memref<1x128xf32, #tpu.memory_space<vmem>>, %arg5: memref<1x16x16x128xf32, #tpu.memory_space<vmem>>, %arg6: memref<1x2x128xf32, #tpu.memory_space<vmem>>, %arg7: memref<18x18x128xbf16, #tpu.memory_space<vmem>>) attributes {dimension_semantics = [#tpu.dimension_semantics<parallel>], iteration_bounds = array<i64: 2>, scalar_prefetch = 0 : i64, scratch_operands = 1 : i64, tpu.core_type = #tpu.core_type<tc>, window_params = [{transform_indices = @transform_0, window_bounds = array<i64: 1, 16, 16, 128>}, {pipeline_mode = #tpu.pipeline_mode<synchronous>, transform_indices = @transform_1, window_bounds = array<i64: 9, 128, 128>}, {pipeline_mode = #tpu.pipeline_mode<synchronous>, transform_indices = @transform_2, window_bounds = array<i64: 1, 128>}, {pipeline_mode = #tpu.pipeline_mode<synchronous>, transform_indices = @transform_3, window_bounds = array<i64: 1, 128>}, {transform_indices = @transform_4, window_bounds = array<i64: 1, 16, 16, 128>}, {transform_indices = @transform_5, window_bounds = array<i64: 1, 2, 128>}]} {
    %c0 = arith.constant 0 : index
    %c0_0 = arith.constant 0 : index
    %c0_1 = arith.constant 0 : index
    %c0_2 = arith.constant 0 : index
    %0 = vector.load %arg1[%c0, %c0_0, %c0_1, %c0_2] : memref<1x16x16x128xf32, #tpu.memory_space<vmem>>, vector<1x16x16x128xf32>
    %1 = vector.shape_cast %0 : vector<1x16x16x128xf32> to vector<16x16x128xf32>
    %c0_3 = arith.constant 0 : index
    %c0_4 = arith.constant 0 : index
    %2 = vector.load %arg3[%c0_3, %c0_4] : memref<1x128xf32, #tpu.memory_space<vmem>>, vector<1x128xf32>
    %3 = vector.shape_cast %2 : vector<1x128xf32> to vector<1x1x128xf32>
    %4 = vector.broadcast %3 : vector<1x1x128xf32> to vector<16x16x128xf32>
    %5 = arith.mulf %1, %4 : vector<16x16x128xf32>
    %c0_5 = arith.constant 0 : index
    %c0_6 = arith.constant 0 : index
    %6 = vector.load %arg4[%c0_5, %c0_6] : memref<1x128xf32, #tpu.memory_space<vmem>>, vector<1x128xf32>
    %7 = vector.shape_cast %6 : vector<1x128xf32> to vector<1x1x128xf32>
    %8 = vector.broadcast %7 : vector<1x1x128xf32> to vector<16x16x128xf32>
    %9 = arith.addf %5, %8 : vector<16x16x128xf32>
    %cst = arith.constant 0.000000e+00 : f32
    %10 = vector.broadcast %cst : f32 to vector<16x16x128xf32>
    %11 = arith.maximumf %9, %10 : vector<16x16x128xf32>
    %cst_7 = arith.constant 0.000000e+00 : bf16
    %12 = vector.broadcast %cst_7 : bf16 to vector<18x18x128xbf16>
    %c0_8 = arith.constant 0 : index
    %c0_9 = arith.constant 0 : index
    %c0_10 = arith.constant 0 : index
    %13 = vector.load %arg7[%c0_8, %c0_9, %c0_10] : memref<18x18x128xbf16, #tpu.memory_space<vmem>>, vector<18x18x128xbf16>
    tpu.vector_store %arg7[%c0_8, %c0_9, %c0_10], %12 {strides = array<i32>} : memref<18x18x128xbf16, #tpu.memory_space<vmem>>, vector<18x18x128xbf16>,
    %14 = arith.truncf %11 : vector<16x16x128xf32> to vector<16x16x128xbf16>
    %c1 = arith.constant 1 : index
    %c1_11 = arith.constant 1 : index
    %c0_12 = arith.constant 0 : index
    %15 = vector.load %arg7[%c1, %c1_11, %c0_12] : memref<18x18x128xbf16, #tpu.memory_space<vmem>>, vector<16x16x128xbf16>
    tpu.vector_store %arg7[%c1, %c1_11, %c0_12], %14 {strides = array<i32>} : memref<18x18x128xbf16, #tpu.memory_space<vmem>>, vector<16x16x128xbf16>,
    %c0_13 = arith.constant 0 : index
    %c0_14 = arith.constant 0 : index
    %c0_15 = arith.constant 0 : index
    %16 = vector.load %arg7[%c0_13, %c0_14, %c0_15] : memref<18x18x128xbf16, #tpu.memory_space<vmem>>, vector<16x16x128xbf16>
    %17 = vector.shape_cast %16 : vector<16x16x128xbf16> to vector<256x128xbf16>
    %c0_16 = arith.constant 0 : index
    %c0_17 = arith.constant 0 : index
    %c0_18 = arith.constant 0 : index
    %18 = vector.load %arg2[%c0_16, %c0_17, %c0_18] : memref<9x128x128xbf16, #tpu.memory_space<vmem>>, vector<1x128x128xbf16>
    %19 = vector.shape_cast %18 : vector<1x128x128xbf16> to vector<128x128xbf16>
    %cst_19 = arith.constant dense<0.000000e+00> : vector<256x128xf32>
    %20 = tpu.matmul %17, %19, %cst_19 {dimension_numbers = #tpu.dot_dimension_numbers<[1], [0], [0], [1], [0, 0, 1, 1], [], []>} : vector<256x128xbf16>, vector<128x128xbf16>, vector<256x128xf32> -> vector<256x128xf32>
    %c0_20 = arith.constant 0 : index
    %c1_21 = arith.constant 1 : index
    %c0_22 = arith.constant 0 : index
    %21 = vector.load %arg7[%c0_20, %c1_21, %c0_22] : memref<18x18x128xbf16, #tpu.memory_space<vmem>>, vector<16x16x128xbf16>
    %22 = vector.shape_cast %21 : vector<16x16x128xbf16> to vector<256x128xbf16>
    %c1_23 = arith.constant 1 : index
    %c0_24 = arith.constant 0 : index
    %c0_25 = arith.constant 0 : index
    %23 = vector.load %arg2[%c1_23, %c0_24, %c0_25] : memref<9x128x128xbf16, #tpu.memory_space<vmem>>, vector<1x128x128xbf16>
    %24 = vector.shape_cast %23 : vector<1x128x128xbf16> to vector<128x128xbf16>
    %cst_26 = arith.constant dense<0.000000e+00> : vector<256x128xf32>
    %25 = tpu.matmul %22, %24, %cst_26 {dimension_numbers = #tpu.dot_dimension_numbers<[1], [0], [0], [1], [0, 0, 1, 1], [], []>} : vector<256x128xbf16>, vector<128x128xbf16>, vector<256x128xf32> -> vector<256x128xf32>
    %26 = arith.addf %20, %25 : vector<256x128xf32>
    %c0_27 = arith.constant 0 : index
    %c2 = arith.constant 2 : index
    %c0_28 = arith.constant 0 : index
    %27 = vector.load %arg7[%c0_27, %c2, %c0_28] : memref<18x18x128xbf16, #tpu.memory_space<vmem>>, vector<16x16x128xbf16>
    %28 = vector.shape_cast %27 : vector<16x16x128xbf16> to vector<256x128xbf16>
    %c2_29 = arith.constant 2 : index
    %c0_30 = arith.constant 0 : index
    %c0_31 = arith.constant 0 : index
    %29 = vector.load %arg2[%c2_29, %c0_30, %c0_31] : memref<9x128x128xbf16, #tpu.memory_space<vmem>>, vector<1x128x128xbf16>
    %30 = vector.shape_cast %29 : vector<1x128x128xbf16> to vector<128x128xbf16>
    %cst_32 = arith.constant dense<0.000000e+00> : vector<256x128xf32>
    %31 = tpu.matmul %28, %30, %cst_32 {dimension_numbers = #tpu.dot_dimension_numbers<[1], [0], [0], [1], [0, 0, 1, 1], [], []>} : vector<256x128xbf16>, vector<128x128xbf16>, vector<256x128xf32> -> vector<256x128xf32>
    %32 = arith.addf %26, %31 : vector<256x128xf32>
    %c1_33 = arith.constant 1 : index
    %c0_34 = arith.constant 0 : index
    %c0_35 = arith.constant 0 : index
    %33 = vector.load %arg7[%c1_33, %c0_34, %c0_35] : memref<18x18x128xbf16, #tpu.memory_space<vmem>>, vector<16x16x128xbf16>
    %34 = vector.shape_cast %33 : vector<16x16x128xbf16> to vector<256x128xbf16>
    %c3 = arith.constant 3 : index
    %c0_36 = arith.constant 0 : index
    %c0_37 = arith.constant 0 : index
    %35 = vector.load %arg2[%c3, %c0_36, %c0_37] : memref<9x128x128xbf16, #tpu.memory_space<vmem>>, vector<1x128x128xbf16>
    %36 = vector.shape_cast %35 : vector<1x128x128xbf16> to vector<128x128xbf16>
    %cst_38 = arith.constant dense<0.000000e+00> : vector<256x128xf32>
    %37 = tpu.matmul %34, %36, %cst_38 {dimension_numbers = #tpu.dot_dimension_numbers<[1], [0], [0], [1], [0, 0, 1, 1], [], []>} : vector<256x128xbf16>, vector<128x128xbf16>, vector<256x128xf32> -> vector<256x128xf32>
    %38 = arith.addf %32, %37 : vector<256x128xf32>
    %c1_39 = arith.constant 1 : index
    %c1_40 = arith.constant 1 : index
    %c0_41 = arith.constant 0 : index
    %39 = vector.load %arg7[%c1_39, %c1_40, %c0_41] : memref<18x18x128xbf16, #tpu.memory_space<vmem>>, vector<16x16x128xbf16>
    %40 = vector.shape_cast %39 : vector<16x16x128xbf16> to vector<256x128xbf16>
    %c4 = arith.constant 4 : index
    %c0_42 = arith.constant 0 : index
    %c0_43 = arith.constant 0 : index
    %41 = vector.load %arg2[%c4, %c0_42, %c0_43] : memref<9x128x128xbf16, #tpu.memory_space<vmem>>, vector<1x128x128xbf16>
    %42 = vector.shape_cast %41 : vector<1x128x128xbf16> to vector<128x128xbf16>
    %cst_44 = arith.constant dense<0.000000e+00> : vector<256x128xf32>
    %43 = tpu.matmul %40, %42, %cst_44 {dimension_numbers = #tpu.dot_dimension_numbers<[1], [0], [0], [1], [0, 0, 1, 1], [], []>} : vector<256x128xbf16>, vector<128x128xbf16>, vector<256x128xf32> -> vector<256x128xf32>
    %44 = arith.addf %38, %43 : vector<256x128xf32>
    %c1_45 = arith.constant 1 : index
    %c2_46 = arith.constant 2 : index
    %c0_47 = arith.constant 0 : index
    %45 = vector.load %arg7[%c1_45, %c2_46, %c0_47] : memref<18x18x128xbf16, #tpu.memory_space<vmem>>, vector<16x16x128xbf16>
    %46 = vector.shape_cast %45 : vector<16x16x128xbf16> to vector<256x128xbf16>
    %c5 = arith.constant 5 : index
    %c0_48 = arith.constant 0 : index
    %c0_49 = arith.constant 0 : index
    %47 = vector.load %arg2[%c5, %c0_48, %c0_49] : memref<9x128x128xbf16, #tpu.memory_space<vmem>>, vector<1x128x128xbf16>
    %48 = vector.shape_cast %47 : vector<1x128x128xbf16> to vector<128x128xbf16>
    %cst_50 = arith.constant dense<0.000000e+00> : vector<256x128xf32>
    %49 = tpu.matmul %46, %48, %cst_50 {dimension_numbers = #tpu.dot_dimension_numbers<[1], [0], [0], [1], [0, 0, 1, 1], [], []>} : vector<256x128xbf16>, vector<128x128xbf16>, vector<256x128xf32> -> vector<256x128xf32>
    %50 = arith.addf %44, %49 : vector<256x128xf32>
    %c2_51 = arith.constant 2 : index
    %c0_52 = arith.constant 0 : index
    %c0_53 = arith.constant 0 : index
    %51 = vector.load %arg7[%c2_51, %c0_52, %c0_53] : memref<18x18x128xbf16, #tpu.memory_space<vmem>>, vector<16x16x128xbf16>
    %52 = vector.shape_cast %51 : vector<16x16x128xbf16> to vector<256x128xbf16>
    %c6 = arith.constant 6 : index
    %c0_54 = arith.constant 0 : index
    %c0_55 = arith.constant 0 : index
    %53 = vector.load %arg2[%c6, %c0_54, %c0_55] : memref<9x128x128xbf16, #tpu.memory_space<vmem>>, vector<1x128x128xbf16>
    %54 = vector.shape_cast %53 : vector<1x128x128xbf16> to vector<128x128xbf16>
    %cst_56 = arith.constant dense<0.000000e+00> : vector<256x128xf32>
    %55 = tpu.matmul %52, %54, %cst_56 {dimension_numbers = #tpu.dot_dimension_numbers<[1], [0], [0], [1], [0, 0, 1, 1], [], []>} : vector<256x128xbf16>, vector<128x128xbf16>, vector<256x128xf32> -> vector<256x128xf32>
    %56 = arith.addf %50, %55 : vector<256x128xf32>
    %c2_57 = arith.constant 2 : index
    %c1_58 = arith.constant 1 : index
    %c0_59 = arith.constant 0 : index
    %57 = vector.load %arg7[%c2_57, %c1_58, %c0_59] : memref<18x18x128xbf16, #tpu.memory_space<vmem>>, vector<16x16x128xbf16>
    %58 = vector.shape_cast %57 : vector<16x16x128xbf16> to vector<256x128xbf16>
    %c7 = arith.constant 7 : index
    %c0_60 = arith.constant 0 : index
    %c0_61 = arith.constant 0 : index
    %59 = vector.load %arg2[%c7, %c0_60, %c0_61] : memref<9x128x128xbf16, #tpu.memory_space<vmem>>, vector<1x128x128xbf16>
    %60 = vector.shape_cast %59 : vector<1x128x128xbf16> to vector<128x128xbf16>
    %cst_62 = arith.constant dense<0.000000e+00> : vector<256x128xf32>
    %61 = tpu.matmul %58, %60, %cst_62 {dimension_numbers = #tpu.dot_dimension_numbers<[1], [0], [0], [1], [0, 0, 1, 1], [], []>} : vector<256x128xbf16>, vector<128x128xbf16>, vector<256x128xf32> -> vector<256x128xf32>
    %62 = arith.addf %56, %61 : vector<256x128xf32>
    %c2_63 = arith.constant 2 : index
    %c2_64 = arith.constant 2 : index
    %c0_65 = arith.constant 0 : index
    %63 = vector.load %arg7[%c2_63, %c2_64, %c0_65] : memref<18x18x128xbf16, #tpu.memory_space<vmem>>, vector<16x16x128xbf16>
    %64 = vector.shape_cast %63 : vector<16x16x128xbf16> to vector<256x128xbf16>
    %c8 = arith.constant 8 : index
    %c0_66 = arith.constant 0 : index
    %c0_67 = arith.constant 0 : index
    %65 = vector.load %arg2[%c8, %c0_66, %c0_67] : memref<9x128x128xbf16, #tpu.memory_space<vmem>>, vector<1x128x128xbf16>
    %66 = vector.shape_cast %65 : vector<1x128x128xbf16> to vector<128x128xbf16>
    %cst_68 = arith.constant dense<0.000000e+00> : vector<256x128xf32>
    %67 = tpu.matmul %64, %66, %cst_68 {dimension_numbers = #tpu.dot_dimension_numbers<[1], [0], [0], [1], [0, 0, 1, 1], [], []>} : vector<256x128xbf16>, vector<128x128xbf16>, vector<256x128xf32> -> vector<256x128xf32>
    %68 = arith.addf %62, %67 : vector<256x128xf32>
    %69 = vector.shape_cast %68 : vector<256x128xf32> to vector<1x16x16x128xf32>
    %c0_69 = arith.constant 0 : index
    %c0_70 = arith.constant 0 : index
    %c0_71 = arith.constant 0 : index
    %c0_72 = arith.constant 0 : index
    %70 = vector.load %arg5[%c0_69, %c0_70, %c0_71, %c0_72] : memref<1x16x16x128xf32, #tpu.memory_space<vmem>>, vector<1x16x16x128xf32>
    tpu.vector_store %arg5[%c0_69, %c0_70, %c0_71, %c0_72], %69 {strides = array<i32>} : memref<1x16x16x128xf32, #tpu.memory_space<vmem>>, vector<1x16x16x128xf32>,
    %cst_73 = arith.constant dense<0.000000e+00> : vector<128xf32>
    %71 = vector.multi_reduction <add>, %68, %cst_73 [0] : vector<256x128xf32> to vector<128xf32>
    %72 = vector.shape_cast %71 : vector<128xf32> to vector<1x128xf32>
    %cst_74 = arith.constant 3.906250e-03 : f32
    %73 = vector.broadcast %cst_74 : f32 to vector<1x128xf32>
    %74 = arith.mulf %72, %73 : vector<1x128xf32>
    %75 = vector.broadcast %74 : vector<1x128xf32> to vector<256x128xf32>
    %76 = arith.subf %68, %75 : vector<256x128xf32>
    %77 = arith.mulf %76, %76 : vector<256x128xf32>
    %cst_75 = arith.constant dense<0.000000e+00> : vector<128xf32>
    %78 = vector.multi_reduction <add>, %77, %cst_75 [0] : vector<256x128xf32> to vector<128xf32>
    %79 = vector.shape_cast %78 : vector<128xf32> to vector<1x128xf32>
    %80 = tpu.concatenate %72, %79 in 0 : vector<1x128xf32>, vector<1x128xf32> -> vector<2x128xf32>
    %81 = vector.shape_cast %80 : vector<2x128xf32> to vector<1x2x128xf32>
    %c0_76 = arith.constant 0 : index
    %c0_77 = arith.constant 0 : index
    %c0_78 = arith.constant 0 : index
    %82 = vector.load %arg6[%c0_76, %c0_77, %c0_78] : memref<1x2x128xf32, #tpu.memory_space<vmem>>, vector<1x2x128xf32>
    tpu.vector_store %arg6[%c0_76, %c0_77, %c0_78], %81 {strides = array<i32>} : memref<1x2x128xf32, #tpu.memory_space<vmem>>, vector<1x2x128xf32>,
    return
  }
  func.func @transform_0(%arg0: i32) -> (i32, i32, i32, i32) {
    %c0_i32 = arith.constant 0 : i32
    %c0_i32_0 = arith.constant 0 : i32
    %c0_i32_1 = arith.constant 0 : i32
    %c0_i32_2 = arith.constant 0 : i32
    return %arg0, %c0_i32, %c0_i32_0, %c0_i32_1 : i32, i32, i32, i32
  }
  func.func @transform_1(%arg0: i32) -> (i32, i32, i32) {
    %c0_i32 = arith.constant 0 : i32
    %c0_i32_0 = arith.constant 0 : i32
    %c0_i32_1 = arith.constant 0 : i32
    %c0_i32_2 = arith.constant 0 : i32
    return %c0_i32, %c0_i32_0, %c0_i32_1 : i32, i32, i32
  }
  func.func @transform_2(%arg0: i32) -> (i32, i32) {
    %c0_i32 = arith.constant 0 : i32
    %c0_i32_0 = arith.constant 0 : i32
    %c0_i32_1 = arith.constant 0 : i32
    return %c0_i32, %c0_i32_0 : i32, i32
  }
  func.func @transform_3(%arg0: i32) -> (i32, i32) {
    %c0_i32 = arith.constant 0 : i32
    %c0_i32_0 = arith.constant 0 : i32
    %c0_i32_1 = arith.constant 0 : i32
    return %c0_i32, %c0_i32_0 : i32, i32
  }
  func.func @transform_4(%arg0: i32) -> (i32, i32, i32, i32) {
    %c0_i32 = arith.constant 0 : i32
    %c0_i32_0 = arith.constant 0 : i32
    %c0_i32_1 = arith.constant 0 : i32
    %c0_i32_2 = arith.constant 0 : i32
    return %arg0, %c0_i32, %c0_i32_0, %c0_i32_1 : i32, i32, i32, i32
  }
  func.func @transform_5(%arg0: i32) -> (i32, i32, i32) {
    %c0_i32 = arith.constant 0 : i32
    %c0_i32_0 = arith.constant 0 : i32
    %c0_i32_1 = arith.constant 0 : i32
    return %arg0, %c0_i32, %c0_i32_0 : i32, i32, i32
  }
}

module attributes {stable_mosaic.version = 11 : i64} {
  func.func @_affine_relu_kernel(%arg0: i32, %arg1: memref<1x16x16x128xf32, #tpu.memory_space<vmem>>, %arg2: memref<1x128xf32, #tpu.memory_space<vmem>>, %arg3: memref<1x128xf32, #tpu.memory_space<vmem>>, %arg4: memref<1x16x16x128xf32, #tpu.memory_space<vmem>>) attributes {dimension_semantics = [#tpu.dimension_semantics<parallel>], iteration_bounds = array<i64: 2>, scalar_prefetch = 0 : i64, scratch_operands = 0 : i64, tpu.core_type = #tpu.core_type<tc>, window_params = [{transform_indices = @transform_0, window_bounds = array<i64: 1, 16, 16, 128>}, {pipeline_mode = #tpu.pipeline_mode<synchronous>, transform_indices = @transform_1, window_bounds = array<i64: 1, 128>}, {pipeline_mode = #tpu.pipeline_mode<synchronous>, transform_indices = @transform_2, window_bounds = array<i64: 1, 128>}, {transform_indices = @transform_3, window_bounds = array<i64: 1, 16, 16, 128>}]} {
    %c0 = arith.constant 0 : index
    %c0_0 = arith.constant 0 : index
    %c0_1 = arith.constant 0 : index
    %c0_2 = arith.constant 0 : index
    %0 = vector.load %arg1[%c0, %c0_0, %c0_1, %c0_2] : memref<1x16x16x128xf32, #tpu.memory_space<vmem>>, vector<1x16x16x128xf32>
    %c0_3 = arith.constant 0 : index
    %c0_4 = arith.constant 0 : index
    %1 = vector.load %arg2[%c0_3, %c0_4] : memref<1x128xf32, #tpu.memory_space<vmem>>, vector<1x128xf32>
    %2 = vector.shape_cast %1 : vector<1x128xf32> to vector<1x1x1x128xf32>
    %3 = vector.broadcast %2 : vector<1x1x1x128xf32> to vector<1x16x16x128xf32>
    %4 = arith.mulf %0, %3 : vector<1x16x16x128xf32>
    %c0_5 = arith.constant 0 : index
    %c0_6 = arith.constant 0 : index
    %5 = vector.load %arg3[%c0_5, %c0_6] : memref<1x128xf32, #tpu.memory_space<vmem>>, vector<1x128xf32>
    %6 = vector.shape_cast %5 : vector<1x128xf32> to vector<1x1x1x128xf32>
    %7 = vector.broadcast %6 : vector<1x1x1x128xf32> to vector<1x16x16x128xf32>
    %8 = arith.addf %4, %7 : vector<1x16x16x128xf32>
    %cst = arith.constant 0.000000e+00 : f32
    %9 = vector.broadcast %cst : f32 to vector<1x16x16x128xf32>
    %10 = arith.maximumf %8, %9 : vector<1x16x16x128xf32>
    %c0_7 = arith.constant 0 : index
    %c0_8 = arith.constant 0 : index
    %c0_9 = arith.constant 0 : index
    %c0_10 = arith.constant 0 : index
    %11 = vector.load %arg4[%c0_7, %c0_8, %c0_9, %c0_10] : memref<1x16x16x128xf32, #tpu.memory_space<vmem>>, vector<1x16x16x128xf32>
    tpu.vector_store %arg4[%c0_7, %c0_8, %c0_9, %c0_10], %10 {strides = array<i32>} : memref<1x16x16x128xf32, #tpu.memory_space<vmem>>, vector<1x16x16x128xf32>,
    return
  }
  func.func @transform_0(%arg0: i32) -> (i32, i32, i32, i32) {
    %c0_i32 = arith.constant 0 : i32
    %c0_i32_0 = arith.constant 0 : i32
    %c0_i32_1 = arith.constant 0 : i32
    %c0_i32_2 = arith.constant 0 : i32
    return %arg0, %c0_i32, %c0_i32_0, %c0_i32_1 : i32, i32, i32, i32
  }
  func.func @transform_1(%arg0: i32) -> (i32, i32) {
    %c0_i32 = arith.constant 0 : i32
    %c0_i32_0 = arith.constant 0 : i32
    %c0_i32_1 = arith.constant 0 : i32
    return %c0_i32, %c0_i32_0 : i32, i32
  }
  func.func @transform_2(%arg0: i32) -> (i32, i32) {
    %c0_i32 = arith.constant 0 : i32
    %c0_i32_0 = arith.constant 0 : i32
    %c0_i32_1 = arith.constant 0 : i32
    return %c0_i32, %c0_i32_0 : i32, i32
  }
  func.func @transform_3(%arg0: i32) -> (i32, i32, i32, i32) {
    %c0_i32 = arith.constant 0 : i32
    %c0_i32_0 = arith.constant 0 : i32
    %c0_i32_1 = arith.constant 0 : i32
    %c0_i32_2 = arith.constant 0 : i32
    return %arg0, %c0_i32, %c0_i32_0, %c0_i32_1 : i32, i32, i32, i32
  }
}

</mosaic_0001>

<llo_original>
// kernel: double_conv.3
$region0: #{double_conv.3}
  #allocation0 [shape = 'u32[]', space=smem, size = 0x4, offset = 0x4, fixed_abs, tag = 'smem constant byte address 0x4 - core index']
  #allocation1 [shape = 'u32[144,128]{1,0:T(1,128)}', space=vmem, size = 0x12000, scoped, tag = 'internal scratch']
  %s0 = inlined_call_operand.vmem [shape: bf16[2,16,16,128], index: 0, kind: input, shape index: {}]
  %s1 = inlined_call_operand.vmem [shape: bf16[128,128], index: 1, kind: input, shape index: {}]
  %s2 = inlined_call_operand.vmem [shape: f32[2,16,16,128], index: 2, kind: output, shape index: {0}]
  %s3 = inlined_call_operand.vmem [shape: f32[2,2,128], index: 3, kind: output, shape index: {1}]
  %4 = xla_tuple %s2, %s3
  %s5 = sld [smem:[#allocation0]]
  $region49: #{double_conv.3} parent=0
    _
  %s7 = ssub.s32 1, %s5
  %s8 = scalar_select 0, %s7, %s5
  loop: start=0, step=1, limit=4
  $region2: #{double_conv.3} parent=0 // loop_pre_header
    _
  $region3: #{double_conv.3} parent=0 // loop_header
    %s10 = sphi 0, %s14
    %p11 = scmp.ge.s32.totalorder %s10, 4
    %s20 = sphi 0, %s22
    %s23 = sphi 0, %s20
    %s24 = sphi 0, %s23
    %s40 = sphi 0, %s24
    %s44 = sphi 0, %s44
    %s46 = sphi 0, %s44
    %s47 = sphi 0, %s46
    %s61 = sphi 0, %s47
    %s67 = sphi 0, %s69
    %s70 = sphi 0, %s67
    %s71 = sphi 0, %s70
    %s87 = sphi 0, %s71
    %s93 = sphi 0, %s95
    %s96 = sphi 0, %s93
    %s97 = sphi 0, %s96
    %s113 = sphi 0, %s97
  $region4: #{double_conv.3} parent=0 // loop_header_branch
    %13 = sbr.rel (%p11) target = $region8
  $region5: #{double_conv.3} parent=0 // loop_body
    %s15 = ssub.s32 %s10, 1
    %s16 = ssub.s32 %s10, 2
    %s17 = sadd.s32 %s10, 1
    %s18 = ssub.s32 %s10, %s17
    %p19 = scmp.eq.s32.totalorder %s18, 0
    %s21 = sadd.s32 %s20, 1
    %s22 = scalar_select %p19, %s20, %s21
    %p25 = pneg %p19
    %p26 = scmp.eq.s32.totalorder %s10, 1
    %p27 = por %p25, %p26
    %p28 = scmp.ne.s32.totalorder %s20, %s23
    %p29 = scmp.eq.s32.totalorder %s10, 0
    %p30 = por %p28, %p29
    %p31 = scmp.ne.s32.totalorder %s20, %s23
    %p32 = scmp.eq.s32.totalorder %s15, 1
    %p33 = por %p31, %p32
    %p34 = scmp.ne.s32.totalorder %s23, %s24
    %p35 = scmp.eq.s32.totalorder %s15, 0
    %p36 = por %p34, %p35
    %p37 = scmp.ne.s32.totalorder %s23, %s24
    %p38 = scmp.eq.s32.totalorder %s16, 1
    %p39 = por %p37, %p38
    %p41 = scmp.ne.s32.totalorder %s24, %s40
    %p42 = scmp.eq.s32.totalorder %s16, 0
    %p43 = por %p41, %p42
    %s45 = sadd.s32 %s44, 1
    %p48 = scmp.eq.s32.totalorder %s10, 1
    %p49 = scmp.ne.s32.totalorder %s44, %s46
    %p50 = scmp.eq.s32.totalorder %s10, 0
    %p51 = por %p49, %p50
    %p52 = scmp.ne.s32.totalorder %s44, %s46
    %p53 = scmp.eq.s32.totalorder %s15, 1
    %p54 = por %p52, %p53
    %p55 = scmp.ne.s32.totalorder %s46, %s47
    %p56 = scmp.eq.s32.totalorder %s15, 0
    %p57 = por %p55, %p56
    %p58 = scmp.ne.s32.totalorder %s46, %s47
    %p59 = scmp.eq.s32.totalorder %s16, 1
    %p60 = por %p58, %p59
    %p62 = scmp.ne.s32.totalorder %s47, %s61
    %p63 = scmp.eq.s32.totalorder %s16, 0
    %p64 = por %p62, %p63
    %s65 = ssub.s32 %s10, %s17
    %p66 = scmp.eq.s32.totalorder %s65, 0
    %s68 = sadd.s32 %s67, 1
    %s69 = scalar_select %p66, %s67, %s68
    %p72 = pneg %p66
    %p73 = scmp.eq.s32.totalorder %s10, 1
    %p74 = por %p72, %p73
    %p75 = scmp.ne.s32.totalorder %s67, %s70
    %p76 = scmp.eq.s32.totalorder %s10, 0
    %p77 = por %p75, %p76
    %p78 = scmp.ne.s32.totalorder %s67, %s70
    %p79 = scmp.eq.s32.totalorder %s15, 1
    %p80 = por %p78, %p79
    %p81 = scmp.ne.s32.totalorder %s70, %s71
    %p82 = scmp.eq.s32.totalorder %s15, 0
    %p83 = por %p81, %p82
    %p84 = scmp.ne.s32.totalorder %s70, %s71
    %p85 = scmp.eq.s32.totalorder %s16, 1
    %p86 = por %p84, %p85
    %p88 = scmp.ne.s32.totalorder %s71, %s87
    %p89 = scmp.eq.s32.totalorder %s16, 0
    %p90 = por %p88, %p89
    %s91 = ssub.s32 %s10, %s17
    %p92 = scmp.eq.s32.totalorder %s91, 0
    %s94 = sadd.s32 %s93, 1
    %s95 = scalar_select %p92, %s93, %s94
    %p98 = pneg %p92
    %p99 = scmp.eq.s32.totalorder %s10, 1
    %p100 = por %p98, %p99
    %p101 = scmp.ne.s32.totalorder %s93, %s96
    %p102 = scmp.eq.s32.totalorder %s10, 0
    %p103 = por %p101, %p102
    %p104 = scmp.ne.s32.totalorder %s93, %s96
    %p105 = scmp.eq.s32.totalorder %s15, 1
    %p106 = por %p104, %p105
    %p107 = scmp.ne.s32.totalorder %s96, %s97
    %p108 = scmp.eq.s32.totalorder %s15, 0
    %p109 = por %p107, %p108
    %p110 = scmp.ne.s32.totalorder %s96, %s97
    %p111 = scmp.eq.s32.totalorder %s16, 1
    %p112 = por %p110, %p111
    %p114 = scmp.ne.s32.totalorder %s97, %s113
    %p115 = scmp.eq.s32.totalorder %s16, 0
    %p116 = por %p114, %p115
    %p117 = scmp.le.s32.totalorder 1, %s10
    %p118 = scmp.lt.s32.totalorder %s10, 3
    %p119 = pnand %p117, %p118
    %p120 = pneg %p119
    // Predicated region
    $region9: #{double_conv.3} parent=5 // pred_check
      _
    $region10: #{double_conv.3} parent=5 // pred_check_branch
      %122 = sbr.rel (%p119) target = $region12
    $region11: #{double_conv.3} parent=5 // pred_region
      %s123 = ssub.s32 %s10, 1
      // Predicated region
      $region13: #{double_conv.3} parent=11 // pred_check
        %p124 = pneg %p57
      $region14: #{double_conv.3} parent=11 // pred_check_branch
        %126 = sbr.rel (%p124) target = $region16
      $region15: #{double_conv.3} parent=11 // pred_region
        _
      $region16: #{double_conv.3} parent=11 // pred_fallthru
        _
    $region12: #{double_conv.3} parent=5 // pred_fallthru
      _
    %p127 = scmp.lt.s32.totalorder %s10, 2
    // Predicated region
    $region17: #{double_conv.3} parent=5 // pred_check
      %p128 = pneg %p127
    $region18: #{double_conv.3} parent=5 // pred_check_branch
      %130 = sbr.rel (%p128) target = $region20
    $region19: #{double_conv.3} parent=5 // pred_region
      // Predicated region
      $region21: #{double_conv.3} parent=19 // pred_check
        %p131 = pneg %p30
      $region22: #{double_conv.3} parent=19 // pred_check_branch
        %133 = sbr.rel (%p131) target = $region24
      $region23: #{double_conv.3} parent=19 // pred_region
        %p134 = scmp.lt.s32.totalorder %s10, 1
        %s135 = scalar_select %p134, %s10, 1
        %s136 = smul.addr %s135, 32
        %s137 = smul.addr %s136, 4
        %s138 = scalar_lea.vmem %s0, %s137
      $region24: #{double_conv.3} parent=19 // pred_fallthru
        _
    $region20: #{double_conv.3} parent=5 // pred_fallthru
      _
    %p139 = scmp.le.s32.totalorder 1, %s10
    %p140 = scmp.lt.s32.totalorder %s10, 3
    %p141 = pnand %p139, %p140
    %p142 = pneg %p141
    // Predicated region
    $region25: #{double_conv.3} parent=5 // pred_check
      _
    $region26: #{double_conv.3} parent=5 // pred_check_branch
      %144 = sbr.rel (%p141) target = $region28
    $region27: #{double_conv.3} parent=5 // pred_region
      %s145 = ssub.s32 %s10, 1
      %p146 = scmp.lt.s32.totalorder %s15, 1
      %s147 = scalar_select %p146, %s15, 1
      %s148 = smul.addr %s147, 32
      %s149 = smul.addr %s148, 4
      %s150 = scalar_lea.vmem %s0, %s149
      %p151 = pneg %p36
      %p152 = pneg %p33
      %p153 = pneg %p57
      %p154 = pneg %p54
      %p155 = pneg %p83
      %p156 = pneg %p80
      %p157 = scmp.lt.s32.totalorder %s15, 1
      %s158 = scalar_select %p157, %s15, 1
      %s159 = smul.addr %s158, 32
      %s160 = smul.addr %s159, 8
      %s161 = scalar_lea.vmem %s2, %s160
      %p162 = pneg %p109
      %p163 = pneg %p106
      %p164 = scmp.lt.s32.totalorder %s15, 1
      %s165 = scalar_select %p164, %s15, 1
      %s166 = smul.addr %s165, 2
      %s167 = scalar_lea.vmem %s3, %s166
      %p168 = scmp.lt.s32.totalorder %s15, 1
      %s169 = scalar_select %p168, %s15, 1
      %s170 = smul.addr %s169, 32
      %s171 = smul.addr %s170, 4
      %s172 = scalar_lea.vmem %s0, %s171
      %p173 = scmp.lt.s32.totalorder %s15, 1
      %s174 = scalar_select %p173, %s15, 1
      %s175 = smul.addr %s174, 32
      %s176 = smul.addr %s175, 8
      %s177 = scalar_lea.vmem %s2, %s176
      %p178 = scmp.lt.s32.totalorder %s15, 1
      %s179 = scalar_select %p178, %s15, 1
      %s180 = smul.addr %s179, 2
      %s181 = scalar_lea.vmem %s3, %s180
      %v183 = vld [vmem:[%s172] sm:$0xf]
      %v184 = vld [vmem:[%s172 + $0x4] sm:$0xf]
      %v185 = vld [vmem:[%s172 + $0x8] sm:$0xf]
      %v186 = vld [vmem:[%s172 + $0xc] sm:$0xf]
      %v187 = vld [vmem:[%s172 + $0x10] sm:$0xf]
      %v188 = vld [vmem:[%s172 + $0x14] sm:$0xf]
      %v189 = vld [vmem:[%s172 + $0x18] sm:$0xf]
      %v190 = vld [vmem:[%s172 + $0x1c] sm:$0xf]
      %v191 = vld [vmem:[%s172 + $0x20] sm:$0xf]
      %v192 = vld [vmem:[%s172 + $0x24] sm:$0xf]
      %v193 = vld [vmem:[%s172 + $0x28] sm:$0xf]
      %v194 = vld [vmem:[%s172 + $0x2c] sm:$0xf]
      %v195 = vld [vmem:[%s172 + $0x30] sm:$0xf]
      %v196 = vld [vmem:[%s172 + $0x34] sm:$0xf]
      %v197 = vld [vmem:[%s172 + $0x38] sm:$0xf]
      %v198 = vld [vmem:[%s172 + $0x3c] sm:$0xf]
      %v199 = vld [vmem:[%s172 + $0x40] sm:$0xf]
      %v200 = vld [vmem:[%s172 + $0x44] sm:$0xf]
      %v201 = vld [vmem:[%s172 + $0x48] sm:$0xf]
      %v202 = vld [vmem:[%s172 + $0x4c] sm:$0xf]
      %v203 = vld [vmem:[%s172 + $0x50] sm:$0xf]
      %v204 = vld [vmem:[%s172 + $0x54] sm:$0xf]
      %v205 = vld [vmem:[%s172 + $0x58] sm:$0xf]
      %v206 = vld [vmem:[%s172 + $0x5c] sm:$0xf]
      %v207 = vld [vmem:[%s172 + $0x60] sm:$0xf]
      %v208 = vld [vmem:[%s172 + $0x64] sm:$0xf]
      %v209 = vld [vmem:[%s172 + $0x68] sm:$0xf]
      %v210 = vld [vmem:[%s172 + $0x6c] sm:$0xf]
      %v211 = vld [vmem:[%s172 + $0x70] sm:$0xf]
      %v212 = vld [vmem:[%s172 + $0x74] sm:$0xf]
      %v213 = vld [vmem:[%s172 + $0x78] sm:$0xf]
      %v214 = vld [vmem:[%s172 + $0x7c] sm:$0xf]
      %v215 = vld [vmem:[%s1] sm:$0xf]
      %v216 = vld [vmem:[%s1 + $0x4] sm:$0xf]
      %v217 = vld [vmem:[%s1 + $0x8] sm:$0xf]
      %v218 = vld [vmem:[%s1 + $0xc] sm:$0xf]
      %v219 = vld [vmem:[%s1 + $0x10] sm:$0xf]
      %v220 = vld [vmem:[%s1 + $0x14] sm:$0xf]
      %v221 = vld [vmem:[%s1 + $0x18] sm:$0xf]
      %v222 = vld [vmem:[%s1 + $0x1c] sm:$0xf]
      %v223 = vld [vmem:[%s1 + $0x20] sm:$0xf]
      %v224 = vld [vmem:[%s1 + $0x24] sm:$0xf]
      %v225 = vld [vmem:[%s1 + $0x28] sm:$0xf]
      %v226 = vld [vmem:[%s1 + $0x2c] sm:$0xf]
      %v227 = vld [vmem:[%s1 + $0x30] sm:$0xf]
      %v228 = vld [vmem:[%s1 + $0x34] sm:$0xf]
      %v229 = vld [vmem:[%s1 + $0x38] sm:$0xf]
      %v230 = vld [vmem:[%s1 + $0x3c] sm:$0xf]
      %v263 = vunpack.c.l.b16 %v183
      %v264 = vunpack.c.l.b16 %v184
      %v265 = vunpack.c.l.b16 %v185
      %v266 = vunpack.c.l.b16 %v186
      %v267 = vunpack.c.l.b16 %v187
      %v268 = vunpack.c.l.b16 %v188
      %v269 = vunpack.c.l.b16 %v189
      %v270 = vunpack.c.l.b16 %v190
      %v271 = vunpack.c.l.b16 %v191
      %v272 = vunpack.c.l.b16 %v192
      %v273 = vunpack.c.l.b16 %v193
      %v274 = vunpack.c.l.b16 %v194
      %v275 = vunpack.c.l.b16 %v195
      %v276 = vunpack.c.l.b16 %v196
      %v277 = vunpack.c.l.b16 %v197
      %v278 = vunpack.c.l.b16 %v198
      %v279 = vunpack.c.l.b16 %v199
      %v280 = vunpack.c.l.b16 %v200
      %v281 = vunpack.c.l.b16 %v201
      %v282 = vunpack.c.l.b16 %v202
      %v283 = vunpack.c.l.b16 %v203
      %v284 = vunpack.c.l.b16 %v204
      %v285 = vunpack.c.l.b16 %v205
      %v286 = vunpack.c.l.b16 %v206
      %v287 = vunpack.c.l.b16 %v207
      %v288 = vunpack.c.l.b16 %v208
      %v289 = vunpack.c.l.b16 %v209
      %v290 = vunpack.c.l.b16 %v210
      %v291 = vunpack.c.l.b16 %v211
      %v292 = vunpack.c.l.b16 %v212
      %v293 = vunpack.c.l.b16 %v213
      %v294 = vunpack.c.l.b16 %v214
      %v295 = vpack.c.b16 %v264, %v263
      %v296 = vpack.c.b16 %v266, %v265
      %v297 = vpack.c.b16 %v268, %v267
      %v298 = vpack.c.b16 %v270, %v269
      %v299 = vpack.c.b16 %v272, %v271
      %v300 = vpack.c.b16 %v274, %v273
      %v301 = vpack.c.b16 %v276, %v275
      %v302 = vpack.c.b16 %v278, %v277
      %v303 = vpack.c.b16 %v280, %v279
      %v304 = vpack.c.b16 %v282, %v281
      %v305 = vpack.c.b16 %v284, %v283
      %v306 = vpack.c.b16 %v286, %v285
      %v307 = vpack.c.b16 %v288, %v287
      %v308 = vpack.c.b16 %v290, %v289
      %v309 = vpack.c.b16 %v292, %v291
      %v310 = vpack.c.b16 %v294, %v293
      %v343 = vunpack.c.l.b16 %v215
      %v344 = vunpack.c.l.b16 %v216
      %v345 = vunpack.c.l.b16 %v217
      %v346 = vunpack.c.l.b16 %v218
      %v347 = vunpack.c.l.b16 %v219
      %v348 = vunpack.c.l.b16 %v220
      %v349 = vunpack.c.l.b16 %v221
      %v350 = vunpack.c.l.b16 %v222
      %v351 = vunpack.c.l.b16 %v223
      %v352 = vunpack.c.l.b16 %v224
      %v353 = vunpack.c.l.b16 %v225
      %v354 = vunpack.c.l.b16 %v226
      %v355 = vunpack.c.l.b16 %v227
      %v356 = vunpack.c.l.b16 %v228
      %v357 = vunpack.c.l.b16 %v229
      %v358 = vunpack.c.l.b16 %v230
      %v359 = vpack.c.b16 %v344, %v343
      %v360 = vpack.c.b16 %v346, %v345
      %v361 = vpack.c.b16 %v348, %v347
      %v362 = vpack.c.b16 %v350, %v349
      %v363 = vpack.c.b16 %v352, %v351
      %v364 = vpack.c.b16 %v354, %v353
      %v365 = vpack.c.b16 %v356, %v355
      %v366 = vpack.c.b16 %v358, %v357
      %375 = vmatprep.subr.bf16.mxu0 0
      %376 = vmatpush1.bf16.msra.mxu0 %v359
      %377 = vmatprep.subr.bf16.mxu0 0
      %378 = vmatpush1.bf16.msra.mxu0 %v360
      %379 = vmatprep.subr.bf16.mxu0 0
      %380 = vmatpush1.bf16.msra.mxu0 %v361
      %381 = vmatprep.subr.bf16.mxu0 0
      %382 = vmatpush1.bf16.msra.mxu0 %v362
      %383 = vmatprep.subr.bf16.mxu0 0
      %384 = vmatpush1.bf16.msra.mxu0 %v363
      %385 = vmatprep.subr.bf16.mxu0 0
      %386 = vmatpush1.bf16.msra.mxu0 %v364
      %387 = vmatprep.subr.bf16.mxu0 0
      %388 = vmatpush1.bf16.msra.mxu0 %v365
      %389 = vmatprep.subr.bf16.mxu0 0
      %390 = vmatpush1.bf16.msra.mxu0 %v366
      %391 = vmatprep.subr.bf16.mxu0 0
      %392 = vmatpush1.bf16.msra.mxu0 0
      %393 = vmatprep.subr.bf16.mxu0 0
      %394 = vmatpush1.bf16.msra.mxu0 0
      %395 = vmatprep.subr.bf16.mxu0 0
      %396 = vmatpush1.bf16.msra.mxu0 0
      %397 = vmatprep.subr.bf16.mxu0 0
      %398 = vmatpush1.bf16.msra.mxu0 0
      %399 = vmatprep.subr.bf16.mxu0 0
      %400 = vmatpush1.bf16.msra.mxu0 0
      %401 = vmatprep.subr.bf16.mxu0 0
      %402 = vmatpush1.bf16.msra.mxu0 0
      %403 = vmatprep.subr.bf16.mxu0 0
      %404 = vmatpush1.bf16.msra.mxu0 0
      %405 = vmatprep.subr.bf16.mxu0 0
      %406 = vmatpush1.bf16.msra.mxu0 0
      %407 = vmatprep.mubr.bf16.mxu0 0
      %408 = vmatmul.mubr.bf16.gmra.mrb[0].mxu0 %v295
      %v409 = vpop.f32.mrb[0].mxu0
      %v410 = vadd.f32 0.0, %v409
      %v411 = vpop.f32.mrb[0].mxu0
      %v412 = vpop.f32.mrb[0].mxu0
      %v413 = vadd.f32 0.0, %v412
      %v414 = vpop.f32.mrb[0].mxu0
      %415 = vmatprep.mubr.bf16.mxu0 0
      %416 = vmatmul.mubr.bf16.gmra.mrb[0].mxu0 %v296
      %v417 = vpop.f32.mrb[0].mxu0
      %v418 = vadd.f32 0.0, %v417
      %v419 = vpop.f32.mrb[0].mxu0
      %v420 = vpop.f32.mrb[0].mxu0
      %v421 = vadd.f32 0.0, %v420
      %v422 = vpop.f32.mrb[0].mxu0
      %423 = vmatprep.mubr.bf16.mxu0 0
      %424 = vmatmul.mubr.bf16.gmra.mrb[0].mxu0 %v297
      %v425 = vpop.f32.mrb[0].mxu0
      %v426 = vadd.f32 0.0, %v425
      %v427 = vpop.f32.mrb[0].mxu0
      %v428 = vpop.f32.mrb[0].mxu0
      %v429 = vadd.f32 0.0, %v428
      %v430 = vpop.f32.mrb[0].mxu0
      %431 = vmatprep.mubr.bf16.mxu0 0
      %432 = vmatmul.mubr.bf16.gmra.mrb[0].mxu0 %v298
      %v433 = vpop.f32.mrb[0].mxu0
      %v434 = vadd.f32 0.0, %v433
      %v435 = vpop.f32.mrb[0].mxu0
      %v436 = vpop.f32.mrb[0].mxu0
      %v437 = vadd.f32 0.0, %v436
      %v438 = vpop.f32.mrb[0].mxu0
      %439 = vmatprep.mubr.bf16.mxu0 0
      %440 = vmatmul.mubr.bf16.gmra.mrb[0].mxu0 %v299
      %v441 = vpop.f32.mrb[0].mxu0
      %v442 = vadd.f32 0.0, %v441
      %v443 = vpop.f32.mrb[0].mxu0
      %v444 = vpop.f32.mrb[0].mxu0
      %v445 = vadd.f32 0.0, %v444
      %v446 = vpop.f32.mrb[0].mxu0
      %447 = vmatprep.mubr.bf16.mxu0 0
      %448 = vmatmul.mubr.bf16.gmra.mrb[0].mxu0 %v300
      %v449 = vpop.f32.mrb[0].mxu0
      %v450 = vadd.f32 0.0, %v449
      %v451 = vpop.f32.mrb[0].mxu0
      %v452 = vpop.f32.mrb[0].mxu0
      %v453 = vadd.f32 0.0, %v452
      %v454 = vpop.f32.mrb[0].mxu0
      %455 = vmatprep.mubr.bf16.mxu0 0
      %456 = vmatmul.mubr.bf16.gmra.mrb[0].mxu0 %v301
      %v457 = vpop.f32.mrb[0].mxu0
      %v458 = vadd.f32 0.0, %v457
      %v459 = vpop.f32.mrb[0].mxu0
      %v460 = vpop.f32.mrb[0].mxu0
      %v461 = vadd.f32 0.0, %v460
      %v462 = vpop.f32.mrb[0].mxu0
      %463 = vmatprep.mubr.bf16.mxu0 0
      %464 = vmatmul.mubr.bf16.gmra.mrb[0].mxu0 %v302
      %v465 = vpop.f32.mrb[0].mxu0
      %v466 = vadd.f32 0.0, %v465
      %v467 = vpop.f32.mrb[0].mxu0
      %v468 = vpop.f32.mrb[0].mxu0
      %v469 = vadd.f32 0.0, %v468
      %v470 = vpop.f32.mrb[0].mxu0
      %471 = vmatprep.mubr.bf16.mxu0 0
      %472 = vmatmul.mubr.bf16.gmra.mrb[0].mxu0 %v303
      %v473 = vpop.f32.mrb[0].mxu0
      %v474 = vadd.f32 0.0, %v473
      %v475 = vpop.f32.mrb[0].mxu0
      %v476 = vpop.f32.mrb[0].mxu0
      %v477 = vadd.f32 0.0, %v476
      %v478 = vpop.f32.mrb[0].mxu0
      %479 = vmatprep.mubr.bf16.mxu0 0
      %480 = vmatmul.mubr.bf16.gmra.mrb[0].mxu0 %v304
      %v481 = vpop.f32.mrb[0].mxu0
      %v482 = vadd.f32 0.0, %v481
      %v483 = vpop.f32.mrb[0].mxu0
      %v484 = vpop.f32.mrb[0].mxu0
      %v485 = vadd.f32 0.0, %v484
      %v486 = vpop.f32.mrb[0].mxu0
      %487 = vmatprep.mubr.bf16.mxu0 0
      %488 = vmatmul.mubr.bf16.gmra.mrb[0].mxu0 %v305
      %v489 = vpop.f32.mrb[0].mxu0
      %v490 = vadd.f32 0.0, %v489
      %v491 = vpop.f32.mrb[0].mxu0
      %v492 = vpop.f32.mrb[0].mxu0
      %v493 = vadd.f32 0.0, %v492
      %v494 = vpop.f32.mrb[0].mxu0
      %495 = vmatprep.mubr.bf16.mxu0 0
      %496 = vmatmul.mubr.bf16.gmra.mrb[0].mxu0 %v306
      %v497 = vpop.f32.mrb[0].mxu0
      %v498 = vadd.f32 0.0, %v497
      %v499 = vpop.f32.mrb[0].mxu0
      %v500 = vpop.f32.mrb[0].mxu0
      %v501 = vadd.f32 0.0, %v500
      %v502 = vpop.f32.mrb[0].mxu0
      %503 = vmatprep.mubr.bf16.mxu0 0
      %504 = vmatmul.mubr.bf16.gmra.mrb[0].mxu0 %v307
      %v505 = vpop.f32.mrb[0].mxu0
      %v506 = vadd.f32 0.0, %v505
      %v507 = vpop.f32.mrb[0].mxu0
      %v508 = vpop.f32.mrb[0].mxu0
      %v509 = vadd.f32 0.0, %v508
      %v510 = vpop.f32.mrb[0].mxu0
      %511 = vmatprep.mubr.bf16.mxu0 0
      %512 = vmatmul.mubr.bf16.gmra.mrb[0].mxu0 %v308
      %v513 = vpop.f32.mrb[0].mxu0
      %v514 = vadd.f32 0.0, %v513
      %v515 = vpop.f32.mrb[0].mxu0
      %v516 = vpop.f32.mrb[0].mxu0
      %v517 = vadd.f32 0.0, %v516
      %v518 = vpop.f32.mrb[0].mxu0
      %519 = vmatprep.mubr.bf16.mxu0 0
      %520 = vmatmul.mubr.bf16.gmra.mrb[0].mxu0 %v309
      %v521 = vpop.f32.mrb[0].mxu0
      %v522 = vadd.f32 0.0, %v521
      %v523 = vpop.f32.mrb[0].mxu0
      %v524 = vpop.f32.mrb[0].mxu0
      %v525 = vadd.f32 0.0, %v524
      %v526 = vpop.f32.mrb[0].mxu0
      %527 = vmatprep.mubr.bf16.mxu0 0
      %528 = vmatmul.mubr.bf16.gmra.mrb[0].mxu0 %v310
      %v529 = vpop.f32.mrb[0].mxu0
      %v530 = vadd.f32 0.0, %v529
      %v531 = vpop.f32.mrb[0].mxu0
      %v532 = vpop.f32.mrb[0].mxu0
      %v533 = vadd.f32 0.0, %v532
      %v534 = vpop.f32.mrb[0].mxu0
      %535 = vdwg.mxu0
      %536 = vst [vmem:[%s177] sm:$0xff] %v410
      %537 = vst [vmem:[%s177 + $0x8] sm:$0xff] %v413
      %538 = vst [vmem:[%s177 + $0x10] sm:$0xff] %v418
      %539 = vst [vmem:[%s177 + $0x18] sm:$0xff] %v421
      %540 = vst [vmem:[%s177 + $0x20] sm:$0xff] %v426
      %541 = vst [vmem:[%s177 + $0x28] sm:$0xff] %v429
      %542 = vst [vmem:[%s177 + $0x30] sm:$0xff] %v434
      %543 = vst [vmem:[%s177 + $0x38] sm:$0xff] %v437
      %544 = vst [vmem:[%s177 + $0x40] sm:$0xff] %v442
      %545 = vst [vmem:[%s177 + $0x48] sm:$0xff] %v445
      %546 = vst [vmem:[%s177 + $0x50] sm:$0xff] %v450
      %547 = vst [vmem:[%s177 + $0x58] sm:$0xff] %v453
      %548 = vst [vmem:[%s177 + $0x60] sm:$0xff] %v458
      %549 = vst [vmem:[%s177 + $0x68] sm:$0xff] %v461
      %550 = vst [vmem:[%s177 + $0x70] sm:$0xff] %v466
      %551 = vst [vmem:[%s177 + $0x78] sm:$0xff] %v469
      %552 = vst [vmem:[%s177 + $0x80] sm:$0xff] %v474
      %553 = vst [vmem:[%s177 + $0x88] sm:$0xff] %v477
      %554 = vst [vmem:[%s177 + $0x90] sm:$0xff] %v482
      %555 = vst [vmem:[%s177 + $0x98] sm:$0xff] %v485
      %556 = vst [vmem:[%s177 + $0xa0] sm:$0xff] %v490
      %557 = vst [vmem:[%s177 + $0xa8] sm:$0xff] %v493
      %558 = vst [vmem:[%s177 + $0xb0] sm:$0xff] %v498
      %559 = vst [vmem:[%s177 + $0xb8] sm:$0xff] %v501
      %560 = vst [vmem:[%s177 + $0xc0] sm:$0xff] %v506
      %561 = vst [vmem:[%s177 + $0xc8] sm:$0xff] %v509
      %562 = vst [vmem:[%s177 + $0xd0] sm:$0xff] %v514
      %563 = vst [vmem:[%s177 + $0xd8] sm:$0xff] %v517
      %564 = vst [vmem:[%s177 + $0xe0] sm:$0xff] %v522
      %565 = vst [vmem:[%s177 + $0xe8] sm:$0xff] %v525
      %566 = vst [vmem:[%s177 + $0xf0] sm:$0xff] %v530
      %567 = vst [vmem:[%s177 + $0xf8] sm:$0xff] %v533
      %v568 = vadd.f32 %v410, %v413
      %v569 = vadd.f32 %v568, %v418
      %v570 = vadd.f32 %v569, %v421
      %v571 = vadd.f32 %v570, %v426
      %v572 = vadd.f32 %v571, %v429
      %v573 = vadd.f32 %v572, %v434
      %v574 = vadd.f32 %v573, %v437
      %v575 = vadd.f32 %v574, %v442
      %v576 = vadd.f32 %v575, %v445
      %v577 = vadd.f32 %v576, %v450
      %v578 = vadd.f32 %v577, %v453
      %v579 = vadd.f32 %v578, %v458
      %v580 = vadd.f32 %v579, %v461
      %v581 = vadd.f32 %v580, %v466
      %v582 = vadd.f32 %v581, %v469
      %v583 = vadd.f32 %v582, %v474
      %v584 = vadd.f32 %v583, %v477
      %v585 = vadd.f32 %v584, %v482
      %v586 = vadd.f32 %v585, %v485
      %v587 = vadd.f32 %v586, %v490
      %v588 = vadd.f32 %v587, %v493
      %v589 = vadd.f32 %v588, %v498
      %v590 = vadd.f32 %v589, %v501
      %v591 = vadd.f32 %v590, %v506
      %v592 = vadd.f32 %v591, %v509
      %v593 = vadd.f32 %v592, %v514
      %v594 = vadd.f32 %v593, %v517
      %v595 = vadd.f32 %v594, %v522
      %v596 = vadd.f32 %v595, %v525
      %v597 = vadd.f32 %v596, %v530
      %v598 = vadd.f32 %v597, %v533
      %v599 = vrot.slane %v598, 4
      %v600 = vadd.f32 %v598, %v599
      %v601 = vrot.slane %v600, 2
      %v602 = vadd.f32 %v600, %v601
      %v603 = vrot.slane %v602, 1
      %v604 = vadd.f32 %v602, %v603
      %v605 = vmul.f32 %v604, 0.00390625
      %v606 = vsub.f32 %v410, %v605
      %v607 = vsub.f32 %v413, %v605
      %v608 = vsub.f32 %v418, %v605
      %v609 = vsub.f32 %v421, %v605
      %v610 = vsub.f32 %v426, %v605
      %v611 = vsub.f32 %v429, %v605
      %v612 = vsub.f32 %v434, %v605
      %v613 = vsub.f32 %v437, %v605
      %v614 = vsub.f32 %v442, %v605
      %v615 = vsub.f32 %v445, %v605
      %v616 = vsub.f32 %v450, %v605
      %v617 = vsub.f32 %v453, %v605
      %v618 = vsub.f32 %v458, %v605
      %v619 = vsub.f32 %v461, %v605
      %v620 = vsub.f32 %v466, %v605
      %v621 = vsub.f32 %v469, %v605
      %v622 = vsub.f32 %v474, %v605
      %v623 = vsub.f32 %v477, %v605
      %v624 = vsub.f32 %v482, %v605
      %v625 = vsub.f32 %v485, %v605
      %v626 = vsub.f32 %v490, %v605
      %v627 = vsub.f32 %v493, %v605
      %v628 = vsub.f32 %v498, %v605
      %v629 = vsub.f32 %v501, %v605
      %v630 = vsub.f32 %v506, %v605
      %v631 = vsub.f32 %v509, %v605
      %v632 = vsub.f32 %v514, %v605
      %v633 = vsub.f32 %v517, %v605
      %v634 = vsub.f32 %v522, %v605
      %v635 = vsub.f32 %v525, %v605
      %v636 = vsub.f32 %v530, %v605
      %v637 = vsub.f32 %v533, %v605
      %v638 = vmul.f32 %v606, %v606
      %v639 = vmul.f32 %v607, %v607
      %v640 = vmul.f32 %v608, %v608
      %v641 = vmul.f32 %v609, %v609
      %v642 = vmul.f32 %v610, %v610
      %v643 = vmul.f32 %v611, %v611
      %v644 = vmul.f32 %v612, %v612
      %v645 = vmul.f32 %v613, %v613
      %v646 = vmul.f32 %v614, %v614
      %v647 = vmul.f32 %v615, %v615
      %v648 = vmul.f32 %v616, %v616
      %v649 = vmul.f32 %v617, %v617
      %v650 = vmul.f32 %v618, %v618
      %v651 = vmul.f32 %v619, %v619
      %v652 = vmul.f32 %v620, %v620
      %v653 = vmul.f32 %v621, %v621
      %v654 = vmul.f32 %v622, %v622
      %v655 = vmul.f32 %v623, %v623
      %v656 = vmul.f32 %v624, %v624
      %v657 = vmul.f32 %v625, %v625
      %v658 = vmul.f32 %v626, %v626
      %v659 = vmul.f32 %v627, %v627
      %v660 = vmul.f32 %v628, %v628
      %v661 = vmul.f32 %v629, %v629
      %v662 = vmul.f32 %v630, %v630
      %v663 = vmul.f32 %v631, %v631
      %v664 = vmul.f32 %v632, %v632
      %v665 = vmul.f32 %v633, %v633
      %v666 = vmul.f32 %v634, %v634
      %v667 = vmul.f32 %v635, %v635
      %v668 = vmul.f32 %v636, %v636
      %v669 = vmul.f32 %v637, %v637
      %v670 = vadd.f32 %v638, %v639
      %v671 = vadd.f32 %v670, %v640
      %v672 = vadd.f32 %v671, %v641
      %v673 = vadd.f32 %v672, %v642
      %v674 = vadd.f32 %v673, %v643
      %v675 = vadd.f32 %v674, %v644
      %v676 = vadd.f32 %v675, %v645
      %v677 = vadd.f32 %v676, %v646
      %v678 = vadd.f32 %v677, %v647
      %v679 = vadd.f32 %v678, %v648
      %v680 = vadd.f32 %v679, %v649
      %v681 = vadd.f32 %v680, %v650
      %v682 = vadd.f32 %v681, %v651
      %v683 = vadd.f32 %v682, %v652
      %v684 = vadd.f32 %v683, %v653
      %v685 = vadd.f32 %v684, %v654
      %v686 = vadd.f32 %v685, %v655
      %v687 = vadd.f32 %v686, %v656
      %v688 = vadd.f32 %v687, %v657
      %v689 = vadd.f32 %v688, %v658
      %v690 = vadd.f32 %v689, %v659
      %v691 = vadd.f32 %v690, %v660
      %v692 = vadd.f32 %v691, %v661
      %v693 = vadd.f32 %v692, %v662
      %v694 = vadd.f32 %v693, %v663
      %v695 = vadd.f32 %v694, %v664
      %v696 = vadd.f32 %v695, %v665
      %v697 = vadd.f32 %v696, %v666
      %v698 = vadd.f32 %v697, %v667
      %v699 = vadd.f32 %v698, %v668
      %v700 = vadd.f32 %v699, %v669
      %v701 = vrot.slane %v700, 4
      %v702 = vadd.f32 %v700, %v701
      %v703 = vrot.slane %v702, 2
      %v704 = vadd.f32 %v702, %v703
      %v705 = vrot.slane %v704, 1
      %v706 = vadd.f32 %v704, %v705
      %vm707 = vcmask 1040384
      %v708 = vsel %vm707, %v604, %v706
      %709 = vst [vmem:[%s181] sm:$0x3] %v708
      %p710 = scmp.lt.s32.totalorder %s15, 1
      %s711 = scalar_select %p710, %s15, 1
      %s712 = smul.addr %s711, 32
      %s713 = smul.addr %s712, 8
      %s714 = scalar_lea.vmem %s2, %s713
      %p715 = scmp.lt.s32.totalorder %s15, 1
      %s716 = scalar_select %p715, %s15, 1
      %s717 = smul.addr %s716, 2
      %s718 = scalar_lea.vmem %s3, %s717
      // Predicated region
      $region29: #{double_conv.3} parent=27 // pred_check
        %p719 = pneg %p80
      $region30: #{double_conv.3} parent=27 // pred_check_branch
        %721 = sbr.rel (%p719) target = $region32
      $region31: #{double_conv.3} parent=27 // pred_region
        _
      $region32: #{double_conv.3} parent=27 // pred_fallthru
        _
      // Predicated region
      $region33: #{double_conv.3} parent=27 // pred_check
        %p722 = pneg %p106
      $region34: #{double_conv.3} parent=27 // pred_check_branch
        %724 = sbr.rel (%p722) target = $region36
      $region35: #{double_conv.3} parent=27 // pred_region
        _
      $region36: #{double_conv.3} parent=27 // pred_fallthru
        _
    $region28: #{double_conv.3} parent=5 // pred_fallthru
      _
    %p725 = scmp.le.s32.totalorder 2, %s10
    // Predicated region
    $region37: #{double_conv.3} parent=5 // pred_check
      %p726 = pneg %p725
    $region38: #{double_conv.3} parent=5 // pred_check_branch
      %728 = sbr.rel (%p726) target = $region40
    $region39: #{double_conv.3} parent=5 // pred_region
      %s729 = ssub.s32 %s10, 2
      // Predicated region
      $region41: #{double_conv.3} parent=39 // pred_check
        %p730 = pneg %p86
      $region42: #{double_conv.3} parent=39 // pred_check_branch
        %732 = sbr.rel (%p730) target = $region44
      $region43: #{double_conv.3} parent=39 // pred_region
        %p733 = scmp.lt.s32.totalorder %s16, 1
        %s734 = scalar_select %p733, %s16, 1
        %s735 = smul.addr %s734, 32
        %s736 = smul.addr %s735, 8
        %s737 = scalar_lea.vmem %s2, %s736
      $region44: #{double_conv.3} parent=39 // pred_fallthru
        _
      // Predicated region
      $region45: #{double_conv.3} parent=39 // pred_check
        %p738 = pneg %p112
      $region46: #{double_conv.3} parent=39 // pred_check_branch
        %740 = sbr.rel (%p738) target = $region48
      $region47: #{double_conv.3} parent=39 // pred_region
        %p741 = scmp.lt.s32.totalorder %s16, 1
        %s742 = scalar_select %p741, %s16, 1
        %s743 = smul.addr %s742, 2
        %s744 = scalar_lea.vmem %s3, %s743
      $region48: #{double_conv.3} parent=39 // pred_fallthru
        _
    $region40: #{double_conv.3} parent=5 // pred_fallthru
      _
  $region6: #{double_conv.3} parent=0 // loop_footer
    %s14 = sadd.s32 1, %s10
  $region7: #{double_conv.3} parent=0 // loop_footer_branch
    %9 = sbr.rel target = $region3
  $region8: #{double_conv.3} parent=0 // loop_exit
    _

// kernel: double_conv.5
$region0: #{double_conv.5}
  #allocation0 [shape = 'u32[]', space=smem, size = 0x4, offset = 0x4, fixed_abs, tag = 'smem constant byte address 0x4 - core index']
  #allocation1 [shape = 'u32[144,128]{1,0:T(1,128)}', space=vmem, size = 0x12000, scoped, tag = 'internal scratch']
  %s0 = inlined_call_operand.vmem [shape: f32[2,16,16,128], index: 0, kind: input, shape index: {}]
  %s1 = inlined_call_operand.vmem [shape: f32[1,128], index: 1, kind: input, shape index: {}]
  %s2 = inlined_call_operand.vmem [shape: f32[1,128], index: 2, kind: input, shape index: {}]
  %s3 = inlined_call_operand.vmem [shape: f32[2,16,16,128], index: 3, kind: output, shape index: {}]
  %s4 = sld [smem:[#allocation0]]
  $region45: #{double_conv.5} parent=0
    _
  %s6 = ssub.s32 1, %s4
  %s7 = scalar_select 0, %s6, %s4
  loop: start=0, step=1, limit=4
  $region2: #{double_conv.5} parent=0 // loop_pre_header
    _
  $region3: #{double_conv.5} parent=0 // loop_header
    %s9 = sphi 0, %s13
    %p10 = scmp.ge.s32.totalorder %s9, 4
    %s19 = sphi 0, %s21
    %s22 = sphi 0, %s19
    %s23 = sphi 0, %s22
    %s39 = sphi 0, %s23
    %s43 = sphi 0, %s43
    %s45 = sphi 0, %s43
    %s46 = sphi 0, %s45
    %s60 = sphi 0, %s46
    %s64 = sphi 0, %s64
    %s66 = sphi 0, %s64
    %s67 = sphi 0, %s66
    %s81 = sphi 0, %s67
    %s87 = sphi 0, %s89
    %s90 = sphi 0, %s87
    %s91 = sphi 0, %s90
    %s107 = sphi 0, %s91
  $region4: #{double_conv.5} parent=0 // loop_header_branch
    %12 = sbr.rel (%p10) target = $region8
  $region5: #{double_conv.5} parent=0 // loop_body
    %s14 = ssub.s32 %s9, 1
    %s15 = ssub.s32 %s9, 2
    %s16 = sadd.s32 %s9, 1
    %s17 = ssub.s32 %s9, %s16
    %p18 = scmp.eq.s32.totalorder %s17, 0
    %s20 = sadd.s32 %s19, 1
    %s21 = scalar_select %p18, %s19, %s20
    %p24 = pneg %p18
    %p25 = scmp.eq.s32.totalorder %s9, 1
    %p26 = por %p24, %p25
    %p27 = scmp.ne.s32.totalorder %s19, %s22
    %p28 = scmp.eq.s32.totalorder %s9, 0
    %p29 = por %p27, %p28
    %p30 = scmp.ne.s32.totalorder %s19, %s22
    %p31 = scmp.eq.s32.totalorder %s14, 1
    %p32 = por %p30, %p31
    %p33 = scmp.ne.s32.totalorder %s22, %s23
    %p34 = scmp.eq.s32.totalorder %s14, 0
    %p35 = por %p33, %p34
    %p36 = scmp.ne.s32.totalorder %s22, %s23
    %p37 = scmp.eq.s32.totalorder %s15, 1
    %p38 = por %p36, %p37
    %p40 = scmp.ne.s32.totalorder %s23, %s39
    %p41 = scmp.eq.s32.totalorder %s15, 0
    %p42 = por %p40, %p41
    %s44 = sadd.s32 %s43, 1
    %p47 = scmp.eq.s32.totalorder %s9, 1
    %p48 = scmp.ne.s32.totalorder %s43, %s45
    %p49 = scmp.eq.s32.totalorder %s9, 0
    %p50 = por %p48, %p49
    %p51 = scmp.ne.s32.totalorder %s43, %s45
    %p52 = scmp.eq.s32.totalorder %s14, 1
    %p53 = por %p51, %p52
    %p54 = scmp.ne.s32.totalorder %s45, %s46
    %p55 = scmp.eq.s32.totalorder %s14, 0
    %p56 = por %p54, %p55
    %p57 = scmp.ne.s32.totalorder %s45, %s46
    %p58 = scmp.eq.s32.totalorder %s15, 1
    %p59 = por %p57, %p58
    %p61 = scmp.ne.s32.totalorder %s46, %s60
    %p62 = scmp.eq.s32.totalorder %s15, 0
    %p63 = por %p61, %p62
    %s65 = sadd.s32 %s64, 1
    %p68 = scmp.eq.s32.totalorder %s9, 1
    %p69 = scmp.ne.s32.totalorder %s64, %s66
    %p70 = scmp.eq.s32.totalorder %s9, 0
    %p71 = por %p69, %p70
    %p72 = scmp.ne.s32.totalorder %s64, %s66
    %p73 = scmp.eq.s32.totalorder %s14, 1
    %p74 = por %p72, %p73
    %p75 = scmp.ne.s32.totalorder %s66, %s67
    %p76 = scmp.eq.s32.totalorder %s14, 0
    %p77 = por %p75, %p76
    %p78 = scmp.ne.s32.totalorder %s66, %s67
    %p79 = scmp.eq.s32.totalorder %s15, 1
    %p80 = por %p78, %p79
    %p82 = scmp.ne.s32.totalorder %s67, %s81
    %p83 = scmp.eq.s32.totalorder %s15, 0
    %p84 = por %p82, %p83
    %s85 = ssub.s32 %s9, %s16
    %p86 = scmp.eq.s32.totalorder %s85, 0
    %s88 = sadd.s32 %s87, 1
    %s89 = scalar_select %p86, %s87, %s88
    %p92 = pneg %p86
    %p93 = scmp.eq.s32.totalorder %s9, 1
    %p94 = por %p92, %p93
    %p95 = scmp.ne.s32.totalorder %s87, %s90
    %p96 = scmp.eq.s32.totalorder %s9, 0
    %p97 = por %p95, %p96
    %p98 = scmp.ne.s32.totalorder %s87, %s90
    %p99 = scmp.eq.s32.totalorder %s14, 1
    %p100 = por %p98, %p99
    %p101 = scmp.ne.s32.totalorder %s90, %s91
    %p102 = scmp.eq.s32.totalorder %s14, 0
    %p103 = por %p101, %p102
    %p104 = scmp.ne.s32.totalorder %s90, %s91
    %p105 = scmp.eq.s32.totalorder %s15, 1
    %p106 = por %p104, %p105
    %p108 = scmp.ne.s32.totalorder %s91, %s107
    %p109 = scmp.eq.s32.totalorder %s15, 0
    %p110 = por %p108, %p109
    %p111 = scmp.le.s32.totalorder 1, %s9
    %p112 = scmp.lt.s32.totalorder %s9, 3
    %p113 = pnand %p111, %p112
    %p114 = pneg %p113
    // Predicated region
    $region9: #{double_conv.5} parent=5 // pred_check
      _
    $region10: #{double_conv.5} parent=5 // pred_check_branch
      %116 = sbr.rel (%p113) target = $region12
    $region11: #{double_conv.5} parent=5 // pred_region
      %s117 = ssub.s32 %s9, 1
      // Predicated region
      $region13: #{double_conv.5} parent=11 // pred_check
        %p118 = pneg %p56
      $region14: #{double_conv.5} parent=11 // pred_check_branch
        %120 = sbr.rel (%p118) target = $region16
      $region15: #{double_conv.5} parent=11 // pred_region
        _
      $region16: #{double_conv.5} parent=11 // pred_fallthru
        _
      // Predicated region
      $region17: #{double_conv.5} parent=11 // pred_check
        %p121 = pneg %p77
      $region18: #{double_conv.5} parent=11 // pred_check_branch
        %123 = sbr.rel (%p121) target = $region20
      $region19: #{double_conv.5} parent=11 // pred_region
        _
      $region20: #{double_conv.5} parent=11 // pred_fallthru
        _
    $region12: #{double_conv.5} parent=5 // pred_fallthru
      _
    %p124 = scmp.lt.s32.totalorder %s9, 2
    // Predicated region
    $region21: #{double_conv.5} parent=5 // pred_check
      %p125 = pneg %p124
    $region22: #{double_conv.5} parent=5 // pred_check_branch
      %127 = sbr.rel (%p125) target = $region24
    $region23: #{double_conv.5} parent=5 // pred_region
      // Predicated region
      $region25: #{double_conv.5} parent=23 // pred_check
        %p128 = pneg %p29
      $region26: #{double_conv.5} parent=23 // pred_check_branch
        %130 = sbr.rel (%p128) target = $region28
      $region27: #{double_conv.5} parent=23 // pred_region
        %p131 = scmp.lt.s32.totalorder %s9, 1
        %s132 = scalar_select %p131, %s9, 1
        %s133 = smul.addr %s132, 32
        %s134 = smul.addr %s133, 8
        %s135 = scalar_lea.vmem %s0, %s134
      $region28: #{double_conv.5} parent=23 // pred_fallthru
        _
    $region24: #{double_conv.5} parent=5 // pred_fallthru
      _
    %p136 = scmp.le.s32.totalorder 1, %s9
    %p137 = scmp.lt.s32.totalorder %s9, 3
    %p138 = pnand %p136, %p137
    %p139 = pneg %p138
    // Predicated region
    $region29: #{double_conv.5} parent=5 // pred_check
      _
    $region30: #{double_conv.5} parent=5 // pred_check_branch
      %141 = sbr.rel (%p138) target = $region32
    $region31: #{double_conv.5} parent=5 // pred_region
      %s142 = ssub.s32 %s9, 1
      %p143 = scmp.lt.s32.totalorder %s14, 1
      %s144 = scalar_select %p143, %s14, 1
      %s145 = smul.addr %s144, 32
      %s146 = smul.addr %s145, 8
      %s147 = scalar_lea.vmem %s0, %s146
      %p148 = pneg %p35
      %p149 = pneg %p32
      %p150 = pneg %p56
      %p151 = pneg %p53
      %p152 = pneg %p77
      %p153 = pneg %p74
      %p154 = pneg %p103
      %p155 = pneg %p100
      %p156 = scmp.lt.s32.totalorder %s14, 1
      %s157 = scalar_select %p156, %s14, 1
      %s158 = smul.addr %s157, 32
      %s159 = smul.addr %s158, 8
      %s160 = scalar_lea.vmem %s3, %s159
      %p161 = scmp.lt.s32.totalorder %s14, 1
      %s162 = scalar_select %p161, %s14, 1
      %s163 = smul.addr %s162, 32
      %s164 = smul.addr %s163, 8
      %s165 = scalar_lea.vmem %s0, %s164
      %p166 = scmp.lt.s32.totalorder %s14, 1
      %s167 = scalar_select %p166, %s14, 1
      %s168 = smul.addr %s167, 32
      %s169 = smul.addr %s168, 8
      %s170 = scalar_lea.vmem %s3, %s169
      %v171 = vld [vmem:[%s165] sm:$0xff]
      %v172 = vld [vmem:[%s165 + $0x8] sm:$0xff]
      %v173 = vld [vmem:[%s165 + $0x10] sm:$0xff]
      %v174 = vld [vmem:[%s165 + $0x18] sm:$0xff]
      %v175 = vld [vmem:[%s165 + $0x20] sm:$0xff]
      %v176 = vld [vmem:[%s165 + $0x28] sm:$0xff]
      %v177 = vld [vmem:[%s165 + $0x30] sm:$0xff]
      %v178 = vld [vmem:[%s165 + $0x38] sm:$0xff]
      %v179 = vld [vmem:[%s165 + $0x40] sm:$0xff]
      %v180 = vld [vmem:[%s165 + $0x48] sm:$0xff]
      %v181 = vld [vmem:[%s165 + $0x50] sm:$0xff]
      %v182 = vld [vmem:[%s165 + $0x58] sm:$0xff]
      %v183 = vld [vmem:[%s165 + $0x60] sm:$0xff]
      %v184 = vld [vmem:[%s165 + $0x68] sm:$0xff]
      %v185 = vld [vmem:[%s165 + $0x70] sm:$0xff]
      %v186 = vld [vmem:[%s165 + $0x78] sm:$0xff]
      %v187 = vld [vmem:[%s165 + $0x80] sm:$0xff]
      %v188 = vld [vmem:[%s165 + $0x88] sm:$0xff]
      %v189 = vld [vmem:[%s165 + $0x90] sm:$0xff]
      %v190 = vld [vmem:[%s165 + $0x98] sm:$0xff]
      %v191 = vld [vmem:[%s165 + $0xa0] sm:$0xff]
      %v192 = vld [vmem:[%s165 + $0xa8] sm:$0xff]
      %v193 = vld [vmem:[%s165 + $0xb0] sm:$0xff]
      %v194 = vld [vmem:[%s165 + $0xb8] sm:$0xff]
      %v195 = vld [vmem:[%s165 + $0xc0] sm:$0xff]
      %v196 = vld [vmem:[%s165 + $0xc8] sm:$0xff]
      %v197 = vld [vmem:[%s165 + $0xd0] sm:$0xff]
      %v198 = vld [vmem:[%s165 + $0xd8] sm:$0xff]
      %v199 = vld [vmem:[%s165 + $0xe0] sm:$0xff]
      %v200 = vld [vmem:[%s165 + $0xe8] sm:$0xff]
      %v201 = vld [vmem:[%s165 + $0xf0] sm:$0xff]
      %v202 = vld [vmem:[%s165 + $0xf8] sm:$0xff]
      %v203 = vld [vmem:[%s1] sm:$0x1]
      %v205 = vlaneseq
      %v206 = vshrl.u32 %v205, 7
      %v207 = vsub.s32 0, %v206
      %v208 = vrot.slane %v203, %v207
      %v210 = vmul.f32 %v171, %v208
      %v211 = vmul.f32 %v172, %v208
      %v212 = vmul.f32 %v173, %v208
      %v213 = vmul.f32 %v174, %v208
      %v214 = vmul.f32 %v175, %v208
      %v215 = vmul.f32 %v176, %v208
      %v216 = vmul.f32 %v177, %v208
      %v217 = vmul.f32 %v178, %v208
      %v218 = vmul.f32 %v179, %v208
      %v219 = vmul.f32 %v180, %v208
      %v220 = vmul.f32 %v181, %v208
      %v221 = vmul.f32 %v182, %v208
      %v222 = vmul.f32 %v183, %v208
      %v223 = vmul.f32 %v184, %v208
      %v224 = vmul.f32 %v185, %v208
      %v225 = vmul.f32 %v186, %v208
      %v226 = vmul.f32 %v187, %v208
      %v227 = vmul.f32 %v188, %v208
      %v228 = vmul.f32 %v189, %v208
      %v229 = vmul.f32 %v190, %v208
      %v230 = vmul.f32 %v191, %v208
      %v231 = vmul.f32 %v192, %v208
      %v232 = vmul.f32 %v193, %v208
      %v233 = vmul.f32 %v194, %v208
      %v234 = vmul.f32 %v195, %v208
      %v235 = vmul.f32 %v196, %v208
      %v236 = vmul.f32 %v197, %v208
      %v237 = vmul.f32 %v198, %v208
      %v238 = vmul.f32 %v199, %v208
      %v239 = vmul.f32 %v200, %v208
      %v240 = vmul.f32 %v201, %v208
      %v241 = vmul.f32 %v202, %v208
      %v242 = vld [vmem:[%s2] sm:$0x1]
      %v244 = vlaneseq
      %v245 = vshrl.u32 %v244, 7
      %v246 = vsub.s32 0, %v245
      %v247 = vrot.slane %v242, %v246
      %v249 = vadd.f32 %v210, %v247
      %v250 = vadd.f32 %v211, %v247
      %v251 = vadd.f32 %v212, %v247
      %v252 = vadd.f32 %v213, %v247
      %v253 = vadd.f32 %v214, %v247
      %v254 = vadd.f32 %v215, %v247
      %v255 = vadd.f32 %v216, %v247
      %v256 = vadd.f32 %v217, %v247
      %v257 = vadd.f32 %v218, %v247
      %v258 = vadd.f32 %v219, %v247
      %v259 = vadd.f32 %v220, %v247
      %v260 = vadd.f32 %v221, %v247
      %v261 = vadd.f32 %v222, %v247
      %v262 = vadd.f32 %v223, %v247
      %v263 = vadd.f32 %v224, %v247
      %v264 = vadd.f32 %v225, %v247
      %v265 = vadd.f32 %v226, %v247
      %v266 = vadd.f32 %v227, %v247
      %v267 = vadd.f32 %v228, %v247
      %v268 = vadd.f32 %v229, %v247
      %v269 = vadd.f32 %v230, %v247
      %v270 = vadd.f32 %v231, %v247
      %v271 = vadd.f32 %v232, %v247
      %v272 = vadd.f32 %v233, %v247
      %v273 = vadd.f32 %v234, %v247
      %v274 = vadd.f32 %v235, %v247
      %v275 = vadd.f32 %v236, %v247
      %v276 = vadd.f32 %v237, %v247
      %v277 = vadd.f32 %v238, %v247
      %v278 = vadd.f32 %v239, %v247
      %v279 = vadd.f32 %v240, %v247
      %v280 = vadd.f32 %v241, %v247
      %v281 = vmax.f32 %v249, 0.0
      %v282 = vmax.f32 %v250, 0.0
      %v283 = vmax.f32 %v251, 0.0
      %v284 = vmax.f32 %v252, 0.0
      %v285 = vmax.f32 %v253, 0.0
      %v286 = vmax.f32 %v254, 0.0
      %v287 = vmax.f32 %v255, 0.0
      %v288 = vmax.f32 %v256, 0.0
      %v289 = vmax.f32 %v257, 0.0
      %v290 = vmax.f32 %v258, 0.0
      %v291 = vmax.f32 %v259, 0.0
      %v292 = vmax.f32 %v260, 0.0
      %v293 = vmax.f32 %v261, 0.0
      %v294 = vmax.f32 %v262, 0.0
      %v295 = vmax.f32 %v263, 0.0
      %v296 = vmax.f32 %v264, 0.0
      %v297 = vmax.f32 %v265, 0.0
      %v298 = vmax.f32 %v266, 0.0
      %v299 = vmax.f32 %v267, 0.0
      %v300 = vmax.f32 %v268, 0.0
      %v301 = vmax.f32 %v269, 0.0
      %v302 = vmax.f32 %v270, 0.0
      %v303 = vmax.f32 %v271, 0.0
      %v304 = vmax.f32 %v272, 0.0
      %v305 = vmax.f32 %v273, 0.0
      %v306 = vmax.f32 %v274, 0.0
      %v307 = vmax.f32 %v275, 0.0
      %v308 = vmax.f32 %v276, 0.0
      %v309 = vmax.f32 %v277, 0.0
      %v310 = vmax.f32 %v278, 0.0
      %v311 = vmax.f32 %v279, 0.0
      %v312 = vmax.f32 %v280, 0.0
      %313 = vst [vmem:[%s170] sm:$0xff] %v281
      %314 = vst [vmem:[%s170 + $0x8] sm:$0xff] %v282
      %315 = vst [vmem:[%s170 + $0x10] sm:$0xff] %v283
      %316 = vst [vmem:[%s170 + $0x18] sm:$0xff] %v284
      %317 = vst [vmem:[%s170 + $0x20] sm:$0xff] %v285
      %318 = vst [vmem:[%s170 + $0x28] sm:$0xff] %v286
      %319 = vst [vmem:[%s170 + $0x30] sm:$0xff] %v287
      %320 = vst [vmem:[%s170 + $0x38] sm:$0xff] %v288
      %321 = vst [vmem:[%s170 + $0x40] sm:$0xff] %v289
      %322 = vst [vmem:[%s170 + $0x48] sm:$0xff] %v290
      %323 = vst [vmem:[%s170 + $0x50] sm:$0xff] %v291
      %324 = vst [vmem:[%s170 + $0x58] sm:$0xff] %v292
      %325 = vst [vmem:[%s170 + $0x60] sm:$0xff] %v293
      %326 = vst [vmem:[%s170 + $0x68] sm:$0xff] %v294
      %327 = vst [vmem:[%s170 + $0x70] sm:$0xff] %v295
      %328 = vst [vmem:[%s170 + $0x78] sm:$0xff] %v296
      %329 = vst [vmem:[%s170 + $0x80] sm:$0xff] %v297
      %330 = vst [vmem:[%s170 + $0x88] sm:$0xff] %v298
      %331 = vst [vmem:[%s170 + $0x90] sm:$0xff] %v299
      %332 = vst [vmem:[%s170 + $0x98] sm:$0xff] %v300
      %333 = vst [vmem:[%s170 + $0xa0] sm:$0xff] %v301
      %334 = vst [vmem:[%s170 + $0xa8] sm:$0xff] %v302
      %335 = vst [vmem:[%s170 + $0xb0] sm:$0xff] %v303
      %336 = vst [vmem:[%s170 + $0xb8] sm:$0xff] %v304
      %337 = vst [vmem:[%s170 + $0xc0] sm:$0xff] %v305
      %338 = vst [vmem:[%s170 + $0xc8] sm:$0xff] %v306
      %339 = vst [vmem:[%s170 + $0xd0] sm:$0xff] %v307
      %340 = vst [vmem:[%s170 + $0xd8] sm:$0xff] %v308
      %341 = vst [vmem:[%s170 + $0xe0] sm:$0xff] %v309
      %342 = vst [vmem:[%s170 + $0xe8] sm:$0xff] %v310
      %343 = vst [vmem:[%s170 + $0xf0] sm:$0xff] %v311
      %344 = vst [vmem:[%s170 + $0xf8] sm:$0xff] %v312
      %p345 = scmp.lt.s32.totalorder %s14, 1
      %s346 = scalar_select %p345, %s14, 1
      %s347 = smul.addr %s346, 32
      %s348 = smul.addr %s347, 8
      %s349 = scalar_lea.vmem %s3, %s348
      // Predicated region
      $region33: #{double_conv.5} parent=31 // pred_check
        %p350 = pneg %p100
      $region34: #{double_conv.5} parent=31 // pred_check_branch
        %352 = sbr.rel (%p350) target = $region36
      $region35: #{double_conv.5} parent=31 // pred_region
        _
      $region36: #{double_conv.5} parent=31 // pred_fallthru
        _
    $region32: #{double_conv.5} parent=5 // pred_fallthru
      _
    %p353 = scmp.le.s32.totalorder 2, %s9
    // Predicated region
    $region37: #{double_conv.5} parent=5 // pred_check
      %p354 = pneg %p353
    $region38: #{double_conv.5} parent=5 // pred_check_branch
      %356 = sbr.rel (%p354) target = $region40
    $region39: #{double_conv.5} parent=5 // pred_region
      %s357 = ssub.s32 %s9, 2
      // Predicated region
      $region41: #{double_conv.5} parent=39 // pred_check
        %p358 = pneg %p106
      $region42: #{double_conv.5} parent=39 // pred_check_branch
        %360 = sbr.rel (%p358) target = $region44
      $region43: #{double_conv.5} parent=39 // pred_region
        %p361 = scmp.lt.s32.totalorder %s15, 1
        %s362 = scalar_select %p361, %s15, 1
        %s363 = smul.addr %s362, 32
        %s364 = smul.addr %s363, 8
        %s365 = scalar_lea.vmem %s3, %s364
      $region44: #{double_conv.5} parent=39 // pred_fallthru
        _
    $region40: #{double_conv.5} parent=5 // pred_fallthru
      _
  $region6: #{double_conv.5} parent=0 // loop_footer
    %s13 = sadd.s32 1, %s9
  $region7: #{double_conv.5} parent=0 // loop_footer_branch
    %8 = sbr.rel target = $region3
  $region8: #{double_conv.5} parent=0 // loop_exit
    _

// kernel: double_conv.4
$region0: #{double_conv.4}
  #allocation0 [shape = 'u32[]', space=smem, size = 0x4, offset = 0x4, fixed_abs, tag = 'smem constant byte address 0x4 - core index']
  #allocation1 [shape = 'u32[144,128]{1,0:T(1,128)}', space=vmem, size = 0x12000, scoped, tag = 'internal scratch']
  #allocation2 [shape = 'bf16[18,18,128]{2,1,0:T(8,128)(2,1)}', space=vmem, size = 0x1b000, scoped, tag = 'scratch operand']
  %s0 = inlined_call_operand.vmem [shape: f32[2,16,16,128], index: 0, kind: input, shape index: {}]
  %s1 = inlined_call_operand.vmem [shape: bf16[9,128,128], index: 1, kind: input, shape index: {}]
  %s2 = inlined_call_operand.vmem [shape: f32[1,128], index: 2, kind: input, shape index: {}]
  %s3 = inlined_call_operand.vmem [shape: f32[1,128], index: 3, kind: input, shape index: {}]
  %s4 = inlined_call_operand.vmem [shape: f32[2,16,16,128], index: 4, kind: output, shape index: {0}]
  %s5 = inlined_call_operand.vmem [shape: f32[2,2,128], index: 5, kind: output, shape index: {1}]
  %6 = xla_tuple %s4, %s5
  %s7 = sld [smem:[#allocation0]]
  $region57: #{double_conv.4} parent=0
    _
  %s9 = ssub.s32 1, %s7
  %s10 = scalar_select 0, %s9, %s7
  loop: start=0, step=1, limit=4
  $region2: #{double_conv.4} parent=0 // loop_pre_header
    _
  $region3: #{double_conv.4} parent=0 // loop_header
    %s12 = sphi 0, %s16
    %p13 = scmp.ge.s32.totalorder %s12, 4
    %s22 = sphi 0, %s24
    %s25 = sphi 0, %s22
    %s26 = sphi 0, %s25
    %s42 = sphi 0, %s26
    %s46 = sphi 0, %s46
    %s48 = sphi 0, %s46
    %s49 = sphi 0, %s48
    %s63 = sphi 0, %s49
    %s67 = sphi 0, %s67
    %s69 = sphi 0, %s67
    %s70 = sphi 0, %s69
    %s84 = sphi 0, %s70
    %s88 = sphi 0, %s88
    %s90 = sphi 0, %s88
    %s91 = sphi 0, %s90
    %s105 = sphi 0, %s91
    %s111 = sphi 0, %s113
    %s114 = sphi 0, %s111
    %s115 = sphi 0, %s114
    %s131 = sphi 0, %s115
    %s137 = sphi 0, %s139
    %s140 = sphi 0, %s137
    %s141 = sphi 0, %s140
    %s157 = sphi 0, %s141
  $region4: #{double_conv.4} parent=0 // loop_header_branch
    %15 = sbr.rel (%p13) target = $region8
  $region5: #{double_conv.4} parent=0 // loop_body
    %s17 = ssub.s32 %s12, 1
    %s18 = ssub.s32 %s12, 2
    %s19 = sadd.s32 %s12, 1
    %s20 = ssub.s32 %s12, %s19
    %p21 = scmp.eq.s32.totalorder %s20, 0
    %s23 = sadd.s32 %s22, 1
    %s24 = scalar_select %p21, %s22, %s23
    %p27 = pneg %p21
    %p28 = scmp.eq.s32.totalorder %s12, 1
    %p29 = por %p27, %p28
    %p30 = scmp.ne.s32.totalorder %s22, %s25
    %p31 = scmp.eq.s32.totalorder %s12, 0
    %p32 = por %p30, %p31
    %p33 = scmp.ne.s32.totalorder %s22, %s25
    %p34 = scmp.eq.s32.totalorder %s17, 1
    %p35 = por %p33, %p34
    %p36 = scmp.ne.s32.totalorder %s25, %s26
    %p37 = scmp.eq.s32.totalorder %s17, 0
    %p38 = por %p36, %p37
    %p39 = scmp.ne.s32.totalorder %s25, %s26
    %p40 = scmp.eq.s32.totalorder %s18, 1
    %p41 = por %p39, %p40
    %p43 = scmp.ne.s32.totalorder %s26, %s42
    %p44 = scmp.eq.s32.totalorder %s18, 0
    %p45 = por %p43, %p44
    %s47 = sadd.s32 %s46, 1
    %p50 = scmp.eq.s32.totalorder %s12, 1
    %p51 = scmp.ne.s32.totalorder %s46, %s48
    %p52 = scmp.eq.s32.totalorder %s12, 0
    %p53 = por %p51, %p52
    %p54 = scmp.ne.s32.totalorder %s46, %s48
    %p55 = scmp.eq.s32.totalorder %s17, 1
    %p56 = por %p54, %p55
    %p57 = scmp.ne.s32.totalorder %s48, %s49
    %p58 = scmp.eq.s32.totalorder %s17, 0
    %p59 = por %p57, %p58
    %p60 = scmp.ne.s32.totalorder %s48, %s49
    %p61 = scmp.eq.s32.totalorder %s18, 1
    %p62 = por %p60, %p61
    %p64 = scmp.ne.s32.totalorder %s49, %s63
    %p65 = scmp.eq.s32.totalorder %s18, 0
    %p66 = por %p64, %p65
    %s68 = sadd.s32 %s67, 1
    %p71 = scmp.eq.s32.totalorder %s12, 1
    %p72 = scmp.ne.s32.totalorder %s67, %s69
    %p73 = scmp.eq.s32.totalorder %s12, 0
    %p74 = por %p72, %p73
    %p75 = scmp.ne.s32.totalorder %s67, %s69
    %p76 = scmp.eq.s32.totalorder %s17, 1
    %p77 = por %p75, %p76
    %p78 = scmp.ne.s32.totalorder %s69, %s70
    %p79 = scmp.eq.s32.totalorder %s17, 0
    %p80 = por %p78, %p79
    %p81 = scmp.ne.s32.totalorder %s69, %s70
    %p82 = scmp.eq.s32.totalorder %s18, 1
    %p83 = por %p81, %p82
    %p85 = scmp.ne.s32.totalorder %s70, %s84
    %p86 = scmp.eq.s32.totalorder %s18, 0
    %p87 = por %p85, %p86
    %s89 = sadd.s32 %s88, 1
    %p92 = scmp.eq.s32.totalorder %s12, 1
    %p93 = scmp.ne.s32.totalorder %s88, %s90
    %p94 = scmp.eq.s32.totalorder %s12, 0
    %p95 = por %p93, %p94
    %p96 = scmp.ne.s32.totalorder %s88, %s90
    %p97 = scmp.eq.s32.totalorder %s17, 1
    %p98 = por %p96, %p97
    %p99 = scmp.ne.s32.totalorder %s90, %s91
    %p100 = scmp.eq.s32.totalorder %s17, 0
    %p101 = por %p99, %p100
    %p102 = scmp.ne.s32.totalorder %s90, %s91
    %p103 = scmp.eq.s32.totalorder %s18, 1
    %p104 = por %p102, %p103
    %p106 = scmp.ne.s32.totalorder %s91, %s105
    %p107 = scmp.eq.s32.totalorder %s18, 0
    %p108 = por %p106, %p107
    %s109 = ssub.s32 %s12, %s19
    %p110 = scmp.eq.s32.totalorder %s109, 0
    %s112 = sadd.s32 %s111, 1
    %s113 = scalar_select %p110, %s111, %s112
    %p116 = pneg %p110
    %p117 = scmp.eq.s32.totalorder %s12, 1
    %p118 = por %p116, %p117
    %p119 = scmp.ne.s32.totalorder %s111, %s114
    %p120 = scmp.eq.s32.totalorder %s12, 0
    %p121 = por %p119, %p120
    %p122 = scmp.ne.s32.totalorder %s111, %s114
    %p123 = scmp.eq.s32.totalorder %s17, 1
    %p124 = por %p122, %p123
    %p125 = scmp.ne.s32.totalorder %s114, %s115
    %p126 = scmp.eq.s32.totalorder %s17, 0
    %p127 = por %p125, %p126
    %p128 = scmp.ne.s32.totalorder %s114, %s115
    %p129 = scmp.eq.s32.totalorder %s18, 1
    %p130 = por %p128, %p129
    %p132 = scmp.ne.s32.totalorder %s115, %s131
    %p133 = scmp.eq.s32.totalorder %s18, 0
    %p134 = por %p132, %p133
    %s135 = ssub.s32 %s12, %s19
    %p136 = scmp.eq.s32.totalorder %s135, 0
    %s138 = sadd.s32 %s137, 1
    %s139 = scalar_select %p136, %s137, %s138
    %p142 = pneg %p136
    %p143 = scmp.eq.s32.totalorder %s12, 1
    %p144 = por %p142, %p143
    %p145 = scmp.ne.s32.totalorder %s137, %s140
    %p146 = scmp.eq.s32.totalorder %s12, 0
    %p147 = por %p145, %p146
    %p148 = scmp.ne.s32.totalorder %s137, %s140
    %p149 = scmp.eq.s32.totalorder %s17, 1
    %p150 = por %p148, %p149
    %p151 = scmp.ne.s32.totalorder %s140, %s141
    %p152 = scmp.eq.s32.totalorder %s17, 0
    %p153 = por %p151, %p152
    %p154 = scmp.ne.s32.totalorder %s140, %s141
    %p155 = scmp.eq.s32.totalorder %s18, 1
    %p156 = por %p154, %p155
    %p158 = scmp.ne.s32.totalorder %s141, %s157
    %p159 = scmp.eq.s32.totalorder %s18, 0
    %p160 = por %p158, %p159
    %p161 = scmp.le.s32.totalorder 1, %s12
    %p162 = scmp.lt.s32.totalorder %s12, 3
    %p163 = pnand %p161, %p162
    %p164 = pneg %p163
    // Predicated region
    $region9: #{double_conv.4} parent=5 // pred_check
      _
    $region10: #{double_conv.4} parent=5 // pred_check_branch
      %166 = sbr.rel (%p163) target = $region12
    $region11: #{double_conv.4} parent=5 // pred_region
      %s167 = ssub.s32 %s12, 1
      // Predicated region
      $region13: #{double_conv.4} parent=11 // pred_check
        %p168 = pneg %p59
      $region14: #{double_conv.4} parent=11 // pred_check_branch
        %170 = sbr.rel (%p168) target = $region16
      $region15: #{double_conv.4} parent=11 // pred_region
        _
      $region16: #{double_conv.4} parent=11 // pred_fallthru
        _
      // Predicated region
      $region17: #{double_conv.4} parent=11 // pred_check
        %p171 = pneg %p80
      $region18: #{double_conv.4} parent=11 // pred_check_branch
        %173 = sbr.rel (%p171) target = $region20
      $region19: #{double_conv.4} parent=11 // pred_region
        _
      $region20: #{double_conv.4} parent=11 // pred_fallthru
        _
      // Predicated region
      $region21: #{double_conv.4} parent=11 // pred_check
        %p174 = pneg %p101
      $region22: #{double_conv.4} parent=11 // pred_check_branch
        %176 = sbr.rel (%p174) target = $region24
      $region23: #{double_conv.4} parent=11 // pred_region
        _
      $region24: #{double_conv.4} parent=11 // pred_fallthru
        _
    $region12: #{double_conv.4} parent=5 // pred_fallthru
      _
    %p177 = scmp.lt.s32.totalorder %s12, 2
    // Predicated region
    $region25: #{double_conv.4} parent=5 // pred_check
      %p178 = pneg %p177
    $region26: #{double_conv.4} parent=5 // pred_check_branch
      %180 = sbr.rel (%p178) target = $region28
    $region27: #{double_conv.4} parent=5 // pred_region
      // Predicated region
      $region29: #{double_conv.4} parent=27 // pred_check
        %p181 = pneg %p32
      $region30: #{double_conv.4} parent=27 // pred_check_branch
        %183 = sbr.rel (%p181) target = $region32
      $region31: #{double_conv.4} parent=27 // pred_region
        %p184 = scmp.lt.s32.totalorder %s12, 1
        %s185 = scalar_select %p184, %s12, 1
        %s186 = smul.addr %s185, 32
        %s187 = smul.addr %s186, 8
        %s188 = scalar_lea.vmem %s0, %s187
      $region32: #{double_conv.4} parent=27 // pred_fallthru
        _
    $region28: #{double_conv.4} parent=5 // pred_fallthru
      _
    %p189 = scmp.le.s32.totalorder 1, %s12
    %p190 = scmp.lt.s32.totalorder %s12, 3
    %p191 = pnand %p189, %p190
    %p192 = pneg %p191
    // Predicated region
    $region33: #{double_conv.4} parent=5 // pred_check
      _
    $region34: #{double_conv.4} parent=5 // pred_check_branch
      %194 = sbr.rel (%p191) target = $region36
    $region35: #{double_conv.4} parent=5 // pred_region
      %s195 = ssub.s32 %s12, 1
      %p196 = scmp.lt.s32.totalorder %s17, 1
      %s197 = scalar_select %p196, %s17, 1
      %s198 = smul.addr %s197, 32
      %s199 = smul.addr %s198, 8
      %s200 = scalar_lea.vmem %s0, %s199
      %p201 = pneg %p38
      %p202 = pneg %p35
      %p203 = pneg %p59
      %p204 = pneg %p56
      %p205 = pneg %p80
      %p206 = pneg %p77
      %p207 = pneg %p101
      %p208 = pneg %p98
      %p209 = pneg %p127
      %p210 = pneg %p124
      %p211 = scmp.lt.s32.totalorder %s17, 1
      %s212 = scalar_select %p211, %s17, 1
      %s213 = smul.addr %s212, 32
      %s214 = smul.addr %s213, 8
      %s215 = scalar_lea.vmem %s4, %s214
      %p216 = pneg %p153
      %p217 = pneg %p150
      %p218 = scmp.lt.s32.totalorder %s17, 1
      %s219 = scalar_select %p218, %s17, 1
      %s220 = smul.addr %s219, 2
      %s221 = scalar_lea.vmem %s5, %s220
      %p222 = scmp.lt.s32.totalorder %s17, 1
      %s223 = scalar_select %p222, %s17, 1
      %s224 = smul.addr %s223, 32
      %s225 = smul.addr %s224, 8
      %s226 = scalar_lea.vmem %s0, %s225
      %p227 = scmp.lt.s32.totalorder %s17, 1
      %s228 = scalar_select %p227, %s17, 1
      %s229 = smul.addr %s228, 32
      %s230 = smul.addr %s229, 8
      %s231 = scalar_lea.vmem %s4, %s230
      %p232 = scmp.lt.s32.totalorder %s17, 1
      %s233 = scalar_select %p232, %s17, 1
      %s234 = smul.addr %s233, 2
      %s235 = scalar_lea.vmem %s5, %s234
      %v237 = vld [vmem:[%s226] sm:$0xff]
      %v238 = vld [vmem:[%s226 + $0x8] sm:$0xff]
      %v239 = vld [vmem:[%s226 + $0x10] sm:$0xff]
      %v240 = vld [vmem:[%s226 + $0x18] sm:$0xff]
      %v241 = vld [vmem:[%s226 + $0x20] sm:$0xff]
      %v242 = vld [vmem:[%s226 + $0x28] sm:$0xff]
      %v243 = vld [vmem:[%s226 + $0x30] sm:$0xff]
      %v244 = vld [vmem:[%s226 + $0x38] sm:$0xff]
      %v245 = vld [vmem:[%s226 + $0x40] sm:$0xff]
      %v246 = vld [vmem:[%s226 + $0x48] sm:$0xff]
      %v247 = vld [vmem:[%s226 + $0x50] sm:$0xff]
      %v248 = vld [vmem:[%s226 + $0x58] sm:$0xff]
      %v249 = vld [vmem:[%s226 + $0x60] sm:$0xff]
      %v250 = vld [vmem:[%s226 + $0x68] sm:$0xff]
      %v251 = vld [vmem:[%s226 + $0x70] sm:$0xff]
      %v252 = vld [vmem:[%s226 + $0x78] sm:$0xff]
      %v253 = vld [vmem:[%s226 + $0x80] sm:$0xff]
      %v254 = vld [vmem:[%s226 + $0x88] sm:$0xff]
      %v255 = vld [vmem:[%s226 + $0x90] sm:$0xff]
      %v256 = vld [vmem:[%s226 + $0x98] sm:$0xff]
      %v257 = vld [vmem:[%s226 + $0xa0] sm:$0xff]
      %v258 = vld [vmem:[%s226 + $0xa8] sm:$0xff]
      %v259 = vld [vmem:[%s226 + $0xb0] sm:$0xff]
      %v260 = vld [vmem:[%s226 + $0xb8] sm:$0xff]
      %v261 = vld [vmem:[%s226 + $0xc0] sm:$0xff]
      %v262 = vld [vmem:[%s226 + $0xc8] sm:$0xff]
      %v263 = vld [vmem:[%s226 + $0xd0] sm:$0xff]
      %v264 = vld [vmem:[%s226 + $0xd8] sm:$0xff]
      %v265 = vld [vmem:[%s226 + $0xe0] sm:$0xff]
      %v266 = vld [vmem:[%s226 + $0xe8] sm:$0xff]
      %v267 = vld [vmem:[%s226 + $0xf0] sm:$0xff]
      %v268 = vld [vmem:[%s226 + $0xf8] sm:$0xff]
      %v269 = vld [vmem:[%s2] sm:$0x1]
      %v271 = vlaneseq
      %v272 = vshrl.u32 %v271, 7
      %v273 = vsub.s32 0, %v272
      %v274 = vrot.slane %v269, %v273
      %v276 = vmul.f32 %v237, %v274
      %v277 = vmul.f32 %v238, %v274
      %v278 = vmul.f32 %v239, %v274
      %v279 = vmul.f32 %v240, %v274
      %v280 = vmul.f32 %v241, %v274
      %v281 = vmul.f32 %v242, %v274
      %v282 = vmul.f32 %v243, %v274
      %v283 = vmul.f32 %v244, %v274
      %v284 = vmul.f32 %v245, %v274
      %v285 = vmul.f32 %v246, %v274
      %v286 = vmul.f32 %v247, %v274
      %v287 = vmul.f32 %v248, %v274
      %v288 = vmul.f32 %v249, %v274
      %v289 = vmul.f32 %v250, %v274
      %v290 = vmul.f32 %v251, %v274
      %v291 = vmul.f32 %v252, %v274
      %v292 = vmul.f32 %v253, %v274
      %v293 = vmul.f32 %v254, %v274
      %v294 = vmul.f32 %v255, %v274
      %v295 = vmul.f32 %v256, %v274
      %v296 = vmul.f32 %v257, %v274
      %v297 = vmul.f32 %v258, %v274
      %v298 = vmul.f32 %v259, %v274
      %v299 = vmul.f32 %v260, %v274
      %v300 = vmul.f32 %v261, %v274
      %v301 = vmul.f32 %v262, %v274
      %v302 = vmul.f32 %v263, %v274
      %v303 = vmul.f32 %v264, %v274
      %v304 = vmul.f32 %v265, %v274
      %v305 = vmul.f32 %v266, %v274
      %v306 = vmul.f32 %v267, %v274
      %v307 = vmul.f32 %v268, %v274
      %v308 = vld [vmem:[%s3] sm:$0x1]
      %v310 = vlaneseq
      %v311 = vshrl.u32 %v310, 7
      %v312 = vsub.s32 0, %v311
      %v313 = vrot.slane %v308, %v312
      %v315 = vadd.f32 %v276, %v313
      %v316 = vadd.f32 %v277, %v313
      %v317 = vadd.f32 %v278, %v313
      %v318 = vadd.f32 %v279, %v313
      %v319 = vadd.f32 %v280, %v313
      %v320 = vadd.f32 %v281, %v313
      %v321 = vadd.f32 %v282, %v313
      %v322 = vadd.f32 %v283, %v313
      %v323 = vadd.f32 %v284, %v313
      %v324 = vadd.f32 %v285, %v313
      %v325 = vadd.f32 %v286, %v313
      %v326 = vadd.f32 %v287, %v313
      %v327 = vadd.f32 %v288, %v313
      %v328 = vadd.f32 %v289, %v313
      %v329 = vadd.f32 %v290, %v313
      %v330 = vadd.f32 %v291, %v313
      %v331 = vadd.f32 %v292, %v313
      %v332 = vadd.f32 %v293, %v313
      %v333 = vadd.f32 %v294, %v313
      %v334 = vadd.f32 %v295, %v313
      %v335 = vadd.f32 %v296, %v313
      %v336 = vadd.f32 %v297, %v313
      %v337 = vadd.f32 %v298, %v313
      %v338 = vadd.f32 %v299, %v313
      %v339 = vadd.f32 %v300, %v313
      %v340 = vadd.f32 %v301, %v313
      %v341 = vadd.f32 %v302, %v313
      %v342 = vadd.f32 %v303, %v313
      %v343 = vadd.f32 %v304, %v313
      %v344 = vadd.f32 %v305, %v313
      %v345 = vadd.f32 %v306, %v313
      %v346 = vadd.f32 %v307, %v313
      %v347 = vmax.f32 %v315, 0.0
      %v348 = vmax.f32 %v316, 0.0
      %v349 = vmax.f32 %v317, 0.0
      %v350 = vmax.f32 %v318, 0.0
      %v351 = vmax.f32 %v319, 0.0
      %v352 = vmax.f32 %v320, 0.0
      %v353 = vmax.f32 %v321, 0.0
      %v354 = vmax.f32 %v322, 0.0
      %v355 = vmax.f32 %v323, 0.0
      %v356 = vmax.f32 %v324, 0.0
      %v357 = vmax.f32 %v325, 0.0
      %v358 = vmax.f32 %v326, 0.0
      %v359 = vmax.f32 %v327, 0.0
      %v360 = vmax.f32 %v328, 0.0
      %v361 = vmax.f32 %v329, 0.0
      %v362 = vmax.f32 %v330, 0.0
      %v363 = vmax.f32 %v331, 0.0
      %v364 = vmax.f32 %v332, 0.0
      %v365 = vmax.f32 %v333, 0.0
      %v366 = vmax.f32 %v334, 0.0
      %v367 = vmax.f32 %v335, 0.0
      %v368 = vmax.f32 %v336, 0.0
      %v369 = vmax.f32 %v337, 0.0
      %v370 = vmax.f32 %v338, 0.0
      %v371 = vmax.f32 %v339, 0.0
      %v372 = vmax.f32 %v340, 0.0
      %v373 = vmax.f32 %v341, 0.0
      %v374 = vmax.f32 %v342, 0.0
      %v375 = vmax.f32 %v343, 0.0
      %v376 = vmax.f32 %v344, 0.0
      %v377 = vmax.f32 %v345, 0.0
      %v378 = vmax.f32 %v346, 0.0
      %379 = vst [vmem:[#allocation2] sm:$0xf] 0
      %380 = vst [vmem:[#allocation2 + $0x4] sm:$0xf] 0
      %381 = vst [vmem:[#allocation2 + $0x8] sm:$0x1] 0
      %382 = vst [vmem:[#allocation2 + $0xc] sm:$0xf] 0
      %383 = vst [vmem:[#allocation2 + $0x10] sm:$0xf] 0
      %384 = vst [vmem:[#allocation2 + $0x14] sm:$0x1] 0
      %385 = vst [vmem:[#allocation2 + $0x18] sm:$0xf] 0
      %386 = vst [vmem:[#allocation2 + $0x1c] sm:$0xf] 0
      %387 = vst [vmem:[#allocation2 + $0x20] sm:$0x1] 0
      %388 = vst [vmem:[#allocation2 + $0x24] sm:$0xf] 0
      %389 = vst [vmem:[#allocation2 + $0x28] sm:$0xf] 0
      %390 = vst [vmem:[#allocation2 + $0x2c] sm:$0x1] 0
      %391 = vst [vmem:[#allocation2 + $0x30] sm:$0xf] 0
      %392 = vst [vmem:[#allocation2 + $0x34] sm:$0xf] 0
      %393 = vst [vmem:[#allocation2 + $0x38] sm:$0x1] 0
      %394 = vst [vmem:[#allocation2 + $0x3c] sm:$0xf] 0
      %395 = vst [vmem:[#allocation2 + $0x40] sm:$0xf] 0
      %396 = vst [vmem:[#allocation2 + $0x44] sm:$0x1] 0
      %397 = vst [vmem:[#allocation2 + $0x48] sm:$0xf] 0
      %398 = vst [vmem:[#allocation2 + $0x4c] sm:$0xf] 0
      %399 = vst [vmem:[#allocation2 + $0x50] sm:$0x1] 0
      %400 = vst [vmem:[#allocation2 + $0x54] sm:$0xf] 0
      %401 = vst [vmem:[#allocation2 + $0x58] sm:$0xf] 0
      %402 = vst [vmem:[#allocation2 + $0x5c] sm:$0x1] 0
      %403 = vst [vmem:[#allocation2 + $0x60] sm:$0xf] 0
      %404 = vst [vmem:[#allocation2 + $0x64] sm:$0xf] 0
      %405 = vst [vmem:[#allocation2 + $0x68] sm:$0x1] 0
      %406 = vst [vmem:[#allocation2 + $0x6c] sm:$0xf] 0
      %407 = vst [vmem:[#allocation2 + $0x70] sm:$0xf] 0
      %408 = vst [vmem:[#allocation2 + $0x74] sm:$0x1] 0
      %409 = vst [vmem:[#allocation2 + $0x78] sm:$0xf] 0
      %410 = vst [vmem:[#allocation2 + $0x7c] sm:$0xf] 0
      %411 = vst [vmem:[#allocation2 + $0x80] sm:$0x1] 0
      %412 = vst [vmem:[#allocation2 + $0x84] sm:$0xf] 0
      %413 = vst [vmem:[#allocation2 + $0x88] sm:$0xf] 0
      %414 = vst [vmem:[#allocation2 + $0x8c] sm:$0x1] 0
      %415 = vst [vmem:[#allocation2 + $0x90] sm:$0xf] 0
      %416 = vst [vmem:[#allocation2 + $0x94] sm:$0xf] 0
      %417 = vst [vmem:[#allocation2 + $0x98] sm:$0x1] 0
      %418 = vst [vmem:[#allocation2 + $0x9c] sm:$0xf] 0
      %419 = vst [vmem:[#allocation2 + $0xa0] sm:$0xf] 0
      %420 = vst [vmem:[#allocation2 + $0xa4] sm:$0x1] 0
      %421 = vst [vmem:[#allocation2 + $0xa8] sm:$0xf] 0
      %422 = vst [vmem:[#allocation2 + $0xac] sm:$0xf] 0
      %423 = vst [vmem:[#allocation2 + $0xb0] sm:$0x1] 0
      %424 = vst [vmem:[#allocation2 + $0xb4] sm:$0xf] 0
      %425 = vst [vmem:[#allocation2 + $0xb8] sm:$0xf] 0
      %426 = vst [vmem:[#allocation2 + $0xbc] sm:$0x1] 0
      %427 = vst [vmem:[#allocation2 + $0xc0] sm:$0xf] 0
      %428 = vst [vmem:[#allocation2 + $0xc4] sm:$0xf] 0
      %429 = vst [vmem:[#allocation2 + $0xc8] sm:$0x1] 0
      %430 = vst [vmem:[#allocation2 + $0xcc] sm:$0xf] 0
      %431 = vst [vmem:[#allocation2 + $0xd0] sm:$0xf] 0
      %432 = vst [vmem:[#allocation2 + $0xd4] sm:$0x1] 0
      %v433 = vpack.c.bf16 %v348, %v347
      %v434 = vpack.c.bf16 %v350, %v349
      %v435 = vpack.c.bf16 %v352, %v351
      %v436 = vpack.c.bf16 %v354, %v353
      %v437 = vpack.c.bf16 %v356, %v355
      %v438 = vpack.c.bf16 %v358, %v357
      %v439 = vpack.c.bf16 %v360, %v359
      %v440 = vpack.c.bf16 %v362, %v361
      %v441 = vpack.c.bf16 %v364, %v363
      %v442 = vpack.c.bf16 %v366, %v365
      %v443 = vpack.c.bf16 %v368, %v367
      %v444 = vpack.c.bf16 %v370, %v369
      %v445 = vpack.c.bf16 %v372, %v371
      %v446 = vpack.c.bf16 %v374, %v373
      %v447 = vpack.c.bf16 %v376, %v375
      %v448 = vpack.c.bf16 %v378, %v377
      %v465 = vunpack.c.l.b16 %v433
      %v466 = vunpack.c.h.b16 %v433
      %v467 = vunpack.c.l.b16 %v434
      %v468 = vunpack.c.h.b16 %v434
      %v469 = vunpack.c.l.b16 %v435
      %v470 = vunpack.c.h.b16 %v435
      %v471 = vunpack.c.l.b16 %v436
      %v472 = vunpack.c.h.b16 %v436
      %v473 = vunpack.c.l.b16 %v437
      %v474 = vunpack.c.h.b16 %v437
      %v475 = vunpack.c.l.b16 %v438
      %v476 = vunpack.c.h.b16 %v438
      %v477 = vunpack.c.l.b16 %v439
      %v478 = vunpack.c.h.b16 %v439
      %v479 = vunpack.c.l.b16 %v440
      %v480 = vunpack.c.h.b16 %v440
      %v481 = vunpack.c.l.b16 %v441
      %v482 = vunpack.c.h.b16 %v441
      %v483 = vunpack.c.l.b16 %v442
      %v484 = vunpack.c.h.b16 %v442
      %v485 = vunpack.c.l.b16 %v443
      %v486 = vunpack.c.h.b16 %v443
      %v487 = vunpack.c.l.b16 %v444
      %v488 = vunpack.c.h.b16 %v444
      %v489 = vunpack.c.l.b16 %v445
      %v490 = vunpack.c.h.b16 %v445
      %v491 = vunpack.c.l.b16 %v446
      %v492 = vunpack.c.h.b16 %v446
      %v493 = vunpack.c.l.b16 %v447
      %v494 = vunpack.c.h.b16 %v447
      %v495 = vunpack.c.l.b16 %v448
      %v496 = vunpack.c.h.b16 %v448
      %v497 = vpack.c.b16 %v465, %v465
      %v498 = vpack.c.b16 %v466, %v466
      %v499 = vpack.c.b16 %v467, %v467
      %v500 = vpack.c.b16 %v468, %v468
      %v501 = vpack.c.b16 %v469, %v469
      %v502 = vpack.c.b16 %v470, %v470
      %v503 = vpack.c.b16 %v471, %v471
      %v504 = vpack.c.b16 %v472, %v472
      %v505 = vpack.c.b16 %v473, %v473
      %v506 = vpack.c.b16 %v474, %v474
      %v507 = vpack.c.b16 %v475, %v475
      %v508 = vpack.c.b16 %v476, %v476
      %v509 = vpack.c.b16 %v477, %v477
      %v510 = vpack.c.b16 %v478, %v478
      %v511 = vpack.c.b16 %v479, %v479
      %v512 = vpack.c.b16 %v480, %v480
      %v513 = vpack.c.b16 %v481, %v481
      %v514 = vpack.c.b16 %v482, %v482
      %v515 = vpack.c.b16 %v483, %v483
      %v516 = vpack.c.b16 %v484, %v484
      %v517 = vpack.c.b16 %v485, %v485
      %v518 = vpack.c.b16 %v486, %v486
      %v519 = vpack.c.b16 %v487, %v487
      %v520 = vpack.c.b16 %v488, %v488
      %v521 = vpack.c.b16 %v489, %v489
      %v522 = vpack.c.b16 %v490, %v490
      %v523 = vpack.c.b16 %v491, %v491
      %v524 = vpack.c.b16 %v492, %v492
      %v525 = vpack.c.b16 %v493, %v493
      %v526 = vpack.c.b16 %v494, %v494
      %v527 = vpack.c.b16 %v495, %v495
      %v528 = vpack.c.b16 %v496, %v496
      %vm529 = vsmask.f32 256
      %vm530 = vsmask.f32 4368
      %vm531 = vmor %vm529, %vm530
      %v533 = vshrl.u32 %v497, 16
      %v535 = vrot.slane %v533, 7
      %v536 = vshll.u32 %v497, 16
      %v538 = vor.u32 %v535, %v536
      %v539 = vrot.slane %v535, 4
      %v541 = vshrl.u32 %v498, 16
      %v543 = vrot.slane %v541, 7
      %v544 = vshll.u32 %v498, 16
      %v546 = vor.u32 %v543, %v544
      %v547 = vsel %vm531, %v539, %v546
      %v548 = vrot.slane %v543, 4
      %v550 = vshrl.u32 %v499, 16
      %v552 = vrot.slane %v550, 7
      %v553 = vshll.u32 %v499, 16
      %v555 = vor.u32 %v552, %v553
      %v556 = vrot.slane %v552, 4
      %v558 = vshrl.u32 %v500, 16
      %v560 = vrot.slane %v558, 7
      %v561 = vshll.u32 %v500, 16
      %v563 = vor.u32 %v560, %v561
      %v564 = vsel %vm531, %v556, %v563
      %v565 = vrot.slane %v560, 4
      %v567 = vshrl.u32 %v501, 16
      %v569 = vrot.slane %v567, 7
      %v570 = vshll.u32 %v501, 16
      %v572 = vor.u32 %v569, %v570
      %v573 = vrot.slane %v569, 4
      %v575 = vshrl.u32 %v502, 16
      %v577 = vrot.slane %v575, 7
      %v578 = vshll.u32 %v502, 16
      %v580 = vor.u32 %v577, %v578
      %v581 = vsel %vm531, %v573, %v580
      %v582 = vrot.slane %v577, 4
      %v584 = vshrl.u32 %v503, 16
      %v586 = vrot.slane %v584, 7
      %v587 = vshll.u32 %v503, 16
      %v589 = vor.u32 %v586, %v587
      %v590 = vrot.slane %v586, 4
      %v592 = vshrl.u32 %v504, 16
      %v594 = vrot.slane %v592, 7
      %v595 = vshll.u32 %v504, 16
      %v597 = vor.u32 %v594, %v595
      %v598 = vsel %vm531, %v590, %v597
      %v599 = vrot.slane %v594, 4
      %v601 = vshrl.u32 %v505, 16
      %v603 = vrot.slane %v601, 7
      %v604 = vshll.u32 %v505, 16
      %v606 = vor.u32 %v603, %v604
      %v607 = vrot.slane %v603, 4
      %v609 = vshrl.u32 %v506, 16
      %v611 = vrot.slane %v609, 7
      %v612 = vshll.u32 %v506, 16
      %v614 = vor.u32 %v611, %v612
      %v615 = vsel %vm531, %v607, %v614
      %v616 = vrot.slane %v611, 4
      %v618 = vshrl.u32 %v507, 16
      %v620 = vrot.slane %v618, 7
      %v621 = vshll.u32 %v507, 16
      %v623 = vor.u32 %v620, %v621
      %v624 = vrot.slane %v620, 4
      %v626 = vshrl.u32 %v508, 16
      %v628 = vrot.slane %v626, 7
      %v629 = vshll.u32 %v508, 16
      %v631 = vor.u32 %v628, %v629
      %v632 = vsel %vm531, %v624, %v631
      %v633 = vrot.slane %v628, 4
      %v635 = vshrl.u32 %v509, 16
      %v637 = vrot.slane %v635, 7
      %v638 = vshll.u32 %v509, 16
      %v640 = vor.u32 %v637, %v638
      %v641 = vrot.slane %v637, 4
      %v643 = vshrl.u32 %v510, 16
      %v645 = vrot.slane %v643, 7
      %v646 = vshll.u32 %v510, 16
      %v648 = vor.u32 %v645, %v646
      %v649 = vsel %vm531, %v641, %v648
      %v650 = vrot.slane %v645, 4
      %v652 = vshrl.u32 %v511, 16
      %v654 = vrot.slane %v652, 7
      %v655 = vshll.u32 %v511, 16
      %v657 = vor.u32 %v654, %v655
      %v658 = vrot.slane %v654, 4
      %v660 = vshrl.u32 %v512, 16
      %v662 = vrot.slane %v660, 7
      %v663 = vshll.u32 %v512, 16
      %v665 = vor.u32 %v662, %v663
      %v666 = vsel %vm531, %v658, %v665
      %v667 = vrot.slane %v662, 4
      %v669 = vshrl.u32 %v513, 16
      %v671 = vrot.slane %v669, 7
      %v672 = vshll.u32 %v513, 16
      %v674 = vor.u32 %v671, %v672
      %v675 = vrot.slane %v671, 4
      %v677 = vshrl.u32 %v514, 16
      %v679 = vrot.slane %v677, 7
      %v680 = vshll.u32 %v514, 16
      %v682 = vor.u32 %v679, %v680
      %v683 = vsel %vm531, %v675, %v682
      %v684 = vrot.slane %v679, 4
      %v686 = vshrl.u32 %v515, 16
      %v688 = vrot.slane %v686, 7
      %v689 = vshll.u32 %v515, 16
      %v691 = vor.u32 %v688, %v689
      %v692 = vrot.slane %v688, 4
      %v694 = vshrl.u32 %v516, 16
      %v696 = vrot.slane %v694, 7
      %v697 = vshll.u32 %v516, 16
      %v699 = vor.u32 %v696, %v697
      %v700 = vsel %vm531, %v692, %v699
      %v701 = vrot.slane %v696, 4
      %v703 = vshrl.u32 %v517, 16
      %v705 = vrot.slane %v703, 7
      %v706 = vshll.u32 %v517, 16
      %v708 = vor.u32 %v705, %v706
      %v709 = vrot.slane %v705, 4
      %v711 = vshrl.u32 %v518, 16
      %v713 = vrot.slane %v711, 7
      %v714 = vshll.u32 %v518, 16
      %v716 = vor.u32 %v713, %v714
      %v717 = vsel %vm531, %v709, %v716
      %v718 = vrot.slane %v713, 4
      %v720 = vshrl.u32 %v519, 16
      %v722 = vrot.slane %v720, 7
      %v723 = vshll.u32 %v519, 16
      %v725 = vor.u32 %v722, %v723
      %v726 = vrot.slane %v722, 4
      %v728 = vshrl.u32 %v520, 16
      %v730 = vrot.slane %v728, 7
      %v731 = vshll.u32 %v520, 16
      %v733 = vor.u32 %v730, %v731
      %v734 = vsel %vm531, %v726, %v733
      %v735 = vrot.slane %v730, 4
      %v737 = vshrl.u32 %v521, 16
      %v739 = vrot.slane %v737, 7
      %v740 = vshll.u32 %v521, 16
      %v742 = vor.u32 %v739, %v740
      %v743 = vrot.slane %v739, 4
      %v745 = vshrl.u32 %v522, 16
      %v747 = vrot.slane %v745, 7
      %v748 = vshll.u32 %v522, 16
      %v750 = vor.u32 %v747, %v748
      %v751 = vsel %vm531, %v743, %v750
      %v752 = vrot.slane %v747, 4
      %v754 = vshrl.u32 %v523, 16
      %v756 = vrot.slane %v754, 7
      %v757 = vshll.u32 %v523, 16
      %v759 = vor.u32 %v756, %v757
      %v760 = vrot.slane %v756, 4
      %v762 = vshrl.u32 %v524, 16
      %v764 = vrot.slane %v762, 7
      %v765 = vshll.u32 %v524, 16
      %v767 = vor.u32 %v764, %v765
      %v768 = vsel %vm531, %v760, %v767
      %v769 = vrot.slane %v764, 4
      %v771 = vshrl.u32 %v525, 16
      %v773 = vrot.slane %v771, 7
      %v774 = vshll.u32 %v525, 16
      %v776 = vor.u32 %v773, %v774
      %v777 = vrot.slane %v773, 4
      %v779 = vshrl.u32 %v526, 16
      %v781 = vrot.slane %v779, 7
      %v782 = vshll.u32 %v526, 16
      %v784 = vor.u32 %v781, %v782
      %v785 = vsel %vm531, %v777, %v784
      %v786 = vrot.slane %v781, 4
      %v788 = vshrl.u32 %v527, 16
      %v790 = vrot.slane %v788, 7
      %v791 = vshll.u32 %v527, 16
      %v793 = vor.u32 %v790, %v791
      %v794 = vrot.slane %v790, 4
      %v796 = vshrl.u32 %v528, 16
      %v798 = vrot.slane %v796, 7
      %v799 = vshll.u32 %v528, 16
      %v801 = vor.u32 %v798, %v799
      %v802 = vsel %vm531, %v794, %v801
      %v803 = vrot.slane %v798, 4
      %s852 = scalar_lea.vmem [#allocation2], 12
      %vm853 = vcmask 1043456
      %vm854 = vsmask.f32 7938
      %vm855 = vmand %vm853, %vm854
      %v856 = vld [vmem:[%s852] sm:$0xf]
      %v857 = vsel %vm855, %v538, %v856
      %858 = vst [vmem:[%s852] sm:$0xf] %v857
      %859 = vst [vmem:[%s852 + $0x4] sm:$0xf] %v547
      %vm860 = vcmask 1040384
      %vm861 = vmand %vm860, %vm529
      %v862 = vld [vmem:[%s852 + $0x8] sm:$0x1]
      %v863 = vsel %vm861, %v548, %v862
      %864 = vst [vmem:[%s852 + $0x8] sm:$0x1] %v863
      %v865 = vld [vmem:[%s852 + $0xc] sm:$0xf]
      %v866 = vsel %vm855, %v555, %v865
      %867 = vst [vmem:[%s852 + $0xc] sm:$0xf] %v866
      %868 = vst [vmem:[%s852 + $0x10] sm:$0xf] %v564
      %v869 = vld [vmem:[%s852 + $0x14] sm:$0x1]
      %v870 = vsel %vm861, %v565, %v869
      %871 = vst [vmem:[%s852 + $0x14] sm:$0x1] %v870
      %v872 = vld [vmem:[%s852 + $0x18] sm:$0xf]
      %v873 = vsel %vm855, %v572, %v872
      %874 = vst [vmem:[%s852 + $0x18] sm:$0xf] %v873
      %875 = vst [vmem:[%s852 + $0x1c] sm:$0xf] %v581
      %v876 = vld [vmem:[%s852 + $0x20] sm:$0x1]
      %v877 = vsel %vm861, %v582, %v876
      %878 = vst [vmem:[%s852 + $0x20] sm:$0x1] %v877
      %v879 = vld [vmem:[%s852 + $0x24] sm:$0xf]
      %v880 = vsel %vm855, %v589, %v879
      %881 = vst [vmem:[%s852 + $0x24] sm:$0xf] %v880
      %882 = vst [vmem:[%s852 + $0x28] sm:$0xf] %v598
      %v883 = vld [vmem:[%s852 + $0x2c] sm:$0x1]
      %v884 = vsel %vm861, %v599, %v883
      %885 = vst [vmem:[%s852 + $0x2c] sm:$0x1] %v884
      %v886 = vld [vmem:[%s852 + $0x30] sm:$0xf]
      %v887 = vsel %vm855, %v606, %v886
      %888 = vst [vmem:[%s852 + $0x30] sm:$0xf] %v887
      %889 = vst [vmem:[%s852 + $0x34] sm:$0xf] %v615
      %v890 = vld [vmem:[%s852 + $0x38] sm:$0x1]
      %v891 = vsel %vm861, %v616, %v890
      %892 = vst [vmem:[%s852 + $0x38] sm:$0x1] %v891
      %v893 = vld [vmem:[%s852 + $0x3c] sm:$0xf]
      %v894 = vsel %vm855, %v623, %v893
      %895 = vst [vmem:[%s852 + $0x3c] sm:$0xf] %v894
      %896 = vst [vmem:[%s852 + $0x40] sm:$0xf] %v632
      %v897 = vld [vmem:[%s852 + $0x44] sm:$0x1]
      %v898 = vsel %vm861, %v633, %v897
      %899 = vst [vmem:[%s852 + $0x44] sm:$0x1] %v898
      %v900 = vld [vmem:[%s852 + $0x48] sm:$0xf]
      %v901 = vsel %vm855, %v640, %v900
      %902 = vst [vmem:[%s852 + $0x48] sm:$0xf] %v901
      %903 = vst [vmem:[%s852 + $0x4c] sm:$0xf] %v649
      %v904 = vld [vmem:[%s852 + $0x50] sm:$0x1]
      %v905 = vsel %vm861, %v650, %v904
      %906 = vst [vmem:[%s852 + $0x50] sm:$0x1] %v905
      %v907 = vld [vmem:[%s852 + $0x54] sm:$0xf]
      %v908 = vsel %vm855, %v657, %v907
      %909 = vst [vmem:[%s852 + $0x54] sm:$0xf] %v908
      %910 = vst [vmem:[%s852 + $0x58] sm:$0xf] %v666
      %v911 = vld [vmem:[%s852 + $0x5c] sm:$0x1]
      %v912 = vsel %vm861, %v667, %v911
      %913 = vst [vmem:[%s852 + $0x5c] sm:$0x1] %v912
      %v914 = vld [vmem:[%s852 + $0x60] sm:$0xf]
      %v915 = vsel %vm855, %v674, %v914
      %916 = vst [vmem:[%s852 + $0x60] sm:$0xf] %v915
      %917 = vst [vmem:[%s852 + $0x64] sm:$0xf] %v683
      %v918 = vld [vmem:[%s852 + $0x68] sm:$0x1]
      %v919 = vsel %vm861, %v684, %v918
      %920 = vst [vmem:[%s852 + $0x68] sm:$0x1] %v919
      %v921 = vld [vmem:[%s852 + $0x6c] sm:$0xf]
      %v922 = vsel %vm855, %v691, %v921
      %923 = vst [vmem:[%s852 + $0x6c] sm:$0xf] %v922
      %924 = vst [vmem:[%s852 + $0x70] sm:$0xf] %v700
      %v925 = vld [vmem:[%s852 + $0x74] sm:$0x1]
      %v926 = vsel %vm861, %v701, %v925
      %927 = vst [vmem:[%s852 + $0x74] sm:$0x1] %v926
      %v928 = vld [vmem:[%s852 + $0x78] sm:$0xf]
      %v929 = vsel %vm855, %v708, %v928
      %930 = vst [vmem:[%s852 + $0x78] sm:$0xf] %v929
      %931 = vst [vmem:[%s852 + $0x7c] sm:$0xf] %v717
      %v932 = vld [vmem:[%s852 + $0x80] sm:$0x1]
      %v933 = vsel %vm861, %v718, %v932
      %934 = vst [vmem:[%s852 + $0x80] sm:$0x1] %v933
      %v935 = vld [vmem:[%s852 + $0x84] sm:$0xf]
      %v936 = vsel %vm855, %v725, %v935
      %937 = vst [vmem:[%s852 + $0x84] sm:$0xf] %v936
      %938 = vst [vmem:[%s852 + $0x88] sm:$0xf] %v734
      %v939 = vld [vmem:[%s852 + $0x8c] sm:$0x1]
      %v940 = vsel %vm861, %v735, %v939
      %941 = vst [vmem:[%s852 + $0x8c] sm:$0x1] %v940
      %v942 = vld [vmem:[%s852 + $0x90] sm:$0xf]
      %v943 = vsel %vm855, %v742, %v942
      %944 = vst [vmem:[%s852 + $0x90] sm:$0xf] %v943
      %945 = vst [vmem:[%s852 + $0x94] sm:$0xf] %v751
      %v946 = vld [vmem:[%s852 + $0x98] sm:$0x1]
      %v947 = vsel %vm861, %v752, %v946
      %948 = vst [vmem:[%s852 + $0x98] sm:$0x1] %v947
      %v949 = vld [vmem:[%s852 + $0x9c] sm:$0xf]
      %v950 = vsel %vm855, %v759, %v949
      %951 = vst [vmem:[%s852 + $0x9c] sm:$0xf] %v950
      %952 = vst [vmem:[%s852 + $0xa0] sm:$0xf] %v768
      %v953 = vld [vmem:[%s852 + $0xa4] sm:$0x1]
      %v954 = vsel %vm861, %v769, %v953
      %955 = vst [vmem:[%s852 + $0xa4] sm:$0x1] %v954
      %v956 = vld [vmem:[%s852 + $0xa8] sm:$0xf]
      %v957 = vsel %vm855, %v776, %v956
      %958 = vst [vmem:[%s852 + $0xa8] sm:$0xf] %v957
      %959 = vst [vmem:[%s852 + $0xac] sm:$0xf] %v785
      %v960 = vld [vmem:[%s852 + $0xb0] sm:$0x1]
      %v961 = vsel %vm861, %v786, %v960
      %962 = vst [vmem:[%s852 + $0xb0] sm:$0x1] %v961
      %v963 = vld [vmem:[%s852 + $0xb4] sm:$0xf]
      %v964 = vsel %vm855, %v793, %v963
      %965 = vst [vmem:[%s852 + $0xb4] sm:$0xf] %v964
      %966 = vst [vmem:[%s852 + $0xb8] sm:$0xf] %v802
      %v967 = vld [vmem:[%s852 + $0xbc] sm:$0x1]
      %v968 = vsel %vm861, %v803, %v967
      %969 = vst [vmem:[%s852 + $0xbc] sm:$0x1] %v968
      %v970 = vld [vmem:[#allocation2] sm:$0xf]
      %v971 = vld [vmem:[#allocation2 + $0x4] sm:$0xf]
      %v972 = vld [vmem:[#allocation2 + $0xc] sm:$0xf]
      %v973 = vld [vmem:[#allocation2 + $0x10] sm:$0xf]
      %v974 = vld [vmem:[#allocation2 + $0x18] sm:$0xf]
      %v975 = vld [vmem:[#allocation2 + $0x1c] sm:$0xf]
      %v976 = vld [vmem:[#allocation2 + $0x24] sm:$0xf]
      %v977 = vld [vmem:[#allocation2 + $0x28] sm:$0xf]
      %v978 = vld [vmem:[#allocation2 + $0x30] sm:$0xf]
      %v979 = vld [vmem:[#allocation2 + $0x34] sm:$0xf]
      %v980 = vld [vmem:[#allocation2 + $0x3c] sm:$0xf]
      %v981 = vld [vmem:[#allocation2 + $0x40] sm:$0xf]
      %v982 = vld [vmem:[#allocation2 + $0x48] sm:$0xf]
      %v983 = vld [vmem:[#allocation2 + $0x4c] sm:$0xf]
      %v984 = vld [vmem:[#allocation2 + $0x54] sm:$0xf]
      %v985 = vld [vmem:[#allocation2 + $0x58] sm:$0xf]
      %v986 = vld [vmem:[#allocation2 + $0x60] sm:$0xf]
      %v987 = vld [vmem:[#allocation2 + $0x64] sm:$0xf]
      %v988 = vld [vmem:[#allocation2 + $0x6c] sm:$0xf]
      %v989 = vld [vmem:[#allocation2 + $0x70] sm:$0xf]
      %v990 = vld [vmem:[#allocation2 + $0x78] sm:$0xf]
      %v991 = vld [vmem:[#allocation2 + $0x7c] sm:$0xf]
      %v992 = vld [vmem:[#allocation2 + $0x84] sm:$0xf]
      %v993 = vld [vmem:[#allocation2 + $0x88] sm:$0xf]
      %v994 = vld [vmem:[#allocation2 + $0x90] sm:$0xf]
      %v995 = vld [vmem:[#allocation2 + $0x94] sm:$0xf]
      %v996 = vld [vmem:[#allocation2 + $0x9c] sm:$0xf]
      %v997 = vld [vmem:[#allocation2 + $0xa0] sm:$0xf]
      %v998 = vld [vmem:[#allocation2 + $0xa8] sm:$0xf]
      %v999 = vld [vmem:[#allocation2 + $0xac] sm:$0xf]
      %v1000 = vld [vmem:[#allocation2 + $0xb4] sm:$0xf]
      %v1001 = vld [vmem:[#allocation2 + $0xb8] sm:$0xf]
      %v1002 = vld [vmem:[%s1] sm:$0xf]
      %v1003 = vld [vmem:[%s1 + $0x4] sm:$0xf]
      %v1004 = vld [vmem:[%s1 + $0x8] sm:$0xf]
      %v1005 = vld [vmem:[%s1 + $0xc] sm:$0xf]
      %v1006 = vld [vmem:[%s1 + $0x10] sm:$0xf]
      %v1007 = vld [vmem:[%s1 + $0x14] sm:$0xf]
      %v1008 = vld [vmem:[%s1 + $0x18] sm:$0xf]
      %v1009 = vld [vmem:[%s1 + $0x1c] sm:$0xf]
      %v1010 = vld [vmem:[%s1 + $0x20] sm:$0xf]
      %v1011 = vld [vmem:[%s1 + $0x24] sm:$0xf]
      %v1012 = vld [vmem:[%s1 + $0x28] sm:$0xf]
      %v1013 = vld [vmem:[%s1 + $0x2c] sm:$0xf]
      %v1014 = vld [vmem:[%s1 + $0x30] sm:$0xf]
      %v1015 = vld [vmem:[%s1 + $0x34] sm:$0xf]
      %v1016 = vld [vmem:[%s1 + $0x38] sm:$0xf]
      %v1017 = vld [vmem:[%s1 + $0x3c] sm:$0xf]
      %v1018 = vld [vmem:[#allocation2 + $0x8] sm:$0x1]
      %v1019 = vld [vmem:[#allocation2 + $0x14] sm:$0x1]
      %v1020 = vld [vmem:[#allocation2 + $0x20] sm:$0x1]
      %v1021 = vld [vmem:[#allocation2 + $0x2c] sm:$0x1]
      %v1022 = vld [vmem:[#allocation2 + $0x38] sm:$0x1]
      %v1023 = vld [vmem:[#allocation2 + $0x44] sm:$0x1]
      %v1024 = vld [vmem:[#allocation2 + $0x50] sm:$0x1]
      %v1025 = vld [vmem:[#allocation2 + $0x5c] sm:$0x1]
      %v1026 = vld [vmem:[#allocation2 + $0x68] sm:$0x1]
      %v1027 = vld [vmem:[#allocation2 + $0x74] sm:$0x1]
      %v1028 = vld [vmem:[#allocation2 + $0x80] sm:$0x1]
      %v1029 = vld [vmem:[#allocation2 + $0x8c] sm:$0x1]
      %v1030 = vld [vmem:[#allocation2 + $0x98] sm:$0x1]
      %v1031 = vld [vmem:[#allocation2 + $0xa4] sm:$0x1]
      %v1032 = vld [vmem:[#allocation2 + $0xb0] sm:$0x1]
      %v1033 = vld [vmem:[#allocation2 + $0xbc] sm:$0x1]
      %vm1034 = vsmask.f32 3328
      %vm1035 = vsmask.f32 7440
      %vm1036 = vmor %vm1034, %vm1035
      %v1038 = vshrl.u32 %v970, 16
      %v1040 = vrot.slane %v1038, 4
      %v1041 = vshll.u32 %v970, 16
      %v1043 = vrot.slane %v1041, 5
      %v1044 = vor.u32 %v1040, %v1043
      %v1045 = vrot.slane %v1044, 4
      %v1047 = vshll.u32 %v971, 16
      %v1049 = vrot.slane %v1047, 5
      %v1050 = vsel %vm1036, %v1045, %v1049
      %v1051 = vshrl.u32 %v971, 16
      %v1053 = vrot.slane %v1051, 4
      %v1054 = vor.u32 %v1053, %v1049
      %v1055 = vrot.slane %v1054, 4
      %v1057 = vshll.u32 %v1018, 16
      %v1059 = vrot.slane %v1057, 5
      %v1060 = vsel %vm1036, %v1055, %v1059
      %v1062 = vshrl.u32 %v972, 16
      %v1064 = vrot.slane %v1062, 4
      %v1065 = vshll.u32 %v972, 16
      %v1067 = vrot.slane %v1065, 5
      %v1068 = vor.u32 %v1064, %v1067
      %v1069 = vrot.slane %v1068, 4
      %v1071 = vshll.u32 %v973, 16
      %v1073 = vrot.slane %v1071, 5
      %v1074 = vsel %vm1036, %v1069, %v1073
      %v1075 = vshrl.u32 %v973, 16
      %v1077 = vrot.slane %v1075, 4
      %v1078 = vor.u32 %v1077, %v1073
      %v1079 = vrot.slane %v1078, 4
      %v1081 = vshll.u32 %v1019, 16
      %v1083 = vrot.slane %v1081, 5
      %v1084 = vsel %vm1036, %v1079, %v1083
      %v1086 = vshrl.u32 %v974, 16
      %v1088 = vrot.slane %v1086, 4
      %v1089 = vshll.u32 %v974, 16
      %v1091 = vrot.slane %v1089, 5
      %v1092 = vor.u32 %v1088, %v1091
      %v1093 = vrot.slane %v1092, 4
      %v1095 = vshll.u32 %v975, 16
      %v1097 = vrot.slane %v1095, 5
      %v1098 = vsel %vm1036, %v1093, %v1097
      %v1099 = vshrl.u32 %v975, 16
      %v1101 = vrot.slane %v1099, 4
      %v1102 = vor.u32 %v1101, %v1097
      %v1103 = vrot.slane %v1102, 4
      %v1105 = vshll.u32 %v1020, 16
      %v1107 = vrot.slane %v1105, 5
      %v1108 = vsel %vm1036, %v1103, %v1107
      %v1110 = vshrl.u32 %v976, 16
      %v1112 = vrot.slane %v1110, 4
      %v1113 = vshll.u32 %v976, 16
      %v1115 = vrot.slane %v1113, 5
      %v1116 = vor.u32 %v1112, %v1115
      %v1117 = vrot.slane %v1116, 4
      %v1119 = vshll.u32 %v977, 16
      %v1121 = vrot.slane %v1119, 5
      %v1122 = vsel %vm1036, %v1117, %v1121
      %v1123 = vshrl.u32 %v977, 16
      %v1125 = vrot.slane %v1123, 4
      %v1126 = vor.u32 %v1125, %v1121
      %v1127 = vrot.slane %v1126, 4
      %v1129 = vshll.u32 %v1021, 16
      %v1131 = vrot.slane %v1129, 5
      %v1132 = vsel %vm1036, %v1127, %v1131
      %v1134 = vshrl.u32 %v978, 16
      %v1136 = vrot.slane %v1134, 4
      %v1137 = vshll.u32 %v978, 16
      %v1139 = vrot.slane %v1137, 5
      %v1140 = vor.u32 %v1136, %v1139
      %v1141 = vrot.slane %v1140, 4
      %v1143 = vshll.u32 %v979, 16
      %v1145 = vrot.slane %v1143, 5
      %v1146 = vsel %vm1036, %v1141, %v1145
      %v1147 = vshrl.u32 %v979, 16
      %v1149 = vrot.slane %v1147, 4
      %v1150 = vor.u32 %v1149, %v1145
      %v1151 = vrot.slane %v1150, 4
      %v1153 = vshll.u32 %v1022, 16
      %v1155 = vrot.slane %v1153, 5
      %v1156 = vsel %vm1036, %v1151, %v1155
      %v1158 = vshrl.u32 %v980, 16
      %v1160 = vrot.slane %v1158, 4
      %v1161 = vshll.u32 %v980, 16
      %v1163 = vrot.slane %v1161, 5
      %v1164 = vor.u32 %v1160, %v1163
      %v1165 = vrot.slane %v1164, 4
      %v1167 = vshll.u32 %v981, 16
      %v1169 = vrot.slane %v1167, 5
      %v1170 = vsel %vm1036, %v1165, %v1169
      %v1171 = vshrl.u32 %v981, 16
      %v1173 = vrot.slane %v1171, 4
      %v1174 = vor.u32 %v1173, %v1169
      %v1175 = vrot.slane %v1174, 4
      %v1177 = vshll.u32 %v1023, 16
      %v1179 = vrot.slane %v1177, 5
      %v1180 = vsel %vm1036, %v1175, %v1179
      %v1182 = vshrl.u32 %v982, 16
      %v1184 = vrot.slane %v1182, 4
      %v1185 = vshll.u32 %v982, 16
      %v1187 = vrot.slane %v1185, 5
      %v1188 = vor.u32 %v1184, %v1187
      %v1189 = vrot.slane %v1188, 4
      %v1191 = vshll.u32 %v983, 16
      %v1193 = vrot.slane %v1191, 5
      %v1194 = vsel %vm1036, %v1189, %v1193
      %v1195 = vshrl.u32 %v983, 16
      %v1197 = vrot.slane %v1195, 4
      %v1198 = vor.u32 %v1197, %v1193
      %v1199 = vrot.slane %v1198, 4
      %v1201 = vshll.u32 %v1024, 16
      %v1203 = vrot.slane %v1201, 5
      %v1204 = vsel %vm1036, %v1199, %v1203
      %v1206 = vshrl.u32 %v984, 16
      %v1208 = vrot.slane %v1206, 4
      %v1209 = vshll.u32 %v984, 16
      %v1211 = vrot.slane %v1209, 5
      %v1212 = vor.u32 %v1208, %v1211
      %v1213 = vrot.slane %v1212, 4
      %v1215 = vshll.u32 %v985, 16
      %v1217 = vrot.slane %v1215, 5
      %v1218 = vsel %vm1036, %v1213, %v1217
      %v1219 = vshrl.u32 %v985, 16
      %v1221 = vrot.slane %v1219, 4
      %v1222 = vor.u32 %v1221, %v1217
      %v1223 = vrot.slane %v1222, 4
      %v1225 = vshll.u32 %v1025, 16
      %v1227 = vrot.slane %v1225, 5
      %v1228 = vsel %vm1036, %v1223, %v1227
      %v1230 = vshrl.u32 %v986, 16
      %v1232 = vrot.slane %v1230, 4
      %v1233 = vshll.u32 %v986, 16
      %v1235 = vrot.slane %v1233, 5
      %v1236 = vor.u32 %v1232, %v1235
      %v1237 = vrot.slane %v1236, 4
      %v1239 = vshll.u32 %v987, 16
      %v1241 = vrot.slane %v1239, 5
      %v1242 = vsel %vm1036, %v1237, %v1241
      %v1243 = vshrl.u32 %v987, 16
      %v1245 = vrot.slane %v1243, 4
      %v1246 = vor.u32 %v1245, %v1241
      %v1247 = vrot.slane %v1246, 4
      %v1249 = vshll.u32 %v1026, 16
      %v1251 = vrot.slane %v1249, 5
      %v1252 = vsel %vm1036, %v1247, %v1251
      %v1254 = vshrl.u32 %v988, 16
      %v1256 = vrot.slane %v1254, 4
      %v1257 = vshll.u32 %v988, 16
      %v1259 = vrot.slane %v1257, 5
      %v1260 = vor.u32 %v1256, %v1259
      %v1261 = vrot.slane %v1260, 4
      %v1263 = vshll.u32 %v989, 16
      %v1265 = vrot.slane %v1263, 5
      %v1266 = vsel %vm1036, %v1261, %v1265
      %v1267 = vshrl.u32 %v989, 16
      %v1269 = vrot.slane %v1267, 4
      %v1270 = vor.u32 %v1269, %v1265
      %v1271 = vrot.slane %v1270, 4
      %v1273 = vshll.u32 %v1027, 16
      %v1275 = vrot.slane %v1273, 5
      %v1276 = vsel %vm1036, %v1271, %v1275
      %v1278 = vshrl.u32 %v990, 16
      %v1280 = vrot.slane %v1278, 4
      %v1281 = vshll.u32 %v990, 16
      %v1283 = vrot.slane %v1281, 5
      %v1284 = vor.u32 %v1280, %v1283
      %v1285 = vrot.slane %v1284, 4
      %v1287 = vshll.u32 %v991, 16
      %v1289 = vrot.slane %v1287, 5
      %v1290 = vsel %vm1036, %v1285, %v1289
      %v1291 = vshrl.u32 %v991, 16
      %v1293 = vrot.slane %v1291, 4
      %v1294 = vor.u32 %v1293, %v1289
      %v1295 = vrot.slane %v1294, 4
      %v1297 = vshll.u32 %v1028, 16
      %v1299 = vrot.slane %v1297, 5
      %v1300 = vsel %vm1036, %v1295, %v1299
      %v1302 = vshrl.u32 %v992, 16
      %v1304 = vrot.slane %v1302, 4
      %v1305 = vshll.u32 %v992, 16
      %v1307 = vrot.slane %v1305, 5
      %v1308 = vor.u32 %v1304, %v1307
      %v1309 = vrot.slane %v1308, 4
      %v1311 = vshll.u32 %v993, 16
      %v1313 = vrot.slane %v1311, 5
      %v1314 = vsel %vm1036, %v1309, %v1313
      %v1315 = vshrl.u32 %v993, 16
      %v1317 = vrot.slane %v1315, 4
      %v1318 = vor.u32 %v1317, %v1313
      %v1319 = vrot.slane %v1318, 4
      %v1321 = vshll.u32 %v1029, 16
      %v1323 = vrot.slane %v1321, 5
      %v1324 = vsel %vm1036, %v1319, %v1323
      %v1326 = vshrl.u32 %v994, 16
      %v1328 = vrot.slane %v1326, 4
      %v1329 = vshll.u32 %v994, 16
      %v1331 = vrot.slane %v1329, 5
      %v1332 = vor.u32 %v1328, %v1331
      %v1333 = vrot.slane %v1332, 4
      %v1335 = vshll.u32 %v995, 16
      %v1337 = vrot.slane %v1335, 5
      %v1338 = vsel %vm1036, %v1333, %v1337
      %v1339 = vshrl.u32 %v995, 16
      %v1341 = vrot.slane %v1339, 4
      %v1342 = vor.u32 %v1341, %v1337
      %v1343 = vrot.slane %v1342, 4
      %v1345 = vshll.u32 %v1030, 16
      %v1347 = vrot.slane %v1345, 5
      %v1348 = vsel %vm1036, %v1343, %v1347
      %v1350 = vshrl.u32 %v996, 16
      %v1352 = vrot.slane %v1350, 4
      %v1353 = vshll.u32 %v996, 16
      %v1355 = vrot.slane %v1353, 5
      %v1356 = vor.u32 %v1352, %v1355
      %v1357 = vrot.slane %v1356, 4
      %v1359 = vshll.u32 %v997, 16
      %v1361 = vrot.slane %v1359, 5
      %v1362 = vsel %vm1036, %v1357, %v1361
      %v1363 = vshrl.u32 %v997, 16
      %v1365 = vrot.slane %v1363, 4
      %v1366 = vor.u32 %v1365, %v1361
      %v1367 = vrot.slane %v1366, 4
      %v1369 = vshll.u32 %v1031, 16
      %v1371 = vrot.slane %v1369, 5
      %v1372 = vsel %vm1036, %v1367, %v1371
      %v1374 = vshrl.u32 %v998, 16
      %v1376 = vrot.slane %v1374, 4
      %v1377 = vshll.u32 %v998, 16
      %v1379 = vrot.slane %v1377, 5
      %v1380 = vor.u32 %v1376, %v1379
      %v1381 = vrot.slane %v1380, 4
      %v1383 = vshll.u32 %v999, 16
      %v1385 = vrot.slane %v1383, 5
      %v1386 = vsel %vm1036, %v1381, %v1385
      %v1387 = vshrl.u32 %v999, 16
      %v1389 = vrot.slane %v1387, 4
      %v1390 = vor.u32 %v1389, %v1385
      %v1391 = vrot.slane %v1390, 4
      %v1393 = vshll.u32 %v1032, 16
      %v1395 = vrot.slane %v1393, 5
      %v1396 = vsel %vm1036, %v1391, %v1395
      %v1398 = vshrl.u32 %v1000, 16
      %v1400 = vrot.slane %v1398, 4
      %v1401 = vshll.u32 %v1000, 16
      %v1403 = vrot.slane %v1401, 5
      %v1404 = vor.u32 %v1400, %v1403
      %v1405 = vrot.slane %v1404, 4
      %v1407 = vshll.u32 %v1001, 16
      %v1409 = vrot.slane %v1407, 5
      %v1410 = vsel %vm1036, %v1405, %v1409
      %v1411 = vshrl.u32 %v1001, 16
      %v1413 = vrot.slane %v1411, 4
      %v1414 = vor.u32 %v1413, %v1409
      %v1415 = vrot.slane %v1414, 4
      %v1417 = vshll.u32 %v1033, 16
      %v1419 = vrot.slane %v1417, 5
      %v1420 = vsel %vm1036, %v1415, %v1419
      %s1421 = scalar_lea.vmem %s1, 64
      %v1422 = vld [vmem:[%s1421] sm:$0xf]
      %v1423 = vld [vmem:[%s1421 + $0x4] sm:$0xf]
      %v1424 = vld [vmem:[%s1421 + $0x8] sm:$0xf]
      %v1425 = vld [vmem:[%s1421 + $0xc] sm:$0xf]
      %v1426 = vld [vmem:[%s1421 + $0x10] sm:$0xf]
      %v1427 = vld [vmem:[%s1421 + $0x14] sm:$0xf]
      %v1428 = vld [vmem:[%s1421 + $0x18] sm:$0xf]
      %v1429 = vld [vmem:[%s1421 + $0x1c] sm:$0xf]
      %v1430 = vld [vmem:[%s1421 + $0x20] sm:$0xf]
      %v1431 = vld [vmem:[%s1421 + $0x24] sm:$0xf]
      %v1432 = vld [vmem:[%s1421 + $0x28] sm:$0xf]
      %v1433 = vld [vmem:[%s1421 + $0x2c] sm:$0xf]
      %v1434 = vld [vmem:[%s1421 + $0x30] sm:$0xf]
      %v1435 = vld [vmem:[%s1421 + $0x34] sm:$0xf]
      %v1436 = vld [vmem:[%s1421 + $0x38] sm:$0xf]
      %v1437 = vld [vmem:[%s1421 + $0x3c] sm:$0xf]
      %v1438 = vunpack.c.l.b16 %v1050
      %v1439 = vunpack.c.l.b16 %v1060
      %v1440 = vunpack.c.l.b16 %v1074
      %v1441 = vunpack.c.l.b16 %v1084
      %v1442 = vunpack.c.l.b16 %v1098
      %v1443 = vunpack.c.l.b16 %v1108
      %v1444 = vunpack.c.l.b16 %v1122
      %v1445 = vunpack.c.l.b16 %v1132
      %v1446 = vunpack.c.l.b16 %v1146
      %v1447 = vunpack.c.l.b16 %v1156
      %v1448 = vunpack.c.l.b16 %v1170
      %v1449 = vunpack.c.l.b16 %v1180
      %v1450 = vunpack.c.l.b16 %v1194
      %v1451 = vunpack.c.l.b16 %v1204
      %v1452 = vunpack.c.l.b16 %v1218
      %v1453 = vunpack.c.l.b16 %v1228
      %v1454 = vunpack.c.l.b16 %v1242
      %v1455 = vunpack.c.l.b16 %v1252
      %v1456 = vunpack.c.l.b16 %v1266
      %v1457 = vunpack.c.l.b16 %v1276
      %v1458 = vunpack.c.l.b16 %v1290
      %v1459 = vunpack.c.l.b16 %v1300
      %v1460 = vunpack.c.l.b16 %v1314
      %v1461 = vunpack.c.l.b16 %v1324
      %v1462 = vunpack.c.l.b16 %v1338
      %v1463 = vunpack.c.l.b16 %v1348
      %v1464 = vunpack.c.l.b16 %v1362
      %v1465 = vunpack.c.l.b16 %v1372
      %v1466 = vunpack.c.l.b16 %v1386
      %v1467 = vunpack.c.l.b16 %v1396
      %v1468 = vunpack.c.l.b16 %v1410
      %v1469 = vunpack.c.l.b16 %v1420
      %v1470 = vpack.c.b16 %v1439, %v1438
      %v1471 = vpack.c.b16 %v1441, %v1440
      %v1472 = vpack.c.b16 %v1443, %v1442
      %v1473 = vpack.c.b16 %v1445, %v1444
      %v1474 = vpack.c.b16 %v1447, %v1446
      %v1475 = vpack.c.b16 %v1449, %v1448
      %v1476 = vpack.c.b16 %v1451, %v1450
      %v1477 = vpack.c.b16 %v1453, %v1452
      %v1478 = vpack.c.b16 %v1455, %v1454
      %v1479 = vpack.c.b16 %v1457, %v1456
      %v1480 = vpack.c.b16 %v1459, %v1458
      %v1481 = vpack.c.b16 %v1461, %v1460
      %v1482 = vpack.c.b16 %v1463, %v1462
      %v1483 = vpack.c.b16 %v1465, %v1464
      %v1484 = vpack.c.b16 %v1467, %v1466
      %v1485 = vpack.c.b16 %v1469, %v1468
      %v1518 = vunpack.c.l.b16 %v1422
      %v1519 = vunpack.c.l.b16 %v1423
      %v1520 = vunpack.c.l.b16 %v1424
      %v1521 = vunpack.c.l.b16 %v1425
      %v1522 = vunpack.c.l.b16 %v1426
      %v1523 = vunpack.c.l.b16 %v1427
      %v1524 = vunpack.c.l.b16 %v1428
      %v1525 = vunpack.c.l.b16 %v1429
      %v1526 = vunpack.c.l.b16 %v1430
      %v1527 = vunpack.c.l.b16 %v1431
      %v1528 = vunpack.c.l.b16 %v1432
      %v1529 = vunpack.c.l.b16 %v1433
      %v1530 = vunpack.c.l.b16 %v1434
      %v1531 = vunpack.c.l.b16 %v1435
      %v1532 = vunpack.c.l.b16 %v1436
      %v1533 = vunpack.c.l.b16 %v1437
      %v1534 = vpack.c.b16 %v1519, %v1518
      %v1535 = vpack.c.b16 %v1521, %v1520
      %v1536 = vpack.c.b16 %v1523, %v1522
      %v1537 = vpack.c.b16 %v1525, %v1524
      %v1538 = vpack.c.b16 %v1527, %v1526
      %v1539 = vpack.c.b16 %v1529, %v1528
      %v1540 = vpack.c.b16 %v1531, %v1530
      %v1541 = vpack.c.b16 %v1533, %v1532
      %1550 = vmatprep.subr.bf16.mxu0 0
      %1551 = vmatpush1.bf16.msra.mxu0 %v1534
      %1552 = vmatprep.subr.bf16.mxu0 0
      %1553 = vmatpush1.bf16.msra.mxu0 %v1535
      %1554 = vmatprep.subr.bf16.mxu0 0
      %1555 = vmatpush1.bf16.msra.mxu0 %v1536
      %1556 = vmatprep.subr.bf16.mxu0 0
      %1557 = vmatpush1.bf16.msra.mxu0 %v1537
      %1558 = vmatprep.subr.bf16.mxu0 0
      %1559 = vmatpush1.bf16.msra.mxu0 %v1538
      %1560 = vmatprep.subr.bf16.mxu0 0
      %1561 = vmatpush1.bf16.msra.mxu0 %v1539
      %1562 = vmatprep.subr.bf16.mxu0 0
      %1563 = vmatpush1.bf16.msra.mxu0 %v1540
      %1564 = vmatprep.subr.bf16.mxu0 0
      %1565 = vmatpush1.bf16.msra.mxu0 %v1541
      %1566 = vmatprep.subr.bf16.mxu0 0
      %1567 = vmatpush1.bf16.msra.mxu0 0
      %1568 = vmatprep.subr.bf16.mxu0 0
      %1569 = vmatpush1.bf16.msra.mxu0 0
      %1570 = vmatprep.subr.bf16.mxu0 0
      %1571 = vmatpush1.bf16.msra.mxu0 0
      %1572 = vmatprep.subr.bf16.mxu0 0
      %1573 = vmatpush1.bf16.msra.mxu0 0
      %1574 = vmatprep.subr.bf16.mxu0 0
      %1575 = vmatpush1.bf16.msra.mxu0 0
      %1576 = vmatprep.subr.bf16.mxu0 0
      %1577 = vmatpush1.bf16.msra.mxu0 0
      %1578 = vmatprep.subr.bf16.mxu0 0
      %1579 = vmatpush1.bf16.msra.mxu0 0
      %1580 = vmatprep.subr.bf16.mxu0 0
      %1581 = vmatpush1.bf16.msra.mxu0 0
      %1582 = vmatprep.mubr.bf16.mxu0 0
      %1583 = vmatmul.mubr.bf16.gmra.mrb[0].mxu0 %v1470
      %v1584 = vpop.f32.mrb[0].mxu0
      %v1585 = vadd.f32 0.0, %v1584
      %v1586 = vpop.f32.mrb[0].mxu0
      %v1587 = vpop.f32.mrb[0].mxu0
      %v1588 = vadd.f32 0.0, %v1587
      %v1589 = vpop.f32.mrb[0].mxu0
      %1590 = vmatprep.mubr.bf16.mxu0 0
      %1591 = vmatmul.mubr.bf16.gmra.mrb[0].mxu0 %v1471
      %v1592 = vpop.f32.mrb[0].mxu0
      %v1593 = vadd.f32 0.0, %v1592
      %v1594 = vpop.f32.mrb[0].mxu0
      %v1595 = vpop.f32.mrb[0].mxu0
      %v1596 = vadd.f32 0.0, %v1595
      %v1597 = vpop.f32.mrb[0].mxu0
      %1598 = vmatprep.mubr.bf16.mxu0 0
      %1599 = vmatmul.mubr.bf16.gmra.mrb[0].mxu0 %v1472
      %v1600 = vpop.f32.mrb[0].mxu0
      %v1601 = vadd.f32 0.0, %v1600
      %v1602 = vpop.f32.mrb[0].mxu0
      %v1603 = vpop.f32.mrb[0].mxu0
      %v1604 = vadd.f32 0.0, %v1603
      %v1605 = vpop.f32.mrb[0].mxu0
      %1606 = vmatprep.mubr.bf16.mxu0 0
      %1607 = vmatmul.mubr.bf16.gmra.mrb[0].mxu0 %v1473
      %v1608 = vpop.f32.mrb[0].mxu0
      %v1609 = vadd.f32 0.0, %v1608
      %v1610 = vpop.f32.mrb[0].mxu0
      %v1611 = vpop.f32.mrb[0].mxu0
      %v1612 = vadd.f32 0.0, %v1611
      %v1613 = vpop.f32.mrb[0].mxu0
      %1614 = vmatprep.mubr.bf16.mxu0 0
      %1615 = vmatmul.mubr.bf16.gmra.mrb[0].mxu0 %v1474
      %v1616 = vpop.f32.mrb[0].mxu0
      %v1617 = vadd.f32 0.0, %v1616
      %v1618 = vpop.f32.mrb[0].mxu0
      %v1619 = vpop.f32.mrb[0].mxu0
      %v1620 = vadd.f32 0.0, %v1619
      %v1621 = vpop.f32.mrb[0].mxu0
      %1622 = vmatprep.mubr.bf16.mxu0 0
      %1623 = vmatmul.mubr.bf16.gmra.mrb[0].mxu0 %v1475
      %v1624 = vpop.f32.mrb[0].mxu0
      %v1625 = vadd.f32 0.0, %v1624
      %v1626 = vpop.f32.mrb[0].mxu0
      %v1627 = vpop.f32.mrb[0].mxu0
      %v1628 = vadd.f32 0.0, %v1627
      %v1629 = vpop.f32.mrb[0].mxu0
      %1630 = vmatprep.mubr.bf16.mxu0 0
      %1631 = vmatmul.mubr.bf16.gmra.mrb[0].mxu0 %v1476
      %v1632 = vpop.f32.mrb[0].mxu0
      %v1633 = vadd.f32 0.0, %v1632
      %v1634 = vpop.f32.mrb[0].mxu0
      %v1635 = vpop.f32.mrb[0].mxu0
      %v1636 = vadd.f32 0.0, %v1635
      %v1637 = vpop.f32.mrb[0].mxu0
      %1638 = vmatprep.mubr.bf16.mxu0 0
      %1639 = vmatmul.mubr.bf16.gmra.mrb[0].mxu0 %v1477
      %v1640 = vpop.f32.mrb[0].mxu0
      %v1641 = vadd.f32 0.0, %v1640
      %v1642 = vpop.f32.mrb[0].mxu0
      %v1643 = vpop.f32.mrb[0].mxu0
      %v1644 = vadd.f32 0.0, %v1643
      %v1645 = vpop.f32.mrb[0].mxu0
      %1646 = vmatprep.mubr.bf16.mxu0 0
      %1647 = vmatmul.mubr.bf16.gmra.mrb[0].mxu0 %v1478
      %v1648 = vpop.f32.mrb[0].mxu0
      %v1649 = vadd.f32 0.0, %v1648
      %v1650 = vpop.f32.mrb[0].mxu0
      %v1651 = vpop.f32.mrb[0].mxu0
      %v1652 = vadd.f32 0.0, %v1651
      %v1653 = vpop.f32.mrb[0].mxu0
      %1654 = vmatprep.mubr.bf16.mxu0 0
      %1655 = vmatmul.mubr.bf16.gmra.mrb[0].mxu0 %v1479
      %v1656 = vpop.f32.mrb[0].mxu0
      %v1657 = vadd.f32 0.0, %v1656
      %v1658 = vpop.f32.mrb[0].mxu0
      %v1659 = vpop.f32.mrb[0].mxu0
      %v1660 = vadd.f32 0.0, %v1659
      %v1661 = vpop.f32.mrb[0].mxu0
      %1662 = vmatprep.mubr.bf16.mxu0 0
      %1663 = vmatmul.mubr.bf16.gmra.mrb[0].mxu0 %v1480
      %v1664 = vpop.f32.mrb[0].mxu0
      %v1665 = vadd.f32 0.0, %v1664
      %v1666 = vpop.f32.mrb[0].mxu0
      %v1667 = vpop.f32.mrb[0].mxu0
      %v1668 = vadd.f32 0.0, %v1667
      %v1669 = vpop.f32.mrb[0].mxu0
      %1670 = vmatprep.mubr.bf16.mxu0 0
      %1671 = vmatmul.mubr.bf16.gmra.mrb[0].mxu0 %v1481
      %v1672 = vpop.f32.mrb[0].mxu0
      %v1673 = vadd.f32 0.0, %v1672
      %v1674 = vpop.f32.mrb[0].mxu0
      %v1675 = vpop.f32.mrb[0].mxu0
      %v1676 = vadd.f32 0.0, %v1675
      %v1677 = vpop.f32.mrb[0].mxu0
      %1678 = vmatprep.mubr.bf16.mxu0 0
      %1679 = vmatmul.mubr.bf16.gmra.mrb[0].mxu0 %v1482
      %v1680 = vpop.f32.mrb[0].mxu0
      %v1681 = vadd.f32 0.0, %v1680
      %v1682 = vpop.f32.mrb[0].mxu0
      %v1683 = vpop.f32.mrb[0].mxu0
      %v1684 = vadd.f32 0.0, %v1683
      %v1685 = vpop.f32.mrb[0].mxu0
      %1686 = vmatprep.mubr.bf16.mxu0 0
      %1687 = vmatmul.mubr.bf16.gmra.mrb[0].mxu0 %v1483
      %v1688 = vpop.f32.mrb[0].mxu0
      %v1689 = vadd.f32 0.0, %v1688
      %v1690 = vpop.f32.mrb[0].mxu0
      %v1691 = vpop.f32.mrb[0].mxu0
      %v1692 = vadd.f32 0.0, %v1691
      %v1693 = vpop.f32.mrb[0].mxu0
      %1694 = vmatprep.mubr.bf16.mxu0 0
      %1695 = vmatmul.mubr.bf16.gmra.mrb[0].mxu0 %v1484
      %v1696 = vpop.f32.mrb[0].mxu0
      %v1697 = vadd.f32 0.0, %v1696
      %v1698 = vpop.f32.mrb[0].mxu0
      %v1699 = vpop.f32.mrb[0].mxu0
      %v1700 = vadd.f32 0.0, %v1699
      %v1701 = vpop.f32.mrb[0].mxu0
      %1702 = vmatprep.mubr.bf16.mxu0 0
      %1703 = vmatmul.mubr.bf16.gmra.mrb[0].mxu0 %v1485
      %v1704 = vpop.f32.mrb[0].mxu0
      %v1705 = vadd.f32 0.0, %v1704
      %v1706 = vpop.f32.mrb[0].mxu0
      %v1707 = vpop.f32.mrb[0].mxu0
      %v1708 = vadd.f32 0.0, %v1707
      %v1709 = vpop.f32.mrb[0].mxu0
      %1710 = vdwg.mxu0
      %v1743 = vunpack.c.l.b16 %v970
      %v1744 = vunpack.c.l.b16 %v971
      %v1745 = vunpack.c.l.b16 %v972
      %v1746 = vunpack.c.l.b16 %v973
      %v1747 = vunpack.c.l.b16 %v974
      %v1748 = vunpack.c.l.b16 %v975
      %v1749 = vunpack.c.l.b16 %v976
      %v1750 = vunpack.c.l.b16 %v977
      %v1751 = vunpack.c.l.b16 %v978
      %v1752 = vunpack.c.l.b16 %v979
      %v1753 = vunpack.c.l.b16 %v980
      %v1754 = vunpack.c.l.b16 %v981
      %v1755 = vunpack.c.l.b16 %v982
      %v1756 = vunpack.c.l.b16 %v983
      %v1757 = vunpack.c.l.b16 %v984
      %v1758 = vunpack.c.l.b16 %v985
      %v1759 = vunpack.c.l.b16 %v986
      %v1760 = vunpack.c.l.b16 %v987
      %v1761 = vunpack.c.l.b16 %v988
      %v1762 = vunpack.c.l.b16 %v989
      %v1763 = vunpack.c.l.b16 %v990
      %v1764 = vunpack.c.l.b16 %v991
      %v1765 = vunpack.c.l.b16 %v992
      %v1766 = vunpack.c.l.b16 %v993
      %v1767 = vunpack.c.l.b16 %v994
      %v1768 = vunpack.c.l.b16 %v995
      %v1769 = vunpack.c.l.b16 %v996
      %v1770 = vunpack.c.l.b16 %v997
      %v1771 = vunpack.c.l.b16 %v998
      %v1772 = vunpack.c.l.b16 %v999
      %v1773 = vunpack.c.l.b16 %v1000
      %v1774 = vunpack.c.l.b16 %v1001
      %v1775 = vpack.c.b16 %v1744, %v1743
      %v1776 = vpack.c.b16 %v1746, %v1745
      %v1777 = vpack.c.b16 %v1748, %v1747
      %v1778 = vpack.c.b16 %v1750, %v1749
      %v1779 = vpack.c.b16 %v1752, %v1751
      %v1780 = vpack.c.b16 %v1754, %v1753
      %v1781 = vpack.c.b16 %v1756, %v1755
      %v1782 = vpack.c.b16 %v1758, %v1757
      %v1783 = vpack.c.b16 %v1760, %v1759
      %v1784 = vpack.c.b16 %v1762, %v1761
      %v1785 = vpack.c.b16 %v1764, %v1763
      %v1786 = vpack.c.b16 %v1766, %v1765
      %v1787 = vpack.c.b16 %v1768, %v1767
      %v1788 = vpack.c.b16 %v1770, %v1769
      %v1789 = vpack.c.b16 %v1772, %v1771
      %v1790 = vpack.c.b16 %v1774, %v1773
      %v1823 = vunpack.c.l.b16 %v1002
      %v1824 = vunpack.c.l.b16 %v1003
      %v1825 = vunpack.c.l.b16 %v1004
      %v1826 = vunpack.c.l.b16 %v1005
      %v1827 = vunpack.c.l.b16 %v1006
      %v1828 = vunpack.c.l.b16 %v1007
      %v1829 = vunpack.c.l.b16 %v1008
      %v1830 = vunpack.c.l.b16 %v1009
      %v1831 = vunpack.c.l.b16 %v1010
      %v1832 = vunpack.c.l.b16 %v1011
      %v1833 = vunpack.c.l.b16 %v1012
      %v1834 = vunpack.c.l.b16 %v1013
      %v1835 = vunpack.c.l.b16 %v1014
      %v1836 = vunpack.c.l.b16 %v1015
      %v1837 = vunpack.c.l.b16 %v1016
      %v1838 = vunpack.c.l.b16 %v1017
      %v1839 = vpack.c.b16 %v1824, %v1823
      %v1840 = vpack.c.b16 %v1826, %v1825
      %v1841 = vpack.c.b16 %v1828, %v1827
      %v1842 = vpack.c.b16 %v1830, %v1829
      %v1843 = vpack.c.b16 %v1832, %v1831
      %v1844 = vpack.c.b16 %v1834, %v1833
      %v1845 = vpack.c.b16 %v1836, %v1835
      %v1846 = vpack.c.b16 %v1838, %v1837
      %1855 = vmatprep.subr.bf16.mxu0 0
      %1856 = vmatpush1.bf16.msra.mxu0 %v1839
      %1857 = vmatprep.subr.bf16.mxu0 0
      %1858 = vmatpush1.bf16.msra.mxu0 %v1840
      %1859 = vmatprep.subr.bf16.mxu0 0
      %1860 = vmatpush1.bf16.msra.mxu0 %v1841
      %1861 = vmatprep.subr.bf16.mxu0 0
      %1862 = vmatpush1.bf16.msra.mxu0 %v1842
      %1863 = vmatprep.subr.bf16.mxu0 0
      %1864 = vmatpush1.bf16.msra.mxu0 %v1843
      %1865 = vmatprep.subr.bf16.mxu0 0
      %1866 = vmatpush1.bf16.msra.mxu0 %v1844
      %1867 = vmatprep.subr.bf16.mxu0 0
      %1868 = vmatpush1.bf16.msra.mxu0 %v1845
      %1869 = vmatprep.subr.bf16.mxu0 0
      %1870 = vmatpush1.bf16.msra.mxu0 %v1846
      %1871 = vmatprep.subr.bf16.mxu0 0
      %1872 = vmatpush1.bf16.msra.mxu0 0
      %1873 = vmatprep.subr.bf16.mxu0 0
      %1874 = vmatpush1.bf16.msra.mxu0 0
      %1875 = vmatprep.subr.bf16.mxu0 0
      %1876 = vmatpush1.bf16.msra.mxu0 0
      %1877 = vmatprep.subr.bf16.mxu0 0
      %1878 = vmatpush1.bf16.msra.mxu0 0
      %1879 = vmatprep.subr.bf16.mxu0 0
      %1880 = vmatpush1.bf16.msra.mxu0 0
      %1881 = vmatprep.subr.bf16.mxu0 0
      %1882 = vmatpush1.bf16.msra.mxu0 0
      %1883 = vmatprep.subr.bf16.mxu0 0
      %1884 = vmatpush1.bf16.msra.mxu0 0
      %1885 = vmatprep.subr.bf16.mxu0 0
      %1886 = vmatpush1.bf16.msra.mxu0 0
      %1887 = vmatprep.mubr.bf16.mxu0 0
      %1888 = vmatmul.mubr.bf16.gmra.mrb[0].mxu0 %v1775
      %v1889 = vpop.f32.mrb[0].mxu0
      %v1890 = vadd.f32 %v1585, %v1889
      %v1891 = vpop.f32.mrb[0].mxu0
      %v1892 = vpop.f32.mrb[0].mxu0
      %v1893 = vadd.f32 %v1588, %v1892
      %v1894 = vpop.f32.mrb[0].mxu0
      %1895 = vmatprep.mubr.bf16.mxu0 0
      %1896 = vmatmul.mubr.bf16.gmra.mrb[0].mxu0 %v1776
      %v1897 = vpop.f32.mrb[0].mxu0
      %v1898 = vadd.f32 %v1593, %v1897
      %v1899 = vpop.f32.mrb[0].mxu0
      %v1900 = vpop.f32.mrb[0].mxu0
      %v1901 = vadd.f32 %v1596, %v1900
      %v1902 = vpop.f32.mrb[0].mxu0
      %1903 = vmatprep.mubr.bf16.mxu0 0
      %1904 = vmatmul.mubr.bf16.gmra.mrb[0].mxu0 %v1777
      %v1905 = vpop.f32.mrb[0].mxu0
      %v1906 = vadd.f32 %v1601, %v1905
      %v1907 = vpop.f32.mrb[0].mxu0
      %v1908 = vpop.f32.mrb[0].mxu0
      %v1909 = vadd.f32 %v1604, %v1908
      %v1910 = vpop.f32.mrb[0].mxu0
      %1911 = vmatprep.mubr.bf16.mxu0 0
      %1912 = vmatmul.mubr.bf16.gmra.mrb[0].mxu0 %v1778
      %v1913 = vpop.f32.mrb[0].mxu0
      %v1914 = vadd.f32 %v1609, %v1913
      %v1915 = vpop.f32.mrb[0].mxu0
      %v1916 = vpop.f32.mrb[0].mxu0
      %v1917 = vadd.f32 %v1612, %v1916
      %v1918 = vpop.f32.mrb[0].mxu0
      %1919 = vmatprep.mubr.bf16.mxu0 0
      %1920 = vmatmul.mubr.bf16.gmra.mrb[0].mxu0 %v1779
      %v1921 = vpop.f32.mrb[0].mxu0
      %v1922 = vadd.f32 %v1617, %v1921
      %v1923 = vpop.f32.mrb[0].mxu0
      %v1924 = vpop.f32.mrb[0].mxu0
      %v1925 = vadd.f32 %v1620, %v1924
      %v1926 = vpop.f32.mrb[0].mxu0
      %1927 = vmatprep.mubr.bf16.mxu0 0
      %1928 = vmatmul.mubr.bf16.gmra.mrb[0].mxu0 %v1780
      %v1929 = vpop.f32.mrb[0].mxu0
      %v1930 = vadd.f32 %v1625, %v1929
      %v1931 = vpop.f32.mrb[0].mxu0
      %v1932 = vpop.f32.mrb[0].mxu0
      %v1933 = vadd.f32 %v1628, %v1932
      %v1934 = vpop.f32.mrb[0].mxu0
      %1935 = vmatprep.mubr.bf16.mxu0 0
      %1936 = vmatmul.mubr.bf16.gmra.mrb[0].mxu0 %v1781
      %v1937 = vpop.f32.mrb[0].mxu0
      %v1938 = vadd.f32 %v1633, %v1937
      %v1939 = vpop.f32.mrb[0].mxu0
      %v1940 = vpop.f32.mrb[0].mxu0
      %v1941 = vadd.f32 %v1636, %v1940
      %v1942 = vpop.f32.mrb[0].mxu0
      %1943 = vmatprep.mubr.bf16.mxu0 0
      %1944 = vmatmul.mubr.bf16.gmra.mrb[0].mxu0 %v1782
      %v1945 = vpop.f32.mrb[0].mxu0
      %v1946 = vadd.f32 %v1641, %v1945
      %v1947 = vpop.f32.mrb[0].mxu0
      %v1948 = vpop.f32.mrb[0].mxu0
      %v1949 = vadd.f32 %v1644, %v1948
      %v1950 = vpop.f32.mrb[0].mxu0
      %1951 = vmatprep.mubr.bf16.mxu0 0
      %1952 = vmatmul.mubr.bf16.gmra.mrb[0].mxu0 %v1783
      %v1953 = vpop.f32.mrb[0].mxu0
      %v1954 = vadd.f32 %v1649, %v1953
      %v1955 = vpop.f32.mrb[0].mxu0
      %v1956 = vpop.f32.mrb[0].mxu0
      %v1957 = vadd.f32 %v1652, %v1956
      %v1958 = vpop.f32.mrb[0].mxu0
      %1959 = vmatprep.mubr.bf16.mxu0 0
      %1960 = vmatmul.mubr.bf16.gmra.mrb[0].mxu0 %v1784
      %v1961 = vpop.f32.mrb[0].mxu0
      %v1962 = vadd.f32 %v1657, %v1961
      %v1963 = vpop.f32.mrb[0].mxu0
      %v1964 = vpop.f32.mrb[0].mxu0
      %v1965 = vadd.f32 %v1660, %v1964
      %v1966 = vpop.f32.mrb[0].mxu0
      %1967 = vmatprep.mubr.bf16.mxu0 0
      %1968 = vmatmul.mubr.bf16.gmra.mrb[0].mxu0 %v1785
      %v1969 = vpop.f32.mrb[0].mxu0
      %v1970 = vadd.f32 %v1665, %v1969
      %v1971 = vpop.f32.mrb[0].mxu0
      %v1972 = vpop.f32.mrb[0].mxu0
      %v1973 = vadd.f32 %v1668, %v1972
      %v1974 = vpop.f32.mrb[0].mxu0
      %1975 = vmatprep.mubr.bf16.mxu0 0
      %1976 = vmatmul.mubr.bf16.gmra.mrb[0].mxu0 %v1786
      %v1977 = vpop.f32.mrb[0].mxu0
      %v1978 = vadd.f32 %v1673, %v1977
      %v1979 = vpop.f32.mrb[0].mxu0
      %v1980 = vpop.f32.mrb[0].mxu0
      %v1981 = vadd.f32 %v1676, %v1980
      %v1982 = vpop.f32.mrb[0].mxu0
      %1983 = vmatprep.mubr.bf16.mxu0 0
      %1984 = vmatmul.mubr.bf16.gmra.mrb[0].mxu0 %v1787
      %v1985 = vpop.f32.mrb[0].mxu0
      %v1986 = vadd.f32 %v1681, %v1985
      %v1987 = vpop.f32.mrb[0].mxu0
      %v1988 = vpop.f32.mrb[0].mxu0
      %v1989 = vadd.f32 %v1684, %v1988
      %v1990 = vpop.f32.mrb[0].mxu0
      %1991 = vmatprep.mubr.bf16.mxu0 0
      %1992 = vmatmul.mubr.bf16.gmra.mrb[0].mxu0 %v1788
      %v1993 = vpop.f32.mrb[0].mxu0
      %v1994 = vadd.f32 %v1689, %v1993
      %v1995 = vpop.f32.mrb[0].mxu0
      %v1996 = vpop.f32.mrb[0].mxu0
      %v1997 = vadd.f32 %v1692, %v1996
      %v1998 = vpop.f32.mrb[0].mxu0
      %1999 = vmatprep.mubr.bf16.mxu0 0
      %2000 = vmatmul.mubr.bf16.gmra.mrb[0].mxu0 %v1789
      %v2001 = vpop.f32.mrb[0].mxu0
      %v2002 = vadd.f32 %v1697, %v2001
      %v2003 = vpop.f32.mrb[0].mxu0
      %v2004 = vpop.f32.mrb[0].mxu0
      %v2005 = vadd.f32 %v1700, %v2004
      %v2006 = vpop.f32.mrb[0].mxu0
      %2007 = vmatprep.mubr.bf16.mxu0 0
      %2008 = vmatmul.mubr.bf16.gmra.mrb[0].mxu0 %v1790
      %v2009 = vpop.f32.mrb[0].mxu0
      %v2010 = vadd.f32 %v1705, %v2009
      %v2011 = vpop.f32.mrb[0].mxu0
      %v2012 = vpop.f32.mrb[0].mxu0
      %v2013 = vadd.f32 %v1708, %v2012
      %v2014 = vpop.f32.mrb[0].mxu0
      %2015 = vdwg.mxu0
      %v2016 = vld [vmem:[#allocation2] sm:$0xe]
      %v2017 = vld [vmem:[#allocation2 + $0xc] sm:$0xe]
      %v2018 = vld [vmem:[#allocation2 + $0x18] sm:$0xe]
      %v2019 = vld [vmem:[#allocation2 + $0x24] sm:$0xe]
      %v2020 = vld [vmem:[#allocation2 + $0x30] sm:$0xe]
      %v2021 = vld [vmem:[#allocation2 + $0x3c] sm:$0xe]
      %v2022 = vld [vmem:[#allocation2 + $0x48] sm:$0xe]
      %v2023 = vld [vmem:[#allocation2 + $0x54] sm:$0xe]
      %v2024 = vld [vmem:[#allocation2 + $0x60] sm:$0xe]
      %v2025 = vld [vmem:[#allocation2 + $0x6c] sm:$0xe]
      %v2026 = vld [vmem:[#allocation2 + $0x78] sm:$0xe]
      %v2027 = vld [vmem:[#allocation2 + $0x84] sm:$0xe]
      %v2028 = vld [vmem:[#allocation2 + $0x90] sm:$0xe]
      %v2029 = vld [vmem:[#allocation2 + $0x9c] sm:$0xe]
      %v2030 = vld [vmem:[#allocation2 + $0xa8] sm:$0xe]
      %v2031 = vld [vmem:[#allocation2 + $0xb4] sm:$0xe]
      %vm2064 = vcmask 1042432
      %vm2065 = vcmask 1046532
      %vm2066 = vmor %vm2064, %vm2065
      %v2067 = vrot.slane %v2016, 5
      %v2068 = vrot.slane %v2067, 4
      %v2069 = vrot.slane %v971, 5
      %v2070 = vsel %vm2066, %v2068, %v2069
      %v2071 = vrot.slane %v2069, 4
      %v2072 = vrot.slane %v1018, 5
      %v2073 = vsel %vm2066, %v2071, %v2072
      %v2074 = vrot.slane %v2017, 5
      %v2075 = vrot.slane %v2074, 4
      %v2076 = vrot.slane %v973, 5
      %v2077 = vsel %vm2066, %v2075, %v2076
      %v2078 = vrot.slane %v2076, 4
      %v2079 = vrot.slane %v1019, 5
      %v2080 = vsel %vm2066, %v2078, %v2079
      %v2081 = vrot.slane %v2018, 5
      %v2082 = vrot.slane %v2081, 4
      %v2083 = vrot.slane %v975, 5
      %v2084 = vsel %vm2066, %v2082, %v2083
      %v2085 = vrot.slane %v2083, 4
      %v2086 = vrot.slane %v1020, 5
      %v2087 = vsel %vm2066, %v2085, %v2086
      %v2088 = vrot.slane %v2019, 5
      %v2089 = vrot.slane %v2088, 4
      %v2090 = vrot.slane %v977, 5
      %v2091 = vsel %vm2066, %v2089, %v2090
      %v2092 = vrot.slane %v2090, 4
      %v2093 = vrot.slane %v1021, 5
      %v2094 = vsel %vm2066, %v2092, %v2093
      %v2095 = vrot.slane %v2020, 5
      %v2096 = vrot.slane %v2095, 4
      %v2097 = vrot.slane %v979, 5
      %v2098 = vsel %vm2066, %v2096, %v2097
      %v2099 = vrot.slane %v2097, 4
      %v2100 = vrot.slane %v1022, 5
      %v2101 = vsel %vm2066, %v2099, %v2100
      %v2102 = vrot.slane %v2021, 5
      %v2103 = vrot.slane %v2102, 4
      %v2104 = vrot.slane %v981, 5
      %v2105 = vsel %vm2066, %v2103, %v2104
      %v2106 = vrot.slane %v2104, 4
      %v2107 = vrot.slane %v1023, 5
      %v2108 = vsel %vm2066, %v2106, %v2107
      %v2109 = vrot.slane %v2022, 5
      %v2110 = vrot.slane %v2109, 4
      %v2111 = vrot.slane %v983, 5
      %v2112 = vsel %vm2066, %v2110, %v2111
      %v2113 = vrot.slane %v2111, 4
      %v2114 = vrot.slane %v1024, 5
      %v2115 = vsel %vm2066, %v2113, %v2114
      %v2116 = vrot.slane %v2023, 5
      %v2117 = vrot.slane %v2116, 4
      %v2118 = vrot.slane %v985, 5
      %v2119 = vsel %vm2066, %v2117, %v2118
      %v2120 = vrot.slane %v2118, 4
      %v2121 = vrot.slane %v1025, 5
      %v2122 = vsel %vm2066, %v2120, %v2121
      %v2123 = vrot.slane %v2024, 5
      %v2124 = vrot.slane %v2123, 4
      %v2125 = vrot.slane %v987, 5
      %v2126 = vsel %vm2066, %v2124, %v2125
      %v2127 = vrot.slane %v2125, 4
      %v2128 = vrot.slane %v1026, 5
      %v2129 = vsel %vm2066, %v2127, %v2128
      %v2130 = vrot.slane %v2025, 5
      %v2131 = vrot.slane %v2130, 4
      %v2132 = vrot.slane %v989, 5
      %v2133 = vsel %vm2066, %v2131, %v2132
      %v2134 = vrot.slane %v2132, 4
      %v2135 = vrot.slane %v1027, 5
      %v2136 = vsel %vm2066, %v2134, %v2135
      %v2137 = vrot.slane %v2026, 5
      %v2138 = vrot.slane %v2137, 4
      %v2139 = vrot.slane %v991, 5
      %v2140 = vsel %vm2066, %v2138, %v2139
      %v2141 = vrot.slane %v2139, 4
      %v2142 = vrot.slane %v1028, 5
      %v2143 = vsel %vm2066, %v2141, %v2142
      %v2144 = vrot.slane %v2027, 5
      %v2145 = vrot.slane %v2144, 4
      %v2146 = vrot.slane %v993, 5
      %v2147 = vsel %vm2066, %v2145, %v2146
      %v2148 = vrot.slane %v2146, 4
      %v2149 = vrot.slane %v1029, 5
      %v2150 = vsel %vm2066, %v2148, %v2149
      %v2151 = vrot.slane %v2028, 5
      %v2152 = vrot.slane %v2151, 4
      %v2153 = vrot.slane %v995, 5
      %v2154 = vsel %vm2066, %v2152, %v2153
      %v2155 = vrot.slane %v2153, 4
      %v2156 = vrot.slane %v1030, 5
      %v2157 = vsel %vm2066, %v2155, %v2156
      %v2158 = vrot.slane %v2029, 5
      %v2159 = vrot.slane %v2158, 4
      %v2160 = vrot.slane %v997, 5
      %v2161 = vsel %vm2066, %v2159, %v2160
      %v2162 = vrot.slane %v2160, 4
      %v2163 = vrot.slane %v1031, 5
      %v2164 = vsel %vm2066, %v2162, %v2163
      %v2165 = vrot.slane %v2030, 5
      %v2166 = vrot.slane %v2165, 4
      %v2167 = vrot.slane %v999, 5
      %v2168 = vsel %vm2066, %v2166, %v2167
      %v2169 = vrot.slane %v2167, 4
      %v2170 = vrot.slane %v1032, 5
      %v2171 = vsel %vm2066, %v2169, %v2170
      %v2172 = vrot.slane %v2031, 5
      %v2173 = vrot.slane %v2172, 4
      %v2174 = vrot.slane %v1001, 5
      %v2175 = vsel %vm2066, %v2173, %v2174
      %v2176 = vrot.slane %v2174, 4
      %v2177 = vrot.slane %v1033, 5
      %v2178 = vsel %vm2066, %v2176, %v2177
      %s2179 = scalar_lea.vmem %s1, 128
      %v2180 = vld [vmem:[%s2179] sm:$0xf]
      %v2181 = vld [vmem:[%s2179 + $0x4] sm:$0xf]
      %v2182 = vld [vmem:[%s2179 + $0x8] sm:$0xf]
      %v2183 = vld [vmem:[%s2179 + $0xc] sm:$0xf]
      %v2184 = vld [vmem:[%s2179 + $0x10] sm:$0xf]
      %v2185 = vld [vmem:[%s2179 + $0x14] sm:$0xf]
      %v2186 = vld [vmem:[%s2179 + $0x18] sm:$0xf]
      %v2187 = vld [vmem:[%s2179 + $0x1c] sm:$0xf]
      %v2188 = vld [vmem:[%s2179 + $0x20] sm:$0xf]
      %v2189 = vld [vmem:[%s2179 + $0x24] sm:$0xf]
      %v2190 = vld [vmem:[%s2179 + $0x28] sm:$0xf]
      %v2191 = vld [vmem:[%s2179 + $0x2c] sm:$0xf]
      %v2192 = vld [vmem:[%s2179 + $0x30] sm:$0xf]
      %v2193 = vld [vmem:[%s2179 + $0x34] sm:$0xf]
      %v2194 = vld [vmem:[%s2179 + $0x38] sm:$0xf]
      %v2195 = vld [vmem:[%s2179 + $0x3c] sm:$0xf]
      %v2196 = vunpack.c.l.b16 %v2070
      %v2197 = vunpack.c.l.b16 %v2073
      %v2198 = vunpack.c.l.b16 %v2077
      %v2199 = vunpack.c.l.b16 %v2080
      %v2200 = vunpack.c.l.b16 %v2084
      %v2201 = vunpack.c.l.b16 %v2087
      %v2202 = vunpack.c.l.b16 %v2091
      %v2203 = vunpack.c.l.b16 %v2094
      %v2204 = vunpack.c.l.b16 %v2098
      %v2205 = vunpack.c.l.b16 %v2101
      %v2206 = vunpack.c.l.b16 %v2105
      %v2207 = vunpack.c.l.b16 %v2108
      %v2208 = vunpack.c.l.b16 %v2112
      %v2209 = vunpack.c.l.b16 %v2115
      %v2210 = vunpack.c.l.b16 %v2119
      %v2211 = vunpack.c.l.b16 %v2122
      %v2212 = vunpack.c.l.b16 %v2126
      %v2213 = vunpack.c.l.b16 %v2129
      %v2214 = vunpack.c.l.b16 %v2133
      %v2215 = vunpack.c.l.b16 %v2136
      %v2216 = vunpack.c.l.b16 %v2140
      %v2217 = vunpack.c.l.b16 %v2143
      %v2218 = vunpack.c.l.b16 %v2147
      %v2219 = vunpack.c.l.b16 %v2150
      %v2220 = vunpack.c.l.b16 %v2154
      %v2221 = vunpack.c.l.b16 %v2157
      %v2222 = vunpack.c.l.b16 %v2161
      %v2223 = vunpack.c.l.b16 %v2164
      %v2224 = vunpack.c.l.b16 %v2168
      %v2225 = vunpack.c.l.b16 %v2171
      %v2226 = vunpack.c.l.b16 %v2175
      %v2227 = vunpack.c.l.b16 %v2178
      %v2228 = vpack.c.b16 %v2197, %v2196
      %v2229 = vpack.c.b16 %v2199, %v2198
      %v2230 = vpack.c.b16 %v2201, %v2200
      %v2231 = vpack.c.b16 %v2203, %v2202
      %v2232 = vpack.c.b16 %v2205, %v2204
      %v2233 = vpack.c.b16 %v2207, %v2206
      %v2234 = vpack.c.b16 %v2209, %v2208
      %v2235 = vpack.c.b16 %v2211, %v2210
      %v2236 = vpack.c.b16 %v2213, %v2212
      %v2237 = vpack.c.b16 %v2215, %v2214
      %v2238 = vpack.c.b16 %v2217, %v2216
      %v2239 = vpack.c.b16 %v2219, %v2218
      %v2240 = vpack.c.b16 %v2221, %v2220
      %v2241 = vpack.c.b16 %v2223, %v2222
      %v2242 = vpack.c.b16 %v2225, %v2224
      %v2243 = vpack.c.b16 %v2227, %v2226
      %v2276 = vunpack.c.l.b16 %v2180
      %v2277 = vunpack.c.l.b16 %v2181
      %v2278 = vunpack.c.l.b16 %v2182
      %v2279 = vunpack.c.l.b16 %v2183
      %v2280 = vunpack.c.l.b16 %v2184
      %v2281 = vunpack.c.l.b16 %v2185
      %v2282 = vunpack.c.l.b16 %v2186
      %v2283 = vunpack.c.l.b16 %v2187
      %v2284 = vunpack.c.l.b16 %v2188
      %v2285 = vunpack.c.l.b16 %v2189
      %v2286 = vunpack.c.l.b16 %v2190
      %v2287 = vunpack.c.l.b16 %v2191
      %v2288 = vunpack.c.l.b16 %v2192
      %v2289 = vunpack.c.l.b16 %v2193
      %v2290 = vunpack.c.l.b16 %v2194
      %v2291 = vunpack.c.l.b16 %v2195
      %v2292 = vpack.c.b16 %v2277, %v2276
      %v2293 = vpack.c.b16 %v2279, %v2278
      %v2294 = vpack.c.b16 %v2281, %v2280
      %v2295 = vpack.c.b16 %v2283, %v2282
      %v2296 = vpack.c.b16 %v2285, %v2284
      %v2297 = vpack.c.b16 %v2287, %v2286
      %v2298 = vpack.c.b16 %v2289, %v2288
      %v2299 = vpack.c.b16 %v2291, %v2290
      %2308 = vmatprep.subr.bf16.mxu0 0
      %2309 = vmatpush1.bf16.msra.mxu0 %v2292
      %2310 = vmatprep.subr.bf16.mxu0 0
      %2311 = vmatpush1.bf16.msra.mxu0 %v2293
      %2312 = vmatprep.subr.bf16.mxu0 0
      %2313 = vmatpush1.bf16.msra.mxu0 %v2294
      %2314 = vmatprep.subr.bf16.mxu0 0
      %2315 = vmatpush1.bf16.msra.mxu0 %v2295
      %2316 = vmatprep.subr.bf16.mxu0 0
      %2317 = vmatpush1.bf16.msra.mxu0 %v2296
      %2318 = vmatprep.subr.bf16.mxu0 0
      %2319 = vmatpush1.bf16.msra.mxu0 %v2297
      %2320 = vmatprep.subr.bf16.mxu0 0
      %2321 = vmatpush1.bf16.msra.mxu0 %v2298
      %2322 = vmatprep.subr.bf16.mxu0 0
      %2323 = vmatpush1.bf16.msra.mxu0 %v2299
      %2324 = vmatprep.subr.bf16.mxu0 0
      %2325 = vmatpush1.bf16.msra.mxu0 0
      %2326 = vmatprep.subr.bf16.mxu0 0
      %2327 = vmatpush1.bf16.msra.mxu0 0
      %2328 = vmatprep.subr.bf16.mxu0 0
      %2329 = vmatpush1.bf16.msra.mxu0 0
      %2330 = vmatprep.subr.bf16.mxu0 0
      %2331 = vmatpush1.bf16.msra.mxu0 0
      %2332 = vmatprep.subr.bf16.mxu0 0
      %2333 = vmatpush1.bf16.msra.mxu0 0
      %2334 = vmatprep.subr.bf16.mxu0 0
      %2335 = vmatpush1.bf16.msra.mxu0 0
      %2336 = vmatprep.subr.bf16.mxu0 0
      %2337 = vmatpush1.bf16.msra.mxu0 0
      %2338 = vmatprep.subr.bf16.mxu0 0
      %2339 = vmatpush1.bf16.msra.mxu0 0
      %2340 = vmatprep.mubr.bf16.mxu0 0
      %2341 = vmatmul.mubr.bf16.gmra.mrb[0].mxu0 %v2228
      %v2342 = vpop.f32.mrb[0].mxu0
      %v2343 = vadd.f32 0.0, %v2342
      %v2344 = vpop.f32.mrb[0].mxu0
      %v2345 = vpop.f32.mrb[0].mxu0
      %v2346 = vadd.f32 0.0, %v2345
      %v2347 = vpop.f32.mrb[0].mxu0
      %2348 = vmatprep.mubr.bf16.mxu0 0
      %2349 = vmatmul.mubr.bf16.gmra.mrb[0].mxu0 %v2229
      %v2350 = vpop.f32.mrb[0].mxu0
      %v2351 = vadd.f32 0.0, %v2350
      %v2352 = vpop.f32.mrb[0].mxu0
      %v2353 = vpop.f32.mrb[0].mxu0
      %v2354 = vadd.f32 0.0, %v2353
      %v2355 = vpop.f32.mrb[0].mxu0
      %2356 = vmatprep.mubr.bf16.mxu0 0
      %2357 = vmatmul.mubr.bf16.gmra.mrb[0].mxu0 %v2230
      %v2358 = vpop.f32.mrb[0].mxu0
      %v2359 = vadd.f32 0.0, %v2358
      %v2360 = vpop.f32.mrb[0].mxu0
      %v2361 = vpop.f32.mrb[0].mxu0
      %v2362 = vadd.f32 0.0, %v2361
      %v2363 = vpop.f32.mrb[0].mxu0
      %2364 = vmatprep.mubr.bf16.mxu0 0
      %2365 = vmatmul.mubr.bf16.gmra.mrb[0].mxu0 %v2231
      %v2366 = vpop.f32.mrb[0].mxu0
      %v2367 = vadd.f32 0.0, %v2366
      %v2368 = vpop.f32.mrb[0].mxu0
      %v2369 = vpop.f32.mrb[0].mxu0
      %v2370 = vadd.f32 0.0, %v2369
      %v2371 = vpop.f32.mrb[0].mxu0
      %2372 = vmatprep.mubr.bf16.mxu0 0
      %2373 = vmatmul.mubr.bf16.gmra.mrb[0].mxu0 %v2232
      %v2374 = vpop.f32.mrb[0].mxu0
      %v2375 = vadd.f32 0.0, %v2374
      %v2376 = vpop.f32.mrb[0].mxu0
      %v2377 = vpop.f32.mrb[0].mxu0
      %v2378 = vadd.f32 0.0, %v2377
      %v2379 = vpop.f32.mrb[0].mxu0
      %2380 = vmatprep.mubr.bf16.mxu0 0
      %2381 = vmatmul.mubr.bf16.gmra.mrb[0].mxu0 %v2233
      %v2382 = vpop.f32.mrb[0].mxu0
      %v2383 = vadd.f32 0.0, %v2382
      %v2384 = vpop.f32.mrb[0].mxu0
      %v2385 = vpop.f32.mrb[0].mxu0
      %v2386 = vadd.f32 0.0, %v2385
      %v2387 = vpop.f32.mrb[0].mxu0
      %2388 = vmatprep.mubr.bf16.mxu0 0
      %2389 = vmatmul.mubr.bf16.gmra.mrb[0].mxu0 %v2234
      %v2390 = vpop.f32.mrb[0].mxu0
      %v2391 = vadd.f32 0.0, %v2390
      %v2392 = vpop.f32.mrb[0].mxu0
      %v2393 = vpop.f32.mrb[0].mxu0
      %v2394 = vadd.f32 0.0, %v2393
      %v2395 = vpop.f32.mrb[0].mxu0
      %2396 = vmatprep.mubr.bf16.mxu0 0
      %2397 = vmatmul.mubr.bf16.gmra.mrb[0].mxu0 %v2235
      %v2398 = vpop.f32.mrb[0].mxu0
      %v2399 = vadd.f32 0.0, %v2398
      %v2400 = vpop.f32.mrb[0].mxu0
      %v2401 = vpop.f32.mrb[0].mxu0
      %v2402 = vadd.f32 0.0, %v2401
      %v2403 = vpop.f32.mrb[0].mxu0
      %2404 = vmatprep.mubr.bf16.mxu0 0
      %2405 = vmatmul.mubr.bf16.gmra.mrb[0].mxu0 %v2236
      %v2406 = vpop.f32.mrb[0].mxu0
      %v2407 = vadd.f32 0.0, %v2406
      %v2408 = vpop.f32.mrb[0].mxu0
      %v2409 = vpop.f32.mrb[0].mxu0
      %v2410 = vadd.f32 0.0, %v2409
      %v2411 = vpop.f32.mrb[0].mxu0
      %2412 = vmatprep.mubr.bf16.mxu0 0
      %2413 = vmatmul.mubr.bf16.gmra.mrb[0].mxu0 %v2237
      %v2414 = vpop.f32.mrb[0].mxu0
      %v2415 = vadd.f32 0.0, %v2414
      %v2416 = vpop.f32.mrb[0].mxu0
      %v2417 = vpop.f32.mrb[0].mxu0
      %v2418 = vadd.f32 0.0, %v2417
      %v2419 = vpop.f32.mrb[0].mxu0
      %2420 = vmatprep.mubr.bf16.mxu0 0
      %2421 = vmatmul.mubr.bf16.gmra.mrb[0].mxu0 %v2238
      %v2422 = vpop.f32.mrb[0].mxu0
      %v2423 = vadd.f32 0.0, %v2422
      %v2424 = vpop.f32.mrb[0].mxu0
      %v2425 = vpop.f32.mrb[0].mxu0
      %v2426 = vadd.f32 0.0, %v2425
      %v2427 = vpop.f32.mrb[0].mxu0
      %2428 = vmatprep.mubr.bf16.mxu0 0
      %2429 = vmatmul.mubr.bf16.gmra.mrb[0].mxu0 %v2239
      %v2430 = vpop.f32.mrb[0].mxu0
      %v2431 = vadd.f32 0.0, %v2430
      %v2432 = vpop.f32.mrb[0].mxu0
      %v2433 = vpop.f32.mrb[0].mxu0
      %v2434 = vadd.f32 0.0, %v2433
      %v2435 = vpop.f32.mrb[0].mxu0
      %2436 = vmatprep.mubr.bf16.mxu0 0
      %2437 = vmatmul.mubr.bf16.gmra.mrb[0].mxu0 %v2240
      %v2438 = vpop.f32.mrb[0].mxu0
      %v2439 = vadd.f32 0.0, %v2438
      %v2440 = vpop.f32.mrb[0].mxu0
      %v2441 = vpop.f32.mrb[0].mxu0
      %v2442 = vadd.f32 0.0, %v2441
      %v2443 = vpop.f32.mrb[0].mxu0
      %2444 = vmatprep.mubr.bf16.mxu0 0
      %2445 = vmatmul.mubr.bf16.gmra.mrb[0].mxu0 %v2241
      %v2446 = vpop.f32.mrb[0].mxu0
      %v2447 = vadd.f32 0.0, %v2446
      %v2448 = vpop.f32.mrb[0].mxu0
      %v2449 = vpop.f32.mrb[0].mxu0
      %v2450 = vadd.f32 0.0, %v2449
      %v2451 = vpop.f32.mrb[0].mxu0
      %2452 = vmatprep.mubr.bf16.mxu0 0
      %2453 = vmatmul.mubr.bf16.gmra.mrb[0].mxu0 %v2242
      %v2454 = vpop.f32.mrb[0].mxu0
      %v2455 = vadd.f32 0.0, %v2454
      %v2456 = vpop.f32.mrb[0].mxu0
      %v2457 = vpop.f32.mrb[0].mxu0
      %v2458 = vadd.f32 0.0, %v2457
      %v2459 = vpop.f32.mrb[0].mxu0
      %2460 = vmatprep.mubr.bf16.mxu0 0
      %2461 = vmatmul.mubr.bf16.gmra.mrb[0].mxu0 %v2243
      %v2462 = vpop.f32.mrb[0].mxu0
      %v2463 = vadd.f32 0.0, %v2462
      %v2464 = vpop.f32.mrb[0].mxu0
      %v2465 = vpop.f32.mrb[0].mxu0
      %v2466 = vadd.f32 0.0, %v2465
      %v2467 = vpop.f32.mrb[0].mxu0
      %2468 = vdwg.mxu0
      %v2469 = vadd.f32 %v1890, %v2343
      %v2470 = vadd.f32 %v1893, %v2346
      %v2471 = vadd.f32 %v1898, %v2351
      %v2472 = vadd.f32 %v1901, %v2354
      %v2473 = vadd.f32 %v1906, %v2359
      %v2474 = vadd.f32 %v1909, %v2362
      %v2475 = vadd.f32 %v1914, %v2367
      %v2476 = vadd.f32 %v1917, %v2370
      %v2477 = vadd.f32 %v1922, %v2375
      %v2478 = vadd.f32 %v1925, %v2378
      %v2479 = vadd.f32 %v1930, %v2383
      %v2480 = vadd.f32 %v1933, %v2386
      %v2481 = vadd.f32 %v1938, %v2391
      %v2482 = vadd.f32 %v1941, %v2394
      %v2483 = vadd.f32 %v1946, %v2399
      %v2484 = vadd.f32 %v1949, %v2402
      %v2485 = vadd.f32 %v1954, %v2407
      %v2486 = vadd.f32 %v1957, %v2410
      %v2487 = vadd.f32 %v1962, %v2415
      %v2488 = vadd.f32 %v1965, %v2418
      %v2489 = vadd.f32 %v1970, %v2423
      %v2490 = vadd.f32 %v1973, %v2426
      %v2491 = vadd.f32 %v1978, %v2431
      %v2492 = vadd.f32 %v1981, %v2434
      %v2493 = vadd.f32 %v1986, %v2439
      %v2494 = vadd.f32 %v1989, %v2442
      %v2495 = vadd.f32 %v1994, %v2447
      %v2496 = vadd.f32 %v1997, %v2450
      %v2497 = vadd.f32 %v2002, %v2455
      %v2498 = vadd.f32 %v2005, %v2458
      %v2499 = vadd.f32 %v2010, %v2463
      %v2500 = vadd.f32 %v2013, %v2466
      %v2501 = vld [vmem:[%s852] sm:$0xf]
      %v2502 = vld [vmem:[%s852 + $0x4] sm:$0xf]
      %v2503 = vld [vmem:[%s852 + $0xc] sm:$0xf]
      %v2504 = vld [vmem:[%s852 + $0x10] sm:$0xf]
      %v2505 = vld [vmem:[%s852 + $0x18] sm:$0xf]
      %v2506 = vld [vmem:[%s852 + $0x1c] sm:$0xf]
      %v2507 = vld [vmem:[%s852 + $0x24] sm:$0xf]
      %v2508 = vld [vmem:[%s852 + $0x28] sm:$0xf]
      %v2509 = vld [vmem:[%s852 + $0x30] sm:$0xf]
      %v2510 = vld [vmem:[%s852 + $0x34] sm:$0xf]
      %v2511 = vld [vmem:[%s852 + $0x3c] sm:$0xf]
      %v2512 = vld [vmem:[%s852 + $0x40] sm:$0xf]
      %v2513 = vld [vmem:[%s852 + $0x48] sm:$0xf]
      %v2514 = vld [vmem:[%s852 + $0x4c] sm:$0xf]
      %v2515 = vld [vmem:[%s852 + $0x54] sm:$0xf]
      %v2516 = vld [vmem:[%s852 + $0x58] sm:$0xf]
      %v2517 = vld [vmem:[%s852 + $0x60] sm:$0xf]
      %v2518 = vld [vmem:[%s852 + $0x64] sm:$0xf]
      %v2519 = vld [vmem:[%s852 + $0x6c] sm:$0xf]
      %v2520 = vld [vmem:[%s852 + $0x70] sm:$0xf]
      %v2521 = vld [vmem:[%s852 + $0x78] sm:$0xf]
      %v2522 = vld [vmem:[%s852 + $0x7c] sm:$0xf]
      %v2523 = vld [vmem:[%s852 + $0x84] sm:$0xf]
      %v2524 = vld [vmem:[%s852 + $0x88] sm:$0xf]
      %v2525 = vld [vmem:[%s852 + $0x90] sm:$0xf]
      %v2526 = vld [vmem:[%s852 + $0x94] sm:$0xf]
      %v2527 = vld [vmem:[%s852 + $0x9c] sm:$0xf]
      %v2528 = vld [vmem:[%s852 + $0xa0] sm:$0xf]
      %v2529 = vld [vmem:[%s852 + $0xa8] sm:$0xf]
      %v2530 = vld [vmem:[%s852 + $0xac] sm:$0xf]
      %v2531 = vld [vmem:[%s852 + $0xb4] sm:$0xf]
      %v2532 = vld [vmem:[%s852 + $0xb8] sm:$0xf]
      %s2533 = scalar_lea.vmem %s1, 192
      %v2534 = vld [vmem:[%s2533] sm:$0xf]
      %v2535 = vld [vmem:[%s2533 + $0x4] sm:$0xf]
      %v2536 = vld [vmem:[%s2533 + $0x8] sm:$0xf]
      %v2537 = vld [vmem:[%s2533 + $0xc] sm:$0xf]
      %v2538 = vld [vmem:[%s2533 + $0x10] sm:$0xf]
      %v2539 = vld [vmem:[%s2533 + $0x14] sm:$0xf]
      %v2540 = vld [vmem:[%s2533 + $0x18] sm:$0xf]
      %v2541 = vld [vmem:[%s2533 + $0x1c] sm:$0xf]
      %v2542 = vld [vmem:[%s2533 + $0x20] sm:$0xf]
      %v2543 = vld [vmem:[%s2533 + $0x24] sm:$0xf]
      %v2544 = vld [vmem:[%s2533 + $0x28] sm:$0xf]
      %v2545 = vld [vmem:[%s2533 + $0x2c] sm:$0xf]
      %v2546 = vld [vmem:[%s2533 + $0x30] sm:$0xf]
      %v2547 = vld [vmem:[%s2533 + $0x34] sm:$0xf]
      %v2548 = vld [vmem:[%s2533 + $0x38] sm:$0xf]
      %v2549 = vld [vmem:[%s2533 + $0x3c] sm:$0xf]
      %v2582 = vunpack.c.l.b16 %v2501
      %v2583 = vunpack.c.l.b16 %v2502
      %v2584 = vunpack.c.l.b16 %v2503
      %v2585 = vunpack.c.l.b16 %v2504
      %v2586 = vunpack.c.l.b16 %v2505
      %v2587 = vunpack.c.l.b16 %v2506
      %v2588 = vunpack.c.l.b16 %v2507
      %v2589 = vunpack.c.l.b16 %v2508
      %v2590 = vunpack.c.l.b16 %v2509
      %v2591 = vunpack.c.l.b16 %v2510
      %v2592 = vunpack.c.l.b16 %v2511
      %v2593 = vunpack.c.l.b16 %v2512
      %v2594 = vunpack.c.l.b16 %v2513
      %v2595 = vunpack.c.l.b16 %v2514
      %v2596 = vunpack.c.l.b16 %v2515
      %v2597 = vunpack.c.l.b16 %v2516
      %v2598 = vunpack.c.l.b16 %v2517
      %v2599 = vunpack.c.l.b16 %v2518
      %v2600 = vunpack.c.l.b16 %v2519
      %v2601 = vunpack.c.l.b16 %v2520
      %v2602 = vunpack.c.l.b16 %v2521
      %v2603 = vunpack.c.l.b16 %v2522
      %v2604 = vunpack.c.l.b16 %v2523
      %v2605 = vunpack.c.l.b16 %v2524
      %v2606 = vunpack.c.l.b16 %v2525
      %v2607 = vunpack.c.l.b16 %v2526
      %v2608 = vunpack.c.l.b16 %v2527
      %v2609 = vunpack.c.l.b16 %v2528
      %v2610 = vunpack.c.l.b16 %v2529
      %v2611 = vunpack.c.l.b16 %v2530
      %v2612 = vunpack.c.l.b16 %v2531
      %v2613 = vunpack.c.l.b16 %v2532
      %v2614 = vpack.c.b16 %v2583, %v2582
      %v2615 = vpack.c.b16 %v2585, %v2584
      %v2616 = vpack.c.b16 %v2587, %v2586
      %v2617 = vpack.c.b16 %v2589, %v2588
      %v2618 = vpack.c.b16 %v2591, %v2590
      %v2619 = vpack.c.b16 %v2593, %v2592
      %v2620 = vpack.c.b16 %v2595, %v2594
      %v2621 = vpack.c.b16 %v2597, %v2596
      %v2622 = vpack.c.b16 %v2599, %v2598
      %v2623 = vpack.c.b16 %v2601, %v2600
      %v2624 = vpack.c.b16 %v2603, %v2602
      %v2625 = vpack.c.b16 %v2605, %v2604
      %v2626 = vpack.c.b16 %v2607, %v2606
      %v2627 = vpack.c.b16 %v2609, %v2608
      %v2628 = vpack.c.b16 %v2611, %v2610
      %v2629 = vpack.c.b16 %v2613, %v2612
      %v2662 = vunpack.c.l.b16 %v2534
      %v2663 = vunpack.c.l.b16 %v2535
      %v2664 = vunpack.c.l.b16 %v2536
      %v2665 = vunpack.c.l.b16 %v2537
      %v2666 = vunpack.c.l.b16 %v2538
      %v2667 = vunpack.c.l.b16 %v2539
      %v2668 = vunpack.c.l.b16 %v2540
      %v2669 = vunpack.c.l.b16 %v2541
      %v2670 = vunpack.c.l.b16 %v2542
      %v2671 = vunpack.c.l.b16 %v2543
      %v2672 = vunpack.c.l.b16 %v2544
      %v2673 = vunpack.c.l.b16 %v2545
      %v2674 = vunpack.c.l.b16 %v2546
      %v2675 = vunpack.c.l.b16 %v2547
      %v2676 = vunpack.c.l.b16 %v2548
      %v2677 = vunpack.c.l.b16 %v2549
      %v2678 = vpack.c.b16 %v2663, %v2662
      %v2679 = vpack.c.b16 %v2665, %v2664
      %v2680 = vpack.c.b16 %v2667, %v2666
      %v2681 = vpack.c.b16 %v2669, %v2668
      %v2682 = vpack.c.b16 %v2671, %v2670
      %v2683 = vpack.c.b16 %v2673, %v2672
      %v2684 = vpack.c.b16 %v2675, %v2674
      %v2685 = vpack.c.b16 %v2677, %v2676
      %2694 = vmatprep.subr.bf16.mxu0 0
      %2695 = vmatpush1.bf16.msra.mxu0 %v2678
      %2696 = vmatprep.subr.bf16.mxu0 0
      %2697 = vmatpush1.bf16.msra.mxu0 %v2679
      %2698 = vmatprep.subr.bf16.mxu0 0
      %2699 = vmatpush1.bf16.msra.mxu0 %v2680
      %2700 = vmatprep.subr.bf16.mxu0 0
      %2701 = vmatpush1.bf16.msra.mxu0 %v2681
      %2702 = vmatprep.subr.bf16.mxu0 0
      %2703 = vmatpush1.bf16.msra.mxu0 %v2682
      %2704 = vmatprep.subr.bf16.mxu0 0
      %2705 = vmatpush1.bf16.msra.mxu0 %v2683
      %2706 = vmatprep.subr.bf16.mxu0 0
      %2707 = vmatpush1.bf16.msra.mxu0 %v2684
      %2708 = vmatprep.subr.bf16.mxu0 0
      %2709 = vmatpush1.bf16.msra.mxu0 %v2685
      %2710 = vmatprep.subr.bf16.mxu0 0
      %2711 = vmatpush1.bf16.msra.mxu0 0
      %2712 = vmatprep.subr.bf16.mxu0 0
      %2713 = vmatpush1.bf16.msra.mxu0 0
      %2714 = vmatprep.subr.bf16.mxu0 0
      %2715 = vmatpush1.bf16.msra.mxu0 0
      %2716 = vmatprep.subr.bf16.mxu0 0
      %2717 = vmatpush1.bf16.msra.mxu0 0
      %2718 = vmatprep.subr.bf16.mxu0 0
      %2719 = vmatpush1.bf16.msra.mxu0 0
      %2720 = vmatprep.subr.bf16.mxu0 0
      %2721 = vmatpush1.bf16.msra.mxu0 0
      %2722 = vmatprep.subr.bf16.mxu0 0
      %2723 = vmatpush1.bf16.msra.mxu0 0
      %2724 = vmatprep.subr.bf16.mxu0 0
      %2725 = vmatpush1.bf16.msra.mxu0 0
      %2726 = vmatprep.mubr.bf16.mxu0 0
      %2727 = vmatmul.mubr.bf16.gmra.mrb[0].mxu0 %v2614
      %v2728 = vpop.f32.mrb[0].mxu0
      %v2729 = vadd.f32 0.0, %v2728
      %v2730 = vpop.f32.mrb[0].mxu0
      %v2731 = vpop.f32.mrb[0].mxu0
      %v2732 = vadd.f32 0.0, %v2731
      %v2733 = vpop.f32.mrb[0].mxu0
      %2734 = vmatprep.mubr.bf16.mxu0 0
      %2735 = vmatmul.mubr.bf16.gmra.mrb[0].mxu0 %v2615
      %v2736 = vpop.f32.mrb[0].mxu0
      %v2737 = vadd.f32 0.0, %v2736
      %v2738 = vpop.f32.mrb[0].mxu0
      %v2739 = vpop.f32.mrb[0].mxu0
      %v2740 = vadd.f32 0.0, %v2739
      %v2741 = vpop.f32.mrb[0].mxu0
      %2742 = vmatprep.mubr.bf16.mxu0 0
      %2743 = vmatmul.mubr.bf16.gmra.mrb[0].mxu0 %v2616
      %v2744 = vpop.f32.mrb[0].mxu0
      %v2745 = vadd.f32 0.0, %v2744
      %v2746 = vpop.f32.mrb[0].mxu0
      %v2747 = vpop.f32.mrb[0].mxu0
      %v2748 = vadd.f32 0.0, %v2747
      %v2749 = vpop.f32.mrb[0].mxu0
      %2750 = vmatprep.mubr.bf16.mxu0 0
      %2751 = vmatmul.mubr.bf16.gmra.mrb[0].mxu0 %v2617
      %v2752 = vpop.f32.mrb[0].mxu0
      %v2753 = vadd.f32 0.0, %v2752
      %v2754 = vpop.f32.mrb[0].mxu0
      %v2755 = vpop.f32.mrb[0].mxu0
      %v2756 = vadd.f32 0.0, %v2755
      %v2757 = vpop.f32.mrb[0].mxu0
      %2758 = vmatprep.mubr.bf16.mxu0 0
      %2759 = vmatmul.mubr.bf16.gmra.mrb[0].mxu0 %v2618
      %v2760 = vpop.f32.mrb[0].mxu0
      %v2761 = vadd.f32 0.0, %v2760
      %v2762 = vpop.f32.mrb[0].mxu0
      %v2763 = vpop.f32.mrb[0].mxu0
      %v2764 = vadd.f32 0.0, %v2763
      %v2765 = vpop.f32.mrb[0].mxu0
      %2766 = vmatprep.mubr.bf16.mxu0 0
      %2767 = vmatmul.mubr.bf16.gmra.mrb[0].mxu0 %v2619
      %v2768 = vpop.f32.mrb[0].mxu0
      %v2769 = vadd.f32 0.0, %v2768
      %v2770 = vpop.f32.mrb[0].mxu0
      %v2771 = vpop.f32.mrb[0].mxu0
      %v2772 = vadd.f32 0.0, %v2771
      %v2773 = vpop.f32.mrb[0].mxu0
      %2774 = vmatprep.mubr.bf16.mxu0 0
      %2775 = vmatmul.mubr.bf16.gmra.mrb[0].mxu0 %v2620
      %v2776 = vpop.f32.mrb[0].mxu0
      %v2777 = vadd.f32 0.0, %v2776
      %v2778 = vpop.f32.mrb[0].mxu0
      %v2779 = vpop.f32.mrb[0].mxu0
      %v2780 = vadd.f32 0.0, %v2779
      %v2781 = vpop.f32.mrb[0].mxu0
      %2782 = vmatprep.mubr.bf16.mxu0 0
      %2783 = vmatmul.mubr.bf16.gmra.mrb[0].mxu0 %v2621
      %v2784 = vpop.f32.mrb[0].mxu0
      %v2785 = vadd.f32 0.0, %v2784
      %v2786 = vpop.f32.mrb[0].mxu0
      %v2787 = vpop.f32.mrb[0].mxu0
      %v2788 = vadd.f32 0.0, %v2787
      %v2789 = vpop.f32.mrb[0].mxu0
      %2790 = vmatprep.mubr.bf16.mxu0 0
      %2791 = vmatmul.mubr.bf16.gmra.mrb[0].mxu0 %v2622
      %v2792 = vpop.f32.mrb[0].mxu0
      %v2793 = vadd.f32 0.0, %v2792
      %v2794 = vpop.f32.mrb[0].mxu0
      %v2795 = vpop.f32.mrb[0].mxu0
      %v2796 = vadd.f32 0.0, %v2795
      %v2797 = vpop.f32.mrb[0].mxu0
      %2798 = vmatprep.mubr.bf16.mxu0 0
      %2799 = vmatmul.mubr.bf16.gmra.mrb[0].mxu0 %v2623
      %v2800 = vpop.f32.mrb[0].mxu0
      %v2801 = vadd.f32 0.0, %v2800
      %v2802 = vpop.f32.mrb[0].mxu0
      %v2803 = vpop.f32.mrb[0].mxu0
      %v2804 = vadd.f32 0.0, %v2803
      %v2805 = vpop.f32.mrb[0].mxu0
      %2806 = vmatprep.mubr.bf16.mxu0 0
      %2807 = vmatmul.mubr.bf16.gmra.mrb[0].mxu0 %v2624
      %v2808 = vpop.f32.mrb[0].mxu0
      %v2809 = vadd.f32 0.0, %v2808
      %v2810 = vpop.f32.mrb[0].mxu0
      %v2811 = vpop.f32.mrb[0].mxu0
      %v2812 = vadd.f32 0.0, %v2811
      %v2813 = vpop.f32.mrb[0].mxu0
      %2814 = vmatprep.mubr.bf16.mxu0 0
      %2815 = vmatmul.mubr.bf16.gmra.mrb[0].mxu0 %v2625
      %v2816 = vpop.f32.mrb[0].mxu0
      %v2817 = vadd.f32 0.0, %v2816
      %v2818 = vpop.f32.mrb[0].mxu0
      %v2819 = vpop.f32.mrb[0].mxu0
      %v2820 = vadd.f32 0.0, %v2819
      %v2821 = vpop.f32.mrb[0].mxu0
      %2822 = vmatprep.mubr.bf16.mxu0 0
      %2823 = vmatmul.mubr.bf16.gmra.mrb[0].mxu0 %v2626
      %v2824 = vpop.f32.mrb[0].mxu0
      %v2825 = vadd.f32 0.0, %v2824
      %v2826 = vpop.f32.mrb[0].mxu0
      %v2827 = vpop.f32.mrb[0].mxu0
      %v2828 = vadd.f32 0.0, %v2827
      %v2829 = vpop.f32.mrb[0].mxu0
      %2830 = vmatprep.mubr.bf16.mxu0 0
      %2831 = vmatmul.mubr.bf16.gmra.mrb[0].mxu0 %v2627
      %v2832 = vpop.f32.mrb[0].mxu0
      %v2833 = vadd.f32 0.0, %v2832
      %v2834 = vpop.f32.mrb[0].mxu0
      %v2835 = vpop.f32.mrb[0].mxu0
      %v2836 = vadd.f32 0.0, %v2835
      %v2837 = vpop.f32.mrb[0].mxu0
      %2838 = vmatprep.mubr.bf16.mxu0 0
      %2839 = vmatmul.mubr.bf16.gmra.mrb[0].mxu0 %v2628
      %v2840 = vpop.f32.mrb[0].mxu0
      %v2841 = vadd.f32 0.0, %v2840
      %v2842 = vpop.f32.mrb[0].mxu0
      %v2843 = vpop.f32.mrb[0].mxu0
      %v2844 = vadd.f32 0.0, %v2843
      %v2845 = vpop.f32.mrb[0].mxu0
      %2846 = vmatprep.mubr.bf16.mxu0 0
      %2847 = vmatmul.mubr.bf16.gmra.mrb[0].mxu0 %v2629
      %v2848 = vpop.f32.mrb[0].mxu0
      %v2849 = vadd.f32 0.0, %v2848
      %v2850 = vpop.f32.mrb[0].mxu0
      %v2851 = vpop.f32.mrb[0].mxu0
      %v2852 = vadd.f32 0.0, %v2851
      %v2853 = vpop.f32.mrb[0].mxu0
      %2854 = vdwg.mxu0
      %v2855 = vadd.f32 %v2469, %v2729
      %v2856 = vadd.f32 %v2470, %v2732
      %v2857 = vadd.f32 %v2471, %v2737
      %v2858 = vadd.f32 %v2472, %v2740
      %v2859 = vadd.f32 %v2473, %v2745
      %v2860 = vadd.f32 %v2474, %v2748
      %v2861 = vadd.f32 %v2475, %v2753
      %v2862 = vadd.f32 %v2476, %v2756
      %v2863 = vadd.f32 %v2477, %v2761
      %v2864 = vadd.f32 %v2478, %v2764
      %v2865 = vadd.f32 %v2479, %v2769
      %v2866 = vadd.f32 %v2480, %v2772
      %v2867 = vadd.f32 %v2481, %v2777
      %v2868 = vadd.f32 %v2482, %v2780
      %v2869 = vadd.f32 %v2483, %v2785
      %v2870 = vadd.f32 %v2484, %v2788
      %v2871 = vadd.f32 %v2485, %v2793
      %v2872 = vadd.f32 %v2486, %v2796
      %v2873 = vadd.f32 %v2487, %v2801
      %v2874 = vadd.f32 %v2488, %v2804
      %v2875 = vadd.f32 %v2489, %v2809
      %v2876 = vadd.f32 %v2490, %v2812
      %v2877 = vadd.f32 %v2491, %v2817
      %v2878 = vadd.f32 %v2492, %v2820
      %v2879 = vadd.f32 %v2493, %v2825
      %v2880 = vadd.f32 %v2494, %v2828
      %v2881 = vadd.f32 %v2495, %v2833
      %v2882 = vadd.f32 %v2496, %v2836
      %v2883 = vadd.f32 %v2497, %v2841
      %v2884 = vadd.f32 %v2498, %v2844
      %v2885 = vadd.f32 %v2499, %v2849
      %v2886 = vadd.f32 %v2500, %v2852
      %v2887 = vld [vmem:[%s852] sm:$0xf]
      %v2888 = vld [vmem:[%s852 + $0x4] sm:$0xf]
      %v2889 = vld [vmem:[%s852 + $0x8] sm:$0x1]
      %v2890 = vld [vmem:[%s852 + $0xc] sm:$0xf]
      %v2891 = vld [vmem:[%s852 + $0x10] sm:$0xf]
      %v2892 = vld [vmem:[%s852 + $0x14] sm:$0x1]
      %v2893 = vld [vmem:[%s852 + $0x18] sm:$0xf]
      %v2894 = vld [vmem:[%s852 + $0x1c] sm:$0xf]
      %v2895 = vld [vmem:[%s852 + $0x20] sm:$0x1]
      %v2896 = vld [vmem:[%s852 + $0x24] sm:$0xf]
      %v2897 = vld [vmem:[%s852 + $0x28] sm:$0xf]
      %v2898 = vld [vmem:[%s852 + $0x2c] sm:$0x1]
      %v2899 = vld [vmem:[%s852 + $0x30] sm:$0xf]
      %v2900 = vld [vmem:[%s852 + $0x34] sm:$0xf]
      %v2901 = vld [vmem:[%s852 + $0x38] sm:$0x1]
      %v2902 = vld [vmem:[%s852 + $0x3c] sm:$0xf]
      %v2903 = vld [vmem:[%s852 + $0x40] sm:$0xf]
      %v2904 = vld [vmem:[%s852 + $0x44] sm:$0x1]
      %v2905 = vld [vmem:[%s852 + $0x48] sm:$0xf]
      %v2906 = vld [vmem:[%s852 + $0x4c] sm:$0xf]
      %v2907 = vld [vmem:[%s852 + $0x50] sm:$0x1]
      %v2908 = vld [vmem:[%s852 + $0x54] sm:$0xf]
      %v2909 = vld [vmem:[%s852 + $0x58] sm:$0xf]
      %v2910 = vld [vmem:[%s852 + $0x5c] sm:$0x1]
      %v2911 = vld [vmem:[%s852 + $0x60] sm:$0xf]
      %v2912 = vld [vmem:[%s852 + $0x64] sm:$0xf]
      %v2913 = vld [vmem:[%s852 + $0x68] sm:$0x1]
      %v2914 = vld [vmem:[%s852 + $0x6c] sm:$0xf]
      %v2915 = vld [vmem:[%s852 + $0x70] sm:$0xf]
      %v2916 = vld [vmem:[%s852 + $0x74] sm:$0x1]
      %v2917 = vld [vmem:[%s852 + $0x78] sm:$0xf]
      %v2918 = vld [vmem:[%s852 + $0x7c] sm:$0xf]
      %v2919 = vld [vmem:[%s852 + $0x80] sm:$0x1]
      %v2920 = vld [vmem:[%s852 + $0x84] sm:$0xf]
      %v2921 = vld [vmem:[%s852 + $0x88] sm:$0xf]
      %v2922 = vld [vmem:[%s852 + $0x8c] sm:$0x1]
      %v2923 = vld [vmem:[%s852 + $0x90] sm:$0xf]
      %v2924 = vld [vmem:[%s852 + $0x94] sm:$0xf]
      %v2925 = vld [vmem:[%s852 + $0x98] sm:$0x1]
      %v2926 = vld [vmem:[%s852 + $0x9c] sm:$0xf]
      %v2927 = vld [vmem:[%s852 + $0xa0] sm:$0xf]
      %v2928 = vld [vmem:[%s852 + $0xa4] sm:$0x1]
      %v2929 = vld [vmem:[%s852 + $0xa8] sm:$0xf]
      %v2930 = vld [vmem:[%s852 + $0xac] sm:$0xf]
      %v2931 = vld [vmem:[%s852 + $0xb0] sm:$0x1]
      %v2932 = vld [vmem:[%s852 + $0xb4] sm:$0xf]
      %v2933 = vld [vmem:[%s852 + $0xb8] sm:$0xf]
      %v2934 = vld [vmem:[%s852 + $0xbc] sm:$0x1]
      %v2936 = vshrl.u32 %v2887, 16
      %v2938 = vrot.slane %v2936, 4
      %v2939 = vshll.u32 %v2887, 16
      %v2941 = vrot.slane %v2939, 5
      %v2942 = vor.u32 %v2938, %v2941
      %v2943 = vrot.slane %v2942, 4
      %v2945 = vshll.u32 %v2888, 16
      %v2947 = vrot.slane %v2945, 5
      %v2948 = vsel %vm1036, %v2943, %v2947
      %v2949 = vshrl.u32 %v2888, 16
      %v2951 = vrot.slane %v2949, 4
      %v2952 = vor.u32 %v2951, %v2947
      %v2953 = vrot.slane %v2952, 4
      %v2955 = vshll.u32 %v2889, 16
      %v2957 = vrot.slane %v2955, 5
      %v2958 = vsel %vm1036, %v2953, %v2957
      %v2960 = vshrl.u32 %v2890, 16
      %v2962 = vrot.slane %v2960, 4
      %v2963 = vshll.u32 %v2890, 16
      %v2965 = vrot.slane %v2963, 5
      %v2966 = vor.u32 %v2962, %v2965
      %v2967 = vrot.slane %v2966, 4
      %v2969 = vshll.u32 %v2891, 16
      %v2971 = vrot.slane %v2969, 5
      %v2972 = vsel %vm1036, %v2967, %v2971
      %v2973 = vshrl.u32 %v2891, 16
      %v2975 = vrot.slane %v2973, 4
      %v2976 = vor.u32 %v2975, %v2971
      %v2977 = vrot.slane %v2976, 4
      %v2979 = vshll.u32 %v2892, 16
      %v2981 = vrot.slane %v2979, 5
      %v2982 = vsel %vm1036, %v2977, %v2981
      %v2984 = vshrl.u32 %v2893, 16
      %v2986 = vrot.slane %v2984, 4
      %v2987 = vshll.u32 %v2893, 16
      %v2989 = vrot.slane %v2987, 5
      %v2990 = vor.u32 %v2986, %v2989
      %v2991 = vrot.slane %v2990, 4
      %v2993 = vshll.u32 %v2894, 16
      %v2995 = vrot.slane %v2993, 5
      %v2996 = vsel %vm1036, %v2991, %v2995
      %v2997 = vshrl.u32 %v2894, 16
      %v2999 = vrot.slane %v2997, 4
      %v3000 = vor.u32 %v2999, %v2995
      %v3001 = vrot.slane %v3000, 4
      %v3003 = vshll.u32 %v2895, 16
      %v3005 = vrot.slane %v3003, 5
      %v3006 = vsel %vm1036, %v3001, %v3005
      %v3008 = vshrl.u32 %v2896, 16
      %v3010 = vrot.slane %v3008, 4
      %v3011 = vshll.u32 %v2896, 16
      %v3013 = vrot.slane %v3011, 5
      %v3014 = vor.u32 %v3010, %v3013
      %v3015 = vrot.slane %v3014, 4
      %v3017 = vshll.u32 %v2897, 16
      %v3019 = vrot.slane %v3017, 5
      %v3020 = vsel %vm1036, %v3015, %v3019
      %v3021 = vshrl.u32 %v2897, 16
      %v3023 = vrot.slane %v3021, 4
      %v3024 = vor.u32 %v3023, %v3019
      %v3025 = vrot.slane %v3024, 4
      %v3027 = vshll.u32 %v2898, 16
      %v3029 = vrot.slane %v3027, 5
      %v3030 = vsel %vm1036, %v3025, %v3029
      %v3032 = vshrl.u32 %v2899, 16
      %v3034 = vrot.slane %v3032, 4
      %v3035 = vshll.u32 %v2899, 16
      %v3037 = vrot.slane %v3035, 5
      %v3038 = vor.u32 %v3034, %v3037
      %v3039 = vrot.slane %v3038, 4
      %v3041 = vshll.u32 %v2900, 16
      %v3043 = vrot.slane %v3041, 5
      %v3044 = vsel %vm1036, %v3039, %v3043
      %v3045 = vshrl.u32 %v2900, 16
      %v3047 = vrot.slane %v3045, 4
      %v3048 = vor.u32 %v3047, %v3043
      %v3049 = vrot.slane %v3048, 4
      %v3051 = vshll.u32 %v2901, 16
      %v3053 = vrot.slane %v3051, 5
      %v3054 = vsel %vm1036, %v3049, %v3053
      %v3056 = vshrl.u32 %v2902, 16
      %v3058 = vrot.slane %v3056, 4
      %v3059 = vshll.u32 %v2902, 16
      %v3061 = vrot.slane %v3059, 5
      %v3062 = vor.u32 %v3058, %v3061
      %v3063 = vrot.slane %v3062, 4
      %v3065 = vshll.u32 %v2903, 16
      %v3067 = vrot.slane %v3065, 5
      %v3068 = vsel %vm1036, %v3063, %v3067
      %v3069 = vshrl.u32 %v2903, 16
      %v3071 = vrot.slane %v3069, 4
      %v3072 = vor.u32 %v3071, %v3067
      %v3073 = vrot.slane %v3072, 4
      %v3075 = vshll.u32 %v2904, 16
      %v3077 = vrot.slane %v3075, 5
      %v3078 = vsel %vm1036, %v3073, %v3077
      %v3080 = vshrl.u32 %v2905, 16
      %v3082 = vrot.slane %v3080, 4
      %v3083 = vshll.u32 %v2905, 16
      %v3085 = vrot.slane %v3083, 5
      %v3086 = vor.u32 %v3082, %v3085
      %v3087 = vrot.slane %v3086, 4
      %v3089 = vshll.u32 %v2906, 16
      %v3091 = vrot.slane %v3089, 5
      %v3092 = vsel %vm1036, %v3087, %v3091
      %v3093 = vshrl.u32 %v2906, 16
      %v3095 = vrot.slane %v3093, 4
      %v3096 = vor.u32 %v3095, %v3091
      %v3097 = vrot.slane %v3096, 4
      %v3099 = vshll.u32 %v2907, 16
      %v3101 = vrot.slane %v3099, 5
      %v3102 = vsel %vm1036, %v3097, %v3101
      %v3104 = vshrl.u32 %v2908, 16
      %v3106 = vrot.slane %v3104, 4
      %v3107 = vshll.u32 %v2908, 16
      %v3109 = vrot.slane %v3107, 5
      %v3110 = vor.u32 %v3106, %v3109
      %v3111 = vrot.slane %v3110, 4
      %v3113 = vshll.u32 %v2909, 16
      %v3115 = vrot.slane %v3113, 5
      %v3116 = vsel %vm1036, %v3111, %v3115
      %v3117 = vshrl.u32 %v2909, 16
      %v3119 = vrot.slane %v3117, 4
      %v3120 = vor.u32 %v3119, %v3115
      %v3121 = vrot.slane %v3120, 4
      %v3123 = vshll.u32 %v2910, 16
      %v3125 = vrot.slane %v3123, 5
      %v3126 = vsel %vm1036, %v3121, %v3125
      %v3128 = vshrl.u32 %v2911, 16
      %v3130 = vrot.slane %v3128, 4
      %v3131 = vshll.u32 %v2911, 16
      %v3133 = vrot.slane %v3131, 5
      %v3134 = vor.u32 %v3130, %v3133
      %v3135 = vrot.slane %v3134, 4
      %v3137 = vshll.u32 %v2912, 16
      %v3139 = vrot.slane %v3137, 5
      %v3140 = vsel %vm1036, %v3135, %v3139
      %v3141 = vshrl.u32 %v2912, 16
      %v3143 = vrot.slane %v3141, 4
      %v3144 = vor.u32 %v3143, %v3139
      %v3145 = vrot.slane %v3144, 4
      %v3147 = vshll.u32 %v2913, 16
      %v3149 = vrot.slane %v3147, 5
      %v3150 = vsel %vm1036, %v3145, %v3149
      %v3152 = vshrl.u32 %v2914, 16
      %v3154 = vrot.slane %v3152, 4
      %v3155 = vshll.u32 %v2914, 16
      %v3157 = vrot.slane %v3155, 5
      %v3158 = vor.u32 %v3154, %v3157
      %v3159 = vrot.slane %v3158, 4
      %v3161 = vshll.u32 %v2915, 16
      %v3163 = vrot.slane %v3161, 5
      %v3164 = vsel %vm1036, %v3159, %v3163
      %v3165 = vshrl.u32 %v2915, 16
      %v3167 = vrot.slane %v3165, 4
      %v3168 = vor.u32 %v3167, %v3163
      %v3169 = vrot.slane %v3168, 4
      %v3171 = vshll.u32 %v2916, 16
      %v3173 = vrot.slane %v3171, 5
      %v3174 = vsel %vm1036, %v3169, %v3173
      %v3176 = vshrl.u32 %v2917, 16
      %v3178 = vrot.slane %v3176, 4
      %v3179 = vshll.u32 %v2917, 16
      %v3181 = vrot.slane %v3179, 5
      %v3182 = vor.u32 %v3178, %v3181
      %v3183 = vrot.slane %v3182, 4
      %v3185 = vshll.u32 %v2918, 16
      %v3187 = vrot.slane %v3185, 5
      %v3188 = vsel %vm1036, %v3183, %v3187
      %v3189 = vshrl.u32 %v2918, 16
      %v3191 = vrot.slane %v3189, 4
      %v3192 = vor.u32 %v3191, %v3187
      %v3193 = vrot.slane %v3192, 4
      %v3195 = vshll.u32 %v2919, 16
      %v3197 = vrot.slane %v3195, 5
      %v3198 = vsel %vm1036, %v3193, %v3197
      %v3200 = vshrl.u32 %v2920, 16
      %v3202 = vrot.slane %v3200, 4
      %v3203 = vshll.u32 %v2920, 16
      %v3205 = vrot.slane %v3203, 5
      %v3206 = vor.u32 %v3202, %v3205
      %v3207 = vrot.slane %v3206, 4
      %v3209 = vshll.u32 %v2921, 16
      %v3211 = vrot.slane %v3209, 5
      %v3212 = vsel %vm1036, %v3207, %v3211
      %v3213 = vshrl.u32 %v2921, 16
      %v3215 = vrot.slane %v3213, 4
      %v3216 = vor.u32 %v3215, %v3211
      %v3217 = vrot.slane %v3216, 4
      %v3219 = vshll.u32 %v2922, 16
      %v3221 = vrot.slane %v3219, 5
      %v3222 = vsel %vm1036, %v3217, %v3221
      %v3224 = vshrl.u32 %v2923, 16
      %v3226 = vrot.slane %v3224, 4
      %v3227 = vshll.u32 %v2923, 16
      %v3229 = vrot.slane %v3227, 5
      %v3230 = vor.u32 %v3226, %v3229
      %v3231 = vrot.slane %v3230, 4
      %v3233 = vshll.u32 %v2924, 16
      %v3235 = vrot.slane %v3233, 5
      %v3236 = vsel %vm1036, %v3231, %v3235
      %v3237 = vshrl.u32 %v2924, 16
      %v3239 = vrot.slane %v3237, 4
      %v3240 = vor.u32 %v3239, %v3235
      %v3241 = vrot.slane %v3240, 4
      %v3243 = vshll.u32 %v2925, 16
      %v3245 = vrot.slane %v3243, 5
      %v3246 = vsel %vm1036, %v3241, %v3245
      %v3248 = vshrl.u32 %v2926, 16
      %v3250 = vrot.slane %v3248, 4
      %v3251 = vshll.u32 %v2926, 16
      %v3253 = vrot.slane %v3251, 5
      %v3254 = vor.u32 %v3250, %v3253
      %v3255 = vrot.slane %v3254, 4
      %v3257 = vshll.u32 %v2927, 16
      %v3259 = vrot.slane %v3257, 5
      %v3260 = vsel %vm1036, %v3255, %v3259
      %v3261 = vshrl.u32 %v2927, 16
      %v3263 = vrot.slane %v3261, 4
      %v3264 = vor.u32 %v3263, %v3259
      %v3265 = vrot.slane %v3264, 4
      %v3267 = vshll.u32 %v2928, 16
      %v3269 = vrot.slane %v3267, 5
      %v3270 = vsel %vm1036, %v3265, %v3269
      %v3272 = vshrl.u32 %v2929, 16
      %v3274 = vrot.slane %v3272, 4
      %v3275 = vshll.u32 %v2929, 16
      %v3277 = vrot.slane %v3275, 5
      %v3278 = vor.u32 %v3274, %v3277
      %v3279 = vrot.slane %v3278, 4
      %v3281 = vshll.u32 %v2930, 16
      %v3283 = vrot.slane %v3281, 5
      %v3284 = vsel %vm1036, %v3279, %v3283
      %v3285 = vshrl.u32 %v2930, 16
      %v3287 = vrot.slane %v3285, 4
      %v3288 = vor.u32 %v3287, %v3283
      %v3289 = vrot.slane %v3288, 4
      %v3291 = vshll.u32 %v2931, 16
      %v3293 = vrot.slane %v3291, 5
      %v3294 = vsel %vm1036, %v3289, %v3293
      %v3296 = vshrl.u32 %v2932, 16
      %v3298 = vrot.slane %v3296, 4
      %v3299 = vshll.u32 %v2932, 16
      %v3301 = vrot.slane %v3299, 5
      %v3302 = vor.u32 %v3298, %v3301
      %v3303 = vrot.slane %v3302, 4
      %v3305 = vshll.u32 %v2933, 16
      %v3307 = vrot.slane %v3305, 5
      %v3308 = vsel %vm1036, %v3303, %v3307
      %v3309 = vshrl.u32 %v2933, 16
      %v3311 = vrot.slane %v3309, 4
      %v3312 = vor.u32 %v3311, %v3307
      %v3313 = vrot.slane %v3312, 4
      %v3315 = vshll.u32 %v2934, 16
      %v3317 = vrot.slane %v3315, 5
      %v3318 = vsel %vm1036, %v3313, %v3317
      %s3319 = scalar_lea.vmem %s1, 256
      %v3320 = vld [vmem:[%s3319] sm:$0xf]
      %v3321 = vld [vmem:[%s3319 + $0x4] sm:$0xf]
      %v3322 = vld [vmem:[%s3319 + $0x8] sm:$0xf]
      %v3323 = vld [vmem:[%s3319 + $0xc] sm:$0xf]
      %v3324 = vld [vmem:[%s3319 + $0x10] sm:$0xf]
      %v3325 = vld [vmem:[%s3319 + $0x14] sm:$0xf]
      %v3326 = vld [vmem:[%s3319 + $0x18] sm:$0xf]
      %v3327 = vld [vmem:[%s3319 + $0x1c] sm:$0xf]
      %v3328 = vld [vmem:[%s3319 + $0x20] sm:$0xf]
      %v3329 = vld [vmem:[%s3319 + $0x24] sm:$0xf]
      %v3330 = vld [vmem:[%s3319 + $0x28] sm:$0xf]
      %v3331 = vld [vmem:[%s3319 + $0x2c] sm:$0xf]
      %v3332 = vld [vmem:[%s3319 + $0x30] sm:$0xf]
      %v3333 = vld [vmem:[%s3319 + $0x34] sm:$0xf]
      %v3334 = vld [vmem:[%s3319 + $0x38] sm:$0xf]
      %v3335 = vld [vmem:[%s3319 + $0x3c] sm:$0xf]
      %v3336 = vunpack.c.l.b16 %v2948
      %v3337 = vunpack.c.l.b16 %v2958
      %v3338 = vunpack.c.l.b16 %v2972
      %v3339 = vunpack.c.l.b16 %v2982
      %v3340 = vunpack.c.l.b16 %v2996
      %v3341 = vunpack.c.l.b16 %v3006
      %v3342 = vunpack.c.l.b16 %v3020
      %v3343 = vunpack.c.l.b16 %v3030
      %v3344 = vunpack.c.l.b16 %v3044
      %v3345 = vunpack.c.l.b16 %v3054
      %v3346 = vunpack.c.l.b16 %v3068
      %v3347 = vunpack.c.l.b16 %v3078
      %v3348 = vunpack.c.l.b16 %v3092
      %v3349 = vunpack.c.l.b16 %v3102
      %v3350 = vunpack.c.l.b16 %v3116
      %v3351 = vunpack.c.l.b16 %v3126
      %v3352 = vunpack.c.l.b16 %v3140
      %v3353 = vunpack.c.l.b16 %v3150
      %v3354 = vunpack.c.l.b16 %v3164
      %v3355 = vunpack.c.l.b16 %v3174
      %v3356 = vunpack.c.l.b16 %v3188
      %v3357 = vunpack.c.l.b16 %v3198
      %v3358 = vunpack.c.l.b16 %v3212
      %v3359 = vunpack.c.l.b16 %v3222
      %v3360 = vunpack.c.l.b16 %v3236
      %v3361 = vunpack.c.l.b16 %v3246
      %v3362 = vunpack.c.l.b16 %v3260
      %v3363 = vunpack.c.l.b16 %v3270
      %v3364 = vunpack.c.l.b16 %v3284
      %v3365 = vunpack.c.l.b16 %v3294
      %v3366 = vunpack.c.l.b16 %v3308
      %v3367 = vunpack.c.l.b16 %v3318
      %v3368 = vpack.c.b16 %v3337, %v3336
      %v3369 = vpack.c.b16 %v3339, %v3338
      %v3370 = vpack.c.b16 %v3341, %v3340
      %v3371 = vpack.c.b16 %v3343, %v3342
      %v3372 = vpack.c.b16 %v3345, %v3344
      %v3373 = vpack.c.b16 %v3347, %v3346
      %v3374 = vpack.c.b16 %v3349, %v3348
      %v3375 = vpack.c.b16 %v3351, %v3350
      %v3376 = vpack.c.b16 %v3353, %v3352
      %v3377 = vpack.c.b16 %v3355, %v3354
      %v3378 = vpack.c.b16 %v3357, %v3356
      %v3379 = vpack.c.b16 %v3359, %v3358
      %v3380 = vpack.c.b16 %v3361, %v3360
      %v3381 = vpack.c.b16 %v3363, %v3362
      %v3382 = vpack.c.b16 %v3365, %v3364
      %v3383 = vpack.c.b16 %v3367, %v3366
      %v3416 = vunpack.c.l.b16 %v3320
      %v3417 = vunpack.c.l.b16 %v3321
      %v3418 = vunpack.c.l.b16 %v3322
      %v3419 = vunpack.c.l.b16 %v3323
      %v3420 = vunpack.c.l.b16 %v3324
      %v3421 = vunpack.c.l.b16 %v3325
      %v3422 = vunpack.c.l.b16 %v3326
      %v3423 = vunpack.c.l.b16 %v3327
      %v3424 = vunpack.c.l.b16 %v3328
      %v3425 = vunpack.c.l.b16 %v3329
      %v3426 = vunpack.c.l.b16 %v3330
      %v3427 = vunpack.c.l.b16 %v3331
      %v3428 = vunpack.c.l.b16 %v3332
      %v3429 = vunpack.c.l.b16 %v3333
      %v3430 = vunpack.c.l.b16 %v3334
      %v3431 = vunpack.c.l.b16 %v3335
      %v3432 = vpack.c.b16 %v3417, %v3416
      %v3433 = vpack.c.b16 %v3419, %v3418
      %v3434 = vpack.c.b16 %v3421, %v3420
      %v3435 = vpack.c.b16 %v3423, %v3422
      %v3436 = vpack.c.b16 %v3425, %v3424
      %v3437 = vpack.c.b16 %v3427, %v3426
      %v3438 = vpack.c.b16 %v3429, %v3428
      %v3439 = vpack.c.b16 %v3431, %v3430
      %3448 = vmatprep.subr.bf16.mxu0 0
      %3449 = vmatpush1.bf16.msra.mxu0 %v3432
      %3450 = vmatprep.subr.bf16.mxu0 0
      %3451 = vmatpush1.bf16.msra.mxu0 %v3433
      %3452 = vmatprep.subr.bf16.mxu0 0
      %3453 = vmatpush1.bf16.msra.mxu0 %v3434
      %3454 = vmatprep.subr.bf16.mxu0 0
      %3455 = vmatpush1.bf16.msra.mxu0 %v3435
      %3456 = vmatprep.subr.bf16.mxu0 0
      %3457 = vmatpush1.bf16.msra.mxu0 %v3436
      %3458 = vmatprep.subr.bf16.mxu0 0
      %3459 = vmatpush1.bf16.msra.mxu0 %v3437
      %3460 = vmatprep.subr.bf16.mxu0 0
      %3461 = vmatpush1.bf16.msra.mxu0 %v3438
      %3462 = vmatprep.subr.bf16.mxu0 0
      %3463 = vmatpush1.bf16.msra.mxu0 %v3439
      %3464 = vmatprep.subr.bf16.mxu0 0
      %3465 = vmatpush1.bf16.msra.mxu0 0
      %3466 = vmatprep.subr.bf16.mxu0 0
      %3467 = vmatpush1.bf16.msra.mxu0 0
      %3468 = vmatprep.subr.bf16.mxu0 0
      %3469 = vmatpush1.bf16.msra.mxu0 0
      %3470 = vmatprep.subr.bf16.mxu0 0
      %3471 = vmatpush1.bf16.msra.mxu0 0
      %3472 = vmatprep.subr.bf16.mxu0 0
      %3473 = vmatpush1.bf16.msra.mxu0 0
      %3474 = vmatprep.subr.bf16.mxu0 0
      %3475 = vmatpush1.bf16.msra.mxu0 0
      %3476 = vmatprep.subr.bf16.mxu0 0
      %3477 = vmatpush1.bf16.msra.mxu0 0
      %3478 = vmatprep.subr.bf16.mxu0 0
      %3479 = vmatpush1.bf16.msra.mxu0 0
      %3480 = vmatprep.mubr.bf16.mxu0 0
      %3481 = vmatmul.mubr.bf16.gmra.mrb[0].mxu0 %v3368
      %v3482 = vpop.f32.mrb[0].mxu0
      %v3483 = vadd.f32 0.0, %v3482
      %v3484 = vpop.f32.mrb[0].mxu0
      %v3485 = vpop.f32.mrb[0].mxu0
      %v3486 = vadd.f32 0.0, %v3485
      %v3487 = vpop.f32.mrb[0].mxu0
      %3488 = vmatprep.mubr.bf16.mxu0 0
      %3489 = vmatmul.mubr.bf16.gmra.mrb[0].mxu0 %v3369
      %v3490 = vpop.f32.mrb[0].mxu0
      %v3491 = vadd.f32 0.0, %v3490
      %v3492 = vpop.f32.mrb[0].mxu0
      %v3493 = vpop.f32.mrb[0].mxu0
      %v3494 = vadd.f32 0.0, %v3493
      %v3495 = vpop.f32.mrb[0].mxu0
      %3496 = vmatprep.mubr.bf16.mxu0 0
      %3497 = vmatmul.mubr.bf16.gmra.mrb[0].mxu0 %v3370
      %v3498 = vpop.f32.mrb[0].mxu0
      %v3499 = vadd.f32 0.0, %v3498
      %v3500 = vpop.f32.mrb[0].mxu0
      %v3501 = vpop.f32.mrb[0].mxu0
      %v3502 = vadd.f32 0.0, %v3501
      %v3503 = vpop.f32.mrb[0].mxu0
      %3504 = vmatprep.mubr.bf16.mxu0 0
      %3505 = vmatmul.mubr.bf16.gmra.mrb[0].mxu0 %v3371
      %v3506 = vpop.f32.mrb[0].mxu0
      %v3507 = vadd.f32 0.0, %v3506
      %v3508 = vpop.f32.mrb[0].mxu0
      %v3509 = vpop.f32.mrb[0].mxu0
      %v3510 = vadd.f32 0.0, %v3509
      %v3511 = vpop.f32.mrb[0].mxu0
      %3512 = vmatprep.mubr.bf16.mxu0 0
      %3513 = vmatmul.mubr.bf16.gmra.mrb[0].mxu0 %v3372
      %v3514 = vpop.f32.mrb[0].mxu0
      %v3515 = vadd.f32 0.0, %v3514
      %v3516 = vpop.f32.mrb[0].mxu0
      %v3517 = vpop.f32.mrb[0].mxu0
      %v3518 = vadd.f32 0.0, %v3517
      %v3519 = vpop.f32.mrb[0].mxu0
      %3520 = vmatprep.mubr.bf16.mxu0 0
      %3521 = vmatmul.mubr.bf16.gmra.mrb[0].mxu0 %v3373
      %v3522 = vpop.f32.mrb[0].mxu0
      %v3523 = vadd.f32 0.0, %v3522
      %v3524 = vpop.f32.mrb[0].mxu0
      %v3525 = vpop.f32.mrb[0].mxu0
      %v3526 = vadd.f32 0.0, %v3525
      %v3527 = vpop.f32.mrb[0].mxu0
      %3528 = vmatprep.mubr.bf16.mxu0 0
      %3529 = vmatmul.mubr.bf16.gmra.mrb[0].mxu0 %v3374
      %v3530 = vpop.f32.mrb[0].mxu0
      %v3531 = vadd.f32 0.0, %v3530
      %v3532 = vpop.f32.mrb[0].mxu0
      %v3533 = vpop.f32.mrb[0].mxu0
      %v3534 = vadd.f32 0.0, %v3533
      %v3535 = vpop.f32.mrb[0].mxu0
      %3536 = vmatprep.mubr.bf16.mxu0 0
      %3537 = vmatmul.mubr.bf16.gmra.mrb[0].mxu0 %v3375
      %v3538 = vpop.f32.mrb[0].mxu0
      %v3539 = vadd.f32 0.0, %v3538
      %v3540 = vpop.f32.mrb[0].mxu0
      %v3541 = vpop.f32.mrb[0].mxu0
      %v3542 = vadd.f32 0.0, %v3541
      %v3543 = vpop.f32.mrb[0].mxu0
      %3544 = vmatprep.mubr.bf16.mxu0 0
      %3545 = vmatmul.mubr.bf16.gmra.mrb[0].mxu0 %v3376
      %v3546 = vpop.f32.mrb[0].mxu0
      %v3547 = vadd.f32 0.0, %v3546
      %v3548 = vpop.f32.mrb[0].mxu0
      %v3549 = vpop.f32.mrb[0].mxu0
      %v3550 = vadd.f32 0.0, %v3549
      %v3551 = vpop.f32.mrb[0].mxu0
      %3552 = vmatprep.mubr.bf16.mxu0 0
      %3553 = vmatmul.mubr.bf16.gmra.mrb[0].mxu0 %v3377
      %v3554 = vpop.f32.mrb[0].mxu0
      %v3555 = vadd.f32 0.0, %v3554
      %v3556 = vpop.f32.mrb[0].mxu0
      %v3557 = vpop.f32.mrb[0].mxu0
      %v3558 = vadd.f32 0.0, %v3557
      %v3559 = vpop.f32.mrb[0].mxu0
      %3560 = vmatprep.mubr.bf16.mxu0 0
      %3561 = vmatmul.mubr.bf16.gmra.mrb[0].mxu0 %v3378
      %v3562 = vpop.f32.mrb[0].mxu0
      %v3563 = vadd.f32 0.0, %v3562
      %v3564 = vpop.f32.mrb[0].mxu0
      %v3565 = vpop.f32.mrb[0].mxu0
      %v3566 = vadd.f32 0.0, %v3565
      %v3567 = vpop.f32.mrb[0].mxu0
      %3568 = vmatprep.mubr.bf16.mxu0 0
      %3569 = vmatmul.mubr.bf16.gmra.mrb[0].mxu0 %v3379
      %v3570 = vpop.f32.mrb[0].mxu0
      %v3571 = vadd.f32 0.0, %v3570
      %v3572 = vpop.f32.mrb[0].mxu0
      %v3573 = vpop.f32.mrb[0].mxu0
      %v3574 = vadd.f32 0.0, %v3573
      %v3575 = vpop.f32.mrb[0].mxu0
      %3576 = vmatprep.mubr.bf16.mxu0 0
      %3577 = vmatmul.mubr.bf16.gmra.mrb[0].mxu0 %v3380
      %v3578 = vpop.f32.mrb[0].mxu0
      %v3579 = vadd.f32 0.0, %v3578
      %v3580 = vpop.f32.mrb[0].mxu0
      %v3581 = vpop.f32.mrb[0].mxu0
      %v3582 = vadd.f32 0.0, %v3581
      %v3583 = vpop.f32.mrb[0].mxu0
      %3584 = vmatprep.mubr.bf16.mxu0 0
      %3585 = vmatmul.mubr.bf16.gmra.mrb[0].mxu0 %v3381
      %v3586 = vpop.f32.mrb[0].mxu0
      %v3587 = vadd.f32 0.0, %v3586
      %v3588 = vpop.f32.mrb[0].mxu0
      %v3589 = vpop.f32.mrb[0].mxu0
      %v3590 = vadd.f32 0.0, %v3589
      %v3591 = vpop.f32.mrb[0].mxu0
      %3592 = vmatprep.mubr.bf16.mxu0 0
      %3593 = vmatmul.mubr.bf16.gmra.mrb[0].mxu0 %v3382
      %v3594 = vpop.f32.mrb[0].mxu0
      %v3595 = vadd.f32 0.0, %v3594
      %v3596 = vpop.f32.mrb[0].mxu0
      %v3597 = vpop.f32.mrb[0].mxu0
      %v3598 = vadd.f32 0.0, %v3597
      %v3599 = vpop.f32.mrb[0].mxu0
      %3600 = vmatprep.mubr.bf16.mxu0 0
      %3601 = vmatmul.mubr.bf16.gmra.mrb[0].mxu0 %v3383
      %v3602 = vpop.f32.mrb[0].mxu0
      %v3603 = vadd.f32 0.0, %v3602
      %v3604 = vpop.f32.mrb[0].mxu0
      %v3605 = vpop.f32.mrb[0].mxu0
      %v3606 = vadd.f32 0.0, %v3605
      %v3607 = vpop.f32.mrb[0].mxu0
      %3608 = vdwg.mxu0
      %v3609 = vadd.f32 %v2855, %v3483
      %v3610 = vadd.f32 %v2856, %v3486
      %v3611 = vadd.f32 %v2857, %v3491
      %v3612 = vadd.f32 %v2858, %v3494
      %v3613 = vadd.f32 %v2859, %v3499
      %v3614 = vadd.f32 %v2860, %v3502
      %v3615 = vadd.f32 %v2861, %v3507
      %v3616 = vadd.f32 %v2862, %v3510
      %v3617 = vadd.f32 %v2863, %v3515
      %v3618 = vadd.f32 %v2864, %v3518
      %v3619 = vadd.f32 %v2865, %v3523
      %v3620 = vadd.f32 %v2866, %v3526
      %v3621 = vadd.f32 %v2867, %v3531
      %v3622 = vadd.f32 %v2868, %v3534
      %v3623 = vadd.f32 %v2869, %v3539
      %v3624 = vadd.f32 %v2870, %v3542
      %v3625 = vadd.f32 %v2871, %v3547
      %v3626 = vadd.f32 %v2872, %v3550
      %v3627 = vadd.f32 %v2873, %v3555
      %v3628 = vadd.f32 %v2874, %v3558
      %v3629 = vadd.f32 %v2875, %v3563
      %v3630 = vadd.f32 %v2876, %v3566
      %v3631 = vadd.f32 %v2877, %v3571
      %v3632 = vadd.f32 %v2878, %v3574
      %v3633 = vadd.f32 %v2879, %v3579
      %v3634 = vadd.f32 %v2880, %v3582
      %v3635 = vadd.f32 %v2881, %v3587
      %v3636 = vadd.f32 %v2882, %v3590
      %v3637 = vadd.f32 %v2883, %v3595
      %v3638 = vadd.f32 %v2884, %v3598
      %v3639 = vadd.f32 %v2885, %v3603
      %v3640 = vadd.f32 %v2886, %v3606
      %v3641 = vld [vmem:[%s852] sm:$0xe]
      %v3642 = vld [vmem:[%s852 + $0xc] sm:$0xe]
      %v3643 = vld [vmem:[%s852 + $0x18] sm:$0xe]
      %v3644 = vld [vmem:[%s852 + $0x24] sm:$0xe]
      %v3645 = vld [vmem:[%s852 + $0x30] sm:$0xe]
      %v3646 = vld [vmem:[%s852 + $0x3c] sm:$0xe]
      %v3647 = vld [vmem:[%s852 + $0x48] sm:$0xe]
      %v3648 = vld [vmem:[%s852 + $0x54] sm:$0xe]
      %v3649 = vld [vmem:[%s852 + $0x60] sm:$0xe]
      %v3650 = vld [vmem:[%s852 + $0x6c] sm:$0xe]
      %v3651 = vld [vmem:[%s852 + $0x78] sm:$0xe]
      %v3652 = vld [vmem:[%s852 + $0x84] sm:$0xe]
      %v3653 = vld [vmem:[%s852 + $0x90] sm:$0xe]
      %v3654 = vld [vmem:[%s852 + $0x9c] sm:$0xe]
      %v3655 = vld [vmem:[%s852 + $0xa8] sm:$0xe]
      %v3656 = vld [vmem:[%s852 + $0xb4] sm:$0xe]
      %v3705 = vrot.slane %v3641, 5
      %v3706 = vrot.slane %v3705, 4
      %v3707 = vrot.slane %v2888, 5
      %v3708 = vsel %vm2066, %v3706, %v3707
      %v3709 = vrot.slane %v3707, 4
      %v3710 = vrot.slane %v2889, 5
      %v3711 = vsel %vm2066, %v3709, %v3710
      %v3712 = vrot.slane %v3642, 5
      %v3713 = vrot.slane %v3712, 4
      %v3714 = vrot.slane %v2891, 5
      %v3715 = vsel %vm2066, %v3713, %v3714
      %v3716 = vrot.slane %v3714, 4
      %v3717 = vrot.slane %v2892, 5
      %v3718 = vsel %vm2066, %v3716, %v3717
      %v3719 = vrot.slane %v3643, 5
      %v3720 = vrot.slane %v3719, 4
      %v3721 = vrot.slane %v2894, 5
      %v3722 = vsel %vm2066, %v3720, %v3721
      %v3723 = vrot.slane %v3721, 4
      %v3724 = vrot.slane %v2895, 5
      %v3725 = vsel %vm2066, %v3723, %v3724
      %v3726 = vrot.slane %v3644, 5
      %v3727 = vrot.slane %v3726, 4
      %v3728 = vrot.slane %v2897, 5
      %v3729 = vsel %vm2066, %v3727, %v3728
      %v3730 = vrot.slane %v3728, 4
      %v3731 = vrot.slane %v2898, 5
      %v3732 = vsel %vm2066, %v3730, %v3731
      %v3733 = vrot.slane %v3645, 5
      %v3734 = vrot.slane %v3733, 4
      %v3735 = vrot.slane %v2900, 5
      %v3736 = vsel %vm2066, %v3734, %v3735
      %v3737 = vrot.slane %v3735, 4
      %v3738 = vrot.slane %v2901, 5
      %v3739 = vsel %vm2066, %v3737, %v3738
      %v3740 = vrot.slane %v3646, 5
      %v3741 = vrot.slane %v3740, 4
      %v3742 = vrot.slane %v2903, 5
      %v3743 = vsel %vm2066, %v3741, %v3742
      %v3744 = vrot.slane %v3742, 4
      %v3745 = vrot.slane %v2904, 5
      %v3746 = vsel %vm2066, %v3744, %v3745
      %v3747 = vrot.slane %v3647, 5
      %v3748 = vrot.slane %v3747, 4
      %v3749 = vrot.slane %v2906, 5
      %v3750 = vsel %vm2066, %v3748, %v3749
      %v3751 = vrot.slane %v3749, 4
      %v3752 = vrot.slane %v2907, 5
      %v3753 = vsel %vm2066, %v3751, %v3752
      %v3754 = vrot.slane %v3648, 5
      %v3755 = vrot.slane %v3754, 4
      %v3756 = vrot.slane %v2909, 5
      %v3757 = vsel %vm2066, %v3755, %v3756
      %v3758 = vrot.slane %v3756, 4
      %v3759 = vrot.slane %v2910, 5
      %v3760 = vsel %vm2066, %v3758, %v3759
      %v3761 = vrot.slane %v3649, 5
      %v3762 = vrot.slane %v3761, 4
      %v3763 = vrot.slane %v2912, 5
      %v3764 = vsel %vm2066, %v3762, %v3763
      %v3765 = vrot.slane %v3763, 4
      %v3766 = vrot.slane %v2913, 5
      %v3767 = vsel %vm2066, %v3765, %v3766
      %v3768 = vrot.slane %v3650, 5
      %v3769 = vrot.slane %v3768, 4
      %v3770 = vrot.slane %v2915, 5
      %v3771 = vsel %vm2066, %v3769, %v3770
      %v3772 = vrot.slane %v3770, 4
      %v3773 = vrot.slane %v2916, 5
      %v3774 = vsel %vm2066, %v3772, %v3773
      %v3775 = vrot.slane %v3651, 5
      %v3776 = vrot.slane %v3775, 4
      %v3777 = vrot.slane %v2918, 5
      %v3778 = vsel %vm2066, %v3776, %v3777
      %v3779 = vrot.slane %v3777, 4
      %v3780 = vrot.slane %v2919, 5
      %v3781 = vsel %vm2066, %v3779, %v3780
      %v3782 = vrot.slane %v3652, 5
      %v3783 = vrot.slane %v3782, 4
      %v3784 = vrot.slane %v2921, 5
      %v3785 = vsel %vm2066, %v3783, %v3784
      %v3786 = vrot.slane %v3784, 4
      %v3787 = vrot.slane %v2922, 5
      %v3788 = vsel %vm2066, %v3786, %v3787
      %v3789 = vrot.slane %v3653, 5
      %v3790 = vrot.slane %v3789, 4
      %v3791 = vrot.slane %v2924, 5
      %v3792 = vsel %vm2066, %v3790, %v3791
      %v3793 = vrot.slane %v3791, 4
      %v3794 = vrot.slane %v2925, 5
      %v3795 = vsel %vm2066, %v3793, %v3794
      %v3796 = vrot.slane %v3654, 5
      %v3797 = vrot.slane %v3796, 4
      %v3798 = vrot.slane %v2927, 5
      %v3799 = vsel %vm2066, %v3797, %v3798
      %v3800 = vrot.slane %v3798, 4
      %v3801 = vrot.slane %v2928, 5
      %v3802 = vsel %vm2066, %v3800, %v3801
      %v3803 = vrot.slane %v3655, 5
      %v3804 = vrot.slane %v3803, 4
      %v3805 = vrot.slane %v2930, 5
      %v3806 = vsel %vm2066, %v3804, %v3805
      %v3807 = vrot.slane %v3805, 4
      %v3808 = vrot.slane %v2931, 5
      %v3809 = vsel %vm2066, %v3807, %v3808
      %v3810 = vrot.slane %v3656, 5
      %v3811 = vrot.slane %v3810, 4
      %v3812 = vrot.slane %v2933, 5
      %v3813 = vsel %vm2066, %v3811, %v3812
      %v3814 = vrot.slane %v3812, 4
      %v3815 = vrot.slane %v2934, 5
      %v3816 = vsel %vm2066, %v3814, %v3815
      %s3817 = scalar_lea.vmem %s1, 320
      %v3818 = vld [vmem:[%s3817] sm:$0xf]
      %v3819 = vld [vmem:[%s3817 + $0x4] sm:$0xf]
      %v3820 = vld [vmem:[%s3817 + $0x8] sm:$0xf]
      %v3821 = vld [vmem:[%s3817 + $0xc] sm:$0xf]
      %v3822 = vld [vmem:[%s3817 + $0x10] sm:$0xf]
      %v3823 = vld [vmem:[%s3817 + $0x14] sm:$0xf]
      %v3824 = vld [vmem:[%s3817 + $0x18] sm:$0xf]
      %v3825 = vld [vmem:[%s3817 + $0x1c] sm:$0xf]
      %v3826 = vld [vmem:[%s3817 + $0x20] sm:$0xf]
      %v3827 = vld [vmem:[%s3817 + $0x24] sm:$0xf]
      %v3828 = vld [vmem:[%s3817 + $0x28] sm:$0xf]
      %v3829 = vld [vmem:[%s3817 + $0x2c] sm:$0xf]
      %v3830 = vld [vmem:[%s3817 + $0x30] sm:$0xf]
      %v3831 = vld [vmem:[%s3817 + $0x34] sm:$0xf]
      %v3832 = vld [vmem:[%s3817 + $0x38] sm:$0xf]
      %v3833 = vld [vmem:[%s3817 + $0x3c] sm:$0xf]
      %v3834 = vunpack.c.l.b16 %v3708
      %v3835 = vunpack.c.l.b16 %v3711
      %v3836 = vunpack.c.l.b16 %v3715
      %v3837 = vunpack.c.l.b16 %v3718
      %v3838 = vunpack.c.l.b16 %v3722
      %v3839 = vunpack.c.l.b16 %v3725
      %v3840 = vunpack.c.l.b16 %v3729
      %v3841 = vunpack.c.l.b16 %v3732
      %v3842 = vunpack.c.l.b16 %v3736
      %v3843 = vunpack.c.l.b16 %v3739
      %v3844 = vunpack.c.l.b16 %v3743
      %v3845 = vunpack.c.l.b16 %v3746
      %v3846 = vunpack.c.l.b16 %v3750
      %v3847 = vunpack.c.l.b16 %v3753
      %v3848 = vunpack.c.l.b16 %v3757
      %v3849 = vunpack.c.l.b16 %v3760
      %v3850 = vunpack.c.l.b16 %v3764
      %v3851 = vunpack.c.l.b16 %v3767
      %v3852 = vunpack.c.l.b16 %v3771
      %v3853 = vunpack.c.l.b16 %v3774
      %v3854 = vunpack.c.l.b16 %v3778
      %v3855 = vunpack.c.l.b16 %v3781
      %v3856 = vunpack.c.l.b16 %v3785
      %v3857 = vunpack.c.l.b16 %v3788
      %v3858 = vunpack.c.l.b16 %v3792
      %v3859 = vunpack.c.l.b16 %v3795
      %v3860 = vunpack.c.l.b16 %v3799
      %v3861 = vunpack.c.l.b16 %v3802
      %v3862 = vunpack.c.l.b16 %v3806
      %v3863 = vunpack.c.l.b16 %v3809
      %v3864 = vunpack.c.l.b16 %v3813
      %v3865 = vunpack.c.l.b16 %v3816
      %v3866 = vpack.c.b16 %v3835, %v3834
      %v3867 = vpack.c.b16 %v3837, %v3836
      %v3868 = vpack.c.b16 %v3839, %v3838
      %v3869 = vpack.c.b16 %v3841, %v3840
      %v3870 = vpack.c.b16 %v3843, %v3842
      %v3871 = vpack.c.b16 %v3845, %v3844
      %v3872 = vpack.c.b16 %v3847, %v3846
      %v3873 = vpack.c.b16 %v3849, %v3848
      %v3874 = vpack.c.b16 %v3851, %v3850
      %v3875 = vpack.c.b16 %v3853, %v3852
      %v3876 = vpack.c.b16 %v3855, %v3854
      %v3877 = vpack.c.b16 %v3857, %v3856
      %v3878 = vpack.c.b16 %v3859, %v3858
      %v3879 = vpack.c.b16 %v3861, %v3860
      %v3880 = vpack.c.b16 %v3863, %v3862
      %v3881 = vpack.c.b16 %v3865, %v3864
      %v3914 = vunpack.c.l.b16 %v3818
      %v3915 = vunpack.c.l.b16 %v3819
      %v3916 = vunpack.c.l.b16 %v3820
      %v3917 = vunpack.c.l.b16 %v3821
      %v3918 = vunpack.c.l.b16 %v3822
      %v3919 = vunpack.c.l.b16 %v3823
      %v3920 = vunpack.c.l.b16 %v3824
      %v3921 = vunpack.c.l.b16 %v3825
      %v3922 = vunpack.c.l.b16 %v3826
      %v3923 = vunpack.c.l.b16 %v3827
      %v3924 = vunpack.c.l.b16 %v3828
      %v3925 = vunpack.c.l.b16 %v3829
      %v3926 = vunpack.c.l.b16 %v3830
      %v3927 = vunpack.c.l.b16 %v3831
      %v3928 = vunpack.c.l.b16 %v3832
      %v3929 = vunpack.c.l.b16 %v3833
      %v3930 = vpack.c.b16 %v3915, %v3914
      %v3931 = vpack.c.b16 %v3917, %v3916
      %v3932 = vpack.c.b16 %v3919, %v3918
      %v3933 = vpack.c.b16 %v3921, %v3920
      %v3934 = vpack.c.b16 %v3923, %v3922
      %v3935 = vpack.c.b16 %v3925, %v3924
      %v3936 = vpack.c.b16 %v3927, %v3926
      %v3937 = vpack.c.b16 %v3929, %v3928
      %3946 = vmatprep.subr.bf16.mxu0 0
      %3947 = vmatpush1.bf16.msra.mxu0 %v3930
      %3948 = vmatprep.subr.bf16.mxu0 0
      %3949 = vmatpush1.bf16.msra.mxu0 %v3931
      %3950 = vmatprep.subr.bf16.mxu0 0
      %3951 = vmatpush1.bf16.msra.mxu0 %v3932
      %3952 = vmatprep.subr.bf16.mxu0 0
      %3953 = vmatpush1.bf16.msra.mxu0 %v3933
      %3954 = vmatprep.subr.bf16.mxu0 0
      %3955 = vmatpush1.bf16.msra.mxu0 %v3934
      %3956 = vmatprep.subr.bf16.mxu0 0
      %3957 = vmatpush1.bf16.msra.mxu0 %v3935
      %3958 = vmatprep.subr.bf16.mxu0 0
      %3959 = vmatpush1.bf16.msra.mxu0 %v3936
      %3960 = vmatprep.subr.bf16.mxu0 0
      %3961 = vmatpush1.bf16.msra.mxu0 %v3937
      %3962 = vmatprep.subr.bf16.mxu0 0
      %3963 = vmatpush1.bf16.msra.mxu0 0
      %3964 = vmatprep.subr.bf16.mxu0 0
      %3965 = vmatpush1.bf16.msra.mxu0 0
      %3966 = vmatprep.subr.bf16.mxu0 0
      %3967 = vmatpush1.bf16.msra.mxu0 0
      %3968 = vmatprep.subr.bf16.mxu0 0
      %3969 = vmatpush1.bf16.msra.mxu0 0
      %3970 = vmatprep.subr.bf16.mxu0 0
      %3971 = vmatpush1.bf16.msra.mxu0 0
      %3972 = vmatprep.subr.bf16.mxu0 0
      %3973 = vmatpush1.bf16.msra.mxu0 0
      %3974 = vmatprep.subr.bf16.mxu0 0
      %3975 = vmatpush1.bf16.msra.mxu0 0
      %3976 = vmatprep.subr.bf16.mxu0 0
      %3977 = vmatpush1.bf16.msra.mxu0 0
      %3978 = vmatprep.mubr.bf16.mxu0 0
      %3979 = vmatmul.mubr.bf16.gmra.mrb[0].mxu0 %v3866
      %v3980 = vpop.f32.mrb[0].mxu0
      %v3981 = vadd.f32 0.0, %v3980
      %v3982 = vpop.f32.mrb[0].mxu0
      %v3983 = vpop.f32.mrb[0].mxu0
      %v3984 = vadd.f32 0.0, %v3983
      %v3985 = vpop.f32.mrb[0].mxu0
      %3986 = vmatprep.mubr.bf16.mxu0 0
      %3987 = vmatmul.mubr.bf16.gmra.mrb[0].mxu0 %v3867
      %v3988 = vpop.f32.mrb[0].mxu0
      %v3989 = vadd.f32 0.0, %v3988
      %v3990 = vpop.f32.mrb[0].mxu0
      %v3991 = vpop.f32.mrb[0].mxu0
      %v3992 = vadd.f32 0.0, %v3991
      %v3993 = vpop.f32.mrb[0].mxu0
      %3994 = vmatprep.mubr.bf16.mxu0 0
      %3995 = vmatmul.mubr.bf16.gmra.mrb[0].mxu0 %v3868
      %v3996 = vpop.f32.mrb[0].mxu0
      %v3997 = vadd.f32 0.0, %v3996
      %v3998 = vpop.f32.mrb[0].mxu0
      %v3999 = vpop.f32.mrb[0].mxu0
      %v4000 = vadd.f32 0.0, %v3999
      %v4001 = vpop.f32.mrb[0].mxu0
      %4002 = vmatprep.mubr.bf16.mxu0 0
      %4003 = vmatmul.mubr.bf16.gmra.mrb[0].mxu0 %v3869
      %v4004 = vpop.f32.mrb[0].mxu0
      %v4005 = vadd.f32 0.0, %v4004
      %v4006 = vpop.f32.mrb[0].mxu0
      %v4007 = vpop.f32.mrb[0].mxu0
      %v4008 = vadd.f32 0.0, %v4007
      %v4009 = vpop.f32.mrb[0].mxu0
      %4010 = vmatprep.mubr.bf16.mxu0 0
      %4011 = vmatmul.mubr.bf16.gmra.mrb[0].mxu0 %v3870
      %v4012 = vpop.f32.mrb[0].mxu0
      %v4013 = vadd.f32 0.0, %v4012
      %v4014 = vpop.f32.mrb[0].mxu0
      %v4015 = vpop.f32.mrb[0].mxu0
      %v4016 = vadd.f32 0.0, %v4015
      %v4017 = vpop.f32.mrb[0].mxu0
      %4018 = vmatprep.mubr.bf16.mxu0 0
      %4019 = vmatmul.mubr.bf16.gmra.mrb[0].mxu0 %v3871
      %v4020 = vpop.f32.mrb[0].mxu0
      %v4021 = vadd.f32 0.0, %v4020
      %v4022 = vpop.f32.mrb[0].mxu0
      %v4023 = vpop.f32.mrb[0].mxu0
      %v4024 = vadd.f32 0.0, %v4023
      %v4025 = vpop.f32.mrb[0].mxu0
      %4026 = vmatprep.mubr.bf16.mxu0 0
      %4027 = vmatmul.mubr.bf16.gmra.mrb[0].mxu0 %v3872
      %v4028 = vpop.f32.mrb[0].mxu0
      %v4029 = vadd.f32 0.0, %v4028
      %v4030 = vpop.f32.mrb[0].mxu0
      %v4031 = vpop.f32.mrb[0].mxu0
      %v4032 = vadd.f32 0.0, %v4031
      %v4033 = vpop.f32.mrb[0].mxu0
      %4034 = vmatprep.mubr.bf16.mxu0 0
      %4035 = vmatmul.mubr.bf16.gmra.mrb[0].mxu0 %v3873
      %v4036 = vpop.f32.mrb[0].mxu0
      %v4037 = vadd.f32 0.0, %v4036
      %v4038 = vpop.f32.mrb[0].mxu0
      %v4039 = vpop.f32.mrb[0].mxu0
      %v4040 = vadd.f32 0.0, %v4039
      %v4041 = vpop.f32.mrb[0].mxu0
      %4042 = vmatprep.mubr.bf16.mxu0 0
      %4043 = vmatmul.mubr.bf16.gmra.mrb[0].mxu0 %v3874
      %v4044 = vpop.f32.mrb[0].mxu0
      %v4045 = vadd.f32 0.0, %v4044
      %v4046 = vpop.f32.mrb[0].mxu0
      %v4047 = vpop.f32.mrb[0].mxu0
      %v4048 = vadd.f32 0.0, %v4047
      %v4049 = vpop.f32.mrb[0].mxu0
      %4050 = vmatprep.mubr.bf16.mxu0 0
      %4051 = vmatmul.mubr.bf16.gmra.mrb[0].mxu0 %v3875
      %v4052 = vpop.f32.mrb[0].mxu0
      %v4053 = vadd.f32 0.0, %v4052
      %v4054 = vpop.f32.mrb[0].mxu0
      %v4055 = vpop.f32.mrb[0].mxu0
      %v4056 = vadd.f32 0.0, %v4055
      %v4057 = vpop.f32.mrb[0].mxu0
      %4058 = vmatprep.mubr.bf16.mxu0 0
      %4059 = vmatmul.mubr.bf16.gmra.mrb[0].mxu0 %v3876
      %v4060 = vpop.f32.mrb[0].mxu0
      %v4061 = vadd.f32 0.0, %v4060
      %v4062 = vpop.f32.mrb[0].mxu0
      %v4063 = vpop.f32.mrb[0].mxu0
      %v4064 = vadd.f32 0.0, %v4063
      %v4065 = vpop.f32.mrb[0].mxu0
      %4066 = vmatprep.mubr.bf16.mxu0 0
      %4067 = vmatmul.mubr.bf16.gmra.mrb[0].mxu0 %v3877
      %v4068 = vpop.f32.mrb[0].mxu0
      %v4069 = vadd.f32 0.0, %v4068
      %v4070 = vpop.f32.mrb[0].mxu0
      %v4071 = vpop.f32.mrb[0].mxu0
      %v4072 = vadd.f32 0.0, %v4071
      %v4073 = vpop.f32.mrb[0].mxu0
      %4074 = vmatprep.mubr.bf16.mxu0 0
      %4075 = vmatmul.mubr.bf16.gmra.mrb[0].mxu0 %v3878
      %v4076 = vpop.f32.mrb[0].mxu0
      %v4077 = vadd.f32 0.0, %v4076
      %v4078 = vpop.f32.mrb[0].mxu0
      %v4079 = vpop.f32.mrb[0].mxu0
      %v4080 = vadd.f32 0.0, %v4079
      %v4081 = vpop.f32.mrb[0].mxu0
      %4082 = vmatprep.mubr.bf16.mxu0 0
      %4083 = vmatmul.mubr.bf16.gmra.mrb[0].mxu0 %v3879
      %v4084 = vpop.f32.mrb[0].mxu0
      %v4085 = vadd.f32 0.0, %v4084
      %v4086 = vpop.f32.mrb[0].mxu0
      %v4087 = vpop.f32.mrb[0].mxu0
      %v4088 = vadd.f32 0.0, %v4087
      %v4089 = vpop.f32.mrb[0].mxu0
      %4090 = vmatprep.mubr.bf16.mxu0 0
      %4091 = vmatmul.mubr.bf16.gmra.mrb[0].mxu0 %v3880
      %v4092 = vpop.f32.mrb[0].mxu0
      %v4093 = vadd.f32 0.0, %v4092
      %v4094 = vpop.f32.mrb[0].mxu0
      %v4095 = vpop.f32.mrb[0].mxu0
      %v4096 = vadd.f32 0.0, %v4095
      %v4097 = vpop.f32.mrb[0].mxu0
      %4098 = vmatprep.mubr.bf16.mxu0 0
      %4099 = vmatmul.mubr.bf16.gmra.mrb[0].mxu0 %v3881
      %v4100 = vpop.f32.mrb[0].mxu0
      %v4101 = vadd.f32 0.0, %v4100
      %v4102 = vpop.f32.mrb[0].mxu0
      %v4103 = vpop.f32.mrb[0].mxu0
      %v4104 = vadd.f32 0.0, %v4103
      %v4105 = vpop.f32.mrb[0].mxu0
      %4106 = vdwg.mxu0
      %v4107 = vadd.f32 %v3609, %v3981
      %v4108 = vadd.f32 %v3610, %v3984
      %v4109 = vadd.f32 %v3611, %v3989
      %v4110 = vadd.f32 %v3612, %v3992
      %v4111 = vadd.f32 %v3613, %v3997
      %v4112 = vadd.f32 %v3614, %v4000
      %v4113 = vadd.f32 %v3615, %v4005
      %v4114 = vadd.f32 %v3616, %v4008
      %v4115 = vadd.f32 %v3617, %v4013
      %v4116 = vadd.f32 %v3618, %v4016
      %v4117 = vadd.f32 %v3619, %v4021
      %v4118 = vadd.f32 %v3620, %v4024
      %v4119 = vadd.f32 %v3621, %v4029
      %v4120 = vadd.f32 %v3622, %v4032
      %v4121 = vadd.f32 %v3623, %v4037
      %v4122 = vadd.f32 %v3624, %v4040
      %v4123 = vadd.f32 %v3625, %v4045
      %v4124 = vadd.f32 %v3626, %v4048
      %v4125 = vadd.f32 %v3627, %v4053
      %v4126 = vadd.f32 %v3628, %v4056
      %v4127 = vadd.f32 %v3629, %v4061
      %v4128 = vadd.f32 %v3630, %v4064
      %v4129 = vadd.f32 %v3631, %v4069
      %v4130 = vadd.f32 %v3632, %v4072
      %v4131 = vadd.f32 %v3633, %v4077
      %v4132 = vadd.f32 %v3634, %v4080
      %v4133 = vadd.f32 %v3635, %v4085
      %v4134 = vadd.f32 %v3636, %v4088
      %v4135 = vadd.f32 %v3637, %v4093
      %v4136 = vadd.f32 %v3638, %v4096
      %v4137 = vadd.f32 %v3639, %v4101
      %v4138 = vadd.f32 %v3640, %v4104
      %s4139 = scalar_lea.vmem [#allocation2], 24
      %v4140 = vld [vmem:[%s4139] sm:$0xf]
      %v4141 = vld [vmem:[%s4139 + $0x4] sm:$0xf]
      %v4142 = vld [vmem:[%s4139 + $0xc] sm:$0xf]
      %v4143 = vld [vmem:[%s4139 + $0x10] sm:$0xf]
      %v4144 = vld [vmem:[%s4139 + $0x18] sm:$0xf]
      %v4145 = vld [vmem:[%s4139 + $0x1c] sm:$0xf]
      %v4146 = vld [vmem:[%s4139 + $0x24] sm:$0xf]
      %v4147 = vld [vmem:[%s4139 + $0x28] sm:$0xf]
      %v4148 = vld [vmem:[%s4139 + $0x30] sm:$0xf]
      %v4149 = vld [vmem:[%s4139 + $0x34] sm:$0xf]
      %v4150 = vld [vmem:[%s4139 + $0x3c] sm:$0xf]
      %v4151 = vld [vmem:[%s4139 + $0x40] sm:$0xf]
      %v4152 = vld [vmem:[%s4139 + $0x48] sm:$0xf]
      %v4153 = vld [vmem:[%s4139 + $0x4c] sm:$0xf]
      %v4154 = vld [vmem:[%s4139 + $0x54] sm:$0xf]
      %v4155 = vld [vmem:[%s4139 + $0x58] sm:$0xf]
      %v4156 = vld [vmem:[%s4139 + $0x60] sm:$0xf]
      %v4157 = vld [vmem:[%s4139 + $0x64] sm:$0xf]
      %v4158 = vld [vmem:[%s4139 + $0x6c] sm:$0xf]
      %v4159 = vld [vmem:[%s4139 + $0x70] sm:$0xf]
      %v4160 = vld [vmem:[%s4139 + $0x78] sm:$0xf]
      %v4161 = vld [vmem:[%s4139 + $0x7c] sm:$0xf]
      %v4162 = vld [vmem:[%s4139 + $0x84] sm:$0xf]
      %v4163 = vld [vmem:[%s4139 + $0x88] sm:$0xf]
      %v4164 = vld [vmem:[%s4139 + $0x90] sm:$0xf]
      %v4165 = vld [vmem:[%s4139 + $0x94] sm:$0xf]
      %v4166 = vld [vmem:[%s4139 + $0x9c] sm:$0xf]
      %v4167 = vld [vmem:[%s4139 + $0xa0] sm:$0xf]
      %v4168 = vld [vmem:[%s4139 + $0xa8] sm:$0xf]
      %v4169 = vld [vmem:[%s4139 + $0xac] sm:$0xf]
      %v4170 = vld [vmem:[%s4139 + $0xb4] sm:$0xf]
      %v4171 = vld [vmem:[%s4139 + $0xb8] sm:$0xf]
      %s4172 = scalar_lea.vmem %s1, 384
      %v4173 = vld [vmem:[%s4172] sm:$0xf]
      %v4174 = vld [vmem:[%s4172 + $0x4] sm:$0xf]
      %v4175 = vld [vmem:[%s4172 + $0x8] sm:$0xf]
      %v4176 = vld [vmem:[%s4172 + $0xc] sm:$0xf]
      %v4177 = vld [vmem:[%s4172 + $0x10] sm:$0xf]
      %v4178 = vld [vmem:[%s4172 + $0x14] sm:$0xf]
      %v4179 = vld [vmem:[%s4172 + $0x18] sm:$0xf]
      %v4180 = vld [vmem:[%s4172 + $0x1c] sm:$0xf]
      %v4181 = vld [vmem:[%s4172 + $0x20] sm:$0xf]
      %v4182 = vld [vmem:[%s4172 + $0x24] sm:$0xf]
      %v4183 = vld [vmem:[%s4172 + $0x28] sm:$0xf]
      %v4184 = vld [vmem:[%s4172 + $0x2c] sm:$0xf]
      %v4185 = vld [vmem:[%s4172 + $0x30] sm:$0xf]
      %v4186 = vld [vmem:[%s4172 + $0x34] sm:$0xf]
      %v4187 = vld [vmem:[%s4172 + $0x38] sm:$0xf]
      %v4188 = vld [vmem:[%s4172 + $0x3c] sm:$0xf]
      %v4221 = vunpack.c.l.b16 %v4140
      %v4222 = vunpack.c.l.b16 %v4141
      %v4223 = vunpack.c.l.b16 %v4142
      %v4224 = vunpack.c.l.b16 %v4143
      %v4225 = vunpack.c.l.b16 %v4144
      %v4226 = vunpack.c.l.b16 %v4145
      %v4227 = vunpack.c.l.b16 %v4146
      %v4228 = vunpack.c.l.b16 %v4147
      %v4229 = vunpack.c.l.b16 %v4148
      %v4230 = vunpack.c.l.b16 %v4149
      %v4231 = vunpack.c.l.b16 %v4150
      %v4232 = vunpack.c.l.b16 %v4151
      %v4233 = vunpack.c.l.b16 %v4152
      %v4234 = vunpack.c.l.b16 %v4153
      %v4235 = vunpack.c.l.b16 %v4154
      %v4236 = vunpack.c.l.b16 %v4155
      %v4237 = vunpack.c.l.b16 %v4156
      %v4238 = vunpack.c.l.b16 %v4157
      %v4239 = vunpack.c.l.b16 %v4158
      %v4240 = vunpack.c.l.b16 %v4159
      %v4241 = vunpack.c.l.b16 %v4160
      %v4242 = vunpack.c.l.b16 %v4161
      %v4243 = vunpack.c.l.b16 %v4162
      %v4244 = vunpack.c.l.b16 %v4163
      %v4245 = vunpack.c.l.b16 %v4164
      %v4246 = vunpack.c.l.b16 %v4165
      %v4247 = vunpack.c.l.b16 %v4166
      %v4248 = vunpack.c.l.b16 %v4167
      %v4249 = vunpack.c.l.b16 %v4168
      %v4250 = vunpack.c.l.b16 %v4169
      %v4251 = vunpack.c.l.b16 %v4170
      %v4252 = vunpack.c.l.b16 %v4171
      %v4253 = vpack.c.b16 %v4222, %v4221
      %v4254 = vpack.c.b16 %v4224, %v4223
      %v4255 = vpack.c.b16 %v4226, %v4225
      %v4256 = vpack.c.b16 %v4228, %v4227
      %v4257 = vpack.c.b16 %v4230, %v4229
      %v4258 = vpack.c.b16 %v4232, %v4231
      %v4259 = vpack.c.b16 %v4234, %v4233
      %v4260 = vpack.c.b16 %v4236, %v4235
      %v4261 = vpack.c.b16 %v4238, %v4237
      %v4262 = vpack.c.b16 %v4240, %v4239
      %v4263 = vpack.c.b16 %v4242, %v4241
      %v4264 = vpack.c.b16 %v4244, %v4243
      %v4265 = vpack.c.b16 %v4246, %v4245
      %v4266 = vpack.c.b16 %v4248, %v4247
      %v4267 = vpack.c.b16 %v4250, %v4249
      %v4268 = vpack.c.b16 %v4252, %v4251
      %v4301 = vunpack.c.l.b16 %v4173
      %v4302 = vunpack.c.l.b16 %v4174
      %v4303 = vunpack.c.l.b16 %v4175
      %v4304 = vunpack.c.l.b16 %v4176
      %v4305 = vunpack.c.l.b16 %v4177
      %v4306 = vunpack.c.l.b16 %v4178
      %v4307 = vunpack.c.l.b16 %v4179
      %v4308 = vunpack.c.l.b16 %v4180
      %v4309 = vunpack.c.l.b16 %v4181
      %v4310 = vunpack.c.l.b16 %v4182
      %v4311 = vunpack.c.l.b16 %v4183
      %v4312 = vunpack.c.l.b16 %v4184
      %v4313 = vunpack.c.l.b16 %v4185
      %v4314 = vunpack.c.l.b16 %v4186
      %v4315 = vunpack.c.l.b16 %v4187
      %v4316 = vunpack.c.l.b16 %v4188
      %v4317 = vpack.c.b16 %v4302, %v4301
      %v4318 = vpack.c.b16 %v4304, %v4303
      %v4319 = vpack.c.b16 %v4306, %v4305
      %v4320 = vpack.c.b16 %v4308, %v4307
      %v4321 = vpack.c.b16 %v4310, %v4309
      %v4322 = vpack.c.b16 %v4312, %v4311
      %v4323 = vpack.c.b16 %v4314, %v4313
      %v4324 = vpack.c.b16 %v4316, %v4315
      %4333 = vmatprep.subr.bf16.mxu0 0
      %4334 = vmatpush1.bf16.msra.mxu0 %v4317
      %4335 = vmatprep.subr.bf16.mxu0 0
      %4336 = vmatpush1.bf16.msra.mxu0 %v4318
      %4337 = vmatprep.subr.bf16.mxu0 0
      %4338 = vmatpush1.bf16.msra.mxu0 %v4319
      %4339 = vmatprep.subr.bf16.mxu0 0
      %4340 = vmatpush1.bf16.msra.mxu0 %v4320
      %4341 = vmatprep.subr.bf16.mxu0 0
      %4342 = vmatpush1.bf16.msra.mxu0 %v4321
      %4343 = vmatprep.subr.bf16.mxu0 0
      %4344 = vmatpush1.bf16.msra.mxu0 %v4322
      %4345 = vmatprep.subr.bf16.mxu0 0
      %4346 = vmatpush1.bf16.msra.mxu0 %v4323
      %4347 = vmatprep.subr.bf16.mxu0 0
      %4348 = vmatpush1.bf16.msra.mxu0 %v4324
      %4349 = vmatprep.subr.bf16.mxu0 0
      %4350 = vmatpush1.bf16.msra.mxu0 0
      %4351 = vmatprep.subr.bf16.mxu0 0
      %4352 = vmatpush1.bf16.msra.mxu0 0
      %4353 = vmatprep.subr.bf16.mxu0 0
      %4354 = vmatpush1.bf16.msra.mxu0 0
      %4355 = vmatprep.subr.bf16.mxu0 0
      %4356 = vmatpush1.bf16.msra.mxu0 0
      %4357 = vmatprep.subr.bf16.mxu0 0
      %4358 = vmatpush1.bf16.msra.mxu0 0
      %4359 = vmatprep.subr.bf16.mxu0 0
      %4360 = vmatpush1.bf16.msra.mxu0 0
      %4361 = vmatprep.subr.bf16.mxu0 0
      %4362 = vmatpush1.bf16.msra.mxu0 0
      %4363 = vmatprep.subr.bf16.mxu0 0
      %4364 = vmatpush1.bf16.msra.mxu0 0
      %4365 = vmatprep.mubr.bf16.mxu0 0
      %4366 = vmatmul.mubr.bf16.gmra.mrb[0].mxu0 %v4253
      %v4367 = vpop.f32.mrb[0].mxu0
      %v4368 = vadd.f32 0.0, %v4367
      %v4369 = vpop.f32.mrb[0].mxu0
      %v4370 = vpop.f32.mrb[0].mxu0
      %v4371 = vadd.f32 0.0, %v4370
      %v4372 = vpop.f32.mrb[0].mxu0
      %4373 = vmatprep.mubr.bf16.mxu0 0
      %4374 = vmatmul.mubr.bf16.gmra.mrb[0].mxu0 %v4254
      %v4375 = vpop.f32.mrb[0].mxu0
      %v4376 = vadd.f32 0.0, %v4375
      %v4377 = vpop.f32.mrb[0].mxu0
      %v4378 = vpop.f32.mrb[0].mxu0
      %v4379 = vadd.f32 0.0, %v4378
      %v4380 = vpop.f32.mrb[0].mxu0
      %4381 = vmatprep.mubr.bf16.mxu0 0
      %4382 = vmatmul.mubr.bf16.gmra.mrb[0].mxu0 %v4255
      %v4383 = vpop.f32.mrb[0].mxu0
      %v4384 = vadd.f32 0.0, %v4383
      %v4385 = vpop.f32.mrb[0].mxu0
      %v4386 = vpop.f32.mrb[0].mxu0
      %v4387 = vadd.f32 0.0, %v4386
      %v4388 = vpop.f32.mrb[0].mxu0
      %4389 = vmatprep.mubr.bf16.mxu0 0
      %4390 = vmatmul.mubr.bf16.gmra.mrb[0].mxu0 %v4256
      %v4391 = vpop.f32.mrb[0].mxu0
      %v4392 = vadd.f32 0.0, %v4391
      %v4393 = vpop.f32.mrb[0].mxu0
      %v4394 = vpop.f32.mrb[0].mxu0
      %v4395 = vadd.f32 0.0, %v4394
      %v4396 = vpop.f32.mrb[0].mxu0
      %4397 = vmatprep.mubr.bf16.mxu0 0
      %4398 = vmatmul.mubr.bf16.gmra.mrb[0].mxu0 %v4257
      %v4399 = vpop.f32.mrb[0].mxu0
      %v4400 = vadd.f32 0.0, %v4399
      %v4401 = vpop.f32.mrb[0].mxu0
      %v4402 = vpop.f32.mrb[0].mxu0
      %v4403 = vadd.f32 0.0, %v4402
      %v4404 = vpop.f32.mrb[0].mxu0
      %4405 = vmatprep.mubr.bf16.mxu0 0
      %4406 = vmatmul.mubr.bf16.gmra.mrb[0].mxu0 %v4258
      %v4407 = vpop.f32.mrb[0].mxu0
      %v4408 = vadd.f32 0.0, %v4407
      %v4409 = vpop.f32.mrb[0].mxu0
      %v4410 = vpop.f32.mrb[0].mxu0
      %v4411 = vadd.f32 0.0, %v4410
      %v4412 = vpop.f32.mrb[0].mxu0
      %4413 = vmatprep.mubr.bf16.mxu0 0
      %4414 = vmatmul.mubr.bf16.gmra.mrb[0].mxu0 %v4259
      %v4415 = vpop.f32.mrb[0].mxu0
      %v4416 = vadd.f32 0.0, %v4415
      %v4417 = vpop.f32.mrb[0].mxu0
      %v4418 = vpop.f32.mrb[0].mxu0
      %v4419 = vadd.f32 0.0, %v4418
      %v4420 = vpop.f32.mrb[0].mxu0
      %4421 = vmatprep.mubr.bf16.mxu0 0
      %4422 = vmatmul.mubr.bf16.gmra.mrb[0].mxu0 %v4260
      %v4423 = vpop.f32.mrb[0].mxu0
      %v4424 = vadd.f32 0.0, %v4423
      %v4425 = vpop.f32.mrb[0].mxu0
      %v4426 = vpop.f32.mrb[0].mxu0
      %v4427 = vadd.f32 0.0, %v4426
      %v4428 = vpop.f32.mrb[0].mxu0
      %4429 = vmatprep.mubr.bf16.mxu0 0
      %4430 = vmatmul.mubr.bf16.gmra.mrb[0].mxu0 %v4261
      %v4431 = vpop.f32.mrb[0].mxu0
      %v4432 = vadd.f32 0.0, %v4431
      %v4433 = vpop.f32.mrb[0].mxu0
      %v4434 = vpop.f32.mrb[0].mxu0
      %v4435 = vadd.f32 0.0, %v4434
      %v4436 = vpop.f32.mrb[0].mxu0
      %4437 = vmatprep.mubr.bf16.mxu0 0
      %4438 = vmatmul.mubr.bf16.gmra.mrb[0].mxu0 %v4262
      %v4439 = vpop.f32.mrb[0].mxu0
      %v4440 = vadd.f32 0.0, %v4439
      %v4441 = vpop.f32.mrb[0].mxu0
      %v4442 = vpop.f32.mrb[0].mxu0
      %v4443 = vadd.f32 0.0, %v4442
      %v4444 = vpop.f32.mrb[0].mxu0
      %4445 = vmatprep.mubr.bf16.mxu0 0
      %4446 = vmatmul.mubr.bf16.gmra.mrb[0].mxu0 %v4263
      %v4447 = vpop.f32.mrb[0].mxu0
      %v4448 = vadd.f32 0.0, %v4447
      %v4449 = vpop.f32.mrb[0].mxu0
      %v4450 = vpop.f32.mrb[0].mxu0
      %v4451 = vadd.f32 0.0, %v4450
      %v4452 = vpop.f32.mrb[0].mxu0
      %4453 = vmatprep.mubr.bf16.mxu0 0
      %4454 = vmatmul.mubr.bf16.gmra.mrb[0].mxu0 %v4264
      %v4455 = vpop.f32.mrb[0].mxu0
      %v4456 = vadd.f32 0.0, %v4455
      %v4457 = vpop.f32.mrb[0].mxu0
      %v4458 = vpop.f32.mrb[0].mxu0
      %v4459 = vadd.f32 0.0, %v4458
      %v4460 = vpop.f32.mrb[0].mxu0
      %4461 = vmatprep.mubr.bf16.mxu0 0
      %4462 = vmatmul.mubr.bf16.gmra.mrb[0].mxu0 %v4265
      %v4463 = vpop.f32.mrb[0].mxu0
      %v4464 = vadd.f32 0.0, %v4463
      %v4465 = vpop.f32.mrb[0].mxu0
      %v4466 = vpop.f32.mrb[0].mxu0
      %v4467 = vadd.f32 0.0, %v4466
      %v4468 = vpop.f32.mrb[0].mxu0
      %4469 = vmatprep.mubr.bf16.mxu0 0
      %4470 = vmatmul.mubr.bf16.gmra.mrb[0].mxu0 %v4266
      %v4471 = vpop.f32.mrb[0].mxu0
      %v4472 = vadd.f32 0.0, %v4471
      %v4473 = vpop.f32.mrb[0].mxu0
      %v4474 = vpop.f32.mrb[0].mxu0
      %v4475 = vadd.f32 0.0, %v4474
      %v4476 = vpop.f32.mrb[0].mxu0
      %4477 = vmatprep.mubr.bf16.mxu0 0
      %4478 = vmatmul.mubr.bf16.gmra.mrb[0].mxu0 %v4267
      %v4479 = vpop.f32.mrb[0].mxu0
      %v4480 = vadd.f32 0.0, %v4479
      %v4481 = vpop.f32.mrb[0].mxu0
      %v4482 = vpop.f32.mrb[0].mxu0
      %v4483 = vadd.f32 0.0, %v4482
      %v4484 = vpop.f32.mrb[0].mxu0
      %4485 = vmatprep.mubr.bf16.mxu0 0
      %4486 = vmatmul.mubr.bf16.gmra.mrb[0].mxu0 %v4268
      %v4487 = vpop.f32.mrb[0].mxu0
      %v4488 = vadd.f32 0.0, %v4487
      %v4489 = vpop.f32.mrb[0].mxu0
      %v4490 = vpop.f32.mrb[0].mxu0
      %v4491 = vadd.f32 0.0, %v4490
      %v4492 = vpop.f32.mrb[0].mxu0
      %4493 = vdwg.mxu0
      %v4494 = vadd.f32 %v4107, %v4368
      %v4495 = vadd.f32 %v4108, %v4371
      %v4496 = vadd.f32 %v4109, %v4376
      %v4497 = vadd.f32 %v4110, %v4379
      %v4498 = vadd.f32 %v4111, %v4384
      %v4499 = vadd.f32 %v4112, %v4387
      %v4500 = vadd.f32 %v4113, %v4392
      %v4501 = vadd.f32 %v4114, %v4395
      %v4502 = vadd.f32 %v4115, %v4400
      %v4503 = vadd.f32 %v4116, %v4403
      %v4504 = vadd.f32 %v4117, %v4408
      %v4505 = vadd.f32 %v4118, %v4411
      %v4506 = vadd.f32 %v4119, %v4416
      %v4507 = vadd.f32 %v4120, %v4419
      %v4508 = vadd.f32 %v4121, %v4424
      %v4509 = vadd.f32 %v4122, %v4427
      %v4510 = vadd.f32 %v4123, %v4432
      %v4511 = vadd.f32 %v4124, %v4435
      %v4512 = vadd.f32 %v4125, %v4440
      %v4513 = vadd.f32 %v4126, %v4443
      %v4514 = vadd.f32 %v4127, %v4448
      %v4515 = vadd.f32 %v4128, %v4451
      %v4516 = vadd.f32 %v4129, %v4456
      %v4517 = vadd.f32 %v4130, %v4459
      %v4518 = vadd.f32 %v4131, %v4464
      %v4519 = vadd.f32 %v4132, %v4467
      %v4520 = vadd.f32 %v4133, %v4472
      %v4521 = vadd.f32 %v4134, %v4475
      %v4522 = vadd.f32 %v4135, %v4480
      %v4523 = vadd.f32 %v4136, %v4483
      %v4524 = vadd.f32 %v4137, %v4488
      %v4525 = vadd.f32 %v4138, %v4491
      %v4526 = vld [vmem:[%s4139] sm:$0xf]
      %v4527 = vld [vmem:[%s4139 + $0x4] sm:$0xf]
      %v4528 = vld [vmem:[%s4139 + $0x8] sm:$0x1]
      %v4529 = vld [vmem:[%s4139 + $0xc] sm:$0xf]
      %v4530 = vld [vmem:[%s4139 + $0x10] sm:$0xf]
      %v4531 = vld [vmem:[%s4139 + $0x14] sm:$0x1]
      %v4532 = vld [vmem:[%s4139 + $0x18] sm:$0xf]
      %v4533 = vld [vmem:[%s4139 + $0x1c] sm:$0xf]
      %v4534 = vld [vmem:[%s4139 + $0x20] sm:$0x1]
      %v4535 = vld [vmem:[%s4139 + $0x24] sm:$0xf]
      %v4536 = vld [vmem:[%s4139 + $0x28] sm:$0xf]
      %v4537 = vld [vmem:[%s4139 + $0x2c] sm:$0x1]
      %v4538 = vld [vmem:[%s4139 + $0x30] sm:$0xf]
      %v4539 = vld [vmem:[%s4139 + $0x34] sm:$0xf]
      %v4540 = vld [vmem:[%s4139 + $0x38] sm:$0x1]
      %v4541 = vld [vmem:[%s4139 + $0x3c] sm:$0xf]
      %v4542 = vld [vmem:[%s4139 + $0x40] sm:$0xf]
      %v4543 = vld [vmem:[%s4139 + $0x44] sm:$0x1]
      %v4544 = vld [vmem:[%s4139 + $0x48] sm:$0xf]
      %v4545 = vld [vmem:[%s4139 + $0x4c] sm:$0xf]
      %v4546 = vld [vmem:[%s4139 + $0x50] sm:$0x1]
      %v4547 = vld [vmem:[%s4139 + $0x54] sm:$0xf]
      %v4548 = vld [vmem:[%s4139 + $0x58] sm:$0xf]
      %v4549 = vld [vmem:[%s4139 + $0x5c] sm:$0x1]
      %v4550 = vld [vmem:[%s4139 + $0x60] sm:$0xf]
      %v4551 = vld [vmem:[%s4139 + $0x64] sm:$0xf]
      %v4552 = vld [vmem:[%s4139 + $0x68] sm:$0x1]
      %v4553 = vld [vmem:[%s4139 + $0x6c] sm:$0xf]
      %v4554 = vld [vmem:[%s4139 + $0x70] sm:$0xf]
      %v4555 = vld [vmem:[%s4139 + $0x74] sm:$0x1]
      %v4556 = vld [vmem:[%s4139 + $0x78] sm:$0xf]
      %v4557 = vld [vmem:[%s4139 + $0x7c] sm:$0xf]
      %v4558 = vld [vmem:[%s4139 + $0x80] sm:$0x1]
      %v4559 = vld [vmem:[%s4139 + $0x84] sm:$0xf]
      %v4560 = vld [vmem:[%s4139 + $0x88] sm:$0xf]
      %v4561 = vld [vmem:[%s4139 + $0x8c] sm:$0x1]
      %v4562 = vld [vmem:[%s4139 + $0x90] sm:$0xf]
      %v4563 = vld [vmem:[%s4139 + $0x94] sm:$0xf]
      %v4564 = vld [vmem:[%s4139 + $0x98] sm:$0x1]
      %v4565 = vld [vmem:[%s4139 + $0x9c] sm:$0xf]
      %v4566 = vld [vmem:[%s4139 + $0xa0] sm:$0xf]
      %v4567 = vld [vmem:[%s4139 + $0xa4] sm:$0x1]
      %v4568 = vld [vmem:[%s4139 + $0xa8] sm:$0xf]
      %v4569 = vld [vmem:[%s4139 + $0xac] sm:$0xf]
      %v4570 = vld [vmem:[%s4139 + $0xb0] sm:$0x1]
      %v4571 = vld [vmem:[%s4139 + $0xb4] sm:$0xf]
      %v4572 = vld [vmem:[%s4139 + $0xb8] sm:$0xf]
      %v4573 = vld [vmem:[%s4139 + $0xbc] sm:$0x1]
      %v4575 = vshrl.u32 %v4526, 16
      %v4577 = vrot.slane %v4575, 4
      %v4578 = vshll.u32 %v4526, 16
      %v4580 = vrot.slane %v4578, 5
      %v4581 = vor.u32 %v4577, %v4580
      %v4582 = vrot.slane %v4581, 4
      %v4584 = vshll.u32 %v4527, 16
      %v4586 = vrot.slane %v4584, 5
      %v4587 = vsel %vm1036, %v4582, %v4586
      %v4588 = vshrl.u32 %v4527, 16
      %v4590 = vrot.slane %v4588, 4
      %v4591 = vor.u32 %v4590, %v4586
      %v4592 = vrot.slane %v4591, 4
      %v4594 = vshll.u32 %v4528, 16
      %v4596 = vrot.slane %v4594, 5
      %v4597 = vsel %vm1036, %v4592, %v4596
      %v4599 = vshrl.u32 %v4529, 16
      %v4601 = vrot.slane %v4599, 4
      %v4602 = vshll.u32 %v4529, 16
      %v4604 = vrot.slane %v4602, 5
      %v4605 = vor.u32 %v4601, %v4604
      %v4606 = vrot.slane %v4605, 4
      %v4608 = vshll.u32 %v4530, 16
      %v4610 = vrot.slane %v4608, 5
      %v4611 = vsel %vm1036, %v4606, %v4610
      %v4612 = vshrl.u32 %v4530, 16
      %v4614 = vrot.slane %v4612, 4
      %v4615 = vor.u32 %v4614, %v4610
      %v4616 = vrot.slane %v4615, 4
      %v4618 = vshll.u32 %v4531, 16
      %v4620 = vrot.slane %v4618, 5
      %v4621 = vsel %vm1036, %v4616, %v4620
      %v4623 = vshrl.u32 %v4532, 16
      %v4625 = vrot.slane %v4623, 4
      %v4626 = vshll.u32 %v4532, 16
      %v4628 = vrot.slane %v4626, 5
      %v4629 = vor.u32 %v4625, %v4628
      %v4630 = vrot.slane %v4629, 4
      %v4632 = vshll.u32 %v4533, 16
      %v4634 = vrot.slane %v4632, 5
      %v4635 = vsel %vm1036, %v4630, %v4634
      %v4636 = vshrl.u32 %v4533, 16
      %v4638 = vrot.slane %v4636, 4
      %v4639 = vor.u32 %v4638, %v4634
      %v4640 = vrot.slane %v4639, 4
      %v4642 = vshll.u32 %v4534, 16
      %v4644 = vrot.slane %v4642, 5
      %v4645 = vsel %vm1036, %v4640, %v4644
      %v4647 = vshrl.u32 %v4535, 16
      %v4649 = vrot.slane %v4647, 4
      %v4650 = vshll.u32 %v4535, 16
      %v4652 = vrot.slane %v4650, 5
      %v4653 = vor.u32 %v4649, %v4652
      %v4654 = vrot.slane %v4653, 4
      %v4656 = vshll.u32 %v4536, 16
      %v4658 = vrot.slane %v4656, 5
      %v4659 = vsel %vm1036, %v4654, %v4658
      %v4660 = vshrl.u32 %v4536, 16
      %v4662 = vrot.slane %v4660, 4
      %v4663 = vor.u32 %v4662, %v4658
      %v4664 = vrot.slane %v4663, 4
      %v4666 = vshll.u32 %v4537, 16
      %v4668 = vrot.slane %v4666, 5
      %v4669 = vsel %vm1036, %v4664, %v4668
      %v4671 = vshrl.u32 %v4538, 16
      %v4673 = vrot.slane %v4671, 4
      %v4674 = vshll.u32 %v4538, 16
      %v4676 = vrot.slane %v4674, 5
      %v4677 = vor.u32 %v4673, %v4676
      %v4678 = vrot.slane %v4677, 4
      %v4680 = vshll.u32 %v4539, 16
      %v4682 = vrot.slane %v4680, 5
      %v4683 = vsel %vm1036, %v4678, %v4682
      %v4684 = vshrl.u32 %v4539, 16
      %v4686 = vrot.slane %v4684, 4
      %v4687 = vor.u32 %v4686, %v4682
      %v4688 = vrot.slane %v4687, 4
      %v4690 = vshll.u32 %v4540, 16
      %v4692 = vrot.slane %v4690, 5
      %v4693 = vsel %vm1036, %v4688, %v4692
      %v4695 = vshrl.u32 %v4541, 16
      %v4697 = vrot.slane %v4695, 4
      %v4698 = vshll.u32 %v4541, 16
      %v4700 = vrot.slane %v4698, 5
      %v4701 = vor.u32 %v4697, %v4700
      %v4702 = vrot.slane %v4701, 4
      %v4704 = vshll.u32 %v4542, 16
      %v4706 = vrot.slane %v4704, 5
      %v4707 = vsel %vm1036, %v4702, %v4706
      %v4708 = vshrl.u32 %v4542, 16
      %v4710 = vrot.slane %v4708, 4
      %v4711 = vor.u32 %v4710, %v4706
      %v4712 = vrot.slane %v4711, 4
      %v4714 = vshll.u32 %v4543, 16
      %v4716 = vrot.slane %v4714, 5
      %v4717 = vsel %vm1036, %v4712, %v4716
      %v4719 = vshrl.u32 %v4544, 16
      %v4721 = vrot.slane %v4719, 4
      %v4722 = vshll.u32 %v4544, 16
      %v4724 = vrot.slane %v4722, 5
      %v4725 = vor.u32 %v4721, %v4724
      %v4726 = vrot.slane %v4725, 4
      %v4728 = vshll.u32 %v4545, 16
      %v4730 = vrot.slane %v4728, 5
      %v4731 = vsel %vm1036, %v4726, %v4730
      %v4732 = vshrl.u32 %v4545, 16
      %v4734 = vrot.slane %v4732, 4
      %v4735 = vor.u32 %v4734, %v4730
      %v4736 = vrot.slane %v4735, 4
      %v4738 = vshll.u32 %v4546, 16
      %v4740 = vrot.slane %v4738, 5
      %v4741 = vsel %vm1036, %v4736, %v4740
      %v4743 = vshrl.u32 %v4547, 16
      %v4745 = vrot.slane %v4743, 4
      %v4746 = vshll.u32 %v4547, 16
      %v4748 = vrot.slane %v4746, 5
      %v4749 = vor.u32 %v4745, %v4748
      %v4750 = vrot.slane %v4749, 4
      %v4752 = vshll.u32 %v4548, 16
      %v4754 = vrot.slane %v4752, 5
      %v4755 = vsel %vm1036, %v4750, %v4754
      %v4756 = vshrl.u32 %v4548, 16
      %v4758 = vrot.slane %v4756, 4
      %v4759 = vor.u32 %v4758, %v4754
      %v4760 = vrot.slane %v4759, 4
      %v4762 = vshll.u32 %v4549, 16
      %v4764 = vrot.slane %v4762, 5
      %v4765 = vsel %vm1036, %v4760, %v4764
      %v4767 = vshrl.u32 %v4550, 16
      %v4769 = vrot.slane %v4767, 4
      %v4770 = vshll.u32 %v4550, 16
      %v4772 = vrot.slane %v4770, 5
      %v4773 = vor.u32 %v4769, %v4772
      %v4774 = vrot.slane %v4773, 4
      %v4776 = vshll.u32 %v4551, 16
      %v4778 = vrot.slane %v4776, 5
      %v4779 = vsel %vm1036, %v4774, %v4778
      %v4780 = vshrl.u32 %v4551, 16
      %v4782 = vrot.slane %v4780, 4
      %v4783 = vor.u32 %v4782, %v4778
      %v4784 = vrot.slane %v4783, 4
      %v4786 = vshll.u32 %v4552, 16
      %v4788 = vrot.slane %v4786, 5
      %v4789 = vsel %vm1036, %v4784, %v4788
      %v4791 = vshrl.u32 %v4553, 16
      %v4793 = vrot.slane %v4791, 4
      %v4794 = vshll.u32 %v4553, 16
      %v4796 = vrot.slane %v4794, 5
      %v4797 = vor.u32 %v4793, %v4796
      %v4798 = vrot.slane %v4797, 4
      %v4800 = vshll.u32 %v4554, 16
      %v4802 = vrot.slane %v4800, 5
      %v4803 = vsel %vm1036, %v4798, %v4802
      %v4804 = vshrl.u32 %v4554, 16
      %v4806 = vrot.slane %v4804, 4
      %v4807 = vor.u32 %v4806, %v4802
      %v4808 = vrot.slane %v4807, 4
      %v4810 = vshll.u32 %v4555, 16
      %v4812 = vrot.slane %v4810, 5
      %v4813 = vsel %vm1036, %v4808, %v4812
      %v4815 = vshrl.u32 %v4556, 16
      %v4817 = vrot.slane %v4815, 4
      %v4818 = vshll.u32 %v4556, 16
      %v4820 = vrot.slane %v4818, 5
      %v4821 = vor.u32 %v4817, %v4820
      %v4822 = vrot.slane %v4821, 4
      %v4824 = vshll.u32 %v4557, 16
      %v4826 = vrot.slane %v4824, 5
      %v4827 = vsel %vm1036, %v4822, %v4826
      %v4828 = vshrl.u32 %v4557, 16
      %v4830 = vrot.slane %v4828, 4
      %v4831 = vor.u32 %v4830, %v4826
      %v4832 = vrot.slane %v4831, 4
      %v4834 = vshll.u32 %v4558, 16
      %v4836 = vrot.slane %v4834, 5
      %v4837 = vsel %vm1036, %v4832, %v4836
      %v4839 = vshrl.u32 %v4559, 16
      %v4841 = vrot.slane %v4839, 4
      %v4842 = vshll.u32 %v4559, 16
      %v4844 = vrot.slane %v4842, 5
      %v4845 = vor.u32 %v4841, %v4844
      %v4846 = vrot.slane %v4845, 4
      %v4848 = vshll.u32 %v4560, 16
      %v4850 = vrot.slane %v4848, 5
      %v4851 = vsel %vm1036, %v4846, %v4850
      %v4852 = vshrl.u32 %v4560, 16
      %v4854 = vrot.slane %v4852, 4
      %v4855 = vor.u32 %v4854, %v4850
      %v4856 = vrot.slane %v4855, 4
      %v4858 = vshll.u32 %v4561, 16
      %v4860 = vrot.slane %v4858, 5
      %v4861 = vsel %vm1036, %v4856, %v4860
      %v4863 = vshrl.u32 %v4562, 16
      %v4865 = vrot.slane %v4863, 4
      %v4866 = vshll.u32 %v4562, 16
      %v4868 = vrot.slane %v4866, 5
      %v4869 = vor.u32 %v4865, %v4868
      %v4870 = vrot.slane %v4869, 4
      %v4872 = vshll.u32 %v4563, 16
      %v4874 = vrot.slane %v4872, 5
      %v4875 = vsel %vm1036, %v4870, %v4874
      %v4876 = vshrl.u32 %v4563, 16
      %v4878 = vrot.slane %v4876, 4
      %v4879 = vor.u32 %v4878, %v4874
      %v4880 = vrot.slane %v4879, 4
      %v4882 = vshll.u32 %v4564, 16
      %v4884 = vrot.slane %v4882, 5
      %v4885 = vsel %vm1036, %v4880, %v4884
      %v4887 = vshrl.u32 %v4565, 16
      %v4889 = vrot.slane %v4887, 4
      %v4890 = vshll.u32 %v4565, 16
      %v4892 = vrot.slane %v4890, 5
      %v4893 = vor.u32 %v4889, %v4892
      %v4894 = vrot.slane %v4893, 4
      %v4896 = vshll.u32 %v4566, 16
      %v4898 = vrot.slane %v4896, 5
      %v4899 = vsel %vm1036, %v4894, %v4898
      %v4900 = vshrl.u32 %v4566, 16
      %v4902 = vrot.slane %v4900, 4
      %v4903 = vor.u32 %v4902, %v4898
      %v4904 = vrot.slane %v4903, 4
      %v4906 = vshll.u32 %v4567, 16
      %v4908 = vrot.slane %v4906, 5
      %v4909 = vsel %vm1036, %v4904, %v4908
      %v4911 = vshrl.u32 %v4568, 16
      %v4913 = vrot.slane %v4911, 4
      %v4914 = vshll.u32 %v4568, 16
      %v4916 = vrot.slane %v4914, 5
      %v4917 = vor.u32 %v4913, %v4916
      %v4918 = vrot.slane %v4917, 4
      %v4920 = vshll.u32 %v4569, 16
      %v4922 = vrot.slane %v4920, 5
      %v4923 = vsel %vm1036, %v4918, %v4922
      %v4924 = vshrl.u32 %v4569, 16
      %v4926 = vrot.slane %v4924, 4
      %v4927 = vor.u32 %v4926, %v4922
      %v4928 = vrot.slane %v4927, 4
      %v4930 = vshll.u32 %v4570, 16
      %v4932 = vrot.slane %v4930, 5
      %v4933 = vsel %vm1036, %v4928, %v4932
      %v4935 = vshrl.u32 %v4571, 16
      %v4937 = vrot.slane %v4935, 4
      %v4938 = vshll.u32 %v4571, 16
      %v4940 = vrot.slane %v4938, 5
      %v4941 = vor.u32 %v4937, %v4940
      %v4942 = vrot.slane %v4941, 4
      %v4944 = vshll.u32 %v4572, 16
      %v4946 = vrot.slane %v4944, 5
      %v4947 = vsel %vm1036, %v4942, %v4946
      %v4948 = vshrl.u32 %v4572, 16
      %v4950 = vrot.slane %v4948, 4
      %v4951 = vor.u32 %v4950, %v4946
      %v4952 = vrot.slane %v4951, 4
      %v4954 = vshll.u32 %v4573, 16
      %v4956 = vrot.slane %v4954, 5
      %v4957 = vsel %vm1036, %v4952, %v4956
      %s4958 = scalar_lea.vmem %s1, 448
      %v4959 = vld [vmem:[%s4958] sm:$0xf]
      %v4960 = vld [vmem:[%s4958 + $0x4] sm:$0xf]
      %v4961 = vld [vmem:[%s4958 + $0x8] sm:$0xf]
      %v4962 = vld [vmem:[%s4958 + $0xc] sm:$0xf]
      %v4963 = vld [vmem:[%s4958 + $0x10] sm:$0xf]
      %v4964 = vld [vmem:[%s4958 + $0x14] sm:$0xf]
      %v4965 = vld [vmem:[%s4958 + $0x18] sm:$0xf]
      %v4966 = vld [vmem:[%s4958 + $0x1c] sm:$0xf]
      %v4967 = vld [vmem:[%s4958 + $0x20] sm:$0xf]
      %v4968 = vld [vmem:[%s4958 + $0x24] sm:$0xf]
      %v4969 = vld [vmem:[%s4958 + $0x28] sm:$0xf]
      %v4970 = vld [vmem:[%s4958 + $0x2c] sm:$0xf]
      %v4971 = vld [vmem:[%s4958 + $0x30] sm:$0xf]
      %v4972 = vld [vmem:[%s4958 + $0x34] sm:$0xf]
      %v4973 = vld [vmem:[%s4958 + $0x38] sm:$0xf]
      %v4974 = vld [vmem:[%s4958 + $0x3c] sm:$0xf]
      %v4975 = vunpack.c.l.b16 %v4587
      %v4976 = vunpack.c.l.b16 %v4597
      %v4977 = vunpack.c.l.b16 %v4611
      %v4978 = vunpack.c.l.b16 %v4621
      %v4979 = vunpack.c.l.b16 %v4635
      %v4980 = vunpack.c.l.b16 %v4645
      %v4981 = vunpack.c.l.b16 %v4659
      %v4982 = vunpack.c.l.b16 %v4669
      %v4983 = vunpack.c.l.b16 %v4683
      %v4984 = vunpack.c.l.b16 %v4693
      %v4985 = vunpack.c.l.b16 %v4707
      %v4986 = vunpack.c.l.b16 %v4717
      %v4987 = vunpack.c.l.b16 %v4731
      %v4988 = vunpack.c.l.b16 %v4741
      %v4989 = vunpack.c.l.b16 %v4755
      %v4990 = vunpack.c.l.b16 %v4765
      %v4991 = vunpack.c.l.b16 %v4779
      %v4992 = vunpack.c.l.b16 %v4789
      %v4993 = vunpack.c.l.b16 %v4803
      %v4994 = vunpack.c.l.b16 %v4813
      %v4995 = vunpack.c.l.b16 %v4827
      %v4996 = vunpack.c.l.b16 %v4837
      %v4997 = vunpack.c.l.b16 %v4851
      %v4998 = vunpack.c.l.b16 %v4861
      %v4999 = vunpack.c.l.b16 %v4875
      %v5000 = vunpack.c.l.b16 %v4885
      %v5001 = vunpack.c.l.b16 %v4899
      %v5002 = vunpack.c.l.b16 %v4909
      %v5003 = vunpack.c.l.b16 %v4923
      %v5004 = vunpack.c.l.b16 %v4933
      %v5005 = vunpack.c.l.b16 %v4947
      %v5006 = vunpack.c.l.b16 %v4957
      %v5007 = vpack.c.b16 %v4976, %v4975
      %v5008 = vpack.c.b16 %v4978, %v4977
      %v5009 = vpack.c.b16 %v4980, %v4979
      %v5010 = vpack.c.b16 %v4982, %v4981
      %v5011 = vpack.c.b16 %v4984, %v4983
      %v5012 = vpack.c.b16 %v4986, %v4985
      %v5013 = vpack.c.b16 %v4988, %v4987
      %v5014 = vpack.c.b16 %v4990, %v4989
      %v5015 = vpack.c.b16 %v4992, %v4991
      %v5016 = vpack.c.b16 %v4994, %v4993
      %v5017 = vpack.c.b16 %v4996, %v4995
      %v5018 = vpack.c.b16 %v4998, %v4997
      %v5019 = vpack.c.b16 %v5000, %v4999
      %v5020 = vpack.c.b16 %v5002, %v5001
      %v5021 = vpack.c.b16 %v5004, %v5003
      %v5022 = vpack.c.b16 %v5006, %v5005
      %v5055 = vunpack.c.l.b16 %v4959
      %v5056 = vunpack.c.l.b16 %v4960
      %v5057 = vunpack.c.l.b16 %v4961
      %v5058 = vunpack.c.l.b16 %v4962
      %v5059 = vunpack.c.l.b16 %v4963
      %v5060 = vunpack.c.l.b16 %v4964
      %v5061 = vunpack.c.l.b16 %v4965
      %v5062 = vunpack.c.l.b16 %v4966
      %v5063 = vunpack.c.l.b16 %v4967
      %v5064 = vunpack.c.l.b16 %v4968
      %v5065 = vunpack.c.l.b16 %v4969
      %v5066 = vunpack.c.l.b16 %v4970
      %v5067 = vunpack.c.l.b16 %v4971
      %v5068 = vunpack.c.l.b16 %v4972
      %v5069 = vunpack.c.l.b16 %v4973
      %v5070 = vunpack.c.l.b16 %v4974
      %v5071 = vpack.c.b16 %v5056, %v5055
      %v5072 = vpack.c.b16 %v5058, %v5057
      %v5073 = vpack.c.b16 %v5060, %v5059
      %v5074 = vpack.c.b16 %v5062, %v5061
      %v5075 = vpack.c.b16 %v5064, %v5063
      %v5076 = vpack.c.b16 %v5066, %v5065
      %v5077 = vpack.c.b16 %v5068, %v5067
      %v5078 = vpack.c.b16 %v5070, %v5069
      %5087 = vmatprep.subr.bf16.mxu0 0
      %5088 = vmatpush1.bf16.msra.mxu0 %v5071
      %5089 = vmatprep.subr.bf16.mxu0 0
      %5090 = vmatpush1.bf16.msra.mxu0 %v5072
      %5091 = vmatprep.subr.bf16.mxu0 0
      %5092 = vmatpush1.bf16.msra.mxu0 %v5073
      %5093 = vmatprep.subr.bf16.mxu0 0
      %5094 = vmatpush1.bf16.msra.mxu0 %v5074
      %5095 = vmatprep.subr.bf16.mxu0 0
      %5096 = vmatpush1.bf16.msra.mxu0 %v5075
      %5097 = vmatprep.subr.bf16.mxu0 0
      %5098 = vmatpush1.bf16.msra.mxu0 %v5076
      %5099 = vmatprep.subr.bf16.mxu0 0
      %5100 = vmatpush1.bf16.msra.mxu0 %v5077
      %5101 = vmatprep.subr.bf16.mxu0 0
      %5102 = vmatpush1.bf16.msra.mxu0 %v5078
      %5103 = vmatprep.subr.bf16.mxu0 0
      %5104 = vmatpush1.bf16.msra.mxu0 0
      %5105 = vmatprep.subr.bf16.mxu0 0
      %5106 = vmatpush1.bf16.msra.mxu0 0
      %5107 = vmatprep.subr.bf16.mxu0 0
      %5108 = vmatpush1.bf16.msra.mxu0 0
      %5109 = vmatprep.subr.bf16.mxu0 0
      %5110 = vmatpush1.bf16.msra.mxu0 0
      %5111 = vmatprep.subr.bf16.mxu0 0
      %5112 = vmatpush1.bf16.msra.mxu0 0
      %5113 = vmatprep.subr.bf16.mxu0 0
      %5114 = vmatpush1.bf16.msra.mxu0 0
      %5115 = vmatprep.subr.bf16.mxu0 0
      %5116 = vmatpush1.bf16.msra.mxu0 0
      %5117 = vmatprep.subr.bf16.mxu0 0
      %5118 = vmatpush1.bf16.msra.mxu0 0
      %5119 = vmatprep.mubr.bf16.mxu0 0
      %5120 = vmatmul.mubr.bf16.gmra.mrb[0].mxu0 %v5007
      %v5121 = vpop.f32.mrb[0].mxu0
      %v5122 = vadd.f32 0.0, %v5121
      %v5123 = vpop.f32.mrb[0].mxu0
      %v5124 = vpop.f32.mrb[0].mxu0
      %v5125 = vadd.f32 0.0, %v5124
      %v5126 = vpop.f32.mrb[0].mxu0
      %5127 = vmatprep.mubr.bf16.mxu0 0
      %5128 = vmatmul.mubr.bf16.gmra.mrb[0].mxu0 %v5008
      %v5129 = vpop.f32.mrb[0].mxu0
      %v5130 = vadd.f32 0.0, %v5129
      %v5131 = vpop.f32.mrb[0].mxu0
      %v5132 = vpop.f32.mrb[0].mxu0
      %v5133 = vadd.f32 0.0, %v5132
      %v5134 = vpop.f32.mrb[0].mxu0
      %5135 = vmatprep.mubr.bf16.mxu0 0
      %5136 = vmatmul.mubr.bf16.gmra.mrb[0].mxu0 %v5009
      %v5137 = vpop.f32.mrb[0].mxu0
      %v5138 = vadd.f32 0.0, %v5137
      %v5139 = vpop.f32.mrb[0].mxu0
      %v5140 = vpop.f32.mrb[0].mxu0
      %v5141 = vadd.f32 0.0, %v5140
      %v5142 = vpop.f32.mrb[0].mxu0
      %5143 = vmatprep.mubr.bf16.mxu0 0
      %5144 = vmatmul.mubr.bf16.gmra.mrb[0].mxu0 %v5010
      %v5145 = vpop.f32.mrb[0].mxu0
      %v5146 = vadd.f32 0.0, %v5145
      %v5147 = vpop.f32.mrb[0].mxu0
      %v5148 = vpop.f32.mrb[0].mxu0
      %v5149 = vadd.f32 0.0, %v5148
      %v5150 = vpop.f32.mrb[0].mxu0
      %5151 = vmatprep.mubr.bf16.mxu0 0
      %5152 = vmatmul.mubr.bf16.gmra.mrb[0].mxu0 %v5011
      %v5153 = vpop.f32.mrb[0].mxu0
      %v5154 = vadd.f32 0.0, %v5153
      %v5155 = vpop.f32.mrb[0].mxu0
      %v5156 = vpop.f32.mrb[0].mxu0
      %v5157 = vadd.f32 0.0, %v5156
      %v5158 = vpop.f32.mrb[0].mxu0
      %5159 = vmatprep.mubr.bf16.mxu0 0
      %5160 = vmatmul.mubr.bf16.gmra.mrb[0].mxu0 %v5012
      %v5161 = vpop.f32.mrb[0].mxu0
      %v5162 = vadd.f32 0.0, %v5161
      %v5163 = vpop.f32.mrb[0].mxu0
      %v5164 = vpop.f32.mrb[0].mxu0
      %v5165 = vadd.f32 0.0, %v5164
      %v5166 = vpop.f32.mrb[0].mxu0
      %5167 = vmatprep.mubr.bf16.mxu0 0
      %5168 = vmatmul.mubr.bf16.gmra.mrb[0].mxu0 %v5013
      %v5169 = vpop.f32.mrb[0].mxu0
      %v5170 = vadd.f32 0.0, %v5169
      %v5171 = vpop.f32.mrb[0].mxu0
      %v5172 = vpop.f32.mrb[0].mxu0
      %v5173 = vadd.f32 0.0, %v5172
      %v5174 = vpop.f32.mrb[0].mxu0
      %5175 = vmatprep.mubr.bf16.mxu0 0
      %5176 = vmatmul.mubr.bf16.gmra.mrb[0].mxu0 %v5014
      %v5177 = vpop.f32.mrb[0].mxu0
      %v5178 = vadd.f32 0.0, %v5177
      %v5179 = vpop.f32.mrb[0].mxu0
      %v5180 = vpop.f32.mrb[0].mxu0
      %v5181 = vadd.f32 0.0, %v5180
      %v5182 = vpop.f32.mrb[0].mxu0
      %5183 = vmatprep.mubr.bf16.mxu0 0
      %5184 = vmatmul.mubr.bf16.gmra.mrb[0].mxu0 %v5015
      %v5185 = vpop.f32.mrb[0].mxu0
      %v5186 = vadd.f32 0.0, %v5185
      %v5187 = vpop.f32.mrb[0].mxu0
      %v5188 = vpop.f32.mrb[0].mxu0
      %v5189 = vadd.f32 0.0, %v5188
      %v5190 = vpop.f32.mrb[0].mxu0
      %5191 = vmatprep.mubr.bf16.mxu0 0
      %5192 = vmatmul.mubr.bf16.gmra.mrb[0].mxu0 %v5016
      %v5193 = vpop.f32.mrb[0].mxu0
      %v5194 = vadd.f32 0.0, %v5193
      %v5195 = vpop.f32.mrb[0].mxu0
      %v5196 = vpop.f32.mrb[0].mxu0
      %v5197 = vadd.f32 0.0, %v5196
      %v5198 = vpop.f32.mrb[0].mxu0
      %5199 = vmatprep.mubr.bf16.mxu0 0
      %5200 = vmatmul.mubr.bf16.gmra.mrb[0].mxu0 %v5017
      %v5201 = vpop.f32.mrb[0].mxu0
      %v5202 = vadd.f32 0.0, %v5201
      %v5203 = vpop.f32.mrb[0].mxu0
      %v5204 = vpop.f32.mrb[0].mxu0
      %v5205 = vadd.f32 0.0, %v5204
      %v5206 = vpop.f32.mrb[0].mxu0
      %5207 = vmatprep.mubr.bf16.mxu0 0
      %5208 = vmatmul.mubr.bf16.gmra.mrb[0].mxu0 %v5018
      %v5209 = vpop.f32.mrb[0].mxu0
      %v5210 = vadd.f32 0.0, %v5209
      %v5211 = vpop.f32.mrb[0].mxu0
      %v5212 = vpop.f32.mrb[0].mxu0
      %v5213 = vadd.f32 0.0, %v5212
      %v5214 = vpop.f32.mrb[0].mxu0
      %5215 = vmatprep.mubr.bf16.mxu0 0
      %5216 = vmatmul.mubr.bf16.gmra.mrb[0].mxu0 %v5019
      %v5217 = vpop.f32.mrb[0].mxu0
      %v5218 = vadd.f32 0.0, %v5217
      %v5219 = vpop.f32.mrb[0].mxu0
      %v5220 = vpop.f32.mrb[0].mxu0
      %v5221 = vadd.f32 0.0, %v5220
      %v5222 = vpop.f32.mrb[0].mxu0
      %5223 = vmatprep.mubr.bf16.mxu0 0
      %5224 = vmatmul.mubr.bf16.gmra.mrb[0].mxu0 %v5020
      %v5225 = vpop.f32.mrb[0].mxu0
      %v5226 = vadd.f32 0.0, %v5225
      %v5227 = vpop.f32.mrb[0].mxu0
      %v5228 = vpop.f32.mrb[0].mxu0
      %v5229 = vadd.f32 0.0, %v5228
      %v5230 = vpop.f32.mrb[0].mxu0
      %5231 = vmatprep.mubr.bf16.mxu0 0
      %5232 = vmatmul.mubr.bf16.gmra.mrb[0].mxu0 %v5021
      %v5233 = vpop.f32.mrb[0].mxu0
      %v5234 = vadd.f32 0.0, %v5233
      %v5235 = vpop.f32.mrb[0].mxu0
      %v5236 = vpop.f32.mrb[0].mxu0
      %v5237 = vadd.f32 0.0, %v5236
      %v5238 = vpop.f32.mrb[0].mxu0
      %5239 = vmatprep.mubr.bf16.mxu0 0
      %5240 = vmatmul.mubr.bf16.gmra.mrb[0].mxu0 %v5022
      %v5241 = vpop.f32.mrb[0].mxu0
      %v5242 = vadd.f32 0.0, %v5241
      %v5243 = vpop.f32.mrb[0].mxu0
      %v5244 = vpop.f32.mrb[0].mxu0
      %v5245 = vadd.f32 0.0, %v5244
      %v5246 = vpop.f32.mrb[0].mxu0
      %5247 = vdwg.mxu0
      %v5248 = vadd.f32 %v4494, %v5122
      %v5249 = vadd.f32 %v4495, %v5125
      %v5250 = vadd.f32 %v4496, %v5130
      %v5251 = vadd.f32 %v4497, %v5133
      %v5252 = vadd.f32 %v4498, %v5138
      %v5253 = vadd.f32 %v4499, %v5141
      %v5254 = vadd.f32 %v4500, %v5146
      %v5255 = vadd.f32 %v4501, %v5149
      %v5256 = vadd.f32 %v4502, %v5154
      %v5257 = vadd.f32 %v4503, %v5157
      %v5258 = vadd.f32 %v4504, %v5162
      %v5259 = vadd.f32 %v4505, %v5165
      %v5260 = vadd.f32 %v4506, %v5170
      %v5261 = vadd.f32 %v4507, %v5173
      %v5262 = vadd.f32 %v4508, %v5178
      %v5263 = vadd.f32 %v4509, %v5181
      %v5264 = vadd.f32 %v4510, %v5186
      %v5265 = vadd.f32 %v4511, %v5189
      %v5266 = vadd.f32 %v4512, %v5194
      %v5267 = vadd.f32 %v4513, %v5197
      %v5268 = vadd.f32 %v4514, %v5202
      %v5269 = vadd.f32 %v4515, %v5205
      %v5270 = vadd.f32 %v4516, %v5210
      %v5271 = vadd.f32 %v4517, %v5213
      %v5272 = vadd.f32 %v4518, %v5218
      %v5273 = vadd.f32 %v4519, %v5221
      %v5274 = vadd.f32 %v4520, %v5226
      %v5275 = vadd.f32 %v4521, %v5229
      %v5276 = vadd.f32 %v4522, %v5234
      %v5277 = vadd.f32 %v4523, %v5237
      %v5278 = vadd.f32 %v4524, %v5242
      %v5279 = vadd.f32 %v4525, %v5245
      %v5280 = vld [vmem:[%s4139] sm:$0xe]
      %v5281 = vld [vmem:[%s4139 + $0xc] sm:$0xe]
      %v5282 = vld [vmem:[%s4139 + $0x18] sm:$0xe]
      %v5283 = vld [vmem:[%s4139 + $0x24] sm:$0xe]
      %v5284 = vld [vmem:[%s4139 + $0x30] sm:$0xe]
      %v5285 = vld [vmem:[%s4139 + $0x3c] sm:$0xe]
      %v5286 = vld [vmem:[%s4139 + $0x48] sm:$0xe]
      %v5287 = vld [vmem:[%s4139 + $0x54] sm:$0xe]
      %v5288 = vld [vmem:[%s4139 + $0x60] sm:$0xe]
      %v5289 = vld [vmem:[%s4139 + $0x6c] sm:$0xe]
      %v5290 = vld [vmem:[%s4139 + $0x78] sm:$0xe]
      %v5291 = vld [vmem:[%s4139 + $0x84] sm:$0xe]
      %v5292 = vld [vmem:[%s4139 + $0x90] sm:$0xe]
      %v5293 = vld [vmem:[%s4139 + $0x9c] sm:$0xe]
      %v5294 = vld [vmem:[%s4139 + $0xa8] sm:$0xe]
      %v5295 = vld [vmem:[%s4139 + $0xb4] sm:$0xe]
      %v5344 = vrot.slane %v5280, 5
      %v5345 = vrot.slane %v5344, 4
      %v5346 = vrot.slane %v4527, 5
      %v5347 = vsel %vm2066, %v5345, %v5346
      %v5348 = vrot.slane %v5346, 4
      %v5349 = vrot.slane %v4528, 5
      %v5350 = vsel %vm2066, %v5348, %v5349
      %v5351 = vrot.slane %v5281, 5
      %v5352 = vrot.slane %v5351, 4
      %v5353 = vrot.slane %v4530, 5
      %v5354 = vsel %vm2066, %v5352, %v5353
      %v5355 = vrot.slane %v5353, 4
      %v5356 = vrot.slane %v4531, 5
      %v5357 = vsel %vm2066, %v5355, %v5356
      %v5358 = vrot.slane %v5282, 5
      %v5359 = vrot.slane %v5358, 4
      %v5360 = vrot.slane %v4533, 5
      %v5361 = vsel %vm2066, %v5359, %v5360
      %v5362 = vrot.slane %v5360, 4
      %v5363 = vrot.slane %v4534, 5
      %v5364 = vsel %vm2066, %v5362, %v5363
      %v5365 = vrot.slane %v5283, 5
      %v5366 = vrot.slane %v5365, 4
      %v5367 = vrot.slane %v4536, 5
      %v5368 = vsel %vm2066, %v5366, %v5367
      %v5369 = vrot.slane %v5367, 4
      %v5370 = vrot.slane %v4537, 5
      %v5371 = vsel %vm2066, %v5369, %v5370
      %v5372 = vrot.slane %v5284, 5
      %v5373 = vrot.slane %v5372, 4
      %v5374 = vrot.slane %v4539, 5
      %v5375 = vsel %vm2066, %v5373, %v5374
      %v5376 = vrot.slane %v5374, 4
      %v5377 = vrot.slane %v4540, 5
      %v5378 = vsel %vm2066, %v5376, %v5377
      %v5379 = vrot.slane %v5285, 5
      %v5380 = vrot.slane %v5379, 4
      %v5381 = vrot.slane %v4542, 5
      %v5382 = vsel %vm2066, %v5380, %v5381
      %v5383 = vrot.slane %v5381, 4
      %v5384 = vrot.slane %v4543, 5
      %v5385 = vsel %vm2066, %v5383, %v5384
      %v5386 = vrot.slane %v5286, 5
      %v5387 = vrot.slane %v5386, 4
      %v5388 = vrot.slane %v4545, 5
      %v5389 = vsel %vm2066, %v5387, %v5388
      %v5390 = vrot.slane %v5388, 4
      %v5391 = vrot.slane %v4546, 5
      %v5392 = vsel %vm2066, %v5390, %v5391
      %v5393 = vrot.slane %v5287, 5
      %v5394 = vrot.slane %v5393, 4
      %v5395 = vrot.slane %v4548, 5
      %v5396 = vsel %vm2066, %v5394, %v5395
      %v5397 = vrot.slane %v5395, 4
      %v5398 = vrot.slane %v4549, 5
      %v5399 = vsel %vm2066, %v5397, %v5398
      %v5400 = vrot.slane %v5288, 5
      %v5401 = vrot.slane %v5400, 4
      %v5402 = vrot.slane %v4551, 5
      %v5403 = vsel %vm2066, %v5401, %v5402
      %v5404 = vrot.slane %v5402, 4
      %v5405 = vrot.slane %v4552, 5
      %v5406 = vsel %vm2066, %v5404, %v5405
      %v5407 = vrot.slane %v5289, 5
      %v5408 = vrot.slane %v5407, 4
      %v5409 = vrot.slane %v4554, 5
      %v5410 = vsel %vm2066, %v5408, %v5409
      %v5411 = vrot.slane %v5409, 4
      %v5412 = vrot.slane %v4555, 5
      %v5413 = vsel %vm2066, %v5411, %v5412
      %v5414 = vrot.slane %v5290, 5
      %v5415 = vrot.slane %v5414, 4
      %v5416 = vrot.slane %v4557, 5
      %v5417 = vsel %vm2066, %v5415, %v5416
      %v5418 = vrot.slane %v5416, 4
      %v5419 = vrot.slane %v4558, 5
      %v5420 = vsel %vm2066, %v5418, %v5419
      %v5421 = vrot.slane %v5291, 5
      %v5422 = vrot.slane %v5421, 4
      %v5423 = vrot.slane %v4560, 5
      %v5424 = vsel %vm2066, %v5422, %v5423
      %v5425 = vrot.slane %v5423, 4
      %v5426 = vrot.slane %v4561, 5
      %v5427 = vsel %vm2066, %v5425, %v5426
      %v5428 = vrot.slane %v5292, 5
      %v5429 = vrot.slane %v5428, 4
      %v5430 = vrot.slane %v4563, 5
      %v5431 = vsel %vm2066, %v5429, %v5430
      %v5432 = vrot.slane %v5430, 4
      %v5433 = vrot.slane %v4564, 5
      %v5434 = vsel %vm2066, %v5432, %v5433
      %v5435 = vrot.slane %v5293, 5
      %v5436 = vrot.slane %v5435, 4
      %v5437 = vrot.slane %v4566, 5
      %v5438 = vsel %vm2066, %v5436, %v5437
      %v5439 = vrot.slane %v5437, 4
      %v5440 = vrot.slane %v4567, 5
      %v5441 = vsel %vm2066, %v5439, %v5440
      %v5442 = vrot.slane %v5294, 5
      %v5443 = vrot.slane %v5442, 4
      %v5444 = vrot.slane %v4569, 5
      %v5445 = vsel %vm2066, %v5443, %v5444
      %v5446 = vrot.slane %v5444, 4
      %v5447 = vrot.slane %v4570, 5
      %v5448 = vsel %vm2066, %v5446, %v5447
      %v5449 = vrot.slane %v5295, 5
      %v5450 = vrot.slane %v5449, 4
      %v5451 = vrot.slane %v4572, 5
      %v5452 = vsel %vm2066, %v5450, %v5451
      %v5453 = vrot.slane %v5451, 4
      %v5454 = vrot.slane %v4573, 5
      %v5455 = vsel %vm2066, %v5453, %v5454
      %s5456 = scalar_lea.vmem %s1, 512
      %v5457 = vld [vmem:[%s5456] sm:$0xf]
      %v5458 = vld [vmem:[%s5456 + $0x4] sm:$0xf]
      %v5459 = vld [vmem:[%s5456 + $0x8] sm:$0xf]
      %v5460 = vld [vmem:[%s5456 + $0xc] sm:$0xf]
      %v5461 = vld [vmem:[%s5456 + $0x10] sm:$0xf]
      %v5462 = vld [vmem:[%s5456 + $0x14] sm:$0xf]
      %v5463 = vld [vmem:[%s5456 + $0x18] sm:$0xf]
      %v5464 = vld [vmem:[%s5456 + $0x1c] sm:$0xf]
      %v5465 = vld [vmem:[%s5456 + $0x20] sm:$0xf]
      %v5466 = vld [vmem:[%s5456 + $0x24] sm:$0xf]
      %v5467 = vld [vmem:[%s5456 + $0x28] sm:$0xf]
      %v5468 = vld [vmem:[%s5456 + $0x2c] sm:$0xf]
      %v5469 = vld [vmem:[%s5456 + $0x30] sm:$0xf]
      %v5470 = vld [vmem:[%s5456 + $0x34] sm:$0xf]
      %v5471 = vld [vmem:[%s5456 + $0x38] sm:$0xf]
      %v5472 = vld [vmem:[%s5456 + $0x3c] sm:$0xf]
      %v5473 = vunpack.c.l.b16 %v5347
      %v5474 = vunpack.c.l.b16 %v5350
      %v5475 = vunpack.c.l.b16 %v5354
      %v5476 = vunpack.c.l.b16 %v5357
      %v5477 = vunpack.c.l.b16 %v5361
      %v5478 = vunpack.c.l.b16 %v5364
      %v5479 = vunpack.c.l.b16 %v5368
      %v5480 = vunpack.c.l.b16 %v5371
      %v5481 = vunpack.c.l.b16 %v5375
      %v5482 = vunpack.c.l.b16 %v5378
      %v5483 = vunpack.c.l.b16 %v5382
      %v5484 = vunpack.c.l.b16 %v5385
      %v5485 = vunpack.c.l.b16 %v5389
      %v5486 = vunpack.c.l.b16 %v5392
      %v5487 = vunpack.c.l.b16 %v5396
      %v5488 = vunpack.c.l.b16 %v5399
      %v5489 = vunpack.c.l.b16 %v5403
      %v5490 = vunpack.c.l.b16 %v5406
      %v5491 = vunpack.c.l.b16 %v5410
      %v5492 = vunpack.c.l.b16 %v5413
      %v5493 = vunpack.c.l.b16 %v5417
      %v5494 = vunpack.c.l.b16 %v5420
      %v5495 = vunpack.c.l.b16 %v5424
      %v5496 = vunpack.c.l.b16 %v5427
      %v5497 = vunpack.c.l.b16 %v5431
      %v5498 = vunpack.c.l.b16 %v5434
      %v5499 = vunpack.c.l.b16 %v5438
      %v5500 = vunpack.c.l.b16 %v5441
      %v5501 = vunpack.c.l.b16 %v5445
      %v5502 = vunpack.c.l.b16 %v5448
      %v5503 = vunpack.c.l.b16 %v5452
      %v5504 = vunpack.c.l.b16 %v5455
      %v5505 = vpack.c.b16 %v5474, %v5473
      %v5506 = vpack.c.b16 %v5476, %v5475
      %v5507 = vpack.c.b16 %v5478, %v5477
      %v5508 = vpack.c.b16 %v5480, %v5479
      %v5509 = vpack.c.b16 %v5482, %v5481
      %v5510 = vpack.c.b16 %v5484, %v5483
      %v5511 = vpack.c.b16 %v5486, %v5485
      %v5512 = vpack.c.b16 %v5488, %v5487
      %v5513 = vpack.c.b16 %v5490, %v5489
      %v5514 = vpack.c.b16 %v5492, %v5491
      %v5515 = vpack.c.b16 %v5494, %v5493
      %v5516 = vpack.c.b16 %v5496, %v5495
      %v5517 = vpack.c.b16 %v5498, %v5497
      %v5518 = vpack.c.b16 %v5500, %v5499
      %v5519 = vpack.c.b16 %v5502, %v5501
      %v5520 = vpack.c.b16 %v5504, %v5503
      %v5553 = vunpack.c.l.b16 %v5457
      %v5554 = vunpack.c.l.b16 %v5458
      %v5555 = vunpack.c.l.b16 %v5459
      %v5556 = vunpack.c.l.b16 %v5460
      %v5557 = vunpack.c.l.b16 %v5461
      %v5558 = vunpack.c.l.b16 %v5462
      %v5559 = vunpack.c.l.b16 %v5463
      %v5560 = vunpack.c.l.b16 %v5464
      %v5561 = vunpack.c.l.b16 %v5465
      %v5562 = vunpack.c.l.b16 %v5466
      %v5563 = vunpack.c.l.b16 %v5467
      %v5564 = vunpack.c.l.b16 %v5468
      %v5565 = vunpack.c.l.b16 %v5469
      %v5566 = vunpack.c.l.b16 %v5470
      %v5567 = vunpack.c.l.b16 %v5471
      %v5568 = vunpack.c.l.b16 %v5472
      %v5569 = vpack.c.b16 %v5554, %v5553
      %v5570 = vpack.c.b16 %v5556, %v5555
      %v5571 = vpack.c.b16 %v5558, %v5557
      %v5572 = vpack.c.b16 %v5560, %v5559
      %v5573 = vpack.c.b16 %v5562, %v5561
      %v5574 = vpack.c.b16 %v5564, %v5563
      %v5575 = vpack.c.b16 %v5566, %v5565
      %v5576 = vpack.c.b16 %v5568, %v5567
      %5585 = vmatprep.subr.bf16.mxu0 0
      %5586 = vmatpush1.bf16.msra.mxu0 %v5569
      %5587 = vmatprep.subr.bf16.mxu0 0
      %5588 = vmatpush1.bf16.msra.mxu0 %v5570
      %5589 = vmatprep.subr.bf16.mxu0 0
      %5590 = vmatpush1.bf16.msra.mxu0 %v5571
      %5591 = vmatprep.subr.bf16.mxu0 0
      %5592 = vmatpush1.bf16.msra.mxu0 %v5572
      %5593 = vmatprep.subr.bf16.mxu0 0
      %5594 = vmatpush1.bf16.msra.mxu0 %v5573
      %5595 = vmatprep.subr.bf16.mxu0 0
      %5596 = vmatpush1.bf16.msra.mxu0 %v5574
      %5597 = vmatprep.subr.bf16.mxu0 0
      %5598 = vmatpush1.bf16.msra.mxu0 %v5575
      %5599 = vmatprep.subr.bf16.mxu0 0
      %5600 = vmatpush1.bf16.msra.mxu0 %v5576
      %5601 = vmatprep.subr.bf16.mxu0 0
      %5602 = vmatpush1.bf16.msra.mxu0 0
      %5603 = vmatprep.subr.bf16.mxu0 0
      %5604 = vmatpush1.bf16.msra.mxu0 0
      %5605 = vmatprep.subr.bf16.mxu0 0
      %5606 = vmatpush1.bf16.msra.mxu0 0
      %5607 = vmatprep.subr.bf16.mxu0 0
      %5608 = vmatpush1.bf16.msra.mxu0 0
      %5609 = vmatprep.subr.bf16.mxu0 0
      %5610 = vmatpush1.bf16.msra.mxu0 0
      %5611 = vmatprep.subr.bf16.mxu0 0
      %5612 = vmatpush1.bf16.msra.mxu0 0
      %5613 = vmatprep.subr.bf16.mxu0 0
      %5614 = vmatpush1.bf16.msra.mxu0 0
      %5615 = vmatprep.subr.bf16.mxu0 0
      %5616 = vmatpush1.bf16.msra.mxu0 0
      %5617 = vmatprep.mubr.bf16.mxu0 0
      %5618 = vmatmul.mubr.bf16.gmra.mrb[0].mxu0 %v5505
      %v5619 = vpop.f32.mrb[0].mxu0
      %v5620 = vadd.f32 0.0, %v5619
      %v5621 = vpop.f32.mrb[0].mxu0
      %v5622 = vpop.f32.mrb[0].mxu0
      %v5623 = vadd.f32 0.0, %v5622
      %v5624 = vpop.f32.mrb[0].mxu0
      %5625 = vmatprep.mubr.bf16.mxu0 0
      %5626 = vmatmul.mubr.bf16.gmra.mrb[0].mxu0 %v5506
      %v5627 = vpop.f32.mrb[0].mxu0
      %v5628 = vadd.f32 0.0, %v5627
      %v5629 = vpop.f32.mrb[0].mxu0
      %v5630 = vpop.f32.mrb[0].mxu0
      %v5631 = vadd.f32 0.0, %v5630
      %v5632 = vpop.f32.mrb[0].mxu0
      %5633 = vmatprep.mubr.bf16.mxu0 0
      %5634 = vmatmul.mubr.bf16.gmra.mrb[0].mxu0 %v5507
      %v5635 = vpop.f32.mrb[0].mxu0
      %v5636 = vadd.f32 0.0, %v5635
      %v5637 = vpop.f32.mrb[0].mxu0
      %v5638 = vpop.f32.mrb[0].mxu0
      %v5639 = vadd.f32 0.0, %v5638
      %v5640 = vpop.f32.mrb[0].mxu0
      %5641 = vmatprep.mubr.bf16.mxu0 0
      %5642 = vmatmul.mubr.bf16.gmra.mrb[0].mxu0 %v5508
      %v5643 = vpop.f32.mrb[0].mxu0
      %v5644 = vadd.f32 0.0, %v5643
      %v5645 = vpop.f32.mrb[0].mxu0
      %v5646 = vpop.f32.mrb[0].mxu0
      %v5647 = vadd.f32 0.0, %v5646
      %v5648 = vpop.f32.mrb[0].mxu0
      %5649 = vmatprep.mubr.bf16.mxu0 0
      %5650 = vmatmul.mubr.bf16.gmra.mrb[0].mxu0 %v5509
      %v5651 = vpop.f32.mrb[0].mxu0
      %v5652 = vadd.f32 0.0, %v5651
      %v5653 = vpop.f32.mrb[0].mxu0
      %v5654 = vpop.f32.mrb[0].mxu0
      %v5655 = vadd.f32 0.0, %v5654
      %v5656 = vpop.f32.mrb[0].mxu0
      %5657 = vmatprep.mubr.bf16.mxu0 0
      %5658 = vmatmul.mubr.bf16.gmra.mrb[0].mxu0 %v5510
      %v5659 = vpop.f32.mrb[0].mxu0
      %v5660 = vadd.f32 0.0, %v5659
      %v5661 = vpop.f32.mrb[0].mxu0
      %v5662 = vpop.f32.mrb[0].mxu0
      %v5663 = vadd.f32 0.0, %v5662
      %v5664 = vpop.f32.mrb[0].mxu0
      %5665 = vmatprep.mubr.bf16.mxu0 0
      %5666 = vmatmul.mubr.bf16.gmra.mrb[0].mxu0 %v5511
      %v5667 = vpop.f32.mrb[0].mxu0
      %v5668 = vadd.f32 0.0, %v5667
      %v5669 = vpop.f32.mrb[0].mxu0
      %v5670 = vpop.f32.mrb[0].mxu0
      %v5671 = vadd.f32 0.0, %v5670
      %v5672 = vpop.f32.mrb[0].mxu0
      %5673 = vmatprep.mubr.bf16.mxu0 0
      %5674 = vmatmul.mubr.bf16.gmra.mrb[0].mxu0 %v5512
      %v5675 = vpop.f32.mrb[0].mxu0
      %v5676 = vadd.f32 0.0, %v5675
      %v5677 = vpop.f32.mrb[0].mxu0
      %v5678 = vpop.f32.mrb[0].mxu0
      %v5679 = vadd.f32 0.0, %v5678
      %v5680 = vpop.f32.mrb[0].mxu0
      %5681 = vmatprep.mubr.bf16.mxu0 0
      %5682 = vmatmul.mubr.bf16.gmra.mrb[0].mxu0 %v5513
      %v5683 = vpop.f32.mrb[0].mxu0
      %v5684 = vadd.f32 0.0, %v5683
      %v5685 = vpop.f32.mrb[0].mxu0
      %v5686 = vpop.f32.mrb[0].mxu0
      %v5687 = vadd.f32 0.0, %v5686
      %v5688 = vpop.f32.mrb[0].mxu0
      %5689 = vmatprep.mubr.bf16.mxu0 0
      %5690 = vmatmul.mubr.bf16.gmra.mrb[0].mxu0 %v5514
      %v5691 = vpop.f32.mrb[0].mxu0
      %v5692 = vadd.f32 0.0, %v5691
      %v5693 = vpop.f32.mrb[0].mxu0
      %v5694 = vpop.f32.mrb[0].mxu0
      %v5695 = vadd.f32 0.0, %v5694
      %v5696 = vpop.f32.mrb[0].mxu0
      %5697 = vmatprep.mubr.bf16.mxu0 0
      %5698 = vmatmul.mubr.bf16.gmra.mrb[0].mxu0 %v5515
      %v5699 = vpop.f32.mrb[0].mxu0
      %v5700 = vadd.f32 0.0, %v5699
      %v5701 = vpop.f32.mrb[0].mxu0
      %v5702 = vpop.f32.mrb[0].mxu0
      %v5703 = vadd.f32 0.0, %v5702
      %v5704 = vpop.f32.mrb[0].mxu0
      %5705 = vmatprep.mubr.bf16.mxu0 0
      %5706 = vmatmul.mubr.bf16.gmra.mrb[0].mxu0 %v5516
      %v5707 = vpop.f32.mrb[0].mxu0
      %v5708 = vadd.f32 0.0, %v5707
      %v5709 = vpop.f32.mrb[0].mxu0
      %v5710 = vpop.f32.mrb[0].mxu0
      %v5711 = vadd.f32 0.0, %v5710
      %v5712 = vpop.f32.mrb[0].mxu0
      %5713 = vmatprep.mubr.bf16.mxu0 0
      %5714 = vmatmul.mubr.bf16.gmra.mrb[0].mxu0 %v5517
      %v5715 = vpop.f32.mrb[0].mxu0
      %v5716 = vadd.f32 0.0, %v5715
      %v5717 = vpop.f32.mrb[0].mxu0
      %v5718 = vpop.f32.mrb[0].mxu0
      %v5719 = vadd.f32 0.0, %v5718
      %v5720 = vpop.f32.mrb[0].mxu0
      %5721 = vmatprep.mubr.bf16.mxu0 0
      %5722 = vmatmul.mubr.bf16.gmra.mrb[0].mxu0 %v5518
      %v5723 = vpop.f32.mrb[0].mxu0
      %v5724 = vadd.f32 0.0, %v5723
      %v5725 = vpop.f32.mrb[0].mxu0
      %v5726 = vpop.f32.mrb[0].mxu0
      %v5727 = vadd.f32 0.0, %v5726
      %v5728 = vpop.f32.mrb[0].mxu0
      %5729 = vmatprep.mubr.bf16.mxu0 0
      %5730 = vmatmul.mubr.bf16.gmra.mrb[0].mxu0 %v5519
      %v5731 = vpop.f32.mrb[0].mxu0
      %v5732 = vadd.f32 0.0, %v5731
      %v5733 = vpop.f32.mrb[0].mxu0
      %v5734 = vpop.f32.mrb[0].mxu0
      %v5735 = vadd.f32 0.0, %v5734
      %v5736 = vpop.f32.mrb[0].mxu0
      %5737 = vmatprep.mubr.bf16.mxu0 0
      %5738 = vmatmul.mubr.bf16.gmra.mrb[0].mxu0 %v5520
      %v5739 = vpop.f32.mrb[0].mxu0
      %v5740 = vadd.f32 0.0, %v5739
      %v5741 = vpop.f32.mrb[0].mxu0
      %v5742 = vpop.f32.mrb[0].mxu0
      %v5743 = vadd.f32 0.0, %v5742
      %v5744 = vpop.f32.mrb[0].mxu0
      %5745 = vdwg.mxu0
      %v5746 = vadd.f32 %v5248, %v5620
      %v5747 = vadd.f32 %v5249, %v5623
      %v5748 = vadd.f32 %v5250, %v5628
      %v5749 = vadd.f32 %v5251, %v5631
      %v5750 = vadd.f32 %v5252, %v5636
      %v5751 = vadd.f32 %v5253, %v5639
      %v5752 = vadd.f32 %v5254, %v5644
      %v5753 = vadd.f32 %v5255, %v5647
      %v5754 = vadd.f32 %v5256, %v5652
      %v5755 = vadd.f32 %v5257, %v5655
      %v5756 = vadd.f32 %v5258, %v5660
      %v5757 = vadd.f32 %v5259, %v5663
      %v5758 = vadd.f32 %v5260, %v5668
      %v5759 = vadd.f32 %v5261, %v5671
      %v5760 = vadd.f32 %v5262, %v5676
      %v5761 = vadd.f32 %v5263, %v5679
      %v5762 = vadd.f32 %v5264, %v5684
      %v5763 = vadd.f32 %v5265, %v5687
      %v5764 = vadd.f32 %v5266, %v5692
      %v5765 = vadd.f32 %v5267, %v5695
      %v5766 = vadd.f32 %v5268, %v5700
      %v5767 = vadd.f32 %v5269, %v5703
      %v5768 = vadd.f32 %v5270, %v5708
      %v5769 = vadd.f32 %v5271, %v5711
      %v5770 = vadd.f32 %v5272, %v5716
      %v5771 = vadd.f32 %v5273, %v5719
      %v5772 = vadd.f32 %v5274, %v5724
      %v5773 = vadd.f32 %v5275, %v5727
      %v5774 = vadd.f32 %v5276, %v5732
      %v5775 = vadd.f32 %v5277, %v5735
      %v5776 = vadd.f32 %v5278, %v5740
      %v5777 = vadd.f32 %v5279, %v5743
      %5778 = vst [vmem:[%s231] sm:$0xff] %v5746
      %5779 = vst [vmem:[%s231 + $0x8] sm:$0xff] %v5747
      %5780 = vst [vmem:[%s231 + $0x10] sm:$0xff] %v5748
      %5781 = vst [vmem:[%s231 + $0x18] sm:$0xff] %v5749
      %5782 = vst [vmem:[%s231 + $0x20] sm:$0xff] %v5750
      %5783 = vst [vmem:[%s231 + $0x28] sm:$0xff] %v5751
      %5784 = vst [vmem:[%s231 + $0x30] sm:$0xff] %v5752
      %5785 = vst [vmem:[%s231 + $0x38] sm:$0xff] %v5753
      %5786 = vst [vmem:[%s231 + $0x40] sm:$0xff] %v5754
      %5787 = vst [vmem:[%s231 + $0x48] sm:$0xff] %v5755
      %5788 = vst [vmem:[%s231 + $0x50] sm:$0xff] %v5756
      %5789 = vst [vmem:[%s231 + $0x58] sm:$0xff] %v5757
      %5790 = vst [vmem:[%s231 + $0x60] sm:$0xff] %v5758
      %5791 = vst [vmem:[%s231 + $0x68] sm:$0xff] %v5759
      %5792 = vst [vmem:[%s231 + $0x70] sm:$0xff] %v5760
      %5793 = vst [vmem:[%s231 + $0x78] sm:$0xff] %v5761
      %5794 = vst [vmem:[%s231 + $0x80] sm:$0xff] %v5762
      %5795 = vst [vmem:[%s231 + $0x88] sm:$0xff] %v5763
      %5796 = vst [vmem:[%s231 + $0x90] sm:$0xff] %v5764
      %5797 = vst [vmem:[%s231 + $0x98] sm:$0xff] %v5765
      %5798 = vst [vmem:[%s231 + $0xa0] sm:$0xff] %v5766
      %5799 = vst [vmem:[%s231 + $0xa8] sm:$0xff] %v5767
      %5800 = vst [vmem:[%s231 + $0xb0] sm:$0xff] %v5768
      %5801 = vst [vmem:[%s231 + $0xb8] sm:$0xff] %v5769
      %5802 = vst [vmem:[%s231 + $0xc0] sm:$0xff] %v5770
      %5803 = vst [vmem:[%s231 + $0xc8] sm:$0xff] %v5771
      %5804 = vst [vmem:[%s231 + $0xd0] sm:$0xff] %v5772
      %5805 = vst [vmem:[%s231 + $0xd8] sm:$0xff] %v5773
      %5806 = vst [vmem:[%s231 + $0xe0] sm:$0xff] %v5774
      %5807 = vst [vmem:[%s231 + $0xe8] sm:$0xff] %v5775
      %5808 = vst [vmem:[%s231 + $0xf0] sm:$0xff] %v5776
      %5809 = vst [vmem:[%s231 + $0xf8] sm:$0xff] %v5777
      %v5810 = vadd.f32 %v5746, %v5747
      %v5811 = vadd.f32 %v5810, %v5748
      %v5812 = vadd.f32 %v5811, %v5749
      %v5813 = vadd.f32 %v5812, %v5750
      %v5814 = vadd.f32 %v5813, %v5751
      %v5815 = vadd.f32 %v5814, %v5752
      %v5816 = vadd.f32 %v5815, %v5753
      %v5817 = vadd.f32 %v5816, %v5754
      %v5818 = vadd.f32 %v5817, %v5755
      %v5819 = vadd.f32 %v5818, %v5756
      %v5820 = vadd.f32 %v5819, %v5757
      %v5821 = vadd.f32 %v5820, %v5758
      %v5822 = vadd.f32 %v5821, %v5759
      %v5823 = vadd.f32 %v5822, %v5760
      %v5824 = vadd.f32 %v5823, %v5761
      %v5825 = vadd.f32 %v5824, %v5762
      %v5826 = vadd.f32 %v5825, %v5763
      %v5827 = vadd.f32 %v5826, %v5764
      %v5828 = vadd.f32 %v5827, %v5765
      %v5829 = vadd.f32 %v5828, %v5766
      %v5830 = vadd.f32 %v5829, %v5767
      %v5831 = vadd.f32 %v5830, %v5768
      %v5832 = vadd.f32 %v5831, %v5769
      %v5833 = vadd.f32 %v5832, %v5770
      %v5834 = vadd.f32 %v5833, %v5771
      %v5835 = vadd.f32 %v5834, %v5772
      %v5836 = vadd.f32 %v5835, %v5773
      %v5837 = vadd.f32 %v5836, %v5774
      %v5838 = vadd.f32 %v5837, %v5775
      %v5839 = vadd.f32 %v5838, %v5776
      %v5840 = vadd.f32 %v5839, %v5777
      %v5841 = vrot.slane %v5840, 4
      %v5842 = vadd.f32 %v5840, %v5841
      %v5843 = vrot.slane %v5842, 2
      %v5844 = vadd.f32 %v5842, %v5843
      %v5845 = vrot.slane %v5844, 1
      %v5846 = vadd.f32 %v5844, %v5845
      %v5847 = vmul.f32 %v5846, 0.00390625
      %v5848 = vsub.f32 %v5746, %v5847
      %v5849 = vsub.f32 %v5747, %v5847
      %v5850 = vsub.f32 %v5748, %v5847
      %v5851 = vsub.f32 %v5749, %v5847
      %v5852 = vsub.f32 %v5750, %v5847
      %v5853 = vsub.f32 %v5751, %v5847
      %v5854 = vsub.f32 %v5752, %v5847
      %v5855 = vsub.f32 %v5753, %v5847
      %v5856 = vsub.f32 %v5754, %v5847
      %v5857 = vsub.f32 %v5755, %v5847
      %v5858 = vsub.f32 %v5756, %v5847
      %v5859 = vsub.f32 %v5757, %v5847
      %v5860 = vsub.f32 %v5758, %v5847
      %v5861 = vsub.f32 %v5759, %v5847
      %v5862 = vsub.f32 %v5760, %v5847
      %v5863 = vsub.f32 %v5761, %v5847
      %v5864 = vsub.f32 %v5762, %v5847
      %v5865 = vsub.f32 %v5763, %v5847
      %v5866 = vsub.f32 %v5764, %v5847
      %v5867 = vsub.f32 %v5765, %v5847
      %v5868 = vsub.f32 %v5766, %v5847
      %v5869 = vsub.f32 %v5767, %v5847
      %v5870 = vsub.f32 %v5768, %v5847
      %v5871 = vsub.f32 %v5769, %v5847
      %v5872 = vsub.f32 %v5770, %v5847
      %v5873 = vsub.f32 %v5771, %v5847
      %v5874 = vsub.f32 %v5772, %v5847
      %v5875 = vsub.f32 %v5773, %v5847
      %v5876 = vsub.f32 %v5774, %v5847
      %v5877 = vsub.f32 %v5775, %v5847
      %v5878 = vsub.f32 %v5776, %v5847
      %v5879 = vsub.f32 %v5777, %v5847
      %v5880 = vmul.f32 %v5848, %v5848
      %v5881 = vmul.f32 %v5849, %v5849
      %v5882 = vmul.f32 %v5850, %v5850
      %v5883 = vmul.f32 %v5851, %v5851
      %v5884 = vmul.f32 %v5852, %v5852
      %v5885 = vmul.f32 %v5853, %v5853
      %v5886 = vmul.f32 %v5854, %v5854
      %v5887 = vmul.f32 %v5855, %v5855
      %v5888 = vmul.f32 %v5856, %v5856
      %v5889 = vmul.f32 %v5857, %v5857
      %v5890 = vmul.f32 %v5858, %v5858
      %v5891 = vmul.f32 %v5859, %v5859
      %v5892 = vmul.f32 %v5860, %v5860
      %v5893 = vmul.f32 %v5861, %v5861
      %v5894 = vmul.f32 %v5862, %v5862
      %v5895 = vmul.f32 %v5863, %v5863
      %v5896 = vmul.f32 %v5864, %v5864
      %v5897 = vmul.f32 %v5865, %v5865
      %v5898 = vmul.f32 %v5866, %v5866
      %v5899 = vmul.f32 %v5867, %v5867
      %v5900 = vmul.f32 %v5868, %v5868
      %v5901 = vmul.f32 %v5869, %v5869
      %v5902 = vmul.f32 %v5870, %v5870
      %v5903 = vmul.f32 %v5871, %v5871
      %v5904 = vmul.f32 %v5872, %v5872
      %v5905 = vmul.f32 %v5873, %v5873
      %v5906 = vmul.f32 %v5874, %v5874
      %v5907 = vmul.f32 %v5875, %v5875
      %v5908 = vmul.f32 %v5876, %v5876
      %v5909 = vmul.f32 %v5877, %v5877
      %v5910 = vmul.f32 %v5878, %v5878
      %v5911 = vmul.f32 %v5879, %v5879
      %v5912 = vadd.f32 %v5880, %v5881
      %v5913 = vadd.f32 %v5912, %v5882
      %v5914 = vadd.f32 %v5913, %v5883
      %v5915 = vadd.f32 %v5914, %v5884
      %v5916 = vadd.f32 %v5915, %v5885
      %v5917 = vadd.f32 %v5916, %v5886
      %v5918 = vadd.f32 %v5917, %v5887
      %v5919 = vadd.f32 %v5918, %v5888
      %v5920 = vadd.f32 %v5919, %v5889
      %v5921 = vadd.f32 %v5920, %v5890
      %v5922 = vadd.f32 %v5921, %v5891
      %v5923 = vadd.f32 %v5922, %v5892
      %v5924 = vadd.f32 %v5923, %v5893
      %v5925 = vadd.f32 %v5924, %v5894
      %v5926 = vadd.f32 %v5925, %v5895
      %v5927 = vadd.f32 %v5926, %v5896
      %v5928 = vadd.f32 %v5927, %v5897
      %v5929 = vadd.f32 %v5928, %v5898
      %v5930 = vadd.f32 %v5929, %v5899
      %v5931 = vadd.f32 %v5930, %v5900
      %v5932 = vadd.f32 %v5931, %v5901
      %v5933 = vadd.f32 %v5932, %v5902
      %v5934 = vadd.f32 %v5933, %v5903
      %v5935 = vadd.f32 %v5934, %v5904
      %v5936 = vadd.f32 %v5935, %v5905
      %v5937 = vadd.f32 %v5936, %v5906
      %v5938 = vadd.f32 %v5937, %v5907
      %v5939 = vadd.f32 %v5938, %v5908
      %v5940 = vadd.f32 %v5939, %v5909
      %v5941 = vadd.f32 %v5940, %v5910
      %v5942 = vadd.f32 %v5941, %v5911
      %v5943 = vrot.slane %v5942, 4
      %v5944 = vadd.f32 %v5942, %v5943
      %v5945 = vrot.slane %v5944, 2
      %v5946 = vadd.f32 %v5944, %v5945
      %v5947 = vrot.slane %v5946, 1
      %v5948 = vadd.f32 %v5946, %v5947
      %vm5949 = vcmask 1040384
      %v5950 = vsel %vm5949, %v5846, %v5948
      %5951 = vst [vmem:[%s235] sm:$0x3] %v5950
      %p5952 = scmp.lt.s32.totalorder %s17, 1
      %s5953 = scalar_select %p5952, %s17, 1
      %s5954 = smul.addr %s5953, 32
      %s5955 = smul.addr %s5954, 8
      %s5956 = scalar_lea.vmem %s4, %s5955
      %p5957 = scmp.lt.s32.totalorder %s17, 1
      %s5958 = scalar_select %p5957, %s17, 1
      %s5959 = smul.addr %s5958, 2
      %s5960 = scalar_lea.vmem %s5, %s5959
      // Predicated region
      $region37: #{double_conv.4} parent=35 // pred_check
        %p5961 = pneg %p124
      $region38: #{double_conv.4} parent=35 // pred_check_branch
        %5963 = sbr.rel (%p5961) target = $region40
      $region39: #{double_conv.4} parent=35 // pred_region
        _
      $region40: #{double_conv.4} parent=35 // pred_fallthru
        _
      // Predicated region
      $region41: #{double_conv.4} parent=35 // pred_check
        %p5964 = pneg %p150
      $region42: #{double_conv.4} parent=35 // pred_check_branch
        %5966 = sbr.rel (%p5964) target = $region44
      $region43: #{double_conv.4} parent=35 // pred_region
        _
      $region44: #{double_conv.4} parent=35 // pred_fallthru
        _
    $region36: #{double_conv.4} parent=5 // pred_fallthru
      _
    %p5967 = scmp.le.s32.totalorder 2, %s12
    // Predicated region
    $region45: #{double_conv.4} parent=5 // pred_check
      %p5968 = pneg %p5967
    $region46: #{double_conv.4} parent=5 // pred_check_branch
      %5970 = sbr.rel (%p5968) target = $region48
    $region47: #{double_conv.4} parent=5 // pred_region
      %s5971 = ssub.s32 %s12, 2
      // Predicated region
      $region49: #{double_conv.4} parent=47 // pred_check
        %p5972 = pneg %p130
      $region50: #{double_conv.4} parent=47 // pred_check_branch
        %5974 = sbr.rel (%p5972) target = $region52
      $region51: #{double_conv.4} parent=47 // pred_region
        %p5975 = scmp.lt.s32.totalorder %s18, 1
        %s5976 = scalar_select %p5975, %s18, 1
        %s5977 = smul.addr %s5976, 32
        %s5978 = smul.addr %s5977, 8
        %s5979 = scalar_lea.vmem %s4, %s5978
      $region52: #{double_conv.4} parent=47 // pred_fallthru
        _
      // Predicated region
      $region53: #{double_conv.4} parent=47 // pred_check
        %p5980 = pneg %p156
      $region54: #{double_conv.4} parent=47 // pred_check_branch
        %5982 = sbr.rel (%p5980) target = $region56
      $region55: #{double_conv.4} parent=47 // pred_region
        %p5983 = scmp.lt.s32.totalorder %s18, 1
        %s5984 = scalar_select %p5983, %s18, 1
        %s5985 = smul.addr %s5984, 2
        %s5986 = scalar_lea.vmem %s5, %s5985
      $region56: #{double_conv.4} parent=47 // pred_fallthru
        _
    $region48: #{double_conv.4} parent=5 // pred_fallthru
      _
  $region6: #{double_conv.4} parent=0 // loop_footer
    %s16 = sadd.s32 1, %s12
  $region7: #{double_conv.4} parent=0 // loop_footer_branch
    %11 = sbr.rel target = $region3
  $region8: #{double_conv.4} parent=0 // loop_exit
    _

</llo_original>
